<compile_context>
chip_gen: v6e
topology: v6e:2x2x1
jax: 0.10.0
libtpu: 0.0.40
codegen_flags: <defaults>
</compile_context>

<pallas_src>
import math

import jax
import jax.numpy as jnp
from jax.experimental import pallas as pl
from jax.experimental.pallas import tpu as pltpu

BN_EPS = 1e-5
VMEM_LIMIT = 32 * 1024 * 1024  # safe on v5e/v6e/v7x; sweep per-generation if needed


def _round_up(x, m):
    return (x + m - 1) // m * m


def _row_tile(M):
    # Whole-array block when it fits (always legal: equal to the full dim),
    # otherwise 512-row tiles (multiple of 8) with a cdiv grid / partial last block.
    return M if M <= 512 else 512


# ----------------------------------------------------------------------------
# Pallas kernels
# ----------------------------------------------------------------------------
def _make_mm_kernel(has_pre, has_post, has_bias):
    """Matmul with optional fused BN+ReLU prologue (on A) / epilogue (on the result)
    and optional bias.  MXU operands are cast to bf16; accumulation is f32."""

    def kernel(*refs):
        idx = 0
        a_ref = refs[idx]; idx += 1
        if has_pre:
            ps_ref = refs[idx]; pt_ref = refs[idx + 1]; idx += 2
        b_ref = refs[idx]; idx += 1
        if has_post:
            qs_ref = refs[idx]; qt_ref = refs[idx + 1]; idx += 2
        if has_bias:
            bias_ref = refs[idx]; idx += 1
        o_ref = refs[idx]

        a = a_ref[...]
        if has_pre:  # relu(norm(x)) in f32, then cast for the MXU
            a = jnp.maximum(a * ps_ref[...] + pt_ref[...], 0.0)
        acc = jnp.dot(a.astype(jnp.bfloat16), b_ref[...],
                      preferred_element_type=jnp.float32)
        if has_post:
            acc = jnp.maximum(acc * qs_ref[...] + qt_ref[...], 0.0)
        if has_bias:
            acc = acc + bias_ref[...]
        o_ref[...] = acc

    return kernel


def _conv3x3_kernel(x_ref, w_ref, o_ref):
    """Direct 3x3 / stride 1 / pad 1 conv on one image.

    x_ref: (1, (H+3)*Wp, Cin)  flattened zero-padded image, Wp = round_up(W+2, 8)
    w_ref: (9, Cin, Cout)      bf16 weights, tap index = ky*3 + kx
    o_ref: (1, H, W, Cout)     f32 output
    Each tap (ky, kx) is a row-offset (ky*Wp + kx) matmul over the flattened tile;
    wrapped / padded rows only ever land in discarded columns w >= W.
    """
    _, H, W, Cout = o_ref.shape
    _, L, Cin = x_ref.shape
    Wp = L // (H + 3)
    HW = H * Wp

    acc = jnp.zeros((HW, Cout), jnp.float32)
    for ky in range(3):
        for kx in range(3):
            off = ky * Wp + kx
            a = x_ref[0, off:off + HW, :].astype(jnp.bfloat16)
            acc = acc + jnp.dot(a, w_ref[ky * 3 + kx],
                                preferred_element_type=jnp.float32)
    o_ref[0] = acc.reshape(H, Wp, Cout)[:, :W, :]


def _window_max_kernel(x_ref, o_ref):
    o_ref[...] = jnp.max(x_ref[...], axis=1)


def _window_mean_kernel(x_ref, o_ref):
    o_ref[...] = jnp.mean(x_ref[...], axis=1)


def _gap_bnrelu_kernel(x_ref, s_ref, t_ref, o_ref):
    # norm5 + relu + adaptive_avg_pool2d((1,1)) fused
    a = jnp.maximum(x_ref[...] * s_ref[...] + t_ref[...], 0.0)
    o_ref[...] = jnp.mean(a, axis=1)


# ----------------------------------------------------------------------------
# Pallas call wrappers
# ----------------------------------------------------------------------------
def fused_matmul(a, b, pre_scale=None, pre_shift=None,
                 post_scale=None, post_shift=None, bias=None):
    """a: (M, K) f32, b: (K, N) bf16 -> (M, N) f32 with optional fused BN/ReLU."""
    M, K = a.shape
    _, N = b.shape
    TM = _row_tile(M)

    has_pre = pre_scale is not None
    has_post = post_scale is not None
    has_bias = bias is not None

    in_specs = [pl.BlockSpec((TM, K), lambda i: (i, 0))]
    args = [a]
    if has_pre:
        in_specs += [pl.BlockSpec((1, K), lambda i: (0, 0))] * 2
        args += [pre_scale.reshape(1, K).astype(jnp.float32),
                 pre_shift.reshape(1, K).astype(jnp.float32)]
    in_specs.append(pl.BlockSpec((K, N), lambda i: (0, 0)))
    args.append(b)
    if has_post:
        in_specs += [pl.BlockSpec((1, N), lambda i: (0, 0))] * 2
        args += [post_scale.reshape(1, N).astype(jnp.float32),
                 post_shift.reshape(1, N).astype(jnp.float32)]
    if has_bias:
        in_specs.append(pl.BlockSpec((1, N), lambda i: (0, 0)))
        args.append(bias.reshape(1, N).astype(jnp.float32))

    return pl.pallas_call(
        _make_mm_kernel(has_pre, has_post, has_bias),
        out_shape=jax.ShapeDtypeStruct((M, N), jnp.float32),
        grid=(pl.cdiv(M, TM),),
        in_specs=in_specs,
        out_specs=pl.BlockSpec((TM, N), lambda i: (i, 0)),
        compiler_params=pltpu.CompilerParams(
            dimension_semantics=("parallel",),
            vmem_limit_bytes=VMEM_LIMIT),
    )(*args)


def conv3x3_direct(x, w9):
    """x: (N, H, W, Cin) already-activated f32, w9: (9, Cin, Cout) bf16."""
    N, H, W, Cin = x.shape
    Cout = w9.shape[-1]
    Wp = _round_up(W + 2, 8)
    # zero pad: 1 row top / 2 rows bottom, 1 col left / (Wp - W - 1) cols right
    xp = jnp.pad(x, ((0, 0), (1, 2), (1, Wp - W - 1), (0, 0)))
    xf = xp.reshape(N, (H + 3) * Wp, Cin)
    return pl.pallas_call(
        _conv3x3_kernel,
        out_shape=jax.ShapeDtypeStruct((N, H, W, Cout), jnp.float32),
        grid=(N,),
        in_specs=[
            pl.BlockSpec((1, (H + 3) * Wp, Cin), lambda n: (n, 0, 0)),
            pl.BlockSpec((9, Cin, Cout), lambda n: (0, 0, 0)),
        ],
        out_specs=pl.BlockSpec((1, H, W, Cout), lambda n: (n, 0, 0, 0)),
        compiler_params=pltpu.CompilerParams(
            dimension_semantics=("parallel",),
            vmem_limit_bytes=VMEM_LIMIT),
    )(xf, w9)


def pallas_window_reduce(x, op):
    """x: (M, K, C), reduce over axis 1 with max or mean -> (M, C)."""
    M, K, C = x.shape
    TM = _row_tile(M)
    kernel = _window_max_kernel if op == "max" else _window_mean_kernel
    return pl.pallas_call(
        kernel,
        out_shape=jax.ShapeDtypeStruct((M, C), jnp.float32),
        grid=(pl.cdiv(M, TM),),
        in_specs=[pl.BlockSpec((TM, K, C), lambda i: (i, 0, 0))],
        out_specs=pl.BlockSpec((TM, C), lambda i: (i, 0)),
        compiler_params=pltpu.CompilerParams(dimension_semantics=("parallel",)),
    )(x)


def global_avgpool_bnrelu(x, scale, shift):
    """norm5 + relu + global average pool fused: (N,H,W,C) -> (N,C)."""
    N, H, W, C = x.shape
    xw = x.reshape(N, H * W, C)
    TN = N if N <= 64 else 64
    return pl.pallas_call(
        _gap_bnrelu_kernel,
        out_shape=jax.ShapeDtypeStruct((N, C), jnp.float32),
        grid=(pl.cdiv(N, TN),),
        in_specs=[
            pl.BlockSpec((TN, H * W, C), lambda i: (i, 0, 0)),
            pl.BlockSpec((1, C), lambda i: (0, 0)),
            pl.BlockSpec((1, C), lambda i: (0, 0)),
        ],
        out_specs=pl.BlockSpec((TN, C), lambda i: (i, 0)),
        compiler_params=pltpu.CompilerParams(dimension_semantics=("parallel",)),
    )(xw, scale.reshape(1, C).astype(jnp.float32),
      shift.reshape(1, C).astype(jnp.float32))


# ----------------------------------------------------------------------------
# NN building blocks (im2col only for the single 7x7 stem conv; pooling windows)
# ----------------------------------------------------------------------------
def _bn_scale_shift(bn):
    scale = bn["gamma"] * jax.lax.rsqrt(bn["var"] + BN_EPS)
    shift = bn["beta"] - bn["mean"] * scale
    return scale, shift


def _im2col(x, k, stride, pad):
    N, H, W, C = x.shape
    Ho = (H + 2 * pad - k) // stride + 1
    Wo = (W + 2 * pad - k) // stride + 1
    xp = jnp.pad(x, ((0, 0), (pad, pad), (pad, pad), (0, 0)))
    cols = []
    for ky in range(k):
        for kx in range(k):
            cols.append(
                xp[:, ky:ky + stride * (Ho - 1) + 1:stride,
                   kx:kx + stride * (Wo - 1) + 1:stride, :])
    patches = jnp.stack(cols, axis=3).reshape(N * Ho * Wo, k * k * C)
    return patches, N, Ho, Wo


def _extract_windows(x, k, stride, pad, pad_value):
    N, H, W, C = x.shape
    Ho = (H + 2 * pad - k) // stride + 1
    Wo = (W + 2 * pad - k) // stride + 1
    xp = jnp.pad(x, ((0, 0), (pad, pad), (pad, pad), (0, 0)),
                 constant_values=pad_value)
    wins = []
    for ky in range(k):
        for kx in range(k):
            wins.append(
                xp[:, ky:ky + stride * (Ho - 1) + 1:stride,
                   kx:kx + stride * (Wo - 1) + 1:stride, :])
    stacked = jnp.stack(wins, axis=3).reshape(N * Ho * Wo, k * k, C)
    return stacked, N, Ho, Wo, C


def maxpool2d(x, k=3, stride=2, pad=1):
    # TODO(synk): the 3x3/stride-2 window extraction still expands ~2.25x in HBM;
    #             it runs once per forward so it is not fused into a kernel here.
    neg = jnp.finfo(jnp.float32).min
    wins, N, Ho, Wo, C = _extract_windows(x, k, stride, pad, neg)
    return pallas_window_reduce(wins, "max").reshape(N, Ho, Wo, C)


def avgpool2d(x, k=2, stride=2, pad=0):
    # 2x2 stride-2 windows are non-overlapping -> extraction is a 1x rearrangement.
    wins, N, Ho, Wo, C = _extract_windows(x, k, stride, pad, 0.0)
    return pallas_window_reduce(wins, "mean").reshape(N, Ho, Wo, C)


# ----------------------------------------------------------------------------
# DenseNet parameters & forward
# ----------------------------------------------------------------------------
def _bn_params(c):
    return {
        "gamma": jnp.ones((c,), jnp.float32),
        "beta": jnp.zeros((c,), jnp.float32),
        "mean": jnp.zeros((c,), jnp.float32),
        "var": jnp.ones((c,), jnp.float32),
    }


def _kaiming_conv(key, cout, cin, kh, kw):
    fan_in = cin * kh * kw
    std = math.sqrt(2.0 / fan_in)
    return std * jax.random.normal(key, (cout, cin, kh, kw), dtype=jnp.float32)


def _prep_conv_matrix(w):
    """(Cout, Cin, KH, KW) torch layout -> (KH*KW*Cin, Cout) bf16 matmul weight."""
    cout, cin, kh, kw = w.shape
    return jnp.transpose(w, (2, 3, 1, 0)).reshape(kh * kw * cin, cout).astype(jnp.bfloat16)


def _prep_conv3x3(w):
    """(Cout, Cin, 3, 3) -> (9, Cin, Cout) bf16 per-tap matmul weights."""
    cout, cin, _, _ = w.shape
    return jnp.transpose(w, (2, 3, 1, 0)).reshape(9, cin, cout).astype(jnp.bfloat16)


def init_densenet_params(key, growth_rate=32, block_config=(6, 12, 24, 16),
                         num_init_features=64, bn_size=4, num_classes=1000):
    params = {}
    key, k0 = jax.random.split(key)
    params["conv0_w"] = _prep_conv_matrix(_kaiming_conv(k0, num_init_features, 3, 7, 7))
    params["norm0"] = _bn_params(num_init_features)

    num_features = num_init_features
    blocks, transitions = [], []
    for i, num_layers in enumerate(block_config):
        layers = []
        for li in range(num_layers):
            nin = num_features + li * growth_rate
            key, k1, k2 = jax.random.split(key, 3)
            layers.append({
                "norm1": _bn_params(nin),
                "conv1_w": _prep_conv_matrix(
                    _kaiming_conv(k1, bn_size * growth_rate, nin, 1, 1)),
                "norm2": _bn_params(bn_size * growth_rate),
                "conv2_w9": _prep_conv3x3(
                    _kaiming_conv(k2, growth_rate, bn_size * growth_rate, 3, 3)),
            })
        blocks.append({"layers": layers})
        num_features += num_layers * growth_rate
        if i != len(block_config) - 1:
            key, kt = jax.random.split(key)
            transitions.append({
                "norm": _bn_params(num_features),
                "conv_w": _prep_conv_matrix(
                    _kaiming_conv(kt, num_features // 2, num_features, 1, 1)),
            })
            num_features //= 2
    params["blocks"] = blocks
    params["transitions"] = transitions
    params["norm5"] = _bn_params(num_features)

    key, kw = jax.random.split(key)
    bound = 1.0 / math.sqrt(num_features)
    fc_w = jax.random.uniform(kw, (num_classes, num_features), jnp.float32, -bound, bound)
    params["fc_w"] = jnp.transpose(fc_w).astype(jnp.bfloat16)  # (features, classes)
    params["fc_b"] = jnp.zeros((num_classes,), jnp.float32)
    return params


def dense_layer_forward(x, p):
    """norm1+relu1+conv1 (fused matmul w/ prologue+epilogue) then direct 3x3 conv2.
    drop_rate = 0 -> dropout is a no-op."""
    N, H, W, C = x.shape
    s1, t1 = _bn_scale_shift(p["norm1"])
    s2, t2 = _bn_scale_shift(p["norm2"])
    bott = fused_matmul(x.reshape(N * H * W, C), p["conv1_w"],
                        pre_scale=s1, pre_shift=t1,
                        post_scale=s2, post_shift=t2)
    bott = bott.reshape(N, H, W, -1)
    return conv3x3_direct(bott, p["conv2_w9"])


def dense_block_forward(x, block_p):
    # TODO(synk): per-layer jnp.concatenate re-copies the growing feature map in HBM;
    #             an aliased channel-offset Pallas store into a preallocated buffer
    #             would remove this O(L^2) write traffic.
    features = x
    for lp in block_p["layers"]:
        new = dense_layer_forward(features, lp)
        features = jnp.concatenate([features, new], axis=-1)  # torch.cat(..., dim=1)
    return features


def transition_forward(x, tp):
    N, H, W, C = x.shape
    s, t = _bn_scale_shift(tp["norm"])
    y = fused_matmul(x.reshape(N * H * W, C), tp["conv_w"], pre_scale=s, pre_shift=t)
    y = y.reshape(N, H, W, -1)
    return avgpool2d(y, 2, 2, 0)


def densenet_forward(params, x_nchw):
    # layout: input is NCHW (PyTorch); convert to NHWC for the kernels.
    x = jnp.transpose(x_nchw.astype(jnp.float32), (0, 2, 3, 1))

    # conv0 (7x7/2, im2col) with norm0+relu0 fused as the matmul epilogue.
    patches, N, Ho, Wo = _im2col(x, 7, 2, 3)
    s0, t0 = _bn_scale_shift(params["norm0"])
    nif = params["conv0_w"].shape[1]
    x = fused_matmul(patches, params["conv0_w"], post_scale=s0, post_shift=t0)
    x = x.reshape(N, Ho, Wo, nif)
    x = maxpool2d(x, 3, 2, 1)  # pool0

    n_blocks = len(params["blocks"])
    for i in range(n_blocks):
        x = dense_block_forward(x, params["blocks"][i])
        if i != n_blocks - 1:
            x = transition_forward(x, params["transitions"][i])

    # norm5 + F.relu + adaptive_avg_pool2d((1,1)) + flatten, fused.
    s5, t5 = _bn_scale_shift(params["norm5"])
    pooled = global_avgpool_bnrelu(x, s5, t5)
    return fused_matmul(pooled, params["fc_w"], bias=params["fc_b"])  # classifier


if __name__ == "__main__":
    key = jax.random.PRNGKey(0)
    key_p, key_x = jax.random.split(key)

    # Small DenseNet-BC configuration (same architecture family, reduced sizes).
    growth_rate = 8
    block_config = (2, 2)
    num_init_features = 16
    bn_size = 2
    num_classes = 10

    params = init_densenet_params(
        key_p,
        growth_rate=growth_rate,
        block_config=block_config,
        num_init_features=num_init_features,
        bn_size=bn_size,
        num_classes=num_classes,
    )

    x = jax.random.normal(key_x, (2, 3, 32, 32), dtype=jnp.float32)  # NCHW

    fwd = jax.jit(densenet_forward)
    out = fwd(params, x)
    out = jax.block_until_ready(out)
    assert out.shape == (2, num_classes), out.shape
    assert jnp.all(jnp.isfinite(out)), "non-finite output"
    print("KERNEL_OK")
</pallas_src>

<mosaic_0001>
module attributes {stable_mosaic.version = 11 : i64} {
  func.func @kernel(%arg0: i32, %arg1: memref<512x147xf32, #tpu.memory_space<vmem>>, %arg2: memref<147x16xbf16, #tpu.memory_space<vmem>>, %arg3: memref<1x16xf32, #tpu.memory_space<vmem>>, %arg4: memref<1x16xf32, #tpu.memory_space<vmem>>, %arg5: memref<512x16xf32, #tpu.memory_space<vmem>>) attributes {dimension_semantics = [#tpu.dimension_semantics<parallel>], iteration_bounds = array<i64: 1>, scalar_prefetch = 0 : i64, scratch_operands = 0 : i64, tpu.core_type = #tpu.core_type<tc>, window_params = [{transform_indices = @transform_0, window_bounds = array<i64: 512, 147>}, {pipeline_mode = #tpu.pipeline_mode<synchronous>, transform_indices = @transform_1, window_bounds = array<i64: 147, 16>}, {pipeline_mode = #tpu.pipeline_mode<synchronous>, transform_indices = @transform_2, window_bounds = array<i64: 1, 16>}, {pipeline_mode = #tpu.pipeline_mode<synchronous>, transform_indices = @transform_3, window_bounds = array<i64: 1, 16>}, {transform_indices = @transform_4, window_bounds = array<i64: 512, 16>}]} {
    %c0 = arith.constant 0 : index
    %c0_0 = arith.constant 0 : index
    %0 = vector.load %arg1[%c0, %c0_0] : memref<512x147xf32, #tpu.memory_space<vmem>>, vector<512x147xf32>
    %1 = arith.truncf %0 : vector<512x147xf32> to vector<512x147xbf16>
    %c0_1 = arith.constant 0 : index
    %c0_2 = arith.constant 0 : index
    %2 = vector.load %arg2[%c0_1, %c0_2] : memref<147x16xbf16, #tpu.memory_space<vmem>>, vector<147x16xbf16>
    %cst = arith.constant dense<0.000000e+00> : vector<512x16xf32>
    %3 = tpu.matmul %1, %2, %cst {dimension_numbers = #tpu.dot_dimension_numbers<[1], [0], [0], [1], [0, 0, 1, 1], [], []>} : vector<512x147xbf16>, vector<147x16xbf16>, vector<512x16xf32> -> vector<512x16xf32>
    %c0_3 = arith.constant 0 : index
    %c0_4 = arith.constant 0 : index
    %4 = vector.load %arg3[%c0_3, %c0_4] : memref<1x16xf32, #tpu.memory_space<vmem>>, vector<1x16xf32>
    %5 = vector.broadcast %4 : vector<1x16xf32> to vector<512x16xf32>
    %6 = arith.mulf %3, %5 : vector<512x16xf32>
    %c0_5 = arith.constant 0 : index
    %c0_6 = arith.constant 0 : index
    %7 = vector.load %arg4[%c0_5, %c0_6] : memref<1x16xf32, #tpu.memory_space<vmem>>, vector<1x16xf32>
    %8 = vector.broadcast %7 : vector<1x16xf32> to vector<512x16xf32>
    %9 = arith.addf %6, %8 : vector<512x16xf32>
    %cst_7 = arith.constant 0.000000e+00 : f32
    %10 = vector.broadcast %cst_7 : f32 to vector<512x16xf32>
    %11 = arith.maximumf %9, %10 : vector<512x16xf32>
    %c0_8 = arith.constant 0 : index
    %c0_9 = arith.constant 0 : index
    %12 = vector.load %arg5[%c0_8, %c0_9] : memref<512x16xf32, #tpu.memory_space<vmem>>, vector<512x16xf32>
    tpu.vector_store %arg5[%c0_8, %c0_9], %11 {strides = array<i32>} : memref<512x16xf32, #tpu.memory_space<vmem>>, vector<512x16xf32>,
    return
  }
  func.func @transform_0(%arg0: i32) -> (i32, i32) {
    %c0_i32 = arith.constant 0 : i32
    %c0_i32_0 = arith.constant 0 : i32
    return %arg0, %c0_i32 : i32, i32
  }
  func.func @transform_1(%arg0: i32) -> (i32, i32) {
    %c0_i32 = arith.constant 0 : i32
    %c0_i32_0 = arith.constant 0 : i32
    %c0_i32_1 = arith.constant 0 : i32
    return %c0_i32, %c0_i32_0 : i32, i32
  }
  func.func @transform_2(%arg0: i32) -> (i32, i32) {
    %c0_i32 = arith.constant 0 : i32
    %c0_i32_0 = arith.constant 0 : i32
    %c0_i32_1 = arith.constant 0 : i32
    return %c0_i32, %c0_i32_0 : i32, i32
  }
  func.func @transform_3(%arg0: i32) -> (i32, i32) {
    %c0_i32 = arith.constant 0 : i32
    %c0_i32_0 = arith.constant 0 : i32
    %c0_i32_1 = arith.constant 0 : i32
    return %c0_i32, %c0_i32_0 : i32, i32
  }
  func.func @transform_4(%arg0: i32) -> (i32, i32) {
    %c0_i32 = arith.constant 0 : i32
    %c0_i32_0 = arith.constant 0 : i32
    return %arg0, %c0_i32 : i32, i32
  }
}

module attributes {stable_mosaic.version = 11 : i64} {
  func.func @_window_max_kernel(%arg0: i32, %arg1: memref<128x9x16xf32, #tpu.memory_space<vmem>>, %arg2: memref<128x16xf32, #tpu.memory_space<vmem>>) attributes {dimension_semantics = [#tpu.dimension_semantics<parallel>], iteration_bounds = array<i64: 1>, scalar_prefetch = 0 : i64, scratch_operands = 0 : i64, tpu.core_type = #tpu.core_type<tc>, window_params = [{transform_indices = @transform_0, window_bounds = array<i64: 128, 9, 16>}, {transform_indices = @transform_1, window_bounds = array<i64: 128, 16>}]} {
    %c0 = arith.constant 0 : index
    %c0_0 = arith.constant 0 : index
    %c0_1 = arith.constant 0 : index
    %0 = vector.load %arg1[%c0, %c0_0, %c0_1] : memref<128x9x16xf32, #tpu.memory_space<vmem>>, vector<128x9x16xf32>
    %cst = arith.constant dense<0xFF800000> : vector<128x16xf32>
    %1 = vector.multi_reduction <maximumf>, %0, %cst [1] : vector<128x9x16xf32> to vector<128x16xf32>
    %c0_2 = arith.constant 0 : index
    %c0_3 = arith.constant 0 : index
    %2 = vector.load %arg2[%c0_2, %c0_3] : memref<128x16xf32, #tpu.memory_space<vmem>>, vector<128x16xf32>
    tpu.vector_store %arg2[%c0_2, %c0_3], %1 {strides = array<i32>} : memref<128x16xf32, #tpu.memory_space<vmem>>, vector<128x16xf32>,
    return
  }
  func.func @transform_0(%arg0: i32) -> (i32, i32, i32) {
    %c0_i32 = arith.constant 0 : i32
    %c0_i32_0 = arith.constant 0 : i32
    %c0_i32_1 = arith.constant 0 : i32
    return %arg0, %c0_i32, %c0_i32_0 : i32, i32, i32
  }
  func.func @transform_1(%arg0: i32) -> (i32, i32) {
    %c0_i32 = arith.constant 0 : i32
    %c0_i32_0 = arith.constant 0 : i32
    return %arg0, %c0_i32 : i32, i32
  }
}

module attributes {stable_mosaic.version = 11 : i64} {
  func.func @kernel(%arg0: i32, %arg1: memref<128x16xf32, #tpu.memory_space<vmem>>, %arg2: memref<1x16xf32, #tpu.memory_space<vmem>>, %arg3: memref<1x16xf32, #tpu.memory_space<vmem>>, %arg4: memref<16x16xbf16, #tpu.memory_space<vmem>>, %arg5: memref<1x16xf32, #tpu.memory_space<vmem>>, %arg6: memref<1x16xf32, #tpu.memory_space<vmem>>, %arg7: memref<128x16xf32, #tpu.memory_space<vmem>>) attributes {dimension_semantics = [#tpu.dimension_semantics<parallel>], iteration_bounds = array<i64: 1>, scalar_prefetch = 0 : i64, scratch_operands = 0 : i64, tpu.core_type = #tpu.core_type<tc>, window_params = [{transform_indices = @transform_0, window_bounds = array<i64: 128, 16>}, {pipeline_mode = #tpu.pipeline_mode<synchronous>, transform_indices = @transform_1, window_bounds = array<i64: 1, 16>}, {pipeline_mode = #tpu.pipeline_mode<synchronous>, transform_indices = @transform_2, window_bounds = array<i64: 1, 16>}, {pipeline_mode = #tpu.pipeline_mode<synchronous>, transform_indices = @transform_3, window_bounds = array<i64: 16, 16>}, {pipeline_mode = #tpu.pipeline_mode<synchronous>, transform_indices = @transform_4, window_bounds = array<i64: 1, 16>}, {pipeline_mode = #tpu.pipeline_mode<synchronous>, transform_indices = @transform_5, window_bounds = array<i64: 1, 16>}, {transform_indices = @transform_6, window_bounds = array<i64: 128, 16>}]} {
    %c0 = arith.constant 0 : index
    %c0_0 = arith.constant 0 : index
    %0 = vector.load %arg1[%c0, %c0_0] : memref<128x16xf32, #tpu.memory_space<vmem>>, vector<128x16xf32>
    %c0_1 = arith.constant 0 : index
    %c0_2 = arith.constant 0 : index
    %1 = vector.load %arg2[%c0_1, %c0_2] : memref<1x16xf32, #tpu.memory_space<vmem>>, vector<1x16xf32>
    %2 = vector.broadcast %1 : vector<1x16xf32> to vector<128x16xf32>
    %3 = arith.mulf %0, %2 : vector<128x16xf32>
    %c0_3 = arith.constant 0 : index
    %c0_4 = arith.constant 0 : index
    %4 = vector.load %arg3[%c0_3, %c0_4] : memref<1x16xf32, #tpu.memory_space<vmem>>, vector<1x16xf32>
    %5 = vector.broadcast %4 : vector<1x16xf32> to vector<128x16xf32>
    %6 = arith.addf %3, %5 : vector<128x16xf32>
    %cst = arith.constant 0.000000e+00 : f32
    %7 = vector.broadcast %cst : f32 to vector<128x16xf32>
    %8 = arith.maximumf %6, %7 : vector<128x16xf32>
    %9 = arith.truncf %8 : vector<128x16xf32> to vector<128x16xbf16>
    %c0_5 = arith.constant 0 : index
    %c0_6 = arith.constant 0 : index
    %10 = vector.load %arg4[%c0_5, %c0_6] : memref<16x16xbf16, #tpu.memory_space<vmem>>, vector<16x16xbf16>
    %cst_7 = arith.constant dense<0.000000e+00> : vector<128x16xf32>
    %11 = tpu.matmul %9, %10, %cst_7 {dimension_numbers = #tpu.dot_dimension_numbers<[1], [0], [0], [1], [0, 0, 1, 1], [], []>} : vector<128x16xbf16>, vector<16x16xbf16>, vector<128x16xf32> -> vector<128x16xf32>
    %c0_8 = arith.constant 0 : index
    %c0_9 = arith.constant 0 : index
    %12 = vector.load %arg5[%c0_8, %c0_9] : memref<1x16xf32, #tpu.memory_space<vmem>>, vector<1x16xf32>
    %13 = vector.broadcast %12 : vector<1x16xf32> to vector<128x16xf32>
    %14 = arith.mulf %11, %13 : vector<128x16xf32>
    %c0_10 = arith.constant 0 : index
    %c0_11 = arith.constant 0 : index
    %15 = vector.load %arg6[%c0_10, %c0_11] : memref<1x16xf32, #tpu.memory_space<vmem>>, vector<1x16xf32>
    %16 = vector.broadcast %15 : vector<1x16xf32> to vector<128x16xf32>
    %17 = arith.addf %14, %16 : vector<128x16xf32>
    %cst_12 = arith.constant 0.000000e+00 : f32
    %18 = vector.broadcast %cst_12 : f32 to vector<128x16xf32>
    %19 = arith.maximumf %17, %18 : vector<128x16xf32>
    %c0_13 = arith.constant 0 : index
    %c0_14 = arith.constant 0 : index
    %20 = vector.load %arg7[%c0_13, %c0_14] : memref<128x16xf32, #tpu.memory_space<vmem>>, vector<128x16xf32>
    tpu.vector_store %arg7[%c0_13, %c0_14], %19 {strides = array<i32>} : memref<128x16xf32, #tpu.memory_space<vmem>>, vector<128x16xf32>,
    return
  }
  func.func @transform_0(%arg0: i32) -> (i32, i32) {
    %c0_i32 = arith.constant 0 : i32
    %c0_i32_0 = arith.constant 0 : i32
    return %arg0, %c0_i32 : i32, i32
  }
  func.func @transform_1(%arg0: i32) -> (i32, i32) {
    %c0_i32 = arith.constant 0 : i32
    %c0_i32_0 = arith.constant 0 : i32
    %c0_i32_1 = arith.constant 0 : i32
    return %c0_i32, %c0_i32_0 : i32, i32
  }
  func.func @transform_2(%arg0: i32) -> (i32, i32) {
    %c0_i32 = arith.constant 0 : i32
    %c0_i32_0 = arith.constant 0 : i32
    %c0_i32_1 = arith.constant 0 : i32
    return %c0_i32, %c0_i32_0 : i32, i32
  }
  func.func @transform_3(%arg0: i32) -> (i32, i32) {
    %c0_i32 = arith.constant 0 : i32
    %c0_i32_0 = arith.constant 0 : i32
    %c0_i32_1 = arith.constant 0 : i32
    return %c0_i32, %c0_i32_0 : i32, i32
  }
  func.func @transform_4(%arg0: i32) -> (i32, i32) {
    %c0_i32 = arith.constant 0 : i32
    %c0_i32_0 = arith.constant 0 : i32
    %c0_i32_1 = arith.constant 0 : i32
    return %c0_i32, %c0_i32_0 : i32, i32
  }
  func.func @transform_5(%arg0: i32) -> (i32, i32) {
    %c0_i32 = arith.constant 0 : i32
    %c0_i32_0 = arith.constant 0 : i32
    %c0_i32_1 = arith.constant 0 : i32
    return %c0_i32, %c0_i32_0 : i32, i32
  }
  func.func @transform_6(%arg0: i32) -> (i32, i32) {
    %c0_i32 = arith.constant 0 : i32
    %c0_i32_0 = arith.constant 0 : i32
    return %arg0, %c0_i32 : i32, i32
  }
}

module attributes {stable_mosaic.version = 11 : i64} {
  func.func @_conv3x3_kernel(%arg0: i32, %arg1: memref<1x176x16xf32, #tpu.memory_space<vmem>>, %arg2: memref<9x16x8xbf16, #tpu.memory_space<vmem>>, %arg3: memref<1x8x8x8xf32, #tpu.memory_space<vmem>>) attributes {dimension_semantics = [#tpu.dimension_semantics<parallel>], iteration_bounds = array<i64: 2>, scalar_prefetch = 0 : i64, scratch_operands = 0 : i64, tpu.core_type = #tpu.core_type<tc>, window_params = [{transform_indices = @transform_0, window_bounds = array<i64: 1, 176, 16>}, {pipeline_mode = #tpu.pipeline_mode<synchronous>, transform_indices = @transform_1, window_bounds = array<i64: 9, 16, 8>}, {transform_indices = @transform_2, window_bounds = array<i64: 1, 8, 8, 8>}]} {
    %cst = arith.constant 0.000000e+00 : f32
    %0 = vector.broadcast %cst : f32 to vector<128x8xf32>
    %c0 = arith.constant 0 : index
    %c0_0 = arith.constant 0 : index
    %c0_1 = arith.constant 0 : index
    %1 = vector.load %arg1[%c0, %c0_0, %c0_1] : memref<1x176x16xf32, #tpu.memory_space<vmem>>, vector<1x128x16xf32>
    %2 = vector.shape_cast %1 : vector<1x128x16xf32> to vector<128x16xf32>
    %3 = arith.truncf %2 : vector<128x16xf32> to vector<128x16xbf16>
    %c0_2 = arith.constant 0 : index
    %c0_3 = arith.constant 0 : index
    %c0_4 = arith.constant 0 : index
    %4 = vector.load %arg2[%c0_2, %c0_3, %c0_4] : memref<9x16x8xbf16, #tpu.memory_space<vmem>>, vector<1x16x8xbf16>
    %5 = vector.shape_cast %4 : vector<1x16x8xbf16> to vector<16x8xbf16>
    %cst_5 = arith.constant dense<0.000000e+00> : vector<128x8xf32>
    %6 = tpu.matmul %3, %5, %cst_5 {dimension_numbers = #tpu.dot_dimension_numbers<[1], [0], [0], [1], [0, 0, 1, 1], [], []>} : vector<128x16xbf16>, vector<16x8xbf16>, vector<128x8xf32> -> vector<128x8xf32>
    %7 = arith.addf %0, %6 : vector<128x8xf32>
    %c0_6 = arith.constant 0 : index
    %c1 = arith.constant 1 : index
    %c0_7 = arith.constant 0 : index
    %8 = vector.load %arg1[%c0_6, %c1, %c0_7] : memref<1x176x16xf32, #tpu.memory_space<vmem>>, vector<1x128x16xf32>
    %9 = vector.shape_cast %8 : vector<1x128x16xf32> to vector<128x16xf32>
    %10 = arith.truncf %9 : vector<128x16xf32> to vector<128x16xbf16>
    %c1_8 = arith.constant 1 : index
    %c0_9 = arith.constant 0 : index
    %c0_10 = arith.constant 0 : index
    %11 = vector.load %arg2[%c1_8, %c0_9, %c0_10] : memref<9x16x8xbf16, #tpu.memory_space<vmem>>, vector<1x16x8xbf16>
    %12 = vector.shape_cast %11 : vector<1x16x8xbf16> to vector<16x8xbf16>
    %cst_11 = arith.constant dense<0.000000e+00> : vector<128x8xf32>
    %13 = tpu.matmul %10, %12, %cst_11 {dimension_numbers = #tpu.dot_dimension_numbers<[1], [0], [0], [1], [0, 0, 1, 1], [], []>} : vector<128x16xbf16>, vector<16x8xbf16>, vector<128x8xf32> -> vector<128x8xf32>
    %14 = arith.addf %7, %13 : vector<128x8xf32>
    %c0_12 = arith.constant 0 : index
    %c2 = arith.constant 2 : index
    %c0_13 = arith.constant 0 : index
    %15 = vector.load %arg1[%c0_12, %c2, %c0_13] : memref<1x176x16xf32, #tpu.memory_space<vmem>>, vector<1x128x16xf32>
    %16 = vector.shape_cast %15 : vector<1x128x16xf32> to vector<128x16xf32>
    %17 = arith.truncf %16 : vector<128x16xf32> to vector<128x16xbf16>
    %c2_14 = arith.constant 2 : index
    %c0_15 = arith.constant 0 : index
    %c0_16 = arith.constant 0 : index
    %18 = vector.load %arg2[%c2_14, %c0_15, %c0_16] : memref<9x16x8xbf16, #tpu.memory_space<vmem>>, vector<1x16x8xbf16>
    %19 = vector.shape_cast %18 : vector<1x16x8xbf16> to vector<16x8xbf16>
    %cst_17 = arith.constant dense<0.000000e+00> : vector<128x8xf32>
    %20 = tpu.matmul %17, %19, %cst_17 {dimension_numbers = #tpu.dot_dimension_numbers<[1], [0], [0], [1], [0, 0, 1, 1], [], []>} : vector<128x16xbf16>, vector<16x8xbf16>, vector<128x8xf32> -> vector<128x8xf32>
    %21 = arith.addf %14, %20 : vector<128x8xf32>
    %c0_18 = arith.constant 0 : index
    %c16 = arith.constant 16 : index
    %c0_19 = arith.constant 0 : index
    %22 = vector.load %arg1[%c0_18, %c16, %c0_19] : memref<1x176x16xf32, #tpu.memory_space<vmem>>, vector<1x128x16xf32>
    %23 = vector.shape_cast %22 : vector<1x128x16xf32> to vector<128x16xf32>
    %24 = arith.truncf %23 : vector<128x16xf32> to vector<128x16xbf16>
    %c3 = arith.constant 3 : index
    %c0_20 = arith.constant 0 : index
    %c0_21 = arith.constant 0 : index
    %25 = vector.load %arg2[%c3, %c0_20, %c0_21] : memref<9x16x8xbf16, #tpu.memory_space<vmem>>, vector<1x16x8xbf16>
    %26 = vector.shape_cast %25 : vector<1x16x8xbf16> to vector<16x8xbf16>
    %cst_22 = arith.constant dense<0.000000e+00> : vector<128x8xf32>
    %27 = tpu.matmul %24, %26, %cst_22 {dimension_numbers = #tpu.dot_dimension_numbers<[1], [0], [0], [1], [0, 0, 1, 1], [], []>} : vector<128x16xbf16>, vector<16x8xbf16>, vector<128x8xf32> -> vector<128x8xf32>
    %28 = arith.addf %21, %27 : vector<128x8xf32>
    %c0_23 = arith.constant 0 : index
    %c17 = arith.constant 17 : index
    %c0_24 = arith.constant 0 : index
    %29 = vector.load %arg1[%c0_23, %c17, %c0_24] : memref<1x176x16xf32, #tpu.memory_space<vmem>>, vector<1x128x16xf32>
    %30 = vector.shape_cast %29 : vector<1x128x16xf32> to vector<128x16xf32>
    %31 = arith.truncf %30 : vector<128x16xf32> to vector<128x16xbf16>
    %c4 = arith.constant 4 : index
    %c0_25 = arith.constant 0 : index
    %c0_26 = arith.constant 0 : index
    %32 = vector.load %arg2[%c4, %c0_25, %c0_26] : memref<9x16x8xbf16, #tpu.memory_space<vmem>>, vector<1x16x8xbf16>
    %33 = vector.shape_cast %32 : vector<1x16x8xbf16> to vector<16x8xbf16>
    %cst_27 = arith.constant dense<0.000000e+00> : vector<128x8xf32>
    %34 = tpu.matmul %31, %33, %cst_27 {dimension_numbers = #tpu.dot_dimension_numbers<[1], [0], [0], [1], [0, 0, 1, 1], [], []>} : vector<128x16xbf16>, vector<16x8xbf16>, vector<128x8xf32> -> vector<128x8xf32>
    %35 = arith.addf %28, %34 : vector<128x8xf32>
    %c0_28 = arith.constant 0 : index
    %c18 = arith.constant 18 : index
    %c0_29 = arith.constant 0 : index
    %36 = vector.load %arg1[%c0_28, %c18, %c0_29] : memref<1x176x16xf32, #tpu.memory_space<vmem>>, vector<1x128x16xf32>
    %37 = vector.shape_cast %36 : vector<1x128x16xf32> to vector<128x16xf32>
    %38 = arith.truncf %37 : vector<128x16xf32> to vector<128x16xbf16>
    %c5 = arith.constant 5 : index
    %c0_30 = arith.constant 0 : index
    %c0_31 = arith.constant 0 : index
    %39 = vector.load %arg2[%c5, %c0_30, %c0_31] : memref<9x16x8xbf16, #tpu.memory_space<vmem>>, vector<1x16x8xbf16>
    %40 = vector.shape_cast %39 : vector<1x16x8xbf16> to vector<16x8xbf16>
    %cst_32 = arith.constant dense<0.000000e+00> : vector<128x8xf32>
    %41 = tpu.matmul %38, %40, %cst_32 {dimension_numbers = #tpu.dot_dimension_numbers<[1], [0], [0], [1], [0, 0, 1, 1], [], []>} : vector<128x16xbf16>, vector<16x8xbf16>, vector<128x8xf32> -> vector<128x8xf32>
    %42 = arith.addf %35, %41 : vector<128x8xf32>
    %c0_33 = arith.constant 0 : index
    %c32 = arith.constant 32 : index
    %c0_34 = arith.constant 0 : index
    %43 = vector.load %arg1[%c0_33, %c32, %c0_34] : memref<1x176x16xf32, #tpu.memory_space<vmem>>, vector<1x128x16xf32>
    %44 = vector.shape_cast %43 : vector<1x128x16xf32> to vector<128x16xf32>
    %45 = arith.truncf %44 : vector<128x16xf32> to vector<128x16xbf16>
    %c6 = arith.constant 6 : index
    %c0_35 = arith.constant 0 : index
    %c0_36 = arith.constant 0 : index
    %46 = vector.load %arg2[%c6, %c0_35, %c0_36] : memref<9x16x8xbf16, #tpu.memory_space<vmem>>, vector<1x16x8xbf16>
    %47 = vector.shape_cast %46 : vector<1x16x8xbf16> to vector<16x8xbf16>
    %cst_37 = arith.constant dense<0.000000e+00> : vector<128x8xf32>
    %48 = tpu.matmul %45, %47, %cst_37 {dimension_numbers = #tpu.dot_dimension_numbers<[1], [0], [0], [1], [0, 0, 1, 1], [], []>} : vector<128x16xbf16>, vector<16x8xbf16>, vector<128x8xf32> -> vector<128x8xf32>
    %49 = arith.addf %42, %48 : vector<128x8xf32>
    %c0_38 = arith.constant 0 : index
    %c33 = arith.constant 33 : index
    %c0_39 = arith.constant 0 : index
    %50 = vector.load %arg1[%c0_38, %c33, %c0_39] : memref<1x176x16xf32, #tpu.memory_space<vmem>>, vector<1x128x16xf32>
    %51 = vector.shape_cast %50 : vector<1x128x16xf32> to vector<128x16xf32>
    %52 = arith.truncf %51 : vector<128x16xf32> to vector<128x16xbf16>
    %c7 = arith.constant 7 : index
    %c0_40 = arith.constant 0 : index
    %c0_41 = arith.constant 0 : index
    %53 = vector.load %arg2[%c7, %c0_40, %c0_41] : memref<9x16x8xbf16, #tpu.memory_space<vmem>>, vector<1x16x8xbf16>
    %54 = vector.shape_cast %53 : vector<1x16x8xbf16> to vector<16x8xbf16>
    %cst_42 = arith.constant dense<0.000000e+00> : vector<128x8xf32>
    %55 = tpu.matmul %52, %54, %cst_42 {dimension_numbers = #tpu.dot_dimension_numbers<[1], [0], [0], [1], [0, 0, 1, 1], [], []>} : vector<128x16xbf16>, vector<16x8xbf16>, vector<128x8xf32> -> vector<128x8xf32>
    %56 = arith.addf %49, %55 : vector<128x8xf32>
    %c0_43 = arith.constant 0 : index
    %c34 = arith.constant 34 : index
    %c0_44 = arith.constant 0 : index
    %57 = vector.load %arg1[%c0_43, %c34, %c0_44] : memref<1x176x16xf32, #tpu.memory_space<vmem>>, vector<1x128x16xf32>
    %58 = vector.shape_cast %57 : vector<1x128x16xf32> to vector<128x16xf32>
    %59 = arith.truncf %58 : vector<128x16xf32> to vector<128x16xbf16>
    %c8 = arith.constant 8 : index
    %c0_45 = arith.constant 0 : index
    %c0_46 = arith.constant 0 : index
    %60 = vector.load %arg2[%c8, %c0_45, %c0_46] : memref<9x16x8xbf16, #tpu.memory_space<vmem>>, vector<1x16x8xbf16>
    %61 = vector.shape_cast %60 : vector<1x16x8xbf16> to vector<16x8xbf16>
    %cst_47 = arith.constant dense<0.000000e+00> : vector<128x8xf32>
    %62 = tpu.matmul %59, %61, %cst_47 {dimension_numbers = #tpu.dot_dimension_numbers<[1], [0], [0], [1], [0, 0, 1, 1], [], []>} : vector<128x16xbf16>, vector<16x8xbf16>, vector<128x8xf32> -> vector<128x8xf32>
    %63 = arith.addf %56, %62 : vector<128x8xf32>
    %64 = vector.shape_cast %63 : vector<128x8xf32> to vector<8x16x8xf32>
    %65 = vector.extract_strided_slice %64 {offsets = [0, 0, 0], sizes = [8, 8, 8], strides = [1, 1, 1]} : vector<8x16x8xf32> to vector<8x8x8xf32>
    %c0_48 = arith.constant 0 : index
    %c0_49 = arith.constant 0 : index
    %c0_50 = arith.constant 0 : index
    %c0_51 = arith.constant 0 : index
    %66 = vector.load %arg3[%c0_48, %c0_49, %c0_50, %c0_51] : memref<1x8x8x8xf32, #tpu.memory_space<vmem>>, vector<1x8x8x8xf32>
    %67 = vector.shape_cast %66 : vector<1x8x8x8xf32> to vector<8x8x8xf32>
    %68 = vector.shape_cast %65 : vector<8x8x8xf32> to vector<1x8x8x8xf32>
    tpu.vector_store %arg3[%c0_48, %c0_49, %c0_50, %c0_51], %68 {strides = array<i32>} : memref<1x8x8x8xf32, #tpu.memory_space<vmem>>, vector<1x8x8x8xf32>,
    return
  }
  func.func @transform_0(%arg0: i32) -> (i32, i32, i32) {
    %c0_i32 = arith.constant 0 : i32
    %c0_i32_0 = arith.constant 0 : i32
    %c0_i32_1 = arith.constant 0 : i32
    return %arg0, %c0_i32, %c0_i32_0 : i32, i32, i32
  }
  func.func @transform_1(%arg0: i32) -> (i32, i32, i32) {
    %c0_i32 = arith.constant 0 : i32
    %c0_i32_0 = arith.constant 0 : i32
    %c0_i32_1 = arith.constant 0 : i32
    %c0_i32_2 = arith.constant 0 : i32
    return %c0_i32, %c0_i32_0, %c0_i32_1 : i32, i32, i32
  }
  func.func @transform_2(%arg0: i32) -> (i32, i32, i32, i32) {
    %c0_i32 = arith.constant 0 : i32
    %c0_i32_0 = arith.constant 0 : i32
    %c0_i32_1 = arith.constant 0 : i32
    %c0_i32_2 = arith.constant 0 : i32
    return %arg0, %c0_i32, %c0_i32_0, %c0_i32_1 : i32, i32, i32, i32
  }
}

module attributes {stable_mosaic.version = 11 : i64} {
  func.func @kernel(%arg0: i32, %arg1: memref<128x24xf32, #tpu.memory_space<vmem>>, %arg2: memref<1x24xf32, #tpu.memory_space<vmem>>, %arg3: memref<1x24xf32, #tpu.memory_space<vmem>>, %arg4: memref<24x16xbf16, #tpu.memory_space<vmem>>, %arg5: memref<1x16xf32, #tpu.memory_space<vmem>>, %arg6: memref<1x16xf32, #tpu.memory_space<vmem>>, %arg7: memref<128x16xf32, #tpu.memory_space<vmem>>) attributes {dimension_semantics = [#tpu.dimension_semantics<parallel>], iteration_bounds = array<i64: 1>, scalar_prefetch = 0 : i64, scratch_operands = 0 : i64, tpu.core_type = #tpu.core_type<tc>, window_params = [{transform_indices = @transform_0, window_bounds = array<i64: 128, 24>}, {pipeline_mode = #tpu.pipeline_mode<synchronous>, transform_indices = @transform_1, window_bounds = array<i64: 1, 24>}, {pipeline_mode = #tpu.pipeline_mode<synchronous>, transform_indices = @transform_2, window_bounds = array<i64: 1, 24>}, {pipeline_mode = #tpu.pipeline_mode<synchronous>, transform_indices = @transform_3, window_bounds = array<i64: 24, 16>}, {pipeline_mode = #tpu.pipeline_mode<synchronous>, transform_indices = @transform_4, window_bounds = array<i64: 1, 16>}, {pipeline_mode = #tpu.pipeline_mode<synchronous>, transform_indices = @transform_5, window_bounds = array<i64: 1, 16>}, {transform_indices = @transform_6, window_bounds = array<i64: 128, 16>}]} {
    %c0 = arith.constant 0 : index
    %c0_0 = arith.constant 0 : index
    %0 = vector.load %arg1[%c0, %c0_0] : memref<128x24xf32, #tpu.memory_space<vmem>>, vector<128x24xf32>
    %c0_1 = arith.constant 0 : index
    %c0_2 = arith.constant 0 : index
    %1 = vector.load %arg2[%c0_1, %c0_2] : memref<1x24xf32, #tpu.memory_space<vmem>>, vector<1x24xf32>
    %2 = vector.broadcast %1 : vector<1x24xf32> to vector<128x24xf32>
    %3 = arith.mulf %0, %2 : vector<128x24xf32>
    %c0_3 = arith.constant 0 : index
    %c0_4 = arith.constant 0 : index
    %4 = vector.load %arg3[%c0_3, %c0_4] : memref<1x24xf32, #tpu.memory_space<vmem>>, vector<1x24xf32>
    %5 = vector.broadcast %4 : vector<1x24xf32> to vector<128x24xf32>
    %6 = arith.addf %3, %5 : vector<128x24xf32>
    %cst = arith.constant 0.000000e+00 : f32
    %7 = vector.broadcast %cst : f32 to vector<128x24xf32>
    %8 = arith.maximumf %6, %7 : vector<128x24xf32>
    %9 = arith.truncf %8 : vector<128x24xf32> to vector<128x24xbf16>
    %c0_5 = arith.constant 0 : index
    %c0_6 = arith.constant 0 : index
    %10 = vector.load %arg4[%c0_5, %c0_6] : memref<24x16xbf16, #tpu.memory_space<vmem>>, vector<24x16xbf16>
    %cst_7 = arith.constant dense<0.000000e+00> : vector<128x16xf32>
    %11 = tpu.matmul %9, %10, %cst_7 {dimension_numbers = #tpu.dot_dimension_numbers<[1], [0], [0], [1], [0, 0, 1, 1], [], []>} : vector<128x24xbf16>, vector<24x16xbf16>, vector<128x16xf32> -> vector<128x16xf32>
    %c0_8 = arith.constant 0 : index
    %c0_9 = arith.constant 0 : index
    %12 = vector.load %arg5[%c0_8, %c0_9] : memref<1x16xf32, #tpu.memory_space<vmem>>, vector<1x16xf32>
    %13 = vector.broadcast %12 : vector<1x16xf32> to vector<128x16xf32>
    %14 = arith.mulf %11, %13 : vector<128x16xf32>
    %c0_10 = arith.constant 0 : index
    %c0_11 = arith.constant 0 : index
    %15 = vector.load %arg6[%c0_10, %c0_11] : memref<1x16xf32, #tpu.memory_space<vmem>>, vector<1x16xf32>
    %16 = vector.broadcast %15 : vector<1x16xf32> to vector<128x16xf32>
    %17 = arith.addf %14, %16 : vector<128x16xf32>
    %cst_12 = arith.constant 0.000000e+00 : f32
    %18 = vector.broadcast %cst_12 : f32 to vector<128x16xf32>
    %19 = arith.maximumf %17, %18 : vector<128x16xf32>
    %c0_13 = arith.constant 0 : index
    %c0_14 = arith.constant 0 : index
    %20 = vector.load %arg7[%c0_13, %c0_14] : memref<128x16xf32, #tpu.memory_space<vmem>>, vector<128x16xf32>
    tpu.vector_store %arg7[%c0_13, %c0_14], %19 {strides = array<i32>} : memref<128x16xf32, #tpu.memory_space<vmem>>, vector<128x16xf32>,
    return
  }
  func.func @transform_0(%arg0: i32) -> (i32, i32) {
    %c0_i32 = arith.constant 0 : i32
    %c0_i32_0 = arith.constant 0 : i32
    return %arg0, %c0_i32 : i32, i32
  }
  func.func @transform_1(%arg0: i32) -> (i32, i32) {
    %c0_i32 = arith.constant 0 : i32
    %c0_i32_0 = arith.constant 0 : i32
    %c0_i32_1 = arith.constant 0 : i32
    return %c0_i32, %c0_i32_0 : i32, i32
  }
  func.func @transform_2(%arg0: i32) -> (i32, i32) {
    %c0_i32 = arith.constant 0 : i32
    %c0_i32_0 = arith.constant 0 : i32
    %c0_i32_1 = arith.constant 0 : i32
    return %c0_i32, %c0_i32_0 : i32, i32
  }
  func.func @transform_3(%arg0: i32) -> (i32, i32) {
    %c0_i32 = arith.constant 0 : i32
    %c0_i32_0 = arith.constant 0 : i32
    %c0_i32_1 = arith.constant 0 : i32
    return %c0_i32, %c0_i32_0 : i32, i32
  }
  func.func @transform_4(%arg0: i32) -> (i32, i32) {
    %c0_i32 = arith.constant 0 : i32
    %c0_i32_0 = arith.constant 0 : i32
    %c0_i32_1 = arith.constant 0 : i32
    return %c0_i32, %c0_i32_0 : i32, i32
  }
  func.func @transform_5(%arg0: i32) -> (i32, i32) {
    %c0_i32 = arith.constant 0 : i32
    %c0_i32_0 = arith.constant 0 : i32
    %c0_i32_1 = arith.constant 0 : i32
    return %c0_i32, %c0_i32_0 : i32, i32
  }
  func.func @transform_6(%arg0: i32) -> (i32, i32) {
    %c0_i32 = arith.constant 0 : i32
    %c0_i32_0 = arith.constant 0 : i32
    return %arg0, %c0_i32 : i32, i32
  }
}

module attributes {stable_mosaic.version = 11 : i64} {
  func.func @kernel(%arg0: i32, %arg1: memref<128x32xf32, #tpu.memory_space<vmem>>, %arg2: memref<1x32xf32, #tpu.memory_space<vmem>>, %arg3: memref<1x32xf32, #tpu.memory_space<vmem>>, %arg4: memref<32x16xbf16, #tpu.memory_space<vmem>>, %arg5: memref<128x16xf32, #tpu.memory_space<vmem>>) attributes {dimension_semantics = [#tpu.dimension_semantics<parallel>], iteration_bounds = array<i64: 1>, scalar_prefetch = 0 : i64, scratch_operands = 0 : i64, tpu.core_type = #tpu.core_type<tc>, window_params = [{transform_indices = @transform_0, window_bounds = array<i64: 128, 32>}, {pipeline_mode = #tpu.pipeline_mode<synchronous>, transform_indices = @transform_1, window_bounds = array<i64: 1, 32>}, {pipeline_mode = #tpu.pipeline_mode<synchronous>, transform_indices = @transform_2, window_bounds = array<i64: 1, 32>}, {pipeline_mode = #tpu.pipeline_mode<synchronous>, transform_indices = @transform_3, window_bounds = array<i64: 32, 16>}, {transform_indices = @transform_4, window_bounds = array<i64: 128, 16>}]} {
    %c0 = arith.constant 0 : index
    %c0_0 = arith.constant 0 : index
    %0 = vector.load %arg1[%c0, %c0_0] : memref<128x32xf32, #tpu.memory_space<vmem>>, vector<128x32xf32>
    %c0_1 = arith.constant 0 : index
    %c0_2 = arith.constant 0 : index
    %1 = vector.load %arg2[%c0_1, %c0_2] : memref<1x32xf32, #tpu.memory_space<vmem>>, vector<1x32xf32>
    %2 = vector.broadcast %1 : vector<1x32xf32> to vector<128x32xf32>
    %3 = arith.mulf %0, %2 : vector<128x32xf32>
    %c0_3 = arith.constant 0 : index
    %c0_4 = arith.constant 0 : index
    %4 = vector.load %arg3[%c0_3, %c0_4] : memref<1x32xf32, #tpu.memory_space<vmem>>, vector<1x32xf32>
    %5 = vector.broadcast %4 : vector<1x32xf32> to vector<128x32xf32>
    %6 = arith.addf %3, %5 : vector<128x32xf32>
    %cst = arith.constant 0.000000e+00 : f32
    %7 = vector.broadcast %cst : f32 to vector<128x32xf32>
    %8 = arith.maximumf %6, %7 : vector<128x32xf32>
    %9 = arith.truncf %8 : vector<128x32xf32> to vector<128x32xbf16>
    %c0_5 = arith.constant 0 : index
    %c0_6 = arith.constant 0 : index
    %10 = vector.load %arg4[%c0_5, %c0_6] : memref<32x16xbf16, #tpu.memory_space<vmem>>, vector<32x16xbf16>
    %cst_7 = arith.constant dense<0.000000e+00> : vector<128x16xf32>
    %11 = tpu.matmul %9, %10, %cst_7 {dimension_numbers = #tpu.dot_dimension_numbers<[1], [0], [0], [1], [0, 0, 1, 1], [], []>} : vector<128x32xbf16>, vector<32x16xbf16>, vector<128x16xf32> -> vector<128x16xf32>
    %c0_8 = arith.constant 0 : index
    %c0_9 = arith.constant 0 : index
    %12 = vector.load %arg5[%c0_8, %c0_9] : memref<128x16xf32, #tpu.memory_space<vmem>>, vector<128x16xf32>
    tpu.vector_store %arg5[%c0_8, %c0_9], %11 {strides = array<i32>} : memref<128x16xf32, #tpu.memory_space<vmem>>, vector<128x16xf32>,
    return
  }
  func.func @transform_0(%arg0: i32) -> (i32, i32) {
    %c0_i32 = arith.constant 0 : i32
    %c0_i32_0 = arith.constant 0 : i32
    return %arg0, %c0_i32 : i32, i32
  }
  func.func @transform_1(%arg0: i32) -> (i32, i32) {
    %c0_i32 = arith.constant 0 : i32
    %c0_i32_0 = arith.constant 0 : i32
    %c0_i32_1 = arith.constant 0 : i32
    return %c0_i32, %c0_i32_0 : i32, i32
  }
  func.func @transform_2(%arg0: i32) -> (i32, i32) {
    %c0_i32 = arith.constant 0 : i32
    %c0_i32_0 = arith.constant 0 : i32
    %c0_i32_1 = arith.constant 0 : i32
    return %c0_i32, %c0_i32_0 : i32, i32
  }
  func.func @transform_3(%arg0: i32) -> (i32, i32) {
    %c0_i32 = arith.constant 0 : i32
    %c0_i32_0 = arith.constant 0 : i32
    %c0_i32_1 = arith.constant 0 : i32
    return %c0_i32, %c0_i32_0 : i32, i32
  }
  func.func @transform_4(%arg0: i32) -> (i32, i32) {
    %c0_i32 = arith.constant 0 : i32
    %c0_i32_0 = arith.constant 0 : i32
    return %arg0, %c0_i32 : i32, i32
  }
}

module attributes {stable_mosaic.version = 11 : i64} {
  func.func @_window_mean_kernel(%arg0: i32, %arg1: memref<32x4x16xf32, #tpu.memory_space<vmem>>, %arg2: memref<32x16xf32, #tpu.memory_space<vmem>>) attributes {dimension_semantics = [#tpu.dimension_semantics<parallel>], iteration_bounds = array<i64: 1>, scalar_prefetch = 0 : i64, scratch_operands = 0 : i64, tpu.core_type = #tpu.core_type<tc>, window_params = [{transform_indices = @transform_0, window_bounds = array<i64: 32, 4, 16>}, {transform_indices = @transform_1, window_bounds = array<i64: 32, 16>}]} {
    %c0 = arith.constant 0 : index
    %c0_0 = arith.constant 0 : index
    %c0_1 = arith.constant 0 : index
    %0 = vector.load %arg1[%c0, %c0_0, %c0_1] : memref<32x4x16xf32, #tpu.memory_space<vmem>>, vector<32x4x16xf32>
    %cst = arith.constant dense<0.000000e+00> : vector<32x16xf32>
    %1 = vector.multi_reduction <add>, %0, %cst [1] : vector<32x4x16xf32> to vector<32x16xf32>
    %cst_2 = arith.constant 4.000000e+00 : f32
    %2 = vector.broadcast %cst_2 : f32 to vector<32x16xf32>
    %3 = arith.divf %1, %2 : vector<32x16xf32>
    %c0_3 = arith.constant 0 : index
    %c0_4 = arith.constant 0 : index
    %4 = vector.load %arg2[%c0_3, %c0_4] : memref<32x16xf32, #tpu.memory_space<vmem>>, vector<32x16xf32>
    tpu.vector_store %arg2[%c0_3, %c0_4], %3 {strides = array<i32>} : memref<32x16xf32, #tpu.memory_space<vmem>>, vector<32x16xf32>,
    return
  }
  func.func @transform_0(%arg0: i32) -> (i32, i32, i32) {
    %c0_i32 = arith.constant 0 : i32
    %c0_i32_0 = arith.constant 0 : i32
    %c0_i32_1 = arith.constant 0 : i32
    return %arg0, %c0_i32, %c0_i32_0 : i32, i32, i32
  }
  func.func @transform_1(%arg0: i32) -> (i32, i32) {
    %c0_i32 = arith.constant 0 : i32
    %c0_i32_0 = arith.constant 0 : i32
    return %arg0, %c0_i32 : i32, i32
  }
}

module attributes {stable_mosaic.version = 11 : i64} {
  func.func @kernel(%arg0: i32, %arg1: memref<32x16xf32, #tpu.memory_space<vmem>>, %arg2: memref<1x16xf32, #tpu.memory_space<vmem>>, %arg3: memref<1x16xf32, #tpu.memory_space<vmem>>, %arg4: memref<16x16xbf16, #tpu.memory_space<vmem>>, %arg5: memref<1x16xf32, #tpu.memory_space<vmem>>, %arg6: memref<1x16xf32, #tpu.memory_space<vmem>>, %arg7: memref<32x16xf32, #tpu.memory_space<vmem>>) attributes {dimension_semantics = [#tpu.dimension_semantics<parallel>], iteration_bounds = array<i64: 1>, scalar_prefetch = 0 : i64, scratch_operands = 0 : i64, tpu.core_type = #tpu.core_type<tc>, window_params = [{transform_indices = @transform_0, window_bounds = array<i64: 32, 16>}, {pipeline_mode = #tpu.pipeline_mode<synchronous>, transform_indices = @transform_1, window_bounds = array<i64: 1, 16>}, {pipeline_mode = #tpu.pipeline_mode<synchronous>, transform_indices = @transform_2, window_bounds = array<i64: 1, 16>}, {pipeline_mode = #tpu.pipeline_mode<synchronous>, transform_indices = @transform_3, window_bounds = array<i64: 16, 16>}, {pipeline_mode = #tpu.pipeline_mode<synchronous>, transform_indices = @transform_4, window_bounds = array<i64: 1, 16>}, {pipeline_mode = #tpu.pipeline_mode<synchronous>, transform_indices = @transform_5, window_bounds = array<i64: 1, 16>}, {transform_indices = @transform_6, window_bounds = array<i64: 32, 16>}]} {
    %c0 = arith.constant 0 : index
    %c0_0 = arith.constant 0 : index
    %0 = vector.load %arg1[%c0, %c0_0] : memref<32x16xf32, #tpu.memory_space<vmem>>, vector<32x16xf32>
    %c0_1 = arith.constant 0 : index
    %c0_2 = arith.constant 0 : index
    %1 = vector.load %arg2[%c0_1, %c0_2] : memref<1x16xf32, #tpu.memory_space<vmem>>, vector<1x16xf32>
    %2 = vector.broadcast %1 : vector<1x16xf32> to vector<32x16xf32>
    %3 = arith.mulf %0, %2 : vector<32x16xf32>
    %c0_3 = arith.constant 0 : index
    %c0_4 = arith.constant 0 : index
    %4 = vector.load %arg3[%c0_3, %c0_4] : memref<1x16xf32, #tpu.memory_space<vmem>>, vector<1x16xf32>
    %5 = vector.broadcast %4 : vector<1x16xf32> to vector<32x16xf32>
    %6 = arith.addf %3, %5 : vector<32x16xf32>
    %cst = arith.constant 0.000000e+00 : f32
    %7 = vector.broadcast %cst : f32 to vector<32x16xf32>
    %8 = arith.maximumf %6, %7 : vector<32x16xf32>
    %9 = arith.truncf %8 : vector<32x16xf32> to vector<32x16xbf16>
    %c0_5 = arith.constant 0 : index
    %c0_6 = arith.constant 0 : index
    %10 = vector.load %arg4[%c0_5, %c0_6] : memref<16x16xbf16, #tpu.memory_space<vmem>>, vector<16x16xbf16>
    %cst_7 = arith.constant dense<0.000000e+00> : vector<32x16xf32>
    %11 = tpu.matmul %9, %10, %cst_7 {dimension_numbers = #tpu.dot_dimension_numbers<[1], [0], [0], [1], [0, 0, 1, 1], [], []>} : vector<32x16xbf16>, vector<16x16xbf16>, vector<32x16xf32> -> vector<32x16xf32>
    %c0_8 = arith.constant 0 : index
    %c0_9 = arith.constant 0 : index
    %12 = vector.load %arg5[%c0_8, %c0_9] : memref<1x16xf32, #tpu.memory_space<vmem>>, vector<1x16xf32>
    %13 = vector.broadcast %12 : vector<1x16xf32> to vector<32x16xf32>
    %14 = arith.mulf %11, %13 : vector<32x16xf32>
    %c0_10 = arith.constant 0 : index
    %c0_11 = arith.constant 0 : index
    %15 = vector.load %arg6[%c0_10, %c0_11] : memref<1x16xf32, #tpu.memory_space<vmem>>, vector<1x16xf32>
    %16 = vector.broadcast %15 : vector<1x16xf32> to vector<32x16xf32>
    %17 = arith.addf %14, %16 : vector<32x16xf32>
    %cst_12 = arith.constant 0.000000e+00 : f32
    %18 = vector.broadcast %cst_12 : f32 to vector<32x16xf32>
    %19 = arith.maximumf %17, %18 : vector<32x16xf32>
    %c0_13 = arith.constant 0 : index
    %c0_14 = arith.constant 0 : index
    %20 = vector.load %arg7[%c0_13, %c0_14] : memref<32x16xf32, #tpu.memory_space<vmem>>, vector<32x16xf32>
    tpu.vector_store %arg7[%c0_13, %c0_14], %19 {strides = array<i32>} : memref<32x16xf32, #tpu.memory_space<vmem>>, vector<32x16xf32>,
    return
  }
  func.func @transform_0(%arg0: i32) -> (i32, i32) {
    %c0_i32 = arith.constant 0 : i32
    %c0_i32_0 = arith.constant 0 : i32
    return %arg0, %c0_i32 : i32, i32
  }
  func.func @transform_1(%arg0: i32) -> (i32, i32) {
    %c0_i32 = arith.constant 0 : i32
    %c0_i32_0 = arith.constant 0 : i32
    %c0_i32_1 = arith.constant 0 : i32
    return %c0_i32, %c0_i32_0 : i32, i32
  }
  func.func @transform_2(%arg0: i32) -> (i32, i32) {
    %c0_i32 = arith.constant 0 : i32
    %c0_i32_0 = arith.constant 0 : i32
    %c0_i32_1 = arith.constant 0 : i32
    return %c0_i32, %c0_i32_0 : i32, i32
  }
  func.func @transform_3(%arg0: i32) -> (i32, i32) {
    %c0_i32 = arith.constant 0 : i32
    %c0_i32_0 = arith.constant 0 : i32
    %c0_i32_1 = arith.constant 0 : i32
    return %c0_i32, %c0_i32_0 : i32, i32
  }
  func.func @transform_4(%arg0: i32) -> (i32, i32) {
    %c0_i32 = arith.constant 0 : i32
    %c0_i32_0 = arith.constant 0 : i32
    %c0_i32_1 = arith.constant 0 : i32
    return %c0_i32, %c0_i32_0 : i32, i32
  }
  func.func @transform_5(%arg0: i32) -> (i32, i32) {
    %c0_i32 = arith.constant 0 : i32
    %c0_i32_0 = arith.constant 0 : i32
    %c0_i32_1 = arith.constant 0 : i32
    return %c0_i32, %c0_i32_0 : i32, i32
  }
  func.func @transform_6(%arg0: i32) -> (i32, i32) {
    %c0_i32 = arith.constant 0 : i32
    %c0_i32_0 = arith.constant 0 : i32
    return %arg0, %c0_i32 : i32, i32
  }
}

module attributes {stable_mosaic.version = 11 : i64} {
  func.func @_conv3x3_kernel(%arg0: i32, %arg1: memref<1x56x16xf32, #tpu.memory_space<vmem>>, %arg2: memref<9x16x8xbf16, #tpu.memory_space<vmem>>, %arg3: memref<1x4x4x8xf32, #tpu.memory_space<vmem>>) attributes {dimension_semantics = [#tpu.dimension_semantics<parallel>], iteration_bounds = array<i64: 2>, scalar_prefetch = 0 : i64, scratch_operands = 0 : i64, tpu.core_type = #tpu.core_type<tc>, window_params = [{transform_indices = @transform_0, window_bounds = array<i64: 1, 56, 16>}, {pipeline_mode = #tpu.pipeline_mode<synchronous>, transform_indices = @transform_1, window_bounds = array<i64: 9, 16, 8>}, {transform_indices = @transform_2, window_bounds = array<i64: 1, 4, 4, 8>}]} {
    %cst = arith.constant 0.000000e+00 : f32
    %0 = vector.broadcast %cst : f32 to vector<32x8xf32>
    %c0 = arith.constant 0 : index
    %c0_0 = arith.constant 0 : index
    %c0_1 = arith.constant 0 : index
    %1 = vector.load %arg1[%c0, %c0_0, %c0_1] : memref<1x56x16xf32, #tpu.memory_space<vmem>>, vector<1x32x16xf32>
    %2 = vector.shape_cast %1 : vector<1x32x16xf32> to vector<32x16xf32>
    %3 = arith.truncf %2 : vector<32x16xf32> to vector<32x16xbf16>
    %c0_2 = arith.constant 0 : index
    %c0_3 = arith.constant 0 : index
    %c0_4 = arith.constant 0 : index
    %4 = vector.load %arg2[%c0_2, %c0_3, %c0_4] : memref<9x16x8xbf16, #tpu.memory_space<vmem>>, vector<1x16x8xbf16>
    %5 = vector.shape_cast %4 : vector<1x16x8xbf16> to vector<16x8xbf16>
    %cst_5 = arith.constant dense<0.000000e+00> : vector<32x8xf32>
    %6 = tpu.matmul %3, %5, %cst_5 {dimension_numbers = #tpu.dot_dimension_numbers<[1], [0], [0], [1], [0, 0, 1, 1], [], []>} : vector<32x16xbf16>, vector<16x8xbf16>, vector<32x8xf32> -> vector<32x8xf32>
    %7 = arith.addf %0, %6 : vector<32x8xf32>
    %c0_6 = arith.constant 0 : index
    %c1 = arith.constant 1 : index
    %c0_7 = arith.constant 0 : index
    %8 = vector.load %arg1[%c0_6, %c1, %c0_7] : memref<1x56x16xf32, #tpu.memory_space<vmem>>, vector<1x32x16xf32>
    %9 = vector.shape_cast %8 : vector<1x32x16xf32> to vector<32x16xf32>
    %10 = arith.truncf %9 : vector<32x16xf32> to vector<32x16xbf16>
    %c1_8 = arith.constant 1 : index
    %c0_9 = arith.constant 0 : index
    %c0_10 = arith.constant 0 : index
    %11 = vector.load %arg2[%c1_8, %c0_9, %c0_10] : memref<9x16x8xbf16, #tpu.memory_space<vmem>>, vector<1x16x8xbf16>
    %12 = vector.shape_cast %11 : vector<1x16x8xbf16> to vector<16x8xbf16>
    %cst_11 = arith.constant dense<0.000000e+00> : vector<32x8xf32>
    %13 = tpu.matmul %10, %12, %cst_11 {dimension_numbers = #tpu.dot_dimension_numbers<[1], [0], [0], [1], [0, 0, 1, 1], [], []>} : vector<32x16xbf16>, vector<16x8xbf16>, vector<32x8xf32> -> vector<32x8xf32>
    %14 = arith.addf %7, %13 : vector<32x8xf32>
    %c0_12 = arith.constant 0 : index
    %c2 = arith.constant 2 : index
    %c0_13 = arith.constant 0 : index
    %15 = vector.load %arg1[%c0_12, %c2, %c0_13] : memref<1x56x16xf32, #tpu.memory_space<vmem>>, vector<1x32x16xf32>
    %16 = vector.shape_cast %15 : vector<1x32x16xf32> to vector<32x16xf32>
    %17 = arith.truncf %16 : vector<32x16xf32> to vector<32x16xbf16>
    %c2_14 = arith.constant 2 : index
    %c0_15 = arith.constant 0 : index
    %c0_16 = arith.constant 0 : index
    %18 = vector.load %arg2[%c2_14, %c0_15, %c0_16] : memref<9x16x8xbf16, #tpu.memory_space<vmem>>, vector<1x16x8xbf16>
    %19 = vector.shape_cast %18 : vector<1x16x8xbf16> to vector<16x8xbf16>
    %cst_17 = arith.constant dense<0.000000e+00> : vector<32x8xf32>
    %20 = tpu.matmul %17, %19, %cst_17 {dimension_numbers = #tpu.dot_dimension_numbers<[1], [0], [0], [1], [0, 0, 1, 1], [], []>} : vector<32x16xbf16>, vector<16x8xbf16>, vector<32x8xf32> -> vector<32x8xf32>
    %21 = arith.addf %14, %20 : vector<32x8xf32>
    %c0_18 = arith.constant 0 : index
    %c8 = arith.constant 8 : index
    %c0_19 = arith.constant 0 : index
    %22 = vector.load %arg1[%c0_18, %c8, %c0_19] : memref<1x56x16xf32, #tpu.memory_space<vmem>>, vector<1x32x16xf32>
    %23 = vector.shape_cast %22 : vector<1x32x16xf32> to vector<32x16xf32>
    %24 = arith.truncf %23 : vector<32x16xf32> to vector<32x16xbf16>
    %c3 = arith.constant 3 : index
    %c0_20 = arith.constant 0 : index
    %c0_21 = arith.constant 0 : index
    %25 = vector.load %arg2[%c3, %c0_20, %c0_21] : memref<9x16x8xbf16, #tpu.memory_space<vmem>>, vector<1x16x8xbf16>
    %26 = vector.shape_cast %25 : vector<1x16x8xbf16> to vector<16x8xbf16>
    %cst_22 = arith.constant dense<0.000000e+00> : vector<32x8xf32>
    %27 = tpu.matmul %24, %26, %cst_22 {dimension_numbers = #tpu.dot_dimension_numbers<[1], [0], [0], [1], [0, 0, 1, 1], [], []>} : vector<32x16xbf16>, vector<16x8xbf16>, vector<32x8xf32> -> vector<32x8xf32>
    %28 = arith.addf %21, %27 : vector<32x8xf32>
    %c0_23 = arith.constant 0 : index
    %c9 = arith.constant 9 : index
    %c0_24 = arith.constant 0 : index
    %29 = vector.load %arg1[%c0_23, %c9, %c0_24] : memref<1x56x16xf32, #tpu.memory_space<vmem>>, vector<1x32x16xf32>
    %30 = vector.shape_cast %29 : vector<1x32x16xf32> to vector<32x16xf32>
    %31 = arith.truncf %30 : vector<32x16xf32> to vector<32x16xbf16>
    %c4 = arith.constant 4 : index
    %c0_25 = arith.constant 0 : index
    %c0_26 = arith.constant 0 : index
    %32 = vector.load %arg2[%c4, %c0_25, %c0_26] : memref<9x16x8xbf16, #tpu.memory_space<vmem>>, vector<1x16x8xbf16>
    %33 = vector.shape_cast %32 : vector<1x16x8xbf16> to vector<16x8xbf16>
    %cst_27 = arith.constant dense<0.000000e+00> : vector<32x8xf32>
    %34 = tpu.matmul %31, %33, %cst_27 {dimension_numbers = #tpu.dot_dimension_numbers<[1], [0], [0], [1], [0, 0, 1, 1], [], []>} : vector<32x16xbf16>, vector<16x8xbf16>, vector<32x8xf32> -> vector<32x8xf32>
    %35 = arith.addf %28, %34 : vector<32x8xf32>
    %c0_28 = arith.constant 0 : index
    %c10 = arith.constant 10 : index
    %c0_29 = arith.constant 0 : index
    %36 = vector.load %arg1[%c0_28, %c10, %c0_29] : memref<1x56x16xf32, #tpu.memory_space<vmem>>, vector<1x32x16xf32>
    %37 = vector.shape_cast %36 : vector<1x32x16xf32> to vector<32x16xf32>
    %38 = arith.truncf %37 : vector<32x16xf32> to vector<32x16xbf16>
    %c5 = arith.constant 5 : index
    %c0_30 = arith.constant 0 : index
    %c0_31 = arith.constant 0 : index
    %39 = vector.load %arg2[%c5, %c0_30, %c0_31] : memref<9x16x8xbf16, #tpu.memory_space<vmem>>, vector<1x16x8xbf16>
    %40 = vector.shape_cast %39 : vector<1x16x8xbf16> to vector<16x8xbf16>
    %cst_32 = arith.constant dense<0.000000e+00> : vector<32x8xf32>
    %41 = tpu.matmul %38, %40, %cst_32 {dimension_numbers = #tpu.dot_dimension_numbers<[1], [0], [0], [1], [0, 0, 1, 1], [], []>} : vector<32x16xbf16>, vector<16x8xbf16>, vector<32x8xf32> -> vector<32x8xf32>
    %42 = arith.addf %35, %41 : vector<32x8xf32>
    %c0_33 = arith.constant 0 : index
    %c16 = arith.constant 16 : index
    %c0_34 = arith.constant 0 : index
    %43 = vector.load %arg1[%c0_33, %c16, %c0_34] : memref<1x56x16xf32, #tpu.memory_space<vmem>>, vector<1x32x16xf32>
    %44 = vector.shape_cast %43 : vector<1x32x16xf32> to vector<32x16xf32>
    %45 = arith.truncf %44 : vector<32x16xf32> to vector<32x16xbf16>
    %c6 = arith.constant 6 : index
    %c0_35 = arith.constant 0 : index
    %c0_36 = arith.constant 0 : index
    %46 = vector.load %arg2[%c6, %c0_35, %c0_36] : memref<9x16x8xbf16, #tpu.memory_space<vmem>>, vector<1x16x8xbf16>
    %47 = vector.shape_cast %46 : vector<1x16x8xbf16> to vector<16x8xbf16>
    %cst_37 = arith.constant dense<0.000000e+00> : vector<32x8xf32>
    %48 = tpu.matmul %45, %47, %cst_37 {dimension_numbers = #tpu.dot_dimension_numbers<[1], [0], [0], [1], [0, 0, 1, 1], [], []>} : vector<32x16xbf16>, vector<16x8xbf16>, vector<32x8xf32> -> vector<32x8xf32>
    %49 = arith.addf %42, %48 : vector<32x8xf32>
    %c0_38 = arith.constant 0 : index
    %c17 = arith.constant 17 : index
    %c0_39 = arith.constant 0 : index
    %50 = vector.load %arg1[%c0_38, %c17, %c0_39] : memref<1x56x16xf32, #tpu.memory_space<vmem>>, vector<1x32x16xf32>
    %51 = vector.shape_cast %50 : vector<1x32x16xf32> to vector<32x16xf32>
    %52 = arith.truncf %51 : vector<32x16xf32> to vector<32x16xbf16>
    %c7 = arith.constant 7 : index
    %c0_40 = arith.constant 0 : index
    %c0_41 = arith.constant 0 : index
    %53 = vector.load %arg2[%c7, %c0_40, %c0_41] : memref<9x16x8xbf16, #tpu.memory_space<vmem>>, vector<1x16x8xbf16>
    %54 = vector.shape_cast %53 : vector<1x16x8xbf16> to vector<16x8xbf16>
    %cst_42 = arith.constant dense<0.000000e+00> : vector<32x8xf32>
    %55 = tpu.matmul %52, %54, %cst_42 {dimension_numbers = #tpu.dot_dimension_numbers<[1], [0], [0], [1], [0, 0, 1, 1], [], []>} : vector<32x16xbf16>, vector<16x8xbf16>, vector<32x8xf32> -> vector<32x8xf32>
    %56 = arith.addf %49, %55 : vector<32x8xf32>
    %c0_43 = arith.constant 0 : index
    %c18 = arith.constant 18 : index
    %c0_44 = arith.constant 0 : index
    %57 = vector.load %arg1[%c0_43, %c18, %c0_44] : memref<1x56x16xf32, #tpu.memory_space<vmem>>, vector<1x32x16xf32>
    %58 = vector.shape_cast %57 : vector<1x32x16xf32> to vector<32x16xf32>
    %59 = arith.truncf %58 : vector<32x16xf32> to vector<32x16xbf16>
    %c8_45 = arith.constant 8 : index
    %c0_46 = arith.constant 0 : index
    %c0_47 = arith.constant 0 : index
    %60 = vector.load %arg2[%c8_45, %c0_46, %c0_47] : memref<9x16x8xbf16, #tpu.memory_space<vmem>>, vector<1x16x8xbf16>
    %61 = vector.shape_cast %60 : vector<1x16x8xbf16> to vector<16x8xbf16>
    %cst_48 = arith.constant dense<0.000000e+00> : vector<32x8xf32>
    %62 = tpu.matmul %59, %61, %cst_48 {dimension_numbers = #tpu.dot_dimension_numbers<[1], [0], [0], [1], [0, 0, 1, 1], [], []>} : vector<32x16xbf16>, vector<16x8xbf16>, vector<32x8xf32> -> vector<32x8xf32>
    %63 = arith.addf %56, %62 : vector<32x8xf32>
    %64 = vector.shape_cast %63 : vector<32x8xf32> to vector<4x8x8xf32>
    %65 = vector.extract_strided_slice %64 {offsets = [0, 0, 0], sizes = [4, 4, 8], strides = [1, 1, 1]} : vector<4x8x8xf32> to vector<4x4x8xf32>
    %c0_49 = arith.constant 0 : index
    %c0_50 = arith.constant 0 : index
    %c0_51 = arith.constant 0 : index
    %c0_52 = arith.constant 0 : index
    %66 = vector.load %arg3[%c0_49, %c0_50, %c0_51, %c0_52] : memref<1x4x4x8xf32, #tpu.memory_space<vmem>>, vector<1x4x4x8xf32>
    %67 = vector.shape_cast %66 : vector<1x4x4x8xf32> to vector<4x4x8xf32>
    %68 = vector.shape_cast %65 : vector<4x4x8xf32> to vector<1x4x4x8xf32>
    tpu.vector_store %arg3[%c0_49, %c0_50, %c0_51, %c0_52], %68 {strides = array<i32>} : memref<1x4x4x8xf32, #tpu.memory_space<vmem>>, vector<1x4x4x8xf32>,
    return
  }
  func.func @transform_0(%arg0: i32) -> (i32, i32, i32) {
    %c0_i32 = arith.constant 0 : i32
    %c0_i32_0 = arith.constant 0 : i32
    %c0_i32_1 = arith.constant 0 : i32
    return %arg0, %c0_i32, %c0_i32_0 : i32, i32, i32
  }
  func.func @transform_1(%arg0: i32) -> (i32, i32, i32) {
    %c0_i32 = arith.constant 0 : i32
    %c0_i32_0 = arith.constant 0 : i32
    %c0_i32_1 = arith.constant 0 : i32
    %c0_i32_2 = arith.constant 0 : i32
    return %c0_i32, %c0_i32_0, %c0_i32_1 : i32, i32, i32
  }
  func.func @transform_2(%arg0: i32) -> (i32, i32, i32, i32) {
    %c0_i32 = arith.constant 0 : i32
    %c0_i32_0 = arith.constant 0 : i32
    %c0_i32_1 = arith.constant 0 : i32
    %c0_i32_2 = arith.constant 0 : i32
    return %arg0, %c0_i32, %c0_i32_0, %c0_i32_1 : i32, i32, i32, i32
  }
}

module attributes {stable_mosaic.version = 11 : i64} {
  func.func @kernel(%arg0: i32, %arg1: memref<32x24xf32, #tpu.memory_space<vmem>>, %arg2: memref<1x24xf32, #tpu.memory_space<vmem>>, %arg3: memref<1x24xf32, #tpu.memory_space<vmem>>, %arg4: memref<24x16xbf16, #tpu.memory_space<vmem>>, %arg5: memref<1x16xf32, #tpu.memory_space<vmem>>, %arg6: memref<1x16xf32, #tpu.memory_space<vmem>>, %arg7: memref<32x16xf32, #tpu.memory_space<vmem>>) attributes {dimension_semantics = [#tpu.dimension_semantics<parallel>], iteration_bounds = array<i64: 1>, scalar_prefetch = 0 : i64, scratch_operands = 0 : i64, tpu.core_type = #tpu.core_type<tc>, window_params = [{transform_indices = @transform_0, window_bounds = array<i64: 32, 24>}, {pipeline_mode = #tpu.pipeline_mode<synchronous>, transform_indices = @transform_1, window_bounds = array<i64: 1, 24>}, {pipeline_mode = #tpu.pipeline_mode<synchronous>, transform_indices = @transform_2, window_bounds = array<i64: 1, 24>}, {pipeline_mode = #tpu.pipeline_mode<synchronous>, transform_indices = @transform_3, window_bounds = array<i64: 24, 16>}, {pipeline_mode = #tpu.pipeline_mode<synchronous>, transform_indices = @transform_4, window_bounds = array<i64: 1, 16>}, {pipeline_mode = #tpu.pipeline_mode<synchronous>, transform_indices = @transform_5, window_bounds = array<i64: 1, 16>}, {transform_indices = @transform_6, window_bounds = array<i64: 32, 16>}]} {
    %c0 = arith.constant 0 : index
    %c0_0 = arith.constant 0 : index
    %0 = vector.load %arg1[%c0, %c0_0] : memref<32x24xf32, #tpu.memory_space<vmem>>, vector<32x24xf32>
    %c0_1 = arith.constant 0 : index
    %c0_2 = arith.constant 0 : index
    %1 = vector.load %arg2[%c0_1, %c0_2] : memref<1x24xf32, #tpu.memory_space<vmem>>, vector<1x24xf32>
    %2 = vector.broadcast %1 : vector<1x24xf32> to vector<32x24xf32>
    %3 = arith.mulf %0, %2 : vector<32x24xf32>
    %c0_3 = arith.constant 0 : index
    %c0_4 = arith.constant 0 : index
    %4 = vector.load %arg3[%c0_3, %c0_4] : memref<1x24xf32, #tpu.memory_space<vmem>>, vector<1x24xf32>
    %5 = vector.broadcast %4 : vector<1x24xf32> to vector<32x24xf32>
    %6 = arith.addf %3, %5 : vector<32x24xf32>
    %cst = arith.constant 0.000000e+00 : f32
    %7 = vector.broadcast %cst : f32 to vector<32x24xf32>
    %8 = arith.maximumf %6, %7 : vector<32x24xf32>
    %9 = arith.truncf %8 : vector<32x24xf32> to vector<32x24xbf16>
    %c0_5 = arith.constant 0 : index
    %c0_6 = arith.constant 0 : index
    %10 = vector.load %arg4[%c0_5, %c0_6] : memref<24x16xbf16, #tpu.memory_space<vmem>>, vector<24x16xbf16>
    %cst_7 = arith.constant dense<0.000000e+00> : vector<32x16xf32>
    %11 = tpu.matmul %9, %10, %cst_7 {dimension_numbers = #tpu.dot_dimension_numbers<[1], [0], [0], [1], [0, 0, 1, 1], [], []>} : vector<32x24xbf16>, vector<24x16xbf16>, vector<32x16xf32> -> vector<32x16xf32>
    %c0_8 = arith.constant 0 : index
    %c0_9 = arith.constant 0 : index
    %12 = vector.load %arg5[%c0_8, %c0_9] : memref<1x16xf32, #tpu.memory_space<vmem>>, vector<1x16xf32>
    %13 = vector.broadcast %12 : vector<1x16xf32> to vector<32x16xf32>
    %14 = arith.mulf %11, %13 : vector<32x16xf32>
    %c0_10 = arith.constant 0 : index
    %c0_11 = arith.constant 0 : index
    %15 = vector.load %arg6[%c0_10, %c0_11] : memref<1x16xf32, #tpu.memory_space<vmem>>, vector<1x16xf32>
    %16 = vector.broadcast %15 : vector<1x16xf32> to vector<32x16xf32>
    %17 = arith.addf %14, %16 : vector<32x16xf32>
    %cst_12 = arith.constant 0.000000e+00 : f32
    %18 = vector.broadcast %cst_12 : f32 to vector<32x16xf32>
    %19 = arith.maximumf %17, %18 : vector<32x16xf32>
    %c0_13 = arith.constant 0 : index
    %c0_14 = arith.constant 0 : index
    %20 = vector.load %arg7[%c0_13, %c0_14] : memref<32x16xf32, #tpu.memory_space<vmem>>, vector<32x16xf32>
    tpu.vector_store %arg7[%c0_13, %c0_14], %19 {strides = array<i32>} : memref<32x16xf32, #tpu.memory_space<vmem>>, vector<32x16xf32>,
    return
  }
  func.func @transform_0(%arg0: i32) -> (i32, i32) {
    %c0_i32 = arith.constant 0 : i32
    %c0_i32_0 = arith.constant 0 : i32
    return %arg0, %c0_i32 : i32, i32
  }
  func.func @transform_1(%arg0: i32) -> (i32, i32) {
    %c0_i32 = arith.constant 0 : i32
    %c0_i32_0 = arith.constant 0 : i32
    %c0_i32_1 = arith.constant 0 : i32
    return %c0_i32, %c0_i32_0 : i32, i32
  }
  func.func @transform_2(%arg0: i32) -> (i32, i32) {
    %c0_i32 = arith.constant 0 : i32
    %c0_i32_0 = arith.constant 0 : i32
    %c0_i32_1 = arith.constant 0 : i32
    return %c0_i32, %c0_i32_0 : i32, i32
  }
  func.func @transform_3(%arg0: i32) -> (i32, i32) {
    %c0_i32 = arith.constant 0 : i32
    %c0_i32_0 = arith.constant 0 : i32
    %c0_i32_1 = arith.constant 0 : i32
    return %c0_i32, %c0_i32_0 : i32, i32
  }
  func.func @transform_4(%arg0: i32) -> (i32, i32) {
    %c0_i32 = arith.constant 0 : i32
    %c0_i32_0 = arith.constant 0 : i32
    %c0_i32_1 = arith.constant 0 : i32
    return %c0_i32, %c0_i32_0 : i32, i32
  }
  func.func @transform_5(%arg0: i32) -> (i32, i32) {
    %c0_i32 = arith.constant 0 : i32
    %c0_i32_0 = arith.constant 0 : i32
    %c0_i32_1 = arith.constant 0 : i32
    return %c0_i32, %c0_i32_0 : i32, i32
  }
  func.func @transform_6(%arg0: i32) -> (i32, i32) {
    %c0_i32 = arith.constant 0 : i32
    %c0_i32_0 = arith.constant 0 : i32
    return %arg0, %c0_i32 : i32, i32
  }
}

module attributes {stable_mosaic.version = 11 : i64} {
  func.func @_gap_bnrelu_kernel(%arg0: i32, %arg1: memref<2x16x32xf32, #tpu.memory_space<vmem>>, %arg2: memref<1x32xf32, #tpu.memory_space<vmem>>, %arg3: memref<1x32xf32, #tpu.memory_space<vmem>>, %arg4: memref<2x32xf32, #tpu.memory_space<vmem>>) attributes {dimension_semantics = [#tpu.dimension_semantics<parallel>], iteration_bounds = array<i64: 1>, scalar_prefetch = 0 : i64, scratch_operands = 0 : i64, tpu.core_type = #tpu.core_type<tc>, window_params = [{transform_indices = @transform_0, window_bounds = array<i64: 2, 16, 32>}, {pipeline_mode = #tpu.pipeline_mode<synchronous>, transform_indices = @transform_1, window_bounds = array<i64: 1, 32>}, {pipeline_mode = #tpu.pipeline_mode<synchronous>, transform_indices = @transform_2, window_bounds = array<i64: 1, 32>}, {transform_indices = @transform_3, window_bounds = array<i64: 2, 32>}]} {
    %c0 = arith.constant 0 : index
    %c0_0 = arith.constant 0 : index
    %c0_1 = arith.constant 0 : index
    %0 = vector.load %arg1[%c0, %c0_0, %c0_1] : memref<2x16x32xf32, #tpu.memory_space<vmem>>, vector<2x16x32xf32>
    %c0_2 = arith.constant 0 : index
    %c0_3 = arith.constant 0 : index
    %1 = vector.load %arg2[%c0_2, %c0_3] : memref<1x32xf32, #tpu.memory_space<vmem>>, vector<1x32xf32>
    %2 = vector.shape_cast %1 : vector<1x32xf32> to vector<1x1x32xf32>
    %3 = vector.broadcast %2 : vector<1x1x32xf32> to vector<2x16x32xf32>
    %4 = arith.mulf %0, %3 : vector<2x16x32xf32>
    %c0_4 = arith.constant 0 : index
    %c0_5 = arith.constant 0 : index
    %5 = vector.load %arg3[%c0_4, %c0_5] : memref<1x32xf32, #tpu.memory_space<vmem>>, vector<1x32xf32>
    %6 = vector.shape_cast %5 : vector<1x32xf32> to vector<1x1x32xf32>
    %7 = vector.broadcast %6 : vector<1x1x32xf32> to vector<2x16x32xf32>
    %8 = arith.addf %4, %7 : vector<2x16x32xf32>
    %cst = arith.constant 0.000000e+00 : f32
    %9 = vector.broadcast %cst : f32 to vector<2x16x32xf32>
    %10 = arith.maximumf %8, %9 : vector<2x16x32xf32>
    %cst_6 = arith.constant dense<0.000000e+00> : vector<2x32xf32>
    %11 = vector.multi_reduction <add>, %10, %cst_6 [1] : vector<2x16x32xf32> to vector<2x32xf32>
    %cst_7 = arith.constant 1.600000e+01 : f32
    %12 = vector.broadcast %cst_7 : f32 to vector<2x32xf32>
    %13 = arith.divf %11, %12 : vector<2x32xf32>
    %c0_8 = arith.constant 0 : index
    %c0_9 = arith.constant 0 : index
    %14 = vector.load %arg4[%c0_8, %c0_9] : memref<2x32xf32, #tpu.memory_space<vmem>>, vector<2x32xf32>
    tpu.vector_store %arg4[%c0_8, %c0_9], %13 {strides = array<i32>} : memref<2x32xf32, #tpu.memory_space<vmem>>, vector<2x32xf32>,
    return
  }
  func.func @transform_0(%arg0: i32) -> (i32, i32, i32) {
    %c0_i32 = arith.constant 0 : i32
    %c0_i32_0 = arith.constant 0 : i32
    %c0_i32_1 = arith.constant 0 : i32
    return %arg0, %c0_i32, %c0_i32_0 : i32, i32, i32
  }
  func.func @transform_1(%arg0: i32) -> (i32, i32) {
    %c0_i32 = arith.constant 0 : i32
    %c0_i32_0 = arith.constant 0 : i32
    %c0_i32_1 = arith.constant 0 : i32
    return %c0_i32, %c0_i32_0 : i32, i32
  }
  func.func @transform_2(%arg0: i32) -> (i32, i32) {
    %c0_i32 = arith.constant 0 : i32
    %c0_i32_0 = arith.constant 0 : i32
    %c0_i32_1 = arith.constant 0 : i32
    return %c0_i32, %c0_i32_0 : i32, i32
  }
  func.func @transform_3(%arg0: i32) -> (i32, i32) {
    %c0_i32 = arith.constant 0 : i32
    %c0_i32_0 = arith.constant 0 : i32
    return %arg0, %c0_i32 : i32, i32
  }
}

module attributes {stable_mosaic.version = 11 : i64} {
  func.func @kernel(%arg0: i32, %arg1: memref<2x32xf32, #tpu.memory_space<vmem>>, %arg2: memref<32x10xbf16, #tpu.memory_space<vmem>>, %arg3: memref<1x10xf32, #tpu.memory_space<vmem>>, %arg4: memref<2x10xf32, #tpu.memory_space<vmem>>) attributes {dimension_semantics = [#tpu.dimension_semantics<parallel>], iteration_bounds = array<i64: 1>, scalar_prefetch = 0 : i64, scratch_operands = 0 : i64, tpu.core_type = #tpu.core_type<tc>, window_params = [{transform_indices = @transform_0, window_bounds = array<i64: 2, 32>}, {pipeline_mode = #tpu.pipeline_mode<synchronous>, transform_indices = @transform_1, window_bounds = array<i64: 32, 10>}, {pipeline_mode = #tpu.pipeline_mode<synchronous>, transform_indices = @transform_2, window_bounds = array<i64: 1, 10>}, {transform_indices = @transform_3, window_bounds = array<i64: 2, 10>}]} {
    %c0 = arith.constant 0 : index
    %c0_0 = arith.constant 0 : index
    %0 = vector.load %arg1[%c0, %c0_0] : memref<2x32xf32, #tpu.memory_space<vmem>>, vector<2x32xf32>
    %1 = arith.truncf %0 : vector<2x32xf32> to vector<2x32xbf16>
    %c0_1 = arith.constant 0 : index
    %c0_2 = arith.constant 0 : index
    %2 = vector.load %arg2[%c0_1, %c0_2] : memref<32x10xbf16, #tpu.memory_space<vmem>>, vector<32x10xbf16>
    %cst = arith.constant dense<0.000000e+00> : vector<2x10xf32>
    %3 = tpu.matmul %1, %2, %cst {dimension_numbers = #tpu.dot_dimension_numbers<[1], [0], [0], [1], [0, 0, 1, 1], [], []>} : vector<2x32xbf16>, vector<32x10xbf16>, vector<2x10xf32> -> vector<2x10xf32>
    %c0_3 = arith.constant 0 : index
    %c0_4 = arith.constant 0 : index
    %4 = vector.load %arg3[%c0_3, %c0_4] : memref<1x10xf32, #tpu.memory_space<vmem>>, vector<1x10xf32>
    %5 = vector.broadcast %4 : vector<1x10xf32> to vector<2x10xf32>
    %6 = arith.addf %3, %5 : vector<2x10xf32>
    %c0_5 = arith.constant 0 : index
    %c0_6 = arith.constant 0 : index
    %7 = vector.load %arg4[%c0_5, %c0_6] : memref<2x10xf32, #tpu.memory_space<vmem>>, vector<2x10xf32>
    tpu.vector_store %arg4[%c0_5, %c0_6], %6 {strides = array<i32>} : memref<2x10xf32, #tpu.memory_space<vmem>>, vector<2x10xf32>,
    return
  }
  func.func @transform_0(%arg0: i32) -> (i32, i32) {
    %c0_i32 = arith.constant 0 : i32
    %c0_i32_0 = arith.constant 0 : i32
    return %arg0, %c0_i32 : i32, i32
  }
  func.func @transform_1(%arg0: i32) -> (i32, i32) {
    %c0_i32 = arith.constant 0 : i32
    %c0_i32_0 = arith.constant 0 : i32
    %c0_i32_1 = arith.constant 0 : i32
    return %c0_i32, %c0_i32_0 : i32, i32
  }
  func.func @transform_2(%arg0: i32) -> (i32, i32) {
    %c0_i32 = arith.constant 0 : i32
    %c0_i32_0 = arith.constant 0 : i32
    %c0_i32_1 = arith.constant 0 : i32
    return %c0_i32, %c0_i32_0 : i32, i32
  }
  func.func @transform_3(%arg0: i32) -> (i32, i32) {
    %c0_i32 = arith.constant 0 : i32
    %c0_i32_0 = arith.constant 0 : i32
    return %arg0, %c0_i32 : i32, i32
  }
}

</mosaic_0001>

<llo_original>
// kernel: densenet_forward.14
$region0: #{densenet_forward.14}
  #allocation0 [shape = 'u32[]', space=smem, size = 0x4, offset = 0x4, fixed_abs, tag = 'smem constant byte address 0x4 - core index']
  #allocation1 [shape = 'u32[144,128]{1,0:T(1,128)}', space=vmem, size = 0x12000, scoped, tag = 'internal scratch']
  %s0 = inlined_call_operand.vmem [shape: f32[512,147], index: 0, kind: input, shape index: {}]
  %s1 = inlined_call_operand.vmem [shape: bf16[147,16], index: 1, kind: input, shape index: {}]
  %s2 = inlined_call_operand.vmem [shape: f32[1,16], index: 2, kind: input, shape index: {}]
  %s3 = inlined_call_operand.vmem [shape: f32[1,16], index: 3, kind: input, shape index: {}]
  %s4 = inlined_call_operand.vmem [shape: f32[512,16], index: 4, kind: output, shape index: {}]
  %s5 = sld [smem:[#allocation0]]
  $region26: #{densenet_forward.14} parent=0
    _
  %s7 = ssub.s32 1, %s5
  %s8 = scalar_select 0, %s7, %s5
  // Predicated region
  $region2: #{densenet_forward.14} parent=0 // pred_check
    _
  $region3: #{densenet_forward.14} parent=0 // pred_check_branch
    %10 = sbr.rel (0) target = $region5
  $region4: #{densenet_forward.14} parent=0 // pred_region
    _
  $region5: #{densenet_forward.14} parent=0 // pred_fallthru
    _
  // Predicated region
  $region6: #{densenet_forward.14} parent=0 // pred_check
    _
  $region7: #{densenet_forward.14} parent=0 // pred_check_branch
    %12 = sbr.rel (0) target = $region9
  $region8: #{densenet_forward.14} parent=0 // pred_region
    _
  $region9: #{densenet_forward.14} parent=0 // pred_fallthru
    _
  // Predicated region
  $region10: #{densenet_forward.14} parent=0 // pred_check
    _
  $region11: #{densenet_forward.14} parent=0 // pred_check_branch
    %14 = sbr.rel (0) target = $region13
  $region12: #{densenet_forward.14} parent=0 // pred_region
    _
  $region13: #{densenet_forward.14} parent=0 // pred_fallthru
    _
  // Predicated region
  $region14: #{densenet_forward.14} parent=0 // pred_check
    _
  $region15: #{densenet_forward.14} parent=0 // pred_check_branch
    %16 = sbr.rel (0) target = $region17
  $region16: #{densenet_forward.14} parent=0 // pred_region
    _
  $region17: #{densenet_forward.14} parent=0 // pred_fallthru
    _
  %v18 = vld [vmem:[%s0] sm:$0xff]
  %v19 = vld [vmem:[%s0 + $0x8] sm:$0xff]
  %v20 = vld [vmem:[%s0 + $0x10] sm:$0xff]
  %v21 = vld [vmem:[%s0 + $0x18] sm:$0xff]
  %v22 = vld [vmem:[%s0 + $0x20] sm:$0xff]
  %v23 = vld [vmem:[%s0 + $0x28] sm:$0xff]
  %v24 = vld [vmem:[%s0 + $0x30] sm:$0xff]
  %v25 = vld [vmem:[%s0 + $0x38] sm:$0xff]
  %v26 = vld [vmem:[%s0 + $0x40] sm:$0xff]
  %v27 = vld [vmem:[%s0 + $0x48] sm:$0xff]
  %v28 = vld [vmem:[%s0 + $0x50] sm:$0xff]
  %v29 = vld [vmem:[%s0 + $0x58] sm:$0xff]
  %v30 = vld [vmem:[%s0 + $0x60] sm:$0xff]
  %v31 = vld [vmem:[%s0 + $0x68] sm:$0xff]
  %v32 = vld [vmem:[%s0 + $0x70] sm:$0xff]
  %v33 = vld [vmem:[%s0 + $0x78] sm:$0xff]
  %v34 = vld [vmem:[%s0 + $0x80] sm:$0xff]
  %v35 = vld [vmem:[%s0 + $0x88] sm:$0xff]
  %v36 = vld [vmem:[%s0 + $0x90] sm:$0xff]
  %v37 = vld [vmem:[%s0 + $0x98] sm:$0xff]
  %v38 = vld [vmem:[%s0 + $0xa0] sm:$0xff]
  %v39 = vld [vmem:[%s0 + $0xa8] sm:$0xff]
  %v40 = vld [vmem:[%s0 + $0xb0] sm:$0xff]
  %v41 = vld [vmem:[%s0 + $0xb8] sm:$0xff]
  %v42 = vld [vmem:[%s0 + $0xc0] sm:$0xff]
  %v43 = vld [vmem:[%s0 + $0xc8] sm:$0xff]
  %v44 = vld [vmem:[%s0 + $0xd0] sm:$0xff]
  %v45 = vld [vmem:[%s0 + $0xd8] sm:$0xff]
  %v46 = vld [vmem:[%s0 + $0xe0] sm:$0xff]
  %v47 = vld [vmem:[%s0 + $0xe8] sm:$0xff]
  %v48 = vld [vmem:[%s0 + $0xf0] sm:$0xff]
  %v49 = vld [vmem:[%s0 + $0xf8] sm:$0xff]
  %v50 = vld [vmem:[%s0 + $0x100] sm:$0xff]
  %v51 = vld [vmem:[%s0 + $0x108] sm:$0xff]
  %v52 = vld [vmem:[%s0 + $0x110] sm:$0xff]
  %v53 = vld [vmem:[%s0 + $0x118] sm:$0xff]
  %v54 = vld [vmem:[%s0 + $0x120] sm:$0xff]
  %v55 = vld [vmem:[%s0 + $0x128] sm:$0xff]
  %v56 = vld [vmem:[%s0 + $0x130] sm:$0xff]
  %v57 = vld [vmem:[%s0 + $0x138] sm:$0xff]
  %v58 = vld [vmem:[%s0 + $0x140] sm:$0xff]
  %v59 = vld [vmem:[%s0 + $0x148] sm:$0xff]
  %v60 = vld [vmem:[%s0 + $0x150] sm:$0xff]
  %v61 = vld [vmem:[%s0 + $0x158] sm:$0xff]
  %v62 = vld [vmem:[%s0 + $0x160] sm:$0xff]
  %v63 = vld [vmem:[%s0 + $0x168] sm:$0xff]
  %v64 = vld [vmem:[%s0 + $0x170] sm:$0xff]
  %v65 = vld [vmem:[%s0 + $0x178] sm:$0xff]
  %v66 = vld [vmem:[%s0 + $0x180] sm:$0xff]
  %v67 = vld [vmem:[%s0 + $0x188] sm:$0xff]
  %v68 = vld [vmem:[%s0 + $0x190] sm:$0xff]
  %v69 = vld [vmem:[%s0 + $0x198] sm:$0xff]
  %v70 = vld [vmem:[%s0 + $0x1a0] sm:$0xff]
  %v71 = vld [vmem:[%s0 + $0x1a8] sm:$0xff]
  %v72 = vld [vmem:[%s0 + $0x1b0] sm:$0xff]
  %v73 = vld [vmem:[%s0 + $0x1b8] sm:$0xff]
  %v74 = vld [vmem:[%s0 + $0x1c0] sm:$0xff]
  %v75 = vld [vmem:[%s0 + $0x1c8] sm:$0xff]
  %v76 = vld [vmem:[%s0 + $0x1d0] sm:$0xff]
  %v77 = vld [vmem:[%s0 + $0x1d8] sm:$0xff]
  %v78 = vld [vmem:[%s0 + $0x1e0] sm:$0xff]
  %v79 = vld [vmem:[%s0 + $0x1e8] sm:$0xff]
  %v80 = vld [vmem:[%s0 + $0x1f0] sm:$0xff]
  %v81 = vld [vmem:[%s0 + $0x1f8] sm:$0xff]
  %v82 = vld [vmem:[%s0 + $0x200] sm:$0xff]
  %v83 = vld [vmem:[%s0 + $0x208] sm:$0xff]
  %v84 = vld [vmem:[%s0 + $0x210] sm:$0xff]
  %v85 = vld [vmem:[%s0 + $0x218] sm:$0xff]
  %v86 = vld [vmem:[%s0 + $0x220] sm:$0xff]
  %v87 = vld [vmem:[%s0 + $0x228] sm:$0xff]
  %v88 = vld [vmem:[%s0 + $0x230] sm:$0xff]
  %v89 = vld [vmem:[%s0 + $0x238] sm:$0xff]
  %v90 = vld [vmem:[%s0 + $0x240] sm:$0xff]
  %v91 = vld [vmem:[%s0 + $0x248] sm:$0xff]
  %v92 = vld [vmem:[%s0 + $0x250] sm:$0xff]
  %v93 = vld [vmem:[%s0 + $0x258] sm:$0xff]
  %v94 = vld [vmem:[%s0 + $0x260] sm:$0xff]
  %v95 = vld [vmem:[%s0 + $0x268] sm:$0xff]
  %v96 = vld [vmem:[%s0 + $0x270] sm:$0xff]
  %v97 = vld [vmem:[%s0 + $0x278] sm:$0xff]
  %v98 = vld [vmem:[%s0 + $0x280] sm:$0xff]
  %v99 = vld [vmem:[%s0 + $0x288] sm:$0xff]
  %v100 = vld [vmem:[%s0 + $0x290] sm:$0xff]
  %v101 = vld [vmem:[%s0 + $0x298] sm:$0xff]
  %v102 = vld [vmem:[%s0 + $0x2a0] sm:$0xff]
  %v103 = vld [vmem:[%s0 + $0x2a8] sm:$0xff]
  %v104 = vld [vmem:[%s0 + $0x2b0] sm:$0xff]
  %v105 = vld [vmem:[%s0 + $0x2b8] sm:$0xff]
  %v106 = vld [vmem:[%s0 + $0x2c0] sm:$0xff]
  %v107 = vld [vmem:[%s0 + $0x2c8] sm:$0xff]
  %v108 = vld [vmem:[%s0 + $0x2d0] sm:$0xff]
  %v109 = vld [vmem:[%s0 + $0x2d8] sm:$0xff]
  %v110 = vld [vmem:[%s0 + $0x2e0] sm:$0xff]
  %v111 = vld [vmem:[%s0 + $0x2e8] sm:$0xff]
  %v112 = vld [vmem:[%s0 + $0x2f0] sm:$0xff]
  %v113 = vld [vmem:[%s0 + $0x2f8] sm:$0xff]
  %v114 = vld [vmem:[%s0 + $0x300] sm:$0xff]
  %v115 = vld [vmem:[%s0 + $0x308] sm:$0xff]
  %v116 = vld [vmem:[%s0 + $0x310] sm:$0xff]
  %v117 = vld [vmem:[%s0 + $0x318] sm:$0xff]
  %v118 = vld [vmem:[%s0 + $0x320] sm:$0xff]
  %v119 = vld [vmem:[%s0 + $0x328] sm:$0xff]
  %v120 = vld [vmem:[%s0 + $0x330] sm:$0xff]
  %v121 = vld [vmem:[%s0 + $0x338] sm:$0xff]
  %v122 = vld [vmem:[%s0 + $0x340] sm:$0xff]
  %v123 = vld [vmem:[%s0 + $0x348] sm:$0xff]
  %v124 = vld [vmem:[%s0 + $0x350] sm:$0xff]
  %v125 = vld [vmem:[%s0 + $0x358] sm:$0xff]
  %v126 = vld [vmem:[%s0 + $0x360] sm:$0xff]
  %v127 = vld [vmem:[%s0 + $0x368] sm:$0xff]
  %v128 = vld [vmem:[%s0 + $0x370] sm:$0xff]
  %v129 = vld [vmem:[%s0 + $0x378] sm:$0xff]
  %v130 = vld [vmem:[%s0 + $0x380] sm:$0xff]
  %v131 = vld [vmem:[%s0 + $0x388] sm:$0xff]
  %v132 = vld [vmem:[%s0 + $0x390] sm:$0xff]
  %v133 = vld [vmem:[%s0 + $0x398] sm:$0xff]
  %v134 = vld [vmem:[%s0 + $0x3a0] sm:$0xff]
  %v135 = vld [vmem:[%s0 + $0x3a8] sm:$0xff]
  %v136 = vld [vmem:[%s0 + $0x3b0] sm:$0xff]
  %v137 = vld [vmem:[%s0 + $0x3b8] sm:$0xff]
  %v138 = vld [vmem:[%s0 + $0x3c0] sm:$0xff]
  %v139 = vld [vmem:[%s0 + $0x3c8] sm:$0xff]
  %v140 = vld [vmem:[%s0 + $0x3d0] sm:$0xff]
  %v141 = vld [vmem:[%s0 + $0x3d8] sm:$0xff]
  %v142 = vld [vmem:[%s0 + $0x3e0] sm:$0xff]
  %v143 = vld [vmem:[%s0 + $0x3e8] sm:$0xff]
  %v144 = vld [vmem:[%s0 + $0x3f0] sm:$0xff]
  %v145 = vld [vmem:[%s0 + $0x3f8] sm:$0xff]
  %v146 = vpack.c.bf16 %v20, %v18
  %v147 = vpack.c.bf16 %v21, %v19
  %v148 = vpack.c.bf16 %v24, %v22
  %v149 = vpack.c.bf16 %v25, %v23
  %v150 = vpack.c.bf16 %v28, %v26
  %v151 = vpack.c.bf16 %v29, %v27
  %v152 = vpack.c.bf16 %v32, %v30
  %v153 = vpack.c.bf16 %v33, %v31
  %v154 = vpack.c.bf16 %v36, %v34
  %v155 = vpack.c.bf16 %v37, %v35
  %v156 = vpack.c.bf16 %v40, %v38
  %v157 = vpack.c.bf16 %v41, %v39
  %v158 = vpack.c.bf16 %v44, %v42
  %v159 = vpack.c.bf16 %v45, %v43
  %v160 = vpack.c.bf16 %v48, %v46
  %v161 = vpack.c.bf16 %v49, %v47
  %v162 = vpack.c.bf16 %v52, %v50
  %v163 = vpack.c.bf16 %v53, %v51
  %v164 = vpack.c.bf16 %v56, %v54
  %v165 = vpack.c.bf16 %v57, %v55
  %v166 = vpack.c.bf16 %v60, %v58
  %v167 = vpack.c.bf16 %v61, %v59
  %v168 = vpack.c.bf16 %v64, %v62
  %v169 = vpack.c.bf16 %v65, %v63
  %v170 = vpack.c.bf16 %v68, %v66
  %v171 = vpack.c.bf16 %v69, %v67
  %v172 = vpack.c.bf16 %v72, %v70
  %v173 = vpack.c.bf16 %v73, %v71
  %v174 = vpack.c.bf16 %v76, %v74
  %v175 = vpack.c.bf16 %v77, %v75
  %v176 = vpack.c.bf16 %v80, %v78
  %v177 = vpack.c.bf16 %v81, %v79
  %v178 = vpack.c.bf16 %v84, %v82
  %v179 = vpack.c.bf16 %v85, %v83
  %v180 = vpack.c.bf16 %v88, %v86
  %v181 = vpack.c.bf16 %v89, %v87
  %v182 = vpack.c.bf16 %v92, %v90
  %v183 = vpack.c.bf16 %v93, %v91
  %v184 = vpack.c.bf16 %v96, %v94
  %v185 = vpack.c.bf16 %v97, %v95
  %v186 = vpack.c.bf16 %v100, %v98
  %v187 = vpack.c.bf16 %v101, %v99
  %v188 = vpack.c.bf16 %v104, %v102
  %v189 = vpack.c.bf16 %v105, %v103
  %v190 = vpack.c.bf16 %v108, %v106
  %v191 = vpack.c.bf16 %v109, %v107
  %v192 = vpack.c.bf16 %v112, %v110
  %v193 = vpack.c.bf16 %v113, %v111
  %v194 = vpack.c.bf16 %v116, %v114
  %v195 = vpack.c.bf16 %v117, %v115
  %v196 = vpack.c.bf16 %v120, %v118
  %v197 = vpack.c.bf16 %v121, %v119
  %v198 = vpack.c.bf16 %v124, %v122
  %v199 = vpack.c.bf16 %v125, %v123
  %v200 = vpack.c.bf16 %v128, %v126
  %v201 = vpack.c.bf16 %v129, %v127
  %v202 = vpack.c.bf16 %v132, %v130
  %v203 = vpack.c.bf16 %v133, %v131
  %v204 = vpack.c.bf16 %v136, %v134
  %v205 = vpack.c.bf16 %v137, %v135
  %v206 = vpack.c.bf16 %v140, %v138
  %v207 = vpack.c.bf16 %v141, %v139
  %v208 = vpack.c.bf16 %v144, %v142
  %v209 = vpack.c.bf16 %v145, %v143
  %v210 = vld [vmem:[%s1] sm:$0xf]
  %v211 = vld [vmem:[%s1 + $0x4] sm:$0xf]
  %v212 = vld [vmem:[%s1 + $0x8] sm:$0xf]
  %v213 = vld [vmem:[%s1 + $0xc] sm:$0xf]
  %v214 = vld [vmem:[%s1 + $0x10] sm:$0xf]
  %v215 = vld [vmem:[%s1 + $0x14] sm:$0xf]
  %v216 = vld [vmem:[%s1 + $0x18] sm:$0xf]
  %v217 = vld [vmem:[%s1 + $0x1c] sm:$0xf]
  %v218 = vld [vmem:[%s1 + $0x20] sm:$0xf]
  %v219 = vld [vmem:[%s1 + $0x24] sm:$0xf]
  %v220 = vld [vmem:[%s1 + $0x28] sm:$0xf]
  %v221 = vld [vmem:[%s1 + $0x2c] sm:$0xf]
  %v222 = vld [vmem:[%s1 + $0x30] sm:$0xf]
  %v223 = vld [vmem:[%s1 + $0x34] sm:$0xf]
  %v224 = vld [vmem:[%s1 + $0x38] sm:$0xf]
  %v225 = vld [vmem:[%s1 + $0x3c] sm:$0xf]
  %v226 = vld [vmem:[%s1 + $0x40] sm:$0xf]
  %v227 = vld [vmem:[%s1 + $0x44] sm:$0xf]
  %v228 = vld [vmem:[%s1 + $0x48] sm:$0x3]
  %v248 = vunpack.c.l.b16 %v210
  %v249 = vunpack.c.l.b16 %v211
  %v250 = vunpack.c.l.b16 %v212
  %v251 = vunpack.c.l.b16 %v213
  %v252 = vunpack.c.l.b16 %v214
  %v253 = vunpack.c.l.b16 %v215
  %v254 = vunpack.c.l.b16 %v216
  %v255 = vunpack.c.l.b16 %v217
  %v256 = vunpack.c.l.b16 %v218
  %v257 = vunpack.c.l.b16 %v219
  %v258 = vunpack.c.l.b16 %v220
  %v259 = vunpack.c.l.b16 %v221
  %v260 = vunpack.c.l.b16 %v222
  %v261 = vunpack.c.l.b16 %v223
  %v262 = vunpack.c.l.b16 %v224
  %v263 = vunpack.c.l.b16 %v225
  %v264 = vunpack.c.l.b16 %v226
  %v265 = vunpack.c.l.b16 %v227
  %v266 = vunpack.c.l.b16 %v228
  %v267 = vpack.c.b16 %v249, %v248
  %v268 = vpack.c.b16 %v251, %v250
  %v269 = vpack.c.b16 %v253, %v252
  %v270 = vpack.c.b16 %v255, %v254
  %v271 = vpack.c.b16 %v257, %v256
  %v272 = vpack.c.b16 %v259, %v258
  %v273 = vpack.c.b16 %v261, %v260
  %v274 = vpack.c.b16 %v263, %v262
  %v275 = vpack.c.b16 %v265, %v264
  %v276 = vpack.c.b16 %v266, %v266
  %vm286 = vcmask 154624
  %v288 = vsel %vm286, %v147, 0
  %v291 = vsel %vm286, %v149, 0
  %v294 = vsel %vm286, %v151, 0
  %v297 = vsel %vm286, %v153, 0
  %v300 = vsel %vm286, %v155, 0
  %v303 = vsel %vm286, %v157, 0
  %v306 = vsel %vm286, %v159, 0
  %v309 = vsel %vm286, %v161, 0
  %v312 = vsel %vm286, %v163, 0
  %v315 = vsel %vm286, %v165, 0
  %v318 = vsel %vm286, %v167, 0
  %v321 = vsel %vm286, %v169, 0
  %v324 = vsel %vm286, %v171, 0
  %v327 = vsel %vm286, %v173, 0
  %v330 = vsel %vm286, %v175, 0
  %v333 = vsel %vm286, %v177, 0
  %v336 = vsel %vm286, %v179, 0
  %v339 = vsel %vm286, %v181, 0
  %v342 = vsel %vm286, %v183, 0
  %v345 = vsel %vm286, %v185, 0
  %v348 = vsel %vm286, %v187, 0
  %v351 = vsel %vm286, %v189, 0
  %v354 = vsel %vm286, %v191, 0
  %v357 = vsel %vm286, %v193, 0
  %v360 = vsel %vm286, %v195, 0
  %v363 = vsel %vm286, %v197, 0
  %v366 = vsel %vm286, %v199, 0
  %v369 = vsel %vm286, %v201, 0
  %v372 = vsel %vm286, %v203, 0
  %v375 = vsel %vm286, %v205, 0
  %v378 = vsel %vm286, %v207, 0
  %v381 = vsel %vm286, %v209, 0
  %vm383 = vcmask 1040384
  %vm384 = vcmask 1041408
  %v385 = vsel %vm383, 4294967295, 65535
  %v386 = vsel %vm384, %v385, 0
  %v388 = vand.u32 %v276, %v386
  %390 = vmatprep.subr.bf16.mxu0 0
  %391 = vmatpush1.bf16.msra.mxu0 %v274
  %392 = vmatprep.subr.bf16.mxu0 0
  %393 = vmatpush1.bf16.msra.mxu0 %v273
  %394 = vmatprep.subr.bf16.mxu0 0
  %395 = vmatpush1.bf16.msra.mxu0 %v272
  %396 = vmatprep.subr.bf16.mxu0 0
  %397 = vmatpush1.bf16.msra.mxu0 %v271
  %398 = vmatprep.subr.bf16.mxu0 0
  %399 = vmatpush1.bf16.msra.mxu0 %v270
  %400 = vmatprep.subr.bf16.mxu0 0
  %401 = vmatpush1.bf16.msra.mxu0 %v269
  %402 = vmatprep.subr.bf16.mxu0 0
  %403 = vmatpush1.bf16.msra.mxu0 %v268
  %404 = vmatprep.subr.bf16.mxu0 0
  %405 = vmatpush1.bf16.msra.mxu0 %v267
  %406 = vmatprep.subr.bf16.mxu0 0
  %407 = vmatpush2.bf16.msra.mxu0 0
  %408 = vmatprep.subr.bf16.mxu0 0
  %409 = vmatpush2.bf16.msra.mxu0 0
  %410 = vmatprep.subr.bf16.mxu0 0
  %411 = vmatpush2.bf16.msra.mxu0 0
  %412 = vmatprep.subr.bf16.mxu0 0
  %413 = vmatpush2.bf16.msra.mxu0 0
  %414 = vmatprep.subr.bf16.mxu0 0
  %415 = vmatpush2.bf16.msra.mxu0 0
  %416 = vmatprep.subr.bf16.mxu0 0
  %417 = vmatpush2.bf16.msra.mxu0 0
  %418 = vmatprep.subr.bf16.mxu0 0
  %419 = vmatpush2.bf16.msra.mxu0 %v388
  %420 = vmatprep.subr.bf16.mxu0 0
  %421 = vmatpush2.bf16.msra.mxu0 %v275
  %422 = vmatprep.mubr.bf16.mxu0 %v288
  %423 = vmatmul.mubr.bf16.gmra.mxu0 %v146
  %v424 = vpop.f32.mrf.mxu0
  %v425 = vadd.f32 0.0, %v424
  %v426 = vpop.f32.mrf.mxu0
  %v427 = vpop.f32.mrf.mxu0
  %v428 = vadd.f32 0.0, %v427
  %v429 = vpop.f32.mrf.mxu0
  %430 = vmatprep.mubr.bf16.mxu0 %v291
  %431 = vmatmul.mubr.bf16.gmra.mxu0 %v148
  %v432 = vpop.f32.mrf.mxu0
  %v433 = vadd.f32 0.0, %v432
  %v434 = vpop.f32.mrf.mxu0
  %v435 = vpop.f32.mrf.mxu0
  %v436 = vadd.f32 0.0, %v435
  %v437 = vpop.f32.mrf.mxu0
  %438 = vmatprep.mubr.bf16.mxu0 %v294
  %439 = vmatmul.mubr.bf16.gmra.mxu0 %v150
  %v440 = vpop.f32.mrf.mxu0
  %v441 = vadd.f32 0.0, %v440
  %v442 = vpop.f32.mrf.mxu0
  %v443 = vpop.f32.mrf.mxu0
  %v444 = vadd.f32 0.0, %v443
  %v445 = vpop.f32.mrf.mxu0
  %446 = vmatprep.mubr.bf16.mxu0 %v297
  %447 = vmatmul.mubr.bf16.gmra.mxu0 %v152
  %v448 = vpop.f32.mrf.mxu0
  %v449 = vadd.f32 0.0, %v448
  %v450 = vpop.f32.mrf.mxu0
  %v451 = vpop.f32.mrf.mxu0
  %v452 = vadd.f32 0.0, %v451
  %v453 = vpop.f32.mrf.mxu0
  %454 = vmatprep.mubr.bf16.mxu0 %v300
  %455 = vmatmul.mubr.bf16.gmra.mxu0 %v154
  %v456 = vpop.f32.mrf.mxu0
  %v457 = vadd.f32 0.0, %v456
  %v458 = vpop.f32.mrf.mxu0
  %v459 = vpop.f32.mrf.mxu0
  %v460 = vadd.f32 0.0, %v459
  %v461 = vpop.f32.mrf.mxu0
  %462 = vmatprep.mubr.bf16.mxu0 %v303
  %463 = vmatmul.mubr.bf16.gmra.mxu0 %v156
  %v464 = vpop.f32.mrf.mxu0
  %v465 = vadd.f32 0.0, %v464
  %v466 = vpop.f32.mrf.mxu0
  %v467 = vpop.f32.mrf.mxu0
  %v468 = vadd.f32 0.0, %v467
  %v469 = vpop.f32.mrf.mxu0
  %470 = vmatprep.mubr.bf16.mxu0 %v306
  %471 = vmatmul.mubr.bf16.gmra.mxu0 %v158
  %v472 = vpop.f32.mrf.mxu0
  %v473 = vadd.f32 0.0, %v472
  %v474 = vpop.f32.mrf.mxu0
  %v475 = vpop.f32.mrf.mxu0
  %v476 = vadd.f32 0.0, %v475
  %v477 = vpop.f32.mrf.mxu0
  %478 = vmatprep.mubr.bf16.mxu0 %v309
  %479 = vmatmul.mubr.bf16.gmra.mxu0 %v160
  %v480 = vpop.f32.mrf.mxu0
  %v481 = vadd.f32 0.0, %v480
  %v482 = vpop.f32.mrf.mxu0
  %v483 = vpop.f32.mrf.mxu0
  %v484 = vadd.f32 0.0, %v483
  %v485 = vpop.f32.mrf.mxu0
  %486 = vmatprep.mubr.bf16.mxu0 %v312
  %487 = vmatmul.mubr.bf16.gmra.mxu0 %v162
  %v488 = vpop.f32.mrf.mxu0
  %v489 = vadd.f32 0.0, %v488
  %v490 = vpop.f32.mrf.mxu0
  %v491 = vpop.f32.mrf.mxu0
  %v492 = vadd.f32 0.0, %v491
  %v493 = vpop.f32.mrf.mxu0
  %494 = vmatprep.mubr.bf16.mxu0 %v315
  %495 = vmatmul.mubr.bf16.gmra.mxu0 %v164
  %v496 = vpop.f32.mrf.mxu0
  %v497 = vadd.f32 0.0, %v496
  %v498 = vpop.f32.mrf.mxu0
  %v499 = vpop.f32.mrf.mxu0
  %v500 = vadd.f32 0.0, %v499
  %v501 = vpop.f32.mrf.mxu0
  %502 = vmatprep.mubr.bf16.mxu0 %v318
  %503 = vmatmul.mubr.bf16.gmra.mxu0 %v166
  %v504 = vpop.f32.mrf.mxu0
  %v505 = vadd.f32 0.0, %v504
  %v506 = vpop.f32.mrf.mxu0
  %v507 = vpop.f32.mrf.mxu0
  %v508 = vadd.f32 0.0, %v507
  %v509 = vpop.f32.mrf.mxu0
  %510 = vmatprep.mubr.bf16.mxu0 %v321
  %511 = vmatmul.mubr.bf16.gmra.mxu0 %v168
  %v512 = vpop.f32.mrf.mxu0
  %v513 = vadd.f32 0.0, %v512
  %v514 = vpop.f32.mrf.mxu0
  %v515 = vpop.f32.mrf.mxu0
  %v516 = vadd.f32 0.0, %v515
  %v517 = vpop.f32.mrf.mxu0
  %518 = vmatprep.mubr.bf16.mxu0 %v324
  %519 = vmatmul.mubr.bf16.gmra.mxu0 %v170
  %v520 = vpop.f32.mrf.mxu0
  %v521 = vadd.f32 0.0, %v520
  %v522 = vpop.f32.mrf.mxu0
  %v523 = vpop.f32.mrf.mxu0
  %v524 = vadd.f32 0.0, %v523
  %v525 = vpop.f32.mrf.mxu0
  %526 = vmatprep.mubr.bf16.mxu0 %v327
  %527 = vmatmul.mubr.bf16.gmra.mxu0 %v172
  %v528 = vpop.f32.mrf.mxu0
  %v529 = vadd.f32 0.0, %v528
  %v530 = vpop.f32.mrf.mxu0
  %v531 = vpop.f32.mrf.mxu0
  %v532 = vadd.f32 0.0, %v531
  %v533 = vpop.f32.mrf.mxu0
  %534 = vmatprep.mubr.bf16.mxu0 %v330
  %535 = vmatmul.mubr.bf16.gmra.mxu0 %v174
  %v536 = vpop.f32.mrf.mxu0
  %v537 = vadd.f32 0.0, %v536
  %v538 = vpop.f32.mrf.mxu0
  %v539 = vpop.f32.mrf.mxu0
  %v540 = vadd.f32 0.0, %v539
  %v541 = vpop.f32.mrf.mxu0
  %542 = vmatprep.mubr.bf16.mxu0 %v333
  %543 = vmatmul.mubr.bf16.gmra.mxu0 %v176
  %v544 = vpop.f32.mrf.mxu0
  %v545 = vadd.f32 0.0, %v544
  %v546 = vpop.f32.mrf.mxu0
  %v547 = vpop.f32.mrf.mxu0
  %v548 = vadd.f32 0.0, %v547
  %v549 = vpop.f32.mrf.mxu0
  %550 = vmatprep.mubr.bf16.mxu0 %v336
  %551 = vmatmul.mubr.bf16.gmra.mxu0 %v178
  %v552 = vpop.f32.mrf.mxu0
  %v553 = vadd.f32 0.0, %v552
  %v554 = vpop.f32.mrf.mxu0
  %v555 = vpop.f32.mrf.mxu0
  %v556 = vadd.f32 0.0, %v555
  %v557 = vpop.f32.mrf.mxu0
  %558 = vmatprep.mubr.bf16.mxu0 %v339
  %559 = vmatmul.mubr.bf16.gmra.mxu0 %v180
  %v560 = vpop.f32.mrf.mxu0
  %v561 = vadd.f32 0.0, %v560
  %v562 = vpop.f32.mrf.mxu0
  %v563 = vpop.f32.mrf.mxu0
  %v564 = vadd.f32 0.0, %v563
  %v565 = vpop.f32.mrf.mxu0
  %566 = vmatprep.mubr.bf16.mxu0 %v342
  %567 = vmatmul.mubr.bf16.gmra.mxu0 %v182
  %v568 = vpop.f32.mrf.mxu0
  %v569 = vadd.f32 0.0, %v568
  %v570 = vpop.f32.mrf.mxu0
  %v571 = vpop.f32.mrf.mxu0
  %v572 = vadd.f32 0.0, %v571
  %v573 = vpop.f32.mrf.mxu0
  %574 = vmatprep.mubr.bf16.mxu0 %v345
  %575 = vmatmul.mubr.bf16.gmra.mxu0 %v184
  %v576 = vpop.f32.mrf.mxu0
  %v577 = vadd.f32 0.0, %v576
  %v578 = vpop.f32.mrf.mxu0
  %v579 = vpop.f32.mrf.mxu0
  %v580 = vadd.f32 0.0, %v579
  %v581 = vpop.f32.mrf.mxu0
  %582 = vmatprep.mubr.bf16.mxu0 %v348
  %583 = vmatmul.mubr.bf16.gmra.mxu0 %v186
  %v584 = vpop.f32.mrf.mxu0
  %v585 = vadd.f32 0.0, %v584
  %v586 = vpop.f32.mrf.mxu0
  %v587 = vpop.f32.mrf.mxu0
  %v588 = vadd.f32 0.0, %v587
  %v589 = vpop.f32.mrf.mxu0
  %590 = vmatprep.mubr.bf16.mxu0 %v351
  %591 = vmatmul.mubr.bf16.gmra.mxu0 %v188
  %v592 = vpop.f32.mrf.mxu0
  %v593 = vadd.f32 0.0, %v592
  %v594 = vpop.f32.mrf.mxu0
  %v595 = vpop.f32.mrf.mxu0
  %v596 = vadd.f32 0.0, %v595
  %v597 = vpop.f32.mrf.mxu0
  %598 = vmatprep.mubr.bf16.mxu0 %v354
  %599 = vmatmul.mubr.bf16.gmra.mxu0 %v190
  %v600 = vpop.f32.mrf.mxu0
  %v601 = vadd.f32 0.0, %v600
  %v602 = vpop.f32.mrf.mxu0
  %v603 = vpop.f32.mrf.mxu0
  %v604 = vadd.f32 0.0, %v603
  %v605 = vpop.f32.mrf.mxu0
  %606 = vmatprep.mubr.bf16.mxu0 %v357
  %607 = vmatmul.mubr.bf16.gmra.mxu0 %v192
  %v608 = vpop.f32.mrf.mxu0
  %v609 = vadd.f32 0.0, %v608
  %v610 = vpop.f32.mrf.mxu0
  %v611 = vpop.f32.mrf.mxu0
  %v612 = vadd.f32 0.0, %v611
  %v613 = vpop.f32.mrf.mxu0
  %614 = vmatprep.mubr.bf16.mxu0 %v360
  %615 = vmatmul.mubr.bf16.gmra.mxu0 %v194
  %v616 = vpop.f32.mrf.mxu0
  %v617 = vadd.f32 0.0, %v616
  %v618 = vpop.f32.mrf.mxu0
  %v619 = vpop.f32.mrf.mxu0
  %v620 = vadd.f32 0.0, %v619
  %v621 = vpop.f32.mrf.mxu0
  %622 = vmatprep.mubr.bf16.mxu0 %v363
  %623 = vmatmul.mubr.bf16.gmra.mxu0 %v196
  %v624 = vpop.f32.mrf.mxu0
  %v625 = vadd.f32 0.0, %v624
  %v626 = vpop.f32.mrf.mxu0
  %v627 = vpop.f32.mrf.mxu0
  %v628 = vadd.f32 0.0, %v627
  %v629 = vpop.f32.mrf.mxu0
  %630 = vmatprep.mubr.bf16.mxu0 %v366
  %631 = vmatmul.mubr.bf16.gmra.mxu0 %v198
  %v632 = vpop.f32.mrf.mxu0
  %v633 = vadd.f32 0.0, %v632
  %v634 = vpop.f32.mrf.mxu0
  %v635 = vpop.f32.mrf.mxu0
  %v636 = vadd.f32 0.0, %v635
  %v637 = vpop.f32.mrf.mxu0
  %638 = vmatprep.mubr.bf16.mxu0 %v369
  %639 = vmatmul.mubr.bf16.gmra.mxu0 %v200
  %v640 = vpop.f32.mrf.mxu0
  %v641 = vadd.f32 0.0, %v640
  %v642 = vpop.f32.mrf.mxu0
  %v643 = vpop.f32.mrf.mxu0
  %v644 = vadd.f32 0.0, %v643
  %v645 = vpop.f32.mrf.mxu0
  %646 = vmatprep.mubr.bf16.mxu0 %v372
  %647 = vmatmul.mubr.bf16.gmra.mxu0 %v202
  %v648 = vpop.f32.mrf.mxu0
  %v649 = vadd.f32 0.0, %v648
  %v650 = vpop.f32.mrf.mxu0
  %v651 = vpop.f32.mrf.mxu0
  %v652 = vadd.f32 0.0, %v651
  %v653 = vpop.f32.mrf.mxu0
  %654 = vmatprep.mubr.bf16.mxu0 %v375
  %655 = vmatmul.mubr.bf16.gmra.mxu0 %v204
  %v656 = vpop.f32.mrf.mxu0
  %v657 = vadd.f32 0.0, %v656
  %v658 = vpop.f32.mrf.mxu0
  %v659 = vpop.f32.mrf.mxu0
  %v660 = vadd.f32 0.0, %v659
  %v661 = vpop.f32.mrf.mxu0
  %662 = vmatprep.mubr.bf16.mxu0 %v378
  %663 = vmatmul.mubr.bf16.gmra.mxu0 %v206
  %v664 = vpop.f32.mrf.mxu0
  %v665 = vadd.f32 0.0, %v664
  %v666 = vpop.f32.mrf.mxu0
  %v667 = vpop.f32.mrf.mxu0
  %v668 = vadd.f32 0.0, %v667
  %v669 = vpop.f32.mrf.mxu0
  %670 = vmatprep.mubr.bf16.mxu0 %v381
  %671 = vmatmul.mubr.bf16.gmra.mxu0 %v208
  %v672 = vpop.f32.mrf.mxu0
  %v673 = vadd.f32 0.0, %v672
  %v674 = vpop.f32.mrf.mxu0
  %v675 = vpop.f32.mrf.mxu0
  %v676 = vadd.f32 0.0, %v675
  %v677 = vpop.f32.mrf.mxu0
  %678 = vdwg.mxu0
  %v679 = vld [vmem:[%s2] sm:$0x1]
  %v681 = vlaneseq
  %v682 = vshrl.u32 %v681, 7
  %v683 = vsub.s32 0, %v682
  %v684 = vrot.slane %v679, %v683
  %v686 = vmul.f32 %v425, %v684
  %v687 = vmul.f32 %v428, %v684
  %v688 = vmul.f32 %v433, %v684
  %v689 = vmul.f32 %v436, %v684
  %v690 = vmul.f32 %v441, %v684
  %v691 = vmul.f32 %v444, %v684
  %v692 = vmul.f32 %v449, %v684
  %v693 = vmul.f32 %v452, %v684
  %v694 = vmul.f32 %v457, %v684
  %v695 = vmul.f32 %v460, %v684
  %v696 = vmul.f32 %v465, %v684
  %v697 = vmul.f32 %v468, %v684
  %v698 = vmul.f32 %v473, %v684
  %v699 = vmul.f32 %v476, %v684
  %v700 = vmul.f32 %v481, %v684
  %v701 = vmul.f32 %v484, %v684
  %v702 = vmul.f32 %v489, %v684
  %v703 = vmul.f32 %v492, %v684
  %v704 = vmul.f32 %v497, %v684
  %v705 = vmul.f32 %v500, %v684
  %v706 = vmul.f32 %v505, %v684
  %v707 = vmul.f32 %v508, %v684
  %v708 = vmul.f32 %v513, %v684
  %v709 = vmul.f32 %v516, %v684
  %v710 = vmul.f32 %v521, %v684
  %v711 = vmul.f32 %v524, %v684
  %v712 = vmul.f32 %v529, %v684
  %v713 = vmul.f32 %v532, %v684
  %v714 = vmul.f32 %v537, %v684
  %v715 = vmul.f32 %v540, %v684
  %v716 = vmul.f32 %v545, %v684
  %v717 = vmul.f32 %v548, %v684
  %v718 = vmul.f32 %v553, %v684
  %v719 = vmul.f32 %v556, %v684
  %v720 = vmul.f32 %v561, %v684
  %v721 = vmul.f32 %v564, %v684
  %v722 = vmul.f32 %v569, %v684
  %v723 = vmul.f32 %v572, %v684
  %v724 = vmul.f32 %v577, %v684
  %v725 = vmul.f32 %v580, %v684
  %v726 = vmul.f32 %v585, %v684
  %v727 = vmul.f32 %v588, %v684
  %v728 = vmul.f32 %v593, %v684
  %v729 = vmul.f32 %v596, %v684
  %v730 = vmul.f32 %v601, %v684
  %v731 = vmul.f32 %v604, %v684
  %v732 = vmul.f32 %v609, %v684
  %v733 = vmul.f32 %v612, %v684
  %v734 = vmul.f32 %v617, %v684
  %v735 = vmul.f32 %v620, %v684
  %v736 = vmul.f32 %v625, %v684
  %v737 = vmul.f32 %v628, %v684
  %v738 = vmul.f32 %v633, %v684
  %v739 = vmul.f32 %v636, %v684
  %v740 = vmul.f32 %v641, %v684
  %v741 = vmul.f32 %v644, %v684
  %v742 = vmul.f32 %v649, %v684
  %v743 = vmul.f32 %v652, %v684
  %v744 = vmul.f32 %v657, %v684
  %v745 = vmul.f32 %v660, %v684
  %v746 = vmul.f32 %v665, %v684
  %v747 = vmul.f32 %v668, %v684
  %v748 = vmul.f32 %v673, %v684
  %v749 = vmul.f32 %v676, %v684
  %v750 = vld [vmem:[%s3] sm:$0x1]
  %v752 = vlaneseq
  %v753 = vshrl.u32 %v752, 7
  %v754 = vsub.s32 0, %v753
  %v755 = vrot.slane %v750, %v754
  %v757 = vadd.f32 %v686, %v755
  %v758 = vadd.f32 %v687, %v755
  %v759 = vadd.f32 %v688, %v755
  %v760 = vadd.f32 %v689, %v755
  %v761 = vadd.f32 %v690, %v755
  %v762 = vadd.f32 %v691, %v755
  %v763 = vadd.f32 %v692, %v755
  %v764 = vadd.f32 %v693, %v755
  %v765 = vadd.f32 %v694, %v755
  %v766 = vadd.f32 %v695, %v755
  %v767 = vadd.f32 %v696, %v755
  %v768 = vadd.f32 %v697, %v755
  %v769 = vadd.f32 %v698, %v755
  %v770 = vadd.f32 %v699, %v755
  %v771 = vadd.f32 %v700, %v755
  %v772 = vadd.f32 %v701, %v755
  %v773 = vadd.f32 %v702, %v755
  %v774 = vadd.f32 %v703, %v755
  %v775 = vadd.f32 %v704, %v755
  %v776 = vadd.f32 %v705, %v755
  %v777 = vadd.f32 %v706, %v755
  %v778 = vadd.f32 %v707, %v755
  %v779 = vadd.f32 %v708, %v755
  %v780 = vadd.f32 %v709, %v755
  %v781 = vadd.f32 %v710, %v755
  %v782 = vadd.f32 %v711, %v755
  %v783 = vadd.f32 %v712, %v755
  %v784 = vadd.f32 %v713, %v755
  %v785 = vadd.f32 %v714, %v755
  %v786 = vadd.f32 %v715, %v755
  %v787 = vadd.f32 %v716, %v755
  %v788 = vadd.f32 %v717, %v755
  %v789 = vadd.f32 %v718, %v755
  %v790 = vadd.f32 %v719, %v755
  %v791 = vadd.f32 %v720, %v755
  %v792 = vadd.f32 %v721, %v755
  %v793 = vadd.f32 %v722, %v755
  %v794 = vadd.f32 %v723, %v755
  %v795 = vadd.f32 %v724, %v755
  %v796 = vadd.f32 %v725, %v755
  %v797 = vadd.f32 %v726, %v755
  %v798 = vadd.f32 %v727, %v755
  %v799 = vadd.f32 %v728, %v755
  %v800 = vadd.f32 %v729, %v755
  %v801 = vadd.f32 %v730, %v755
  %v802 = vadd.f32 %v731, %v755
  %v803 = vadd.f32 %v732, %v755
  %v804 = vadd.f32 %v733, %v755
  %v805 = vadd.f32 %v734, %v755
  %v806 = vadd.f32 %v735, %v755
  %v807 = vadd.f32 %v736, %v755
  %v808 = vadd.f32 %v737, %v755
  %v809 = vadd.f32 %v738, %v755
  %v810 = vadd.f32 %v739, %v755
  %v811 = vadd.f32 %v740, %v755
  %v812 = vadd.f32 %v741, %v755
  %v813 = vadd.f32 %v742, %v755
  %v814 = vadd.f32 %v743, %v755
  %v815 = vadd.f32 %v744, %v755
  %v816 = vadd.f32 %v745, %v755
  %v817 = vadd.f32 %v746, %v755
  %v818 = vadd.f32 %v747, %v755
  %v819 = vadd.f32 %v748, %v755
  %v820 = vadd.f32 %v749, %v755
  %v821 = vmax.f32 %v757, 0.0
  %v822 = vmax.f32 %v758, 0.0
  %v823 = vmax.f32 %v759, 0.0
  %v824 = vmax.f32 %v760, 0.0
  %v825 = vmax.f32 %v761, 0.0
  %v826 = vmax.f32 %v762, 0.0
  %v827 = vmax.f32 %v763, 0.0
  %v828 = vmax.f32 %v764, 0.0
  %v829 = vmax.f32 %v765, 0.0
  %v830 = vmax.f32 %v766, 0.0
  %v831 = vmax.f32 %v767, 0.0
  %v832 = vmax.f32 %v768, 0.0
  %v833 = vmax.f32 %v769, 0.0
  %v834 = vmax.f32 %v770, 0.0
  %v835 = vmax.f32 %v771, 0.0
  %v836 = vmax.f32 %v772, 0.0
  %v837 = vmax.f32 %v773, 0.0
  %v838 = vmax.f32 %v774, 0.0
  %v839 = vmax.f32 %v775, 0.0
  %v840 = vmax.f32 %v776, 0.0
  %v841 = vmax.f32 %v777, 0.0
  %v842 = vmax.f32 %v778, 0.0
  %v843 = vmax.f32 %v779, 0.0
  %v844 = vmax.f32 %v780, 0.0
  %v845 = vmax.f32 %v781, 0.0
  %v846 = vmax.f32 %v782, 0.0
  %v847 = vmax.f32 %v783, 0.0
  %v848 = vmax.f32 %v784, 0.0
  %v849 = vmax.f32 %v785, 0.0
  %v850 = vmax.f32 %v786, 0.0
  %v851 = vmax.f32 %v787, 0.0
  %v852 = vmax.f32 %v788, 0.0
  %v853 = vmax.f32 %v789, 0.0
  %v854 = vmax.f32 %v790, 0.0
  %v855 = vmax.f32 %v791, 0.0
  %v856 = vmax.f32 %v792, 0.0
  %v857 = vmax.f32 %v793, 0.0
  %v858 = vmax.f32 %v794, 0.0
  %v859 = vmax.f32 %v795, 0.0
  %v860 = vmax.f32 %v796, 0.0
  %v861 = vmax.f32 %v797, 0.0
  %v862 = vmax.f32 %v798, 0.0
  %v863 = vmax.f32 %v799, 0.0
  %v864 = vmax.f32 %v800, 0.0
  %v865 = vmax.f32 %v801, 0.0
  %v866 = vmax.f32 %v802, 0.0
  %v867 = vmax.f32 %v803, 0.0
  %v868 = vmax.f32 %v804, 0.0
  %v869 = vmax.f32 %v805, 0.0
  %v870 = vmax.f32 %v806, 0.0
  %v871 = vmax.f32 %v807, 0.0
  %v872 = vmax.f32 %v808, 0.0
  %v873 = vmax.f32 %v809, 0.0
  %v874 = vmax.f32 %v810, 0.0
  %v875 = vmax.f32 %v811, 0.0
  %v876 = vmax.f32 %v812, 0.0
  %v877 = vmax.f32 %v813, 0.0
  %v878 = vmax.f32 %v814, 0.0
  %v879 = vmax.f32 %v815, 0.0
  %v880 = vmax.f32 %v816, 0.0
  %v881 = vmax.f32 %v817, 0.0
  %v882 = vmax.f32 %v818, 0.0
  %v883 = vmax.f32 %v819, 0.0
  %v884 = vmax.f32 %v820, 0.0
  %vm885 = vcmask 130048
  %886 = vst.msk [vmem:[%s4] sm:$0xff] %vm885, %v821
  %887 = vst.msk [vmem:[%s4 + $0x8] sm:$0xff] %vm885, %v822
  %888 = vst.msk [vmem:[%s4 + $0x10] sm:$0xff] %vm885, %v823
  %889 = vst.msk [vmem:[%s4 + $0x18] sm:$0xff] %vm885, %v824
  %890 = vst.msk [vmem:[%s4 + $0x20] sm:$0xff] %vm885, %v825
  %891 = vst.msk [vmem:[%s4 + $0x28] sm:$0xff] %vm885, %v826
  %892 = vst.msk [vmem:[%s4 + $0x30] sm:$0xff] %vm885, %v827
  %893 = vst.msk [vmem:[%s4 + $0x38] sm:$0xff] %vm885, %v828
  %894 = vst.msk [vmem:[%s4 + $0x40] sm:$0xff] %vm885, %v829
  %895 = vst.msk [vmem:[%s4 + $0x48] sm:$0xff] %vm885, %v830
  %896 = vst.msk [vmem:[%s4 + $0x50] sm:$0xff] %vm885, %v831
  %897 = vst.msk [vmem:[%s4 + $0x58] sm:$0xff] %vm885, %v832
  %898 = vst.msk [vmem:[%s4 + $0x60] sm:$0xff] %vm885, %v833
  %899 = vst.msk [vmem:[%s4 + $0x68] sm:$0xff] %vm885, %v834
  %900 = vst.msk [vmem:[%s4 + $0x70] sm:$0xff] %vm885, %v835
  %901 = vst.msk [vmem:[%s4 + $0x78] sm:$0xff] %vm885, %v836
  %902 = vst.msk [vmem:[%s4 + $0x80] sm:$0xff] %vm885, %v837
  %903 = vst.msk [vmem:[%s4 + $0x88] sm:$0xff] %vm885, %v838
  %904 = vst.msk [vmem:[%s4 + $0x90] sm:$0xff] %vm885, %v839
  %905 = vst.msk [vmem:[%s4 + $0x98] sm:$0xff] %vm885, %v840
  %906 = vst.msk [vmem:[%s4 + $0xa0] sm:$0xff] %vm885, %v841
  %907 = vst.msk [vmem:[%s4 + $0xa8] sm:$0xff] %vm885, %v842
  %908 = vst.msk [vmem:[%s4 + $0xb0] sm:$0xff] %vm885, %v843
  %909 = vst.msk [vmem:[%s4 + $0xb8] sm:$0xff] %vm885, %v844
  %910 = vst.msk [vmem:[%s4 + $0xc0] sm:$0xff] %vm885, %v845
  %911 = vst.msk [vmem:[%s4 + $0xc8] sm:$0xff] %vm885, %v846
  %912 = vst.msk [vmem:[%s4 + $0xd0] sm:$0xff] %vm885, %v847
  %913 = vst.msk [vmem:[%s4 + $0xd8] sm:$0xff] %vm885, %v848
  %914 = vst.msk [vmem:[%s4 + $0xe0] sm:$0xff] %vm885, %v849
  %915 = vst.msk [vmem:[%s4 + $0xe8] sm:$0xff] %vm885, %v850
  %916 = vst.msk [vmem:[%s4 + $0xf0] sm:$0xff] %vm885, %v851
  %917 = vst.msk [vmem:[%s4 + $0xf8] sm:$0xff] %vm885, %v852
  %918 = vst.msk [vmem:[%s4 + $0x100] sm:$0xff] %vm885, %v853
  %919 = vst.msk [vmem:[%s4 + $0x108] sm:$0xff] %vm885, %v854
  %920 = vst.msk [vmem:[%s4 + $0x110] sm:$0xff] %vm885, %v855
  %921 = vst.msk [vmem:[%s4 + $0x118] sm:$0xff] %vm885, %v856
  %922 = vst.msk [vmem:[%s4 + $0x120] sm:$0xff] %vm885, %v857
  %923 = vst.msk [vmem:[%s4 + $0x128] sm:$0xff] %vm885, %v858
  %924 = vst.msk [vmem:[%s4 + $0x130] sm:$0xff] %vm885, %v859
  %925 = vst.msk [vmem:[%s4 + $0x138] sm:$0xff] %vm885, %v860
  %926 = vst.msk [vmem:[%s4 + $0x140] sm:$0xff] %vm885, %v861
  %927 = vst.msk [vmem:[%s4 + $0x148] sm:$0xff] %vm885, %v862
  %928 = vst.msk [vmem:[%s4 + $0x150] sm:$0xff] %vm885, %v863
  %929 = vst.msk [vmem:[%s4 + $0x158] sm:$0xff] %vm885, %v864
  %930 = vst.msk [vmem:[%s4 + $0x160] sm:$0xff] %vm885, %v865
  %931 = vst.msk [vmem:[%s4 + $0x168] sm:$0xff] %vm885, %v866
  %932 = vst.msk [vmem:[%s4 + $0x170] sm:$0xff] %vm885, %v867
  %933 = vst.msk [vmem:[%s4 + $0x178] sm:$0xff] %vm885, %v868
  %934 = vst.msk [vmem:[%s4 + $0x180] sm:$0xff] %vm885, %v869
  %935 = vst.msk [vmem:[%s4 + $0x188] sm:$0xff] %vm885, %v870
  %936 = vst.msk [vmem:[%s4 + $0x190] sm:$0xff] %vm885, %v871
  %937 = vst.msk [vmem:[%s4 + $0x198] sm:$0xff] %vm885, %v872
  %938 = vst.msk [vmem:[%s4 + $0x1a0] sm:$0xff] %vm885, %v873
  %939 = vst.msk [vmem:[%s4 + $0x1a8] sm:$0xff] %vm885, %v874
  %940 = vst.msk [vmem:[%s4 + $0x1b0] sm:$0xff] %vm885, %v875
  %941 = vst.msk [vmem:[%s4 + $0x1b8] sm:$0xff] %vm885, %v876
  %942 = vst.msk [vmem:[%s4 + $0x1c0] sm:$0xff] %vm885, %v877
  %943 = vst.msk [vmem:[%s4 + $0x1c8] sm:$0xff] %vm885, %v878
  %944 = vst.msk [vmem:[%s4 + $0x1d0] sm:$0xff] %vm885, %v879
  %945 = vst.msk [vmem:[%s4 + $0x1d8] sm:$0xff] %vm885, %v880
  %946 = vst.msk [vmem:[%s4 + $0x1e0] sm:$0xff] %vm885, %v881
  %947 = vst.msk [vmem:[%s4 + $0x1e8] sm:$0xff] %vm885, %v882
  %948 = vst.msk [vmem:[%s4 + $0x1f0] sm:$0xff] %vm885, %v883
  %949 = vst.msk [vmem:[%s4 + $0x1f8] sm:$0xff] %vm885, %v884
  // Predicated region
  $region18: #{densenet_forward.14} parent=0 // pred_check
    _
  $region19: #{densenet_forward.14} parent=0 // pred_check_branch
    %951 = sbr.rel (0) target = $region21
  $region20: #{densenet_forward.14} parent=0 // pred_region
    _
  $region21: #{densenet_forward.14} parent=0 // pred_fallthru
    _
  // Predicated region
  $region22: #{densenet_forward.14} parent=0 // pred_check
    _
  $region23: #{densenet_forward.14} parent=0 // pred_check_branch
    %953 = sbr.rel (0) target = $region25
  $region24: #{densenet_forward.14} parent=0 // pred_region
    _
  $region25: #{densenet_forward.14} parent=0 // pred_fallthru
    _

// kernel: densenet_forward.15
$region0: #{densenet_forward.15}
  #allocation0 [shape = 'u32[]', space=smem, size = 0x4, offset = 0x4, fixed_abs, tag = 'smem constant byte address 0x4 - core index']
  #allocation1 [shape = 'u32[144,128]{1,0:T(1,128)}', space=vmem, size = 0x12000, scoped, tag = 'internal scratch']
  %s0 = inlined_call_operand.vmem [shape: f32[128,9,16], index: 0, kind: input, shape index: {}]
  %s1 = inlined_call_operand.vmem [shape: f32[128,16], index: 1, kind: output, shape index: {}]
  %s2 = sld [smem:[#allocation0]]
  $region14: #{densenet_forward.15} parent=0
    _
  %s4 = ssub.s32 1, %s2
  %s5 = scalar_select 0, %s4, %s2
  // Predicated region
  $region2: #{densenet_forward.15} parent=0 // pred_check
    _
  $region3: #{densenet_forward.15} parent=0 // pred_check_branch
    %7 = sbr.rel (0) target = $region5
  $region4: #{densenet_forward.15} parent=0 // pred_region
    _
  $region5: #{densenet_forward.15} parent=0 // pred_fallthru
    _
  %v8 = vld [vmem:[%s0] sm:$0xff]
  %v9 = vld [vmem:[%s0 + $0x8] sm:$0x1]
  %v10 = vld [vmem:[%s0 + $0x10] sm:$0xff]
  %v11 = vld [vmem:[%s0 + $0x18] sm:$0x1]
  %v12 = vld [vmem:[%s0 + $0x20] sm:$0xff]
  %v13 = vld [vmem:[%s0 + $0x28] sm:$0x1]
  %v14 = vld [vmem:[%s0 + $0x30] sm:$0xff]
  %v15 = vld [vmem:[%s0 + $0x38] sm:$0x1]
  %v16 = vld [vmem:[%s0 + $0x40] sm:$0xff]
  %v17 = vld [vmem:[%s0 + $0x48] sm:$0x1]
  %v18 = vld [vmem:[%s0 + $0x50] sm:$0xff]
  %v19 = vld [vmem:[%s0 + $0x58] sm:$0x1]
  %v20 = vld [vmem:[%s0 + $0x60] sm:$0xff]
  %v21 = vld [vmem:[%s0 + $0x68] sm:$0x1]
  %v22 = vld [vmem:[%s0 + $0x70] sm:$0xff]
  %v23 = vld [vmem:[%s0 + $0x78] sm:$0x1]
  %v24 = vld [vmem:[%s0 + $0x80] sm:$0xff]
  %v25 = vld [vmem:[%s0 + $0x88] sm:$0x1]
  %v26 = vld [vmem:[%s0 + $0x90] sm:$0xff]
  %v27 = vld [vmem:[%s0 + $0x98] sm:$0x1]
  %v28 = vld [vmem:[%s0 + $0xa0] sm:$0xff]
  %v29 = vld [vmem:[%s0 + $0xa8] sm:$0x1]
  %v30 = vld [vmem:[%s0 + $0xb0] sm:$0xff]
  %v31 = vld [vmem:[%s0 + $0xb8] sm:$0x1]
  %v32 = vld [vmem:[%s0 + $0xc0] sm:$0xff]
  %v33 = vld [vmem:[%s0 + $0xc8] sm:$0x1]
  %v34 = vld [vmem:[%s0 + $0xd0] sm:$0xff]
  %v35 = vld [vmem:[%s0 + $0xd8] sm:$0x1]
  %v36 = vld [vmem:[%s0 + $0xe0] sm:$0xff]
  %v37 = vld [vmem:[%s0 + $0xe8] sm:$0x1]
  %v38 = vld [vmem:[%s0 + $0xf0] sm:$0xff]
  %v39 = vld [vmem:[%s0 + $0xf8] sm:$0x1]
  %v40 = vld [vmem:[%s0 + $0x100] sm:$0xff]
  %v41 = vld [vmem:[%s0 + $0x108] sm:$0x1]
  %v42 = vld [vmem:[%s0 + $0x110] sm:$0xff]
  %v43 = vld [vmem:[%s0 + $0x118] sm:$0x1]
  %v44 = vld [vmem:[%s0 + $0x120] sm:$0xff]
  %v45 = vld [vmem:[%s0 + $0x128] sm:$0x1]
  %v46 = vld [vmem:[%s0 + $0x130] sm:$0xff]
  %v47 = vld [vmem:[%s0 + $0x138] sm:$0x1]
  %v48 = vld [vmem:[%s0 + $0x140] sm:$0xff]
  %v49 = vld [vmem:[%s0 + $0x148] sm:$0x1]
  %v50 = vld [vmem:[%s0 + $0x150] sm:$0xff]
  %v51 = vld [vmem:[%s0 + $0x158] sm:$0x1]
  %v52 = vld [vmem:[%s0 + $0x160] sm:$0xff]
  %v53 = vld [vmem:[%s0 + $0x168] sm:$0x1]
  %v54 = vld [vmem:[%s0 + $0x170] sm:$0xff]
  %v55 = vld [vmem:[%s0 + $0x178] sm:$0x1]
  %v56 = vld [vmem:[%s0 + $0x180] sm:$0xff]
  %v57 = vld [vmem:[%s0 + $0x188] sm:$0x1]
  %v58 = vld [vmem:[%s0 + $0x190] sm:$0xff]
  %v59 = vld [vmem:[%s0 + $0x198] sm:$0x1]
  %v60 = vld [vmem:[%s0 + $0x1a0] sm:$0xff]
  %v61 = vld [vmem:[%s0 + $0x1a8] sm:$0x1]
  %v62 = vld [vmem:[%s0 + $0x1b0] sm:$0xff]
  %v63 = vld [vmem:[%s0 + $0x1b8] sm:$0x1]
  %v64 = vld [vmem:[%s0 + $0x1c0] sm:$0xff]
  %v65 = vld [vmem:[%s0 + $0x1c8] sm:$0x1]
  %v66 = vld [vmem:[%s0 + $0x1d0] sm:$0xff]
  %v67 = vld [vmem:[%s0 + $0x1d8] sm:$0x1]
  %v68 = vld [vmem:[%s0 + $0x1e0] sm:$0xff]
  %v69 = vld [vmem:[%s0 + $0x1e8] sm:$0x1]
  %v70 = vld [vmem:[%s0 + $0x1f0] sm:$0xff]
  %v71 = vld [vmem:[%s0 + $0x1f8] sm:$0x1]
  %v72 = vld [vmem:[%s0 + $0x200] sm:$0xff]
  %v73 = vld [vmem:[%s0 + $0x208] sm:$0x1]
  %v74 = vld [vmem:[%s0 + $0x210] sm:$0xff]
  %v75 = vld [vmem:[%s0 + $0x218] sm:$0x1]
  %v76 = vld [vmem:[%s0 + $0x220] sm:$0xff]
  %v77 = vld [vmem:[%s0 + $0x228] sm:$0x1]
  %v78 = vld [vmem:[%s0 + $0x230] sm:$0xff]
  %v79 = vld [vmem:[%s0 + $0x238] sm:$0x1]
  %v80 = vld [vmem:[%s0 + $0x240] sm:$0xff]
  %v81 = vld [vmem:[%s0 + $0x248] sm:$0x1]
  %v82 = vld [vmem:[%s0 + $0x250] sm:$0xff]
  %v83 = vld [vmem:[%s0 + $0x258] sm:$0x1]
  %v84 = vld [vmem:[%s0 + $0x260] sm:$0xff]
  %v85 = vld [vmem:[%s0 + $0x268] sm:$0x1]
  %v86 = vld [vmem:[%s0 + $0x270] sm:$0xff]
  %v87 = vld [vmem:[%s0 + $0x278] sm:$0x1]
  %v88 = vld [vmem:[%s0 + $0x280] sm:$0xff]
  %v89 = vld [vmem:[%s0 + $0x288] sm:$0x1]
  %v90 = vld [vmem:[%s0 + $0x290] sm:$0xff]
  %v91 = vld [vmem:[%s0 + $0x298] sm:$0x1]
  %v92 = vld [vmem:[%s0 + $0x2a0] sm:$0xff]
  %v93 = vld [vmem:[%s0 + $0x2a8] sm:$0x1]
  %v94 = vld [vmem:[%s0 + $0x2b0] sm:$0xff]
  %v95 = vld [vmem:[%s0 + $0x2b8] sm:$0x1]
  %v96 = vld [vmem:[%s0 + $0x2c0] sm:$0xff]
  %v97 = vld [vmem:[%s0 + $0x2c8] sm:$0x1]
  %v98 = vld [vmem:[%s0 + $0x2d0] sm:$0xff]
  %v99 = vld [vmem:[%s0 + $0x2d8] sm:$0x1]
  %v100 = vld [vmem:[%s0 + $0x2e0] sm:$0xff]
  %v101 = vld [vmem:[%s0 + $0x2e8] sm:$0x1]
  %v102 = vld [vmem:[%s0 + $0x2f0] sm:$0xff]
  %v103 = vld [vmem:[%s0 + $0x2f8] sm:$0x1]
  %v104 = vld [vmem:[%s0 + $0x300] sm:$0xff]
  %v105 = vld [vmem:[%s0 + $0x308] sm:$0x1]
  %v106 = vld [vmem:[%s0 + $0x310] sm:$0xff]
  %v107 = vld [vmem:[%s0 + $0x318] sm:$0x1]
  %v108 = vld [vmem:[%s0 + $0x320] sm:$0xff]
  %v109 = vld [vmem:[%s0 + $0x328] sm:$0x1]
  %v110 = vld [vmem:[%s0 + $0x330] sm:$0xff]
  %v111 = vld [vmem:[%s0 + $0x338] sm:$0x1]
  %v112 = vld [vmem:[%s0 + $0x340] sm:$0xff]
  %v113 = vld [vmem:[%s0 + $0x348] sm:$0x1]
  %v114 = vld [vmem:[%s0 + $0x350] sm:$0xff]
  %v115 = vld [vmem:[%s0 + $0x358] sm:$0x1]
  %v116 = vld [vmem:[%s0 + $0x360] sm:$0xff]
  %v117 = vld [vmem:[%s0 + $0x368] sm:$0x1]
  %v118 = vld [vmem:[%s0 + $0x370] sm:$0xff]
  %v119 = vld [vmem:[%s0 + $0x378] sm:$0x1]
  %v120 = vld [vmem:[%s0 + $0x380] sm:$0xff]
  %v121 = vld [vmem:[%s0 + $0x388] sm:$0x1]
  %v122 = vld [vmem:[%s0 + $0x390] sm:$0xff]
  %v123 = vld [vmem:[%s0 + $0x398] sm:$0x1]
  %v124 = vld [vmem:[%s0 + $0x3a0] sm:$0xff]
  %v125 = vld [vmem:[%s0 + $0x3a8] sm:$0x1]
  %v126 = vld [vmem:[%s0 + $0x3b0] sm:$0xff]
  %v127 = vld [vmem:[%s0 + $0x3b8] sm:$0x1]
  %v128 = vld [vmem:[%s0 + $0x3c0] sm:$0xff]
  %v129 = vld [vmem:[%s0 + $0x3c8] sm:$0x1]
  %v130 = vld [vmem:[%s0 + $0x3d0] sm:$0xff]
  %v131 = vld [vmem:[%s0 + $0x3d8] sm:$0x1]
  %v132 = vld [vmem:[%s0 + $0x3e0] sm:$0xff]
  %v133 = vld [vmem:[%s0 + $0x3e8] sm:$0x1]
  %v134 = vld [vmem:[%s0 + $0x3f0] sm:$0xff]
  %v135 = vld [vmem:[%s0 + $0x3f8] sm:$0x1]
  %v136 = vld [vmem:[%s0 + $0x400] sm:$0xff]
  %v137 = vld [vmem:[%s0 + $0x408] sm:$0x1]
  %v138 = vld [vmem:[%s0 + $0x410] sm:$0xff]
  %v139 = vld [vmem:[%s0 + $0x418] sm:$0x1]
  %v140 = vld [vmem:[%s0 + $0x420] sm:$0xff]
  %v141 = vld [vmem:[%s0 + $0x428] sm:$0x1]
  %v142 = vld [vmem:[%s0 + $0x430] sm:$0xff]
  %v143 = vld [vmem:[%s0 + $0x438] sm:$0x1]
  %v144 = vld [vmem:[%s0 + $0x440] sm:$0xff]
  %v145 = vld [vmem:[%s0 + $0x448] sm:$0x1]
  %v146 = vld [vmem:[%s0 + $0x450] sm:$0xff]
  %v147 = vld [vmem:[%s0 + $0x458] sm:$0x1]
  %v148 = vld [vmem:[%s0 + $0x460] sm:$0xff]
  %v149 = vld [vmem:[%s0 + $0x468] sm:$0x1]
  %v150 = vld [vmem:[%s0 + $0x470] sm:$0xff]
  %v151 = vld [vmem:[%s0 + $0x478] sm:$0x1]
  %v152 = vld [vmem:[%s0 + $0x480] sm:$0xff]
  %v153 = vld [vmem:[%s0 + $0x488] sm:$0x1]
  %v154 = vld [vmem:[%s0 + $0x490] sm:$0xff]
  %v155 = vld [vmem:[%s0 + $0x498] sm:$0x1]
  %v156 = vld [vmem:[%s0 + $0x4a0] sm:$0xff]
  %v157 = vld [vmem:[%s0 + $0x4a8] sm:$0x1]
  %v158 = vld [vmem:[%s0 + $0x4b0] sm:$0xff]
  %v159 = vld [vmem:[%s0 + $0x4b8] sm:$0x1]
  %v160 = vld [vmem:[%s0 + $0x4c0] sm:$0xff]
  %v161 = vld [vmem:[%s0 + $0x4c8] sm:$0x1]
  %v162 = vld [vmem:[%s0 + $0x4d0] sm:$0xff]
  %v163 = vld [vmem:[%s0 + $0x4d8] sm:$0x1]
  %v164 = vld [vmem:[%s0 + $0x4e0] sm:$0xff]
  %v165 = vld [vmem:[%s0 + $0x4e8] sm:$0x1]
  %v166 = vld [vmem:[%s0 + $0x4f0] sm:$0xff]
  %v167 = vld [vmem:[%s0 + $0x4f8] sm:$0x1]
  %v168 = vld [vmem:[%s0 + $0x500] sm:$0xff]
  %v169 = vld [vmem:[%s0 + $0x508] sm:$0x1]
  %v170 = vld [vmem:[%s0 + $0x510] sm:$0xff]
  %v171 = vld [vmem:[%s0 + $0x518] sm:$0x1]
  %v172 = vld [vmem:[%s0 + $0x520] sm:$0xff]
  %v173 = vld [vmem:[%s0 + $0x528] sm:$0x1]
  %v174 = vld [vmem:[%s0 + $0x530] sm:$0xff]
  %v175 = vld [vmem:[%s0 + $0x538] sm:$0x1]
  %v176 = vld [vmem:[%s0 + $0x540] sm:$0xff]
  %v177 = vld [vmem:[%s0 + $0x548] sm:$0x1]
  %v178 = vld [vmem:[%s0 + $0x550] sm:$0xff]
  %v179 = vld [vmem:[%s0 + $0x558] sm:$0x1]
  %v180 = vld [vmem:[%s0 + $0x560] sm:$0xff]
  %v181 = vld [vmem:[%s0 + $0x568] sm:$0x1]
  %v182 = vld [vmem:[%s0 + $0x570] sm:$0xff]
  %v183 = vld [vmem:[%s0 + $0x578] sm:$0x1]
  %v184 = vld [vmem:[%s0 + $0x580] sm:$0xff]
  %v185 = vld [vmem:[%s0 + $0x588] sm:$0x1]
  %v186 = vld [vmem:[%s0 + $0x590] sm:$0xff]
  %v187 = vld [vmem:[%s0 + $0x598] sm:$0x1]
  %v188 = vld [vmem:[%s0 + $0x5a0] sm:$0xff]
  %v189 = vld [vmem:[%s0 + $0x5a8] sm:$0x1]
  %v190 = vld [vmem:[%s0 + $0x5b0] sm:$0xff]
  %v191 = vld [vmem:[%s0 + $0x5b8] sm:$0x1]
  %v192 = vld [vmem:[%s0 + $0x5c0] sm:$0xff]
  %v193 = vld [vmem:[%s0 + $0x5c8] sm:$0x1]
  %v194 = vld [vmem:[%s0 + $0x5d0] sm:$0xff]
  %v195 = vld [vmem:[%s0 + $0x5d8] sm:$0x1]
  %v196 = vld [vmem:[%s0 + $0x5e0] sm:$0xff]
  %v197 = vld [vmem:[%s0 + $0x5e8] sm:$0x1]
  %v198 = vld [vmem:[%s0 + $0x5f0] sm:$0xff]
  %v199 = vld [vmem:[%s0 + $0x5f8] sm:$0x1]
  %v200 = vld [vmem:[%s0 + $0x600] sm:$0xff]
  %v201 = vld [vmem:[%s0 + $0x608] sm:$0x1]
  %v202 = vld [vmem:[%s0 + $0x610] sm:$0xff]
  %v203 = vld [vmem:[%s0 + $0x618] sm:$0x1]
  %v204 = vld [vmem:[%s0 + $0x620] sm:$0xff]
  %v205 = vld [vmem:[%s0 + $0x628] sm:$0x1]
  %v206 = vld [vmem:[%s0 + $0x630] sm:$0xff]
  %v207 = vld [vmem:[%s0 + $0x638] sm:$0x1]
  %v208 = vld [vmem:[%s0 + $0x640] sm:$0xff]
  %v209 = vld [vmem:[%s0 + $0x648] sm:$0x1]
  %v210 = vld [vmem:[%s0 + $0x650] sm:$0xff]
  %v211 = vld [vmem:[%s0 + $0x658] sm:$0x1]
  %v212 = vld [vmem:[%s0 + $0x660] sm:$0xff]
  %v213 = vld [vmem:[%s0 + $0x668] sm:$0x1]
  %v214 = vld [vmem:[%s0 + $0x670] sm:$0xff]
  %v215 = vld [vmem:[%s0 + $0x678] sm:$0x1]
  %v216 = vld [vmem:[%s0 + $0x680] sm:$0xff]
  %v217 = vld [vmem:[%s0 + $0x688] sm:$0x1]
  %v218 = vld [vmem:[%s0 + $0x690] sm:$0xff]
  %v219 = vld [vmem:[%s0 + $0x698] sm:$0x1]
  %v220 = vld [vmem:[%s0 + $0x6a0] sm:$0xff]
  %v221 = vld [vmem:[%s0 + $0x6a8] sm:$0x1]
  %v222 = vld [vmem:[%s0 + $0x6b0] sm:$0xff]
  %v223 = vld [vmem:[%s0 + $0x6b8] sm:$0x1]
  %v224 = vld [vmem:[%s0 + $0x6c0] sm:$0xff]
  %v225 = vld [vmem:[%s0 + $0x6c8] sm:$0x1]
  %v226 = vld [vmem:[%s0 + $0x6d0] sm:$0xff]
  %v227 = vld [vmem:[%s0 + $0x6d8] sm:$0x1]
  %v228 = vld [vmem:[%s0 + $0x6e0] sm:$0xff]
  %v229 = vld [vmem:[%s0 + $0x6e8] sm:$0x1]
  %v230 = vld [vmem:[%s0 + $0x6f0] sm:$0xff]
  %v231 = vld [vmem:[%s0 + $0x6f8] sm:$0x1]
  %v232 = vld [vmem:[%s0 + $0x700] sm:$0xff]
  %v233 = vld [vmem:[%s0 + $0x708] sm:$0x1]
  %v234 = vld [vmem:[%s0 + $0x710] sm:$0xff]
  %v235 = vld [vmem:[%s0 + $0x718] sm:$0x1]
  %v236 = vld [vmem:[%s0 + $0x720] sm:$0xff]
  %v237 = vld [vmem:[%s0 + $0x728] sm:$0x1]
  %v238 = vld [vmem:[%s0 + $0x730] sm:$0xff]
  %v239 = vld [vmem:[%s0 + $0x738] sm:$0x1]
  %v240 = vld [vmem:[%s0 + $0x740] sm:$0xff]
  %v241 = vld [vmem:[%s0 + $0x748] sm:$0x1]
  %v242 = vld [vmem:[%s0 + $0x750] sm:$0xff]
  %v243 = vld [vmem:[%s0 + $0x758] sm:$0x1]
  %v244 = vld [vmem:[%s0 + $0x760] sm:$0xff]
  %v245 = vld [vmem:[%s0 + $0x768] sm:$0x1]
  %v246 = vld [vmem:[%s0 + $0x770] sm:$0xff]
  %v247 = vld [vmem:[%s0 + $0x778] sm:$0x1]
  %v248 = vld [vmem:[%s0 + $0x780] sm:$0xff]
  %v249 = vld [vmem:[%s0 + $0x788] sm:$0x1]
  %v250 = vld [vmem:[%s0 + $0x790] sm:$0xff]
  %v251 = vld [vmem:[%s0 + $0x798] sm:$0x1]
  %v252 = vld [vmem:[%s0 + $0x7a0] sm:$0xff]
  %v253 = vld [vmem:[%s0 + $0x7a8] sm:$0x1]
  %v254 = vld [vmem:[%s0 + $0x7b0] sm:$0xff]
  %v255 = vld [vmem:[%s0 + $0x7b8] sm:$0x1]
  %v256 = vld [vmem:[%s0 + $0x7c0] sm:$0xff]
  %v257 = vld [vmem:[%s0 + $0x7c8] sm:$0x1]
  %v258 = vld [vmem:[%s0 + $0x7d0] sm:$0xff]
  %v259 = vld [vmem:[%s0 + $0x7d8] sm:$0x1]
  %v260 = vld [vmem:[%s0 + $0x7e0] sm:$0xff]
  %v261 = vld [vmem:[%s0 + $0x7e8] sm:$0x1]
  %v262 = vld [vmem:[%s0 + $0x7f0] sm:$0xff]
  %v263 = vld [vmem:[%s0 + $0x7f8] sm:$0x1]
  %vm264 = vcmask 130048
  %v265 = vsel %vm264, %v8, -inf
  %vm266 = vcmask 122880
  %v267 = vsel %vm266, %v9, -inf
  %v268 = vmax.f32 %v265, %v267
  %v269 = vrot.slane %v268, 4
  %v270 = vmax.f32 %v268, %v269
  %v271 = vrot.slane %v270, 2
  %v272 = vmax.f32 %v270, %v271
  %v273 = vrot.slane %v272, 1
  %v274 = vmax.f32 %v272, %v273
  %v275 = vsel %vm264, %v10, -inf
  %v276 = vsel %vm266, %v11, -inf
  %v277 = vmax.f32 %v275, %v276
  %v278 = vrot.slane %v277, 4
  %v279 = vmax.f32 %v277, %v278
  %v280 = vrot.slane %v279, 2
  %v281 = vmax.f32 %v279, %v280
  %v282 = vrot.slane %v281, 1
  %v283 = vmax.f32 %v281, %v282
  %v284 = vsel %vm264, %v12, -inf
  %v285 = vsel %vm266, %v13, -inf
  %v286 = vmax.f32 %v284, %v285
  %v287 = vrot.slane %v286, 4
  %v288 = vmax.f32 %v286, %v287
  %v289 = vrot.slane %v288, 2
  %v290 = vmax.f32 %v288, %v289
  %v291 = vrot.slane %v290, 1
  %v292 = vmax.f32 %v290, %v291
  %v293 = vsel %vm264, %v14, -inf
  %v294 = vsel %vm266, %v15, -inf
  %v295 = vmax.f32 %v293, %v294
  %v296 = vrot.slane %v295, 4
  %v297 = vmax.f32 %v295, %v296
  %v298 = vrot.slane %v297, 2
  %v299 = vmax.f32 %v297, %v298
  %v300 = vrot.slane %v299, 1
  %v301 = vmax.f32 %v299, %v300
  %v302 = vsel %vm264, %v16, -inf
  %v303 = vsel %vm266, %v17, -inf
  %v304 = vmax.f32 %v302, %v303
  %v305 = vrot.slane %v304, 4
  %v306 = vmax.f32 %v304, %v305
  %v307 = vrot.slane %v306, 2
  %v308 = vmax.f32 %v306, %v307
  %v309 = vrot.slane %v308, 1
  %v310 = vmax.f32 %v308, %v309
  %v311 = vsel %vm264, %v18, -inf
  %v312 = vsel %vm266, %v19, -inf
  %v313 = vmax.f32 %v311, %v312
  %v314 = vrot.slane %v313, 4
  %v315 = vmax.f32 %v313, %v314
  %v316 = vrot.slane %v315, 2
  %v317 = vmax.f32 %v315, %v316
  %v318 = vrot.slane %v317, 1
  %v319 = vmax.f32 %v317, %v318
  %v320 = vsel %vm264, %v20, -inf
  %v321 = vsel %vm266, %v21, -inf
  %v322 = vmax.f32 %v320, %v321
  %v323 = vrot.slane %v322, 4
  %v324 = vmax.f32 %v322, %v323
  %v325 = vrot.slane %v324, 2
  %v326 = vmax.f32 %v324, %v325
  %v327 = vrot.slane %v326, 1
  %v328 = vmax.f32 %v326, %v327
  %v329 = vsel %vm264, %v22, -inf
  %v330 = vsel %vm266, %v23, -inf
  %v331 = vmax.f32 %v329, %v330
  %v332 = vrot.slane %v331, 4
  %v333 = vmax.f32 %v331, %v332
  %v334 = vrot.slane %v333, 2
  %v335 = vmax.f32 %v333, %v334
  %v336 = vrot.slane %v335, 1
  %v337 = vmax.f32 %v335, %v336
  %v338 = vsel %vm264, %v24, -inf
  %v339 = vsel %vm266, %v25, -inf
  %v340 = vmax.f32 %v338, %v339
  %v341 = vrot.slane %v340, 4
  %v342 = vmax.f32 %v340, %v341
  %v343 = vrot.slane %v342, 2
  %v344 = vmax.f32 %v342, %v343
  %v345 = vrot.slane %v344, 1
  %v346 = vmax.f32 %v344, %v345
  %v347 = vsel %vm264, %v26, -inf
  %v348 = vsel %vm266, %v27, -inf
  %v349 = vmax.f32 %v347, %v348
  %v350 = vrot.slane %v349, 4
  %v351 = vmax.f32 %v349, %v350
  %v352 = vrot.slane %v351, 2
  %v353 = vmax.f32 %v351, %v352
  %v354 = vrot.slane %v353, 1
  %v355 = vmax.f32 %v353, %v354
  %v356 = vsel %vm264, %v28, -inf
  %v357 = vsel %vm266, %v29, -inf
  %v358 = vmax.f32 %v356, %v357
  %v359 = vrot.slane %v358, 4
  %v360 = vmax.f32 %v358, %v359
  %v361 = vrot.slane %v360, 2
  %v362 = vmax.f32 %v360, %v361
  %v363 = vrot.slane %v362, 1
  %v364 = vmax.f32 %v362, %v363
  %v365 = vsel %vm264, %v30, -inf
  %v366 = vsel %vm266, %v31, -inf
  %v367 = vmax.f32 %v365, %v366
  %v368 = vrot.slane %v367, 4
  %v369 = vmax.f32 %v367, %v368
  %v370 = vrot.slane %v369, 2
  %v371 = vmax.f32 %v369, %v370
  %v372 = vrot.slane %v371, 1
  %v373 = vmax.f32 %v371, %v372
  %v374 = vsel %vm264, %v32, -inf
  %v375 = vsel %vm266, %v33, -inf
  %v376 = vmax.f32 %v374, %v375
  %v377 = vrot.slane %v376, 4
  %v378 = vmax.f32 %v376, %v377
  %v379 = vrot.slane %v378, 2
  %v380 = vmax.f32 %v378, %v379
  %v381 = vrot.slane %v380, 1
  %v382 = vmax.f32 %v380, %v381
  %v383 = vsel %vm264, %v34, -inf
  %v384 = vsel %vm266, %v35, -inf
  %v385 = vmax.f32 %v383, %v384
  %v386 = vrot.slane %v385, 4
  %v387 = vmax.f32 %v385, %v386
  %v388 = vrot.slane %v387, 2
  %v389 = vmax.f32 %v387, %v388
  %v390 = vrot.slane %v389, 1
  %v391 = vmax.f32 %v389, %v390
  %v392 = vsel %vm264, %v36, -inf
  %v393 = vsel %vm266, %v37, -inf
  %v394 = vmax.f32 %v392, %v393
  %v395 = vrot.slane %v394, 4
  %v396 = vmax.f32 %v394, %v395
  %v397 = vrot.slane %v396, 2
  %v398 = vmax.f32 %v396, %v397
  %v399 = vrot.slane %v398, 1
  %v400 = vmax.f32 %v398, %v399
  %v401 = vsel %vm264, %v38, -inf
  %v402 = vsel %vm266, %v39, -inf
  %v403 = vmax.f32 %v401, %v402
  %v404 = vrot.slane %v403, 4
  %v405 = vmax.f32 %v403, %v404
  %v406 = vrot.slane %v405, 2
  %v407 = vmax.f32 %v405, %v406
  %v408 = vrot.slane %v407, 1
  %v409 = vmax.f32 %v407, %v408
  %v410 = vsel %vm264, %v40, -inf
  %v411 = vsel %vm266, %v41, -inf
  %v412 = vmax.f32 %v410, %v411
  %v413 = vrot.slane %v412, 4
  %v414 = vmax.f32 %v412, %v413
  %v415 = vrot.slane %v414, 2
  %v416 = vmax.f32 %v414, %v415
  %v417 = vrot.slane %v416, 1
  %v418 = vmax.f32 %v416, %v417
  %v419 = vsel %vm264, %v42, -inf
  %v420 = vsel %vm266, %v43, -inf
  %v421 = vmax.f32 %v419, %v420
  %v422 = vrot.slane %v421, 4
  %v423 = vmax.f32 %v421, %v422
  %v424 = vrot.slane %v423, 2
  %v425 = vmax.f32 %v423, %v424
  %v426 = vrot.slane %v425, 1
  %v427 = vmax.f32 %v425, %v426
  %v428 = vsel %vm264, %v44, -inf
  %v429 = vsel %vm266, %v45, -inf
  %v430 = vmax.f32 %v428, %v429
  %v431 = vrot.slane %v430, 4
  %v432 = vmax.f32 %v430, %v431
  %v433 = vrot.slane %v432, 2
  %v434 = vmax.f32 %v432, %v433
  %v435 = vrot.slane %v434, 1
  %v436 = vmax.f32 %v434, %v435
  %v437 = vsel %vm264, %v46, -inf
  %v438 = vsel %vm266, %v47, -inf
  %v439 = vmax.f32 %v437, %v438
  %v440 = vrot.slane %v439, 4
  %v441 = vmax.f32 %v439, %v440
  %v442 = vrot.slane %v441, 2
  %v443 = vmax.f32 %v441, %v442
  %v444 = vrot.slane %v443, 1
  %v445 = vmax.f32 %v443, %v444
  %v446 = vsel %vm264, %v48, -inf
  %v447 = vsel %vm266, %v49, -inf
  %v448 = vmax.f32 %v446, %v447
  %v449 = vrot.slane %v448, 4
  %v450 = vmax.f32 %v448, %v449
  %v451 = vrot.slane %v450, 2
  %v452 = vmax.f32 %v450, %v451
  %v453 = vrot.slane %v452, 1
  %v454 = vmax.f32 %v452, %v453
  %v455 = vsel %vm264, %v50, -inf
  %v456 = vsel %vm266, %v51, -inf
  %v457 = vmax.f32 %v455, %v456
  %v458 = vrot.slane %v457, 4
  %v459 = vmax.f32 %v457, %v458
  %v460 = vrot.slane %v459, 2
  %v461 = vmax.f32 %v459, %v460
  %v462 = vrot.slane %v461, 1
  %v463 = vmax.f32 %v461, %v462
  %v464 = vsel %vm264, %v52, -inf
  %v465 = vsel %vm266, %v53, -inf
  %v466 = vmax.f32 %v464, %v465
  %v467 = vrot.slane %v466, 4
  %v468 = vmax.f32 %v466, %v467
  %v469 = vrot.slane %v468, 2
  %v470 = vmax.f32 %v468, %v469
  %v471 = vrot.slane %v470, 1
  %v472 = vmax.f32 %v470, %v471
  %v473 = vsel %vm264, %v54, -inf
  %v474 = vsel %vm266, %v55, -inf
  %v475 = vmax.f32 %v473, %v474
  %v476 = vrot.slane %v475, 4
  %v477 = vmax.f32 %v475, %v476
  %v478 = vrot.slane %v477, 2
  %v479 = vmax.f32 %v477, %v478
  %v480 = vrot.slane %v479, 1
  %v481 = vmax.f32 %v479, %v480
  %v482 = vsel %vm264, %v56, -inf
  %v483 = vsel %vm266, %v57, -inf
  %v484 = vmax.f32 %v482, %v483
  %v485 = vrot.slane %v484, 4
  %v486 = vmax.f32 %v484, %v485
  %v487 = vrot.slane %v486, 2
  %v488 = vmax.f32 %v486, %v487
  %v489 = vrot.slane %v488, 1
  %v490 = vmax.f32 %v488, %v489
  %v491 = vsel %vm264, %v58, -inf
  %v492 = vsel %vm266, %v59, -inf
  %v493 = vmax.f32 %v491, %v492
  %v494 = vrot.slane %v493, 4
  %v495 = vmax.f32 %v493, %v494
  %v496 = vrot.slane %v495, 2
  %v497 = vmax.f32 %v495, %v496
  %v498 = vrot.slane %v497, 1
  %v499 = vmax.f32 %v497, %v498
  %v500 = vsel %vm264, %v60, -inf
  %v501 = vsel %vm266, %v61, -inf
  %v502 = vmax.f32 %v500, %v501
  %v503 = vrot.slane %v502, 4
  %v504 = vmax.f32 %v502, %v503
  %v505 = vrot.slane %v504, 2
  %v506 = vmax.f32 %v504, %v505
  %v507 = vrot.slane %v506, 1
  %v508 = vmax.f32 %v506, %v507
  %v509 = vsel %vm264, %v62, -inf
  %v510 = vsel %vm266, %v63, -inf
  %v511 = vmax.f32 %v509, %v510
  %v512 = vrot.slane %v511, 4
  %v513 = vmax.f32 %v511, %v512
  %v514 = vrot.slane %v513, 2
  %v515 = vmax.f32 %v513, %v514
  %v516 = vrot.slane %v515, 1
  %v517 = vmax.f32 %v515, %v516
  %v518 = vsel %vm264, %v64, -inf
  %v519 = vsel %vm266, %v65, -inf
  %v520 = vmax.f32 %v518, %v519
  %v521 = vrot.slane %v520, 4
  %v522 = vmax.f32 %v520, %v521
  %v523 = vrot.slane %v522, 2
  %v524 = vmax.f32 %v522, %v523
  %v525 = vrot.slane %v524, 1
  %v526 = vmax.f32 %v524, %v525
  %v527 = vsel %vm264, %v66, -inf
  %v528 = vsel %vm266, %v67, -inf
  %v529 = vmax.f32 %v527, %v528
  %v530 = vrot.slane %v529, 4
  %v531 = vmax.f32 %v529, %v530
  %v532 = vrot.slane %v531, 2
  %v533 = vmax.f32 %v531, %v532
  %v534 = vrot.slane %v533, 1
  %v535 = vmax.f32 %v533, %v534
  %v536 = vsel %vm264, %v68, -inf
  %v537 = vsel %vm266, %v69, -inf
  %v538 = vmax.f32 %v536, %v537
  %v539 = vrot.slane %v538, 4
  %v540 = vmax.f32 %v538, %v539
  %v541 = vrot.slane %v540, 2
  %v542 = vmax.f32 %v540, %v541
  %v543 = vrot.slane %v542, 1
  %v544 = vmax.f32 %v542, %v543
  %v545 = vsel %vm264, %v70, -inf
  %v546 = vsel %vm266, %v71, -inf
  %v547 = vmax.f32 %v545, %v546
  %v548 = vrot.slane %v547, 4
  %v549 = vmax.f32 %v547, %v548
  %v550 = vrot.slane %v549, 2
  %v551 = vmax.f32 %v549, %v550
  %v552 = vrot.slane %v551, 1
  %v553 = vmax.f32 %v551, %v552
  %v554 = vsel %vm264, %v72, -inf
  %v555 = vsel %vm266, %v73, -inf
  %v556 = vmax.f32 %v554, %v555
  %v557 = vrot.slane %v556, 4
  %v558 = vmax.f32 %v556, %v557
  %v559 = vrot.slane %v558, 2
  %v560 = vmax.f32 %v558, %v559
  %v561 = vrot.slane %v560, 1
  %v562 = vmax.f32 %v560, %v561
  %v563 = vsel %vm264, %v74, -inf
  %v564 = vsel %vm266, %v75, -inf
  %v565 = vmax.f32 %v563, %v564
  %v566 = vrot.slane %v565, 4
  %v567 = vmax.f32 %v565, %v566
  %v568 = vrot.slane %v567, 2
  %v569 = vmax.f32 %v567, %v568
  %v570 = vrot.slane %v569, 1
  %v571 = vmax.f32 %v569, %v570
  %v572 = vsel %vm264, %v76, -inf
  %v573 = vsel %vm266, %v77, -inf
  %v574 = vmax.f32 %v572, %v573
  %v575 = vrot.slane %v574, 4
  %v576 = vmax.f32 %v574, %v575
  %v577 = vrot.slane %v576, 2
  %v578 = vmax.f32 %v576, %v577
  %v579 = vrot.slane %v578, 1
  %v580 = vmax.f32 %v578, %v579
  %v581 = vsel %vm264, %v78, -inf
  %v582 = vsel %vm266, %v79, -inf
  %v583 = vmax.f32 %v581, %v582
  %v584 = vrot.slane %v583, 4
  %v585 = vmax.f32 %v583, %v584
  %v586 = vrot.slane %v585, 2
  %v587 = vmax.f32 %v585, %v586
  %v588 = vrot.slane %v587, 1
  %v589 = vmax.f32 %v587, %v588
  %v590 = vsel %vm264, %v80, -inf
  %v591 = vsel %vm266, %v81, -inf
  %v592 = vmax.f32 %v590, %v591
  %v593 = vrot.slane %v592, 4
  %v594 = vmax.f32 %v592, %v593
  %v595 = vrot.slane %v594, 2
  %v596 = vmax.f32 %v594, %v595
  %v597 = vrot.slane %v596, 1
  %v598 = vmax.f32 %v596, %v597
  %v599 = vsel %vm264, %v82, -inf
  %v600 = vsel %vm266, %v83, -inf
  %v601 = vmax.f32 %v599, %v600
  %v602 = vrot.slane %v601, 4
  %v603 = vmax.f32 %v601, %v602
  %v604 = vrot.slane %v603, 2
  %v605 = vmax.f32 %v603, %v604
  %v606 = vrot.slane %v605, 1
  %v607 = vmax.f32 %v605, %v606
  %v608 = vsel %vm264, %v84, -inf
  %v609 = vsel %vm266, %v85, -inf
  %v610 = vmax.f32 %v608, %v609
  %v611 = vrot.slane %v610, 4
  %v612 = vmax.f32 %v610, %v611
  %v613 = vrot.slane %v612, 2
  %v614 = vmax.f32 %v612, %v613
  %v615 = vrot.slane %v614, 1
  %v616 = vmax.f32 %v614, %v615
  %v617 = vsel %vm264, %v86, -inf
  %v618 = vsel %vm266, %v87, -inf
  %v619 = vmax.f32 %v617, %v618
  %v620 = vrot.slane %v619, 4
  %v621 = vmax.f32 %v619, %v620
  %v622 = vrot.slane %v621, 2
  %v623 = vmax.f32 %v621, %v622
  %v624 = vrot.slane %v623, 1
  %v625 = vmax.f32 %v623, %v624
  %v626 = vsel %vm264, %v88, -inf
  %v627 = vsel %vm266, %v89, -inf
  %v628 = vmax.f32 %v626, %v627
  %v629 = vrot.slane %v628, 4
  %v630 = vmax.f32 %v628, %v629
  %v631 = vrot.slane %v630, 2
  %v632 = vmax.f32 %v630, %v631
  %v633 = vrot.slane %v632, 1
  %v634 = vmax.f32 %v632, %v633
  %v635 = vsel %vm264, %v90, -inf
  %v636 = vsel %vm266, %v91, -inf
  %v637 = vmax.f32 %v635, %v636
  %v638 = vrot.slane %v637, 4
  %v639 = vmax.f32 %v637, %v638
  %v640 = vrot.slane %v639, 2
  %v641 = vmax.f32 %v639, %v640
  %v642 = vrot.slane %v641, 1
  %v643 = vmax.f32 %v641, %v642
  %v644 = vsel %vm264, %v92, -inf
  %v645 = vsel %vm266, %v93, -inf
  %v646 = vmax.f32 %v644, %v645
  %v647 = vrot.slane %v646, 4
  %v648 = vmax.f32 %v646, %v647
  %v649 = vrot.slane %v648, 2
  %v650 = vmax.f32 %v648, %v649
  %v651 = vrot.slane %v650, 1
  %v652 = vmax.f32 %v650, %v651
  %v653 = vsel %vm264, %v94, -inf
  %v654 = vsel %vm266, %v95, -inf
  %v655 = vmax.f32 %v653, %v654
  %v656 = vrot.slane %v655, 4
  %v657 = vmax.f32 %v655, %v656
  %v658 = vrot.slane %v657, 2
  %v659 = vmax.f32 %v657, %v658
  %v660 = vrot.slane %v659, 1
  %v661 = vmax.f32 %v659, %v660
  %v662 = vsel %vm264, %v96, -inf
  %v663 = vsel %vm266, %v97, -inf
  %v664 = vmax.f32 %v662, %v663
  %v665 = vrot.slane %v664, 4
  %v666 = vmax.f32 %v664, %v665
  %v667 = vrot.slane %v666, 2
  %v668 = vmax.f32 %v666, %v667
  %v669 = vrot.slane %v668, 1
  %v670 = vmax.f32 %v668, %v669
  %v671 = vsel %vm264, %v98, -inf
  %v672 = vsel %vm266, %v99, -inf
  %v673 = vmax.f32 %v671, %v672
  %v674 = vrot.slane %v673, 4
  %v675 = vmax.f32 %v673, %v674
  %v676 = vrot.slane %v675, 2
  %v677 = vmax.f32 %v675, %v676
  %v678 = vrot.slane %v677, 1
  %v679 = vmax.f32 %v677, %v678
  %v680 = vsel %vm264, %v100, -inf
  %v681 = vsel %vm266, %v101, -inf
  %v682 = vmax.f32 %v680, %v681
  %v683 = vrot.slane %v682, 4
  %v684 = vmax.f32 %v682, %v683
  %v685 = vrot.slane %v684, 2
  %v686 = vmax.f32 %v684, %v685
  %v687 = vrot.slane %v686, 1
  %v688 = vmax.f32 %v686, %v687
  %v689 = vsel %vm264, %v102, -inf
  %v690 = vsel %vm266, %v103, -inf
  %v691 = vmax.f32 %v689, %v690
  %v692 = vrot.slane %v691, 4
  %v693 = vmax.f32 %v691, %v692
  %v694 = vrot.slane %v693, 2
  %v695 = vmax.f32 %v693, %v694
  %v696 = vrot.slane %v695, 1
  %v697 = vmax.f32 %v695, %v696
  %v698 = vsel %vm264, %v104, -inf
  %v699 = vsel %vm266, %v105, -inf
  %v700 = vmax.f32 %v698, %v699
  %v701 = vrot.slane %v700, 4
  %v702 = vmax.f32 %v700, %v701
  %v703 = vrot.slane %v702, 2
  %v704 = vmax.f32 %v702, %v703
  %v705 = vrot.slane %v704, 1
  %v706 = vmax.f32 %v704, %v705
  %v707 = vsel %vm264, %v106, -inf
  %v708 = vsel %vm266, %v107, -inf
  %v709 = vmax.f32 %v707, %v708
  %v710 = vrot.slane %v709, 4
  %v711 = vmax.f32 %v709, %v710
  %v712 = vrot.slane %v711, 2
  %v713 = vmax.f32 %v711, %v712
  %v714 = vrot.slane %v713, 1
  %v715 = vmax.f32 %v713, %v714
  %v716 = vsel %vm264, %v108, -inf
  %v717 = vsel %vm266, %v109, -inf
  %v718 = vmax.f32 %v716, %v717
  %v719 = vrot.slane %v718, 4
  %v720 = vmax.f32 %v718, %v719
  %v721 = vrot.slane %v720, 2
  %v722 = vmax.f32 %v720, %v721
  %v723 = vrot.slane %v722, 1
  %v724 = vmax.f32 %v722, %v723
  %v725 = vsel %vm264, %v110, -inf
  %v726 = vsel %vm266, %v111, -inf
  %v727 = vmax.f32 %v725, %v726
  %v728 = vrot.slane %v727, 4
  %v729 = vmax.f32 %v727, %v728
  %v730 = vrot.slane %v729, 2
  %v731 = vmax.f32 %v729, %v730
  %v732 = vrot.slane %v731, 1
  %v733 = vmax.f32 %v731, %v732
  %v734 = vsel %vm264, %v112, -inf
  %v735 = vsel %vm266, %v113, -inf
  %v736 = vmax.f32 %v734, %v735
  %v737 = vrot.slane %v736, 4
  %v738 = vmax.f32 %v736, %v737
  %v739 = vrot.slane %v738, 2
  %v740 = vmax.f32 %v738, %v739
  %v741 = vrot.slane %v740, 1
  %v742 = vmax.f32 %v740, %v741
  %v743 = vsel %vm264, %v114, -inf
  %v744 = vsel %vm266, %v115, -inf
  %v745 = vmax.f32 %v743, %v744
  %v746 = vrot.slane %v745, 4
  %v747 = vmax.f32 %v745, %v746
  %v748 = vrot.slane %v747, 2
  %v749 = vmax.f32 %v747, %v748
  %v750 = vrot.slane %v749, 1
  %v751 = vmax.f32 %v749, %v750
  %v752 = vsel %vm264, %v116, -inf
  %v753 = vsel %vm266, %v117, -inf
  %v754 = vmax.f32 %v752, %v753
  %v755 = vrot.slane %v754, 4
  %v756 = vmax.f32 %v754, %v755
  %v757 = vrot.slane %v756, 2
  %v758 = vmax.f32 %v756, %v757
  %v759 = vrot.slane %v758, 1
  %v760 = vmax.f32 %v758, %v759
  %v761 = vsel %vm264, %v118, -inf
  %v762 = vsel %vm266, %v119, -inf
  %v763 = vmax.f32 %v761, %v762
  %v764 = vrot.slane %v763, 4
  %v765 = vmax.f32 %v763, %v764
  %v766 = vrot.slane %v765, 2
  %v767 = vmax.f32 %v765, %v766
  %v768 = vrot.slane %v767, 1
  %v769 = vmax.f32 %v767, %v768
  %v770 = vsel %vm264, %v120, -inf
  %v771 = vsel %vm266, %v121, -inf
  %v772 = vmax.f32 %v770, %v771
  %v773 = vrot.slane %v772, 4
  %v774 = vmax.f32 %v772, %v773
  %v775 = vrot.slane %v774, 2
  %v776 = vmax.f32 %v774, %v775
  %v777 = vrot.slane %v776, 1
  %v778 = vmax.f32 %v776, %v777
  %v779 = vsel %vm264, %v122, -inf
  %v780 = vsel %vm266, %v123, -inf
  %v781 = vmax.f32 %v779, %v780
  %v782 = vrot.slane %v781, 4
  %v783 = vmax.f32 %v781, %v782
  %v784 = vrot.slane %v783, 2
  %v785 = vmax.f32 %v783, %v784
  %v786 = vrot.slane %v785, 1
  %v787 = vmax.f32 %v785, %v786
  %v788 = vsel %vm264, %v124, -inf
  %v789 = vsel %vm266, %v125, -inf
  %v790 = vmax.f32 %v788, %v789
  %v791 = vrot.slane %v790, 4
  %v792 = vmax.f32 %v790, %v791
  %v793 = vrot.slane %v792, 2
  %v794 = vmax.f32 %v792, %v793
  %v795 = vrot.slane %v794, 1
  %v796 = vmax.f32 %v794, %v795
  %v797 = vsel %vm264, %v126, -inf
  %v798 = vsel %vm266, %v127, -inf
  %v799 = vmax.f32 %v797, %v798
  %v800 = vrot.slane %v799, 4
  %v801 = vmax.f32 %v799, %v800
  %v802 = vrot.slane %v801, 2
  %v803 = vmax.f32 %v801, %v802
  %v804 = vrot.slane %v803, 1
  %v805 = vmax.f32 %v803, %v804
  %v806 = vsel %vm264, %v128, -inf
  %v807 = vsel %vm266, %v129, -inf
  %v808 = vmax.f32 %v806, %v807
  %v809 = vrot.slane %v808, 4
  %v810 = vmax.f32 %v808, %v809
  %v811 = vrot.slane %v810, 2
  %v812 = vmax.f32 %v810, %v811
  %v813 = vrot.slane %v812, 1
  %v814 = vmax.f32 %v812, %v813
  %v815 = vsel %vm264, %v130, -inf
  %v816 = vsel %vm266, %v131, -inf
  %v817 = vmax.f32 %v815, %v816
  %v818 = vrot.slane %v817, 4
  %v819 = vmax.f32 %v817, %v818
  %v820 = vrot.slane %v819, 2
  %v821 = vmax.f32 %v819, %v820
  %v822 = vrot.slane %v821, 1
  %v823 = vmax.f32 %v821, %v822
  %v824 = vsel %vm264, %v132, -inf
  %v825 = vsel %vm266, %v133, -inf
  %v826 = vmax.f32 %v824, %v825
  %v827 = vrot.slane %v826, 4
  %v828 = vmax.f32 %v826, %v827
  %v829 = vrot.slane %v828, 2
  %v830 = vmax.f32 %v828, %v829
  %v831 = vrot.slane %v830, 1
  %v832 = vmax.f32 %v830, %v831
  %v833 = vsel %vm264, %v134, -inf
  %v834 = vsel %vm266, %v135, -inf
  %v835 = vmax.f32 %v833, %v834
  %v836 = vrot.slane %v835, 4
  %v837 = vmax.f32 %v835, %v836
  %v838 = vrot.slane %v837, 2
  %v839 = vmax.f32 %v837, %v838
  %v840 = vrot.slane %v839, 1
  %v841 = vmax.f32 %v839, %v840
  %v842 = vsel %vm264, %v136, -inf
  %v843 = vsel %vm266, %v137, -inf
  %v844 = vmax.f32 %v842, %v843
  %v845 = vrot.slane %v844, 4
  %v846 = vmax.f32 %v844, %v845
  %v847 = vrot.slane %v846, 2
  %v848 = vmax.f32 %v846, %v847
  %v849 = vrot.slane %v848, 1
  %v850 = vmax.f32 %v848, %v849
  %v851 = vsel %vm264, %v138, -inf
  %v852 = vsel %vm266, %v139, -inf
  %v853 = vmax.f32 %v851, %v852
  %v854 = vrot.slane %v853, 4
  %v855 = vmax.f32 %v853, %v854
  %v856 = vrot.slane %v855, 2
  %v857 = vmax.f32 %v855, %v856
  %v858 = vrot.slane %v857, 1
  %v859 = vmax.f32 %v857, %v858
  %v860 = vsel %vm264, %v140, -inf
  %v861 = vsel %vm266, %v141, -inf
  %v862 = vmax.f32 %v860, %v861
  %v863 = vrot.slane %v862, 4
  %v864 = vmax.f32 %v862, %v863
  %v865 = vrot.slane %v864, 2
  %v866 = vmax.f32 %v864, %v865
  %v867 = vrot.slane %v866, 1
  %v868 = vmax.f32 %v866, %v867
  %v869 = vsel %vm264, %v142, -inf
  %v870 = vsel %vm266, %v143, -inf
  %v871 = vmax.f32 %v869, %v870
  %v872 = vrot.slane %v871, 4
  %v873 = vmax.f32 %v871, %v872
  %v874 = vrot.slane %v873, 2
  %v875 = vmax.f32 %v873, %v874
  %v876 = vrot.slane %v875, 1
  %v877 = vmax.f32 %v875, %v876
  %v878 = vsel %vm264, %v144, -inf
  %v879 = vsel %vm266, %v145, -inf
  %v880 = vmax.f32 %v878, %v879
  %v881 = vrot.slane %v880, 4
  %v882 = vmax.f32 %v880, %v881
  %v883 = vrot.slane %v882, 2
  %v884 = vmax.f32 %v882, %v883
  %v885 = vrot.slane %v884, 1
  %v886 = vmax.f32 %v884, %v885
  %v887 = vsel %vm264, %v146, -inf
  %v888 = vsel %vm266, %v147, -inf
  %v889 = vmax.f32 %v887, %v888
  %v890 = vrot.slane %v889, 4
  %v891 = vmax.f32 %v889, %v890
  %v892 = vrot.slane %v891, 2
  %v893 = vmax.f32 %v891, %v892
  %v894 = vrot.slane %v893, 1
  %v895 = vmax.f32 %v893, %v894
  %v896 = vsel %vm264, %v148, -inf
  %v897 = vsel %vm266, %v149, -inf
  %v898 = vmax.f32 %v896, %v897
  %v899 = vrot.slane %v898, 4
  %v900 = vmax.f32 %v898, %v899
  %v901 = vrot.slane %v900, 2
  %v902 = vmax.f32 %v900, %v901
  %v903 = vrot.slane %v902, 1
  %v904 = vmax.f32 %v902, %v903
  %v905 = vsel %vm264, %v150, -inf
  %v906 = vsel %vm266, %v151, -inf
  %v907 = vmax.f32 %v905, %v906
  %v908 = vrot.slane %v907, 4
  %v909 = vmax.f32 %v907, %v908
  %v910 = vrot.slane %v909, 2
  %v911 = vmax.f32 %v909, %v910
  %v912 = vrot.slane %v911, 1
  %v913 = vmax.f32 %v911, %v912
  %v914 = vsel %vm264, %v152, -inf
  %v915 = vsel %vm266, %v153, -inf
  %v916 = vmax.f32 %v914, %v915
  %v917 = vrot.slane %v916, 4
  %v918 = vmax.f32 %v916, %v917
  %v919 = vrot.slane %v918, 2
  %v920 = vmax.f32 %v918, %v919
  %v921 = vrot.slane %v920, 1
  %v922 = vmax.f32 %v920, %v921
  %v923 = vsel %vm264, %v154, -inf
  %v924 = vsel %vm266, %v155, -inf
  %v925 = vmax.f32 %v923, %v924
  %v926 = vrot.slane %v925, 4
  %v927 = vmax.f32 %v925, %v926
  %v928 = vrot.slane %v927, 2
  %v929 = vmax.f32 %v927, %v928
  %v930 = vrot.slane %v929, 1
  %v931 = vmax.f32 %v929, %v930
  %v932 = vsel %vm264, %v156, -inf
  %v933 = vsel %vm266, %v157, -inf
  %v934 = vmax.f32 %v932, %v933
  %v935 = vrot.slane %v934, 4
  %v936 = vmax.f32 %v934, %v935
  %v937 = vrot.slane %v936, 2
  %v938 = vmax.f32 %v936, %v937
  %v939 = vrot.slane %v938, 1
  %v940 = vmax.f32 %v938, %v939
  %v941 = vsel %vm264, %v158, -inf
  %v942 = vsel %vm266, %v159, -inf
  %v943 = vmax.f32 %v941, %v942
  %v944 = vrot.slane %v943, 4
  %v945 = vmax.f32 %v943, %v944
  %v946 = vrot.slane %v945, 2
  %v947 = vmax.f32 %v945, %v946
  %v948 = vrot.slane %v947, 1
  %v949 = vmax.f32 %v947, %v948
  %v950 = vsel %vm264, %v160, -inf
  %v951 = vsel %vm266, %v161, -inf
  %v952 = vmax.f32 %v950, %v951
  %v953 = vrot.slane %v952, 4
  %v954 = vmax.f32 %v952, %v953
  %v955 = vrot.slane %v954, 2
  %v956 = vmax.f32 %v954, %v955
  %v957 = vrot.slane %v956, 1
  %v958 = vmax.f32 %v956, %v957
  %v959 = vsel %vm264, %v162, -inf
  %v960 = vsel %vm266, %v163, -inf
  %v961 = vmax.f32 %v959, %v960
  %v962 = vrot.slane %v961, 4
  %v963 = vmax.f32 %v961, %v962
  %v964 = vrot.slane %v963, 2
  %v965 = vmax.f32 %v963, %v964
  %v966 = vrot.slane %v965, 1
  %v967 = vmax.f32 %v965, %v966
  %v968 = vsel %vm264, %v164, -inf
  %v969 = vsel %vm266, %v165, -inf
  %v970 = vmax.f32 %v968, %v969
  %v971 = vrot.slane %v970, 4
  %v972 = vmax.f32 %v970, %v971
  %v973 = vrot.slane %v972, 2
  %v974 = vmax.f32 %v972, %v973
  %v975 = vrot.slane %v974, 1
  %v976 = vmax.f32 %v974, %v975
  %v977 = vsel %vm264, %v166, -inf
  %v978 = vsel %vm266, %v167, -inf
  %v979 = vmax.f32 %v977, %v978
  %v980 = vrot.slane %v979, 4
  %v981 = vmax.f32 %v979, %v980
  %v982 = vrot.slane %v981, 2
  %v983 = vmax.f32 %v981, %v982
  %v984 = vrot.slane %v983, 1
  %v985 = vmax.f32 %v983, %v984
  %v986 = vsel %vm264, %v168, -inf
  %v987 = vsel %vm266, %v169, -inf
  %v988 = vmax.f32 %v986, %v987
  %v989 = vrot.slane %v988, 4
  %v990 = vmax.f32 %v988, %v989
  %v991 = vrot.slane %v990, 2
  %v992 = vmax.f32 %v990, %v991
  %v993 = vrot.slane %v992, 1
  %v994 = vmax.f32 %v992, %v993
  %v995 = vsel %vm264, %v170, -inf
  %v996 = vsel %vm266, %v171, -inf
  %v997 = vmax.f32 %v995, %v996
  %v998 = vrot.slane %v997, 4
  %v999 = vmax.f32 %v997, %v998
  %v1000 = vrot.slane %v999, 2
  %v1001 = vmax.f32 %v999, %v1000
  %v1002 = vrot.slane %v1001, 1
  %v1003 = vmax.f32 %v1001, %v1002
  %v1004 = vsel %vm264, %v172, -inf
  %v1005 = vsel %vm266, %v173, -inf
  %v1006 = vmax.f32 %v1004, %v1005
  %v1007 = vrot.slane %v1006, 4
  %v1008 = vmax.f32 %v1006, %v1007
  %v1009 = vrot.slane %v1008, 2
  %v1010 = vmax.f32 %v1008, %v1009
  %v1011 = vrot.slane %v1010, 1
  %v1012 = vmax.f32 %v1010, %v1011
  %v1013 = vsel %vm264, %v174, -inf
  %v1014 = vsel %vm266, %v175, -inf
  %v1015 = vmax.f32 %v1013, %v1014
  %v1016 = vrot.slane %v1015, 4
  %v1017 = vmax.f32 %v1015, %v1016
  %v1018 = vrot.slane %v1017, 2
  %v1019 = vmax.f32 %v1017, %v1018
  %v1020 = vrot.slane %v1019, 1
  %v1021 = vmax.f32 %v1019, %v1020
  %v1022 = vsel %vm264, %v176, -inf
  %v1023 = vsel %vm266, %v177, -inf
  %v1024 = vmax.f32 %v1022, %v1023
  %v1025 = vrot.slane %v1024, 4
  %v1026 = vmax.f32 %v1024, %v1025
  %v1027 = vrot.slane %v1026, 2
  %v1028 = vmax.f32 %v1026, %v1027
  %v1029 = vrot.slane %v1028, 1
  %v1030 = vmax.f32 %v1028, %v1029
  %v1031 = vsel %vm264, %v178, -inf
  %v1032 = vsel %vm266, %v179, -inf
  %v1033 = vmax.f32 %v1031, %v1032
  %v1034 = vrot.slane %v1033, 4
  %v1035 = vmax.f32 %v1033, %v1034
  %v1036 = vrot.slane %v1035, 2
  %v1037 = vmax.f32 %v1035, %v1036
  %v1038 = vrot.slane %v1037, 1
  %v1039 = vmax.f32 %v1037, %v1038
  %v1040 = vsel %vm264, %v180, -inf
  %v1041 = vsel %vm266, %v181, -inf
  %v1042 = vmax.f32 %v1040, %v1041
  %v1043 = vrot.slane %v1042, 4
  %v1044 = vmax.f32 %v1042, %v1043
  %v1045 = vrot.slane %v1044, 2
  %v1046 = vmax.f32 %v1044, %v1045
  %v1047 = vrot.slane %v1046, 1
  %v1048 = vmax.f32 %v1046, %v1047
  %v1049 = vsel %vm264, %v182, -inf
  %v1050 = vsel %vm266, %v183, -inf
  %v1051 = vmax.f32 %v1049, %v1050
  %v1052 = vrot.slane %v1051, 4
  %v1053 = vmax.f32 %v1051, %v1052
  %v1054 = vrot.slane %v1053, 2
  %v1055 = vmax.f32 %v1053, %v1054
  %v1056 = vrot.slane %v1055, 1
  %v1057 = vmax.f32 %v1055, %v1056
  %v1058 = vsel %vm264, %v184, -inf
  %v1059 = vsel %vm266, %v185, -inf
  %v1060 = vmax.f32 %v1058, %v1059
  %v1061 = vrot.slane %v1060, 4
  %v1062 = vmax.f32 %v1060, %v1061
  %v1063 = vrot.slane %v1062, 2
  %v1064 = vmax.f32 %v1062, %v1063
  %v1065 = vrot.slane %v1064, 1
  %v1066 = vmax.f32 %v1064, %v1065
  %v1067 = vsel %vm264, %v186, -inf
  %v1068 = vsel %vm266, %v187, -inf
  %v1069 = vmax.f32 %v1067, %v1068
  %v1070 = vrot.slane %v1069, 4
  %v1071 = vmax.f32 %v1069, %v1070
  %v1072 = vrot.slane %v1071, 2
  %v1073 = vmax.f32 %v1071, %v1072
  %v1074 = vrot.slane %v1073, 1
  %v1075 = vmax.f32 %v1073, %v1074
  %v1076 = vsel %vm264, %v188, -inf
  %v1077 = vsel %vm266, %v189, -inf
  %v1078 = vmax.f32 %v1076, %v1077
  %v1079 = vrot.slane %v1078, 4
  %v1080 = vmax.f32 %v1078, %v1079
  %v1081 = vrot.slane %v1080, 2
  %v1082 = vmax.f32 %v1080, %v1081
  %v1083 = vrot.slane %v1082, 1
  %v1084 = vmax.f32 %v1082, %v1083
  %v1085 = vsel %vm264, %v190, -inf
  %v1086 = vsel %vm266, %v191, -inf
  %v1087 = vmax.f32 %v1085, %v1086
  %v1088 = vrot.slane %v1087, 4
  %v1089 = vmax.f32 %v1087, %v1088
  %v1090 = vrot.slane %v1089, 2
  %v1091 = vmax.f32 %v1089, %v1090
  %v1092 = vrot.slane %v1091, 1
  %v1093 = vmax.f32 %v1091, %v1092
  %v1094 = vsel %vm264, %v192, -inf
  %v1095 = vsel %vm266, %v193, -inf
  %v1096 = vmax.f32 %v1094, %v1095
  %v1097 = vrot.slane %v1096, 4
  %v1098 = vmax.f32 %v1096, %v1097
  %v1099 = vrot.slane %v1098, 2
  %v1100 = vmax.f32 %v1098, %v1099
  %v1101 = vrot.slane %v1100, 1
  %v1102 = vmax.f32 %v1100, %v1101
  %v1103 = vsel %vm264, %v194, -inf
  %v1104 = vsel %vm266, %v195, -inf
  %v1105 = vmax.f32 %v1103, %v1104
  %v1106 = vrot.slane %v1105, 4
  %v1107 = vmax.f32 %v1105, %v1106
  %v1108 = vrot.slane %v1107, 2
  %v1109 = vmax.f32 %v1107, %v1108
  %v1110 = vrot.slane %v1109, 1
  %v1111 = vmax.f32 %v1109, %v1110
  %v1112 = vsel %vm264, %v196, -inf
  %v1113 = vsel %vm266, %v197, -inf
  %v1114 = vmax.f32 %v1112, %v1113
  %v1115 = vrot.slane %v1114, 4
  %v1116 = vmax.f32 %v1114, %v1115
  %v1117 = vrot.slane %v1116, 2
  %v1118 = vmax.f32 %v1116, %v1117
  %v1119 = vrot.slane %v1118, 1
  %v1120 = vmax.f32 %v1118, %v1119
  %v1121 = vsel %vm264, %v198, -inf
  %v1122 = vsel %vm266, %v199, -inf
  %v1123 = vmax.f32 %v1121, %v1122
  %v1124 = vrot.slane %v1123, 4
  %v1125 = vmax.f32 %v1123, %v1124
  %v1126 = vrot.slane %v1125, 2
  %v1127 = vmax.f32 %v1125, %v1126
  %v1128 = vrot.slane %v1127, 1
  %v1129 = vmax.f32 %v1127, %v1128
  %v1130 = vsel %vm264, %v200, -inf
  %v1131 = vsel %vm266, %v201, -inf
  %v1132 = vmax.f32 %v1130, %v1131
  %v1133 = vrot.slane %v1132, 4
  %v1134 = vmax.f32 %v1132, %v1133
  %v1135 = vrot.slane %v1134, 2
  %v1136 = vmax.f32 %v1134, %v1135
  %v1137 = vrot.slane %v1136, 1
  %v1138 = vmax.f32 %v1136, %v1137
  %v1139 = vsel %vm264, %v202, -inf
  %v1140 = vsel %vm266, %v203, -inf
  %v1141 = vmax.f32 %v1139, %v1140
  %v1142 = vrot.slane %v1141, 4
  %v1143 = vmax.f32 %v1141, %v1142
  %v1144 = vrot.slane %v1143, 2
  %v1145 = vmax.f32 %v1143, %v1144
  %v1146 = vrot.slane %v1145, 1
  %v1147 = vmax.f32 %v1145, %v1146
  %v1148 = vsel %vm264, %v204, -inf
  %v1149 = vsel %vm266, %v205, -inf
  %v1150 = vmax.f32 %v1148, %v1149
  %v1151 = vrot.slane %v1150, 4
  %v1152 = vmax.f32 %v1150, %v1151
  %v1153 = vrot.slane %v1152, 2
  %v1154 = vmax.f32 %v1152, %v1153
  %v1155 = vrot.slane %v1154, 1
  %v1156 = vmax.f32 %v1154, %v1155
  %v1157 = vsel %vm264, %v206, -inf
  %v1158 = vsel %vm266, %v207, -inf
  %v1159 = vmax.f32 %v1157, %v1158
  %v1160 = vrot.slane %v1159, 4
  %v1161 = vmax.f32 %v1159, %v1160
  %v1162 = vrot.slane %v1161, 2
  %v1163 = vmax.f32 %v1161, %v1162
  %v1164 = vrot.slane %v1163, 1
  %v1165 = vmax.f32 %v1163, %v1164
  %v1166 = vsel %vm264, %v208, -inf
  %v1167 = vsel %vm266, %v209, -inf
  %v1168 = vmax.f32 %v1166, %v1167
  %v1169 = vrot.slane %v1168, 4
  %v1170 = vmax.f32 %v1168, %v1169
  %v1171 = vrot.slane %v1170, 2
  %v1172 = vmax.f32 %v1170, %v1171
  %v1173 = vrot.slane %v1172, 1
  %v1174 = vmax.f32 %v1172, %v1173
  %v1175 = vsel %vm264, %v210, -inf
  %v1176 = vsel %vm266, %v211, -inf
  %v1177 = vmax.f32 %v1175, %v1176
  %v1178 = vrot.slane %v1177, 4
  %v1179 = vmax.f32 %v1177, %v1178
  %v1180 = vrot.slane %v1179, 2
  %v1181 = vmax.f32 %v1179, %v1180
  %v1182 = vrot.slane %v1181, 1
  %v1183 = vmax.f32 %v1181, %v1182
  %v1184 = vsel %vm264, %v212, -inf
  %v1185 = vsel %vm266, %v213, -inf
  %v1186 = vmax.f32 %v1184, %v1185
  %v1187 = vrot.slane %v1186, 4
  %v1188 = vmax.f32 %v1186, %v1187
  %v1189 = vrot.slane %v1188, 2
  %v1190 = vmax.f32 %v1188, %v1189
  %v1191 = vrot.slane %v1190, 1
  %v1192 = vmax.f32 %v1190, %v1191
  %v1193 = vsel %vm264, %v214, -inf
  %v1194 = vsel %vm266, %v215, -inf
  %v1195 = vmax.f32 %v1193, %v1194
  %v1196 = vrot.slane %v1195, 4
  %v1197 = vmax.f32 %v1195, %v1196
  %v1198 = vrot.slane %v1197, 2
  %v1199 = vmax.f32 %v1197, %v1198
  %v1200 = vrot.slane %v1199, 1
  %v1201 = vmax.f32 %v1199, %v1200
  %v1202 = vsel %vm264, %v216, -inf
  %v1203 = vsel %vm266, %v217, -inf
  %v1204 = vmax.f32 %v1202, %v1203
  %v1205 = vrot.slane %v1204, 4
  %v1206 = vmax.f32 %v1204, %v1205
  %v1207 = vrot.slane %v1206, 2
  %v1208 = vmax.f32 %v1206, %v1207
  %v1209 = vrot.slane %v1208, 1
  %v1210 = vmax.f32 %v1208, %v1209
  %v1211 = vsel %vm264, %v218, -inf
  %v1212 = vsel %vm266, %v219, -inf
  %v1213 = vmax.f32 %v1211, %v1212
  %v1214 = vrot.slane %v1213, 4
  %v1215 = vmax.f32 %v1213, %v1214
  %v1216 = vrot.slane %v1215, 2
  %v1217 = vmax.f32 %v1215, %v1216
  %v1218 = vrot.slane %v1217, 1
  %v1219 = vmax.f32 %v1217, %v1218
  %v1220 = vsel %vm264, %v220, -inf
  %v1221 = vsel %vm266, %v221, -inf
  %v1222 = vmax.f32 %v1220, %v1221
  %v1223 = vrot.slane %v1222, 4
  %v1224 = vmax.f32 %v1222, %v1223
  %v1225 = vrot.slane %v1224, 2
  %v1226 = vmax.f32 %v1224, %v1225
  %v1227 = vrot.slane %v1226, 1
  %v1228 = vmax.f32 %v1226, %v1227
  %v1229 = vsel %vm264, %v222, -inf
  %v1230 = vsel %vm266, %v223, -inf
  %v1231 = vmax.f32 %v1229, %v1230
  %v1232 = vrot.slane %v1231, 4
  %v1233 = vmax.f32 %v1231, %v1232
  %v1234 = vrot.slane %v1233, 2
  %v1235 = vmax.f32 %v1233, %v1234
  %v1236 = vrot.slane %v1235, 1
  %v1237 = vmax.f32 %v1235, %v1236
  %v1238 = vsel %vm264, %v224, -inf
  %v1239 = vsel %vm266, %v225, -inf
  %v1240 = vmax.f32 %v1238, %v1239
  %v1241 = vrot.slane %v1240, 4
  %v1242 = vmax.f32 %v1240, %v1241
  %v1243 = vrot.slane %v1242, 2
  %v1244 = vmax.f32 %v1242, %v1243
  %v1245 = vrot.slane %v1244, 1
  %v1246 = vmax.f32 %v1244, %v1245
  %v1247 = vsel %vm264, %v226, -inf
  %v1248 = vsel %vm266, %v227, -inf
  %v1249 = vmax.f32 %v1247, %v1248
  %v1250 = vrot.slane %v1249, 4
  %v1251 = vmax.f32 %v1249, %v1250
  %v1252 = vrot.slane %v1251, 2
  %v1253 = vmax.f32 %v1251, %v1252
  %v1254 = vrot.slane %v1253, 1
  %v1255 = vmax.f32 %v1253, %v1254
  %v1256 = vsel %vm264, %v228, -inf
  %v1257 = vsel %vm266, %v229, -inf
  %v1258 = vmax.f32 %v1256, %v1257
  %v1259 = vrot.slane %v1258, 4
  %v1260 = vmax.f32 %v1258, %v1259
  %v1261 = vrot.slane %v1260, 2
  %v1262 = vmax.f32 %v1260, %v1261
  %v1263 = vrot.slane %v1262, 1
  %v1264 = vmax.f32 %v1262, %v1263
  %v1265 = vsel %vm264, %v230, -inf
  %v1266 = vsel %vm266, %v231, -inf
  %v1267 = vmax.f32 %v1265, %v1266
  %v1268 = vrot.slane %v1267, 4
  %v1269 = vmax.f32 %v1267, %v1268
  %v1270 = vrot.slane %v1269, 2
  %v1271 = vmax.f32 %v1269, %v1270
  %v1272 = vrot.slane %v1271, 1
  %v1273 = vmax.f32 %v1271, %v1272
  %v1274 = vsel %vm264, %v232, -inf
  %v1275 = vsel %vm266, %v233, -inf
  %v1276 = vmax.f32 %v1274, %v1275
  %v1277 = vrot.slane %v1276, 4
  %v1278 = vmax.f32 %v1276, %v1277
  %v1279 = vrot.slane %v1278, 2
  %v1280 = vmax.f32 %v1278, %v1279
  %v1281 = vrot.slane %v1280, 1
  %v1282 = vmax.f32 %v1280, %v1281
  %v1283 = vsel %vm264, %v234, -inf
  %v1284 = vsel %vm266, %v235, -inf
  %v1285 = vmax.f32 %v1283, %v1284
  %v1286 = vrot.slane %v1285, 4
  %v1287 = vmax.f32 %v1285, %v1286
  %v1288 = vrot.slane %v1287, 2
  %v1289 = vmax.f32 %v1287, %v1288
  %v1290 = vrot.slane %v1289, 1
  %v1291 = vmax.f32 %v1289, %v1290
  %v1292 = vsel %vm264, %v236, -inf
  %v1293 = vsel %vm266, %v237, -inf
  %v1294 = vmax.f32 %v1292, %v1293
  %v1295 = vrot.slane %v1294, 4
  %v1296 = vmax.f32 %v1294, %v1295
  %v1297 = vrot.slane %v1296, 2
  %v1298 = vmax.f32 %v1296, %v1297
  %v1299 = vrot.slane %v1298, 1
  %v1300 = vmax.f32 %v1298, %v1299
  %v1301 = vsel %vm264, %v238, -inf
  %v1302 = vsel %vm266, %v239, -inf
  %v1303 = vmax.f32 %v1301, %v1302
  %v1304 = vrot.slane %v1303, 4
  %v1305 = vmax.f32 %v1303, %v1304
  %v1306 = vrot.slane %v1305, 2
  %v1307 = vmax.f32 %v1305, %v1306
  %v1308 = vrot.slane %v1307, 1
  %v1309 = vmax.f32 %v1307, %v1308
  %v1310 = vsel %vm264, %v240, -inf
  %v1311 = vsel %vm266, %v241, -inf
  %v1312 = vmax.f32 %v1310, %v1311
  %v1313 = vrot.slane %v1312, 4
  %v1314 = vmax.f32 %v1312, %v1313
  %v1315 = vrot.slane %v1314, 2
  %v1316 = vmax.f32 %v1314, %v1315
  %v1317 = vrot.slane %v1316, 1
  %v1318 = vmax.f32 %v1316, %v1317
  %v1319 = vsel %vm264, %v242, -inf
  %v1320 = vsel %vm266, %v243, -inf
  %v1321 = vmax.f32 %v1319, %v1320
  %v1322 = vrot.slane %v1321, 4
  %v1323 = vmax.f32 %v1321, %v1322
  %v1324 = vrot.slane %v1323, 2
  %v1325 = vmax.f32 %v1323, %v1324
  %v1326 = vrot.slane %v1325, 1
  %v1327 = vmax.f32 %v1325, %v1326
  %v1328 = vsel %vm264, %v244, -inf
  %v1329 = vsel %vm266, %v245, -inf
  %v1330 = vmax.f32 %v1328, %v1329
  %v1331 = vrot.slane %v1330, 4
  %v1332 = vmax.f32 %v1330, %v1331
  %v1333 = vrot.slane %v1332, 2
  %v1334 = vmax.f32 %v1332, %v1333
  %v1335 = vrot.slane %v1334, 1
  %v1336 = vmax.f32 %v1334, %v1335
  %v1337 = vsel %vm264, %v246, -inf
  %v1338 = vsel %vm266, %v247, -inf
  %v1339 = vmax.f32 %v1337, %v1338
  %v1340 = vrot.slane %v1339, 4
  %v1341 = vmax.f32 %v1339, %v1340
  %v1342 = vrot.slane %v1341, 2
  %v1343 = vmax.f32 %v1341, %v1342
  %v1344 = vrot.slane %v1343, 1
  %v1345 = vmax.f32 %v1343, %v1344
  %v1346 = vsel %vm264, %v248, -inf
  %v1347 = vsel %vm266, %v249, -inf
  %v1348 = vmax.f32 %v1346, %v1347
  %v1349 = vrot.slane %v1348, 4
  %v1350 = vmax.f32 %v1348, %v1349
  %v1351 = vrot.slane %v1350, 2
  %v1352 = vmax.f32 %v1350, %v1351
  %v1353 = vrot.slane %v1352, 1
  %v1354 = vmax.f32 %v1352, %v1353
  %v1355 = vsel %vm264, %v250, -inf
  %v1356 = vsel %vm266, %v251, -inf
  %v1357 = vmax.f32 %v1355, %v1356
  %v1358 = vrot.slane %v1357, 4
  %v1359 = vmax.f32 %v1357, %v1358
  %v1360 = vrot.slane %v1359, 2
  %v1361 = vmax.f32 %v1359, %v1360
  %v1362 = vrot.slane %v1361, 1
  %v1363 = vmax.f32 %v1361, %v1362
  %v1364 = vsel %vm264, %v252, -inf
  %v1365 = vsel %vm266, %v253, -inf
  %v1366 = vmax.f32 %v1364, %v1365
  %v1367 = vrot.slane %v1366, 4
  %v1368 = vmax.f32 %v1366, %v1367
  %v1369 = vrot.slane %v1368, 2
  %v1370 = vmax.f32 %v1368, %v1369
  %v1371 = vrot.slane %v1370, 1
  %v1372 = vmax.f32 %v1370, %v1371
  %v1373 = vsel %vm264, %v254, -inf
  %v1374 = vsel %vm266, %v255, -inf
  %v1375 = vmax.f32 %v1373, %v1374
  %v1376 = vrot.slane %v1375, 4
  %v1377 = vmax.f32 %v1375, %v1376
  %v1378 = vrot.slane %v1377, 2
  %v1379 = vmax.f32 %v1377, %v1378
  %v1380 = vrot.slane %v1379, 1
  %v1381 = vmax.f32 %v1379, %v1380
  %v1382 = vsel %vm264, %v256, -inf
  %v1383 = vsel %vm266, %v257, -inf
  %v1384 = vmax.f32 %v1382, %v1383
  %v1385 = vrot.slane %v1384, 4
  %v1386 = vmax.f32 %v1384, %v1385
  %v1387 = vrot.slane %v1386, 2
  %v1388 = vmax.f32 %v1386, %v1387
  %v1389 = vrot.slane %v1388, 1
  %v1390 = vmax.f32 %v1388, %v1389
  %v1391 = vsel %vm264, %v258, -inf
  %v1392 = vsel %vm266, %v259, -inf
  %v1393 = vmax.f32 %v1391, %v1392
  %v1394 = vrot.slane %v1393, 4
  %v1395 = vmax.f32 %v1393, %v1394
  %v1396 = vrot.slane %v1395, 2
  %v1397 = vmax.f32 %v1395, %v1396
  %v1398 = vrot.slane %v1397, 1
  %v1399 = vmax.f32 %v1397, %v1398
  %v1400 = vsel %vm264, %v260, -inf
  %v1401 = vsel %vm266, %v261, -inf
  %v1402 = vmax.f32 %v1400, %v1401
  %v1403 = vrot.slane %v1402, 4
  %v1404 = vmax.f32 %v1402, %v1403
  %v1405 = vrot.slane %v1404, 2
  %v1406 = vmax.f32 %v1404, %v1405
  %v1407 = vrot.slane %v1406, 1
  %v1408 = vmax.f32 %v1406, %v1407
  %v1409 = vsel %vm264, %v262, -inf
  %v1410 = vsel %vm266, %v263, -inf
  %v1411 = vmax.f32 %v1409, %v1410
  %v1412 = vrot.slane %v1411, 4
  %v1413 = vmax.f32 %v1411, %v1412
  %v1414 = vrot.slane %v1413, 2
  %v1415 = vmax.f32 %v1413, %v1414
  %v1416 = vrot.slane %v1415, 1
  %v1417 = vmax.f32 %v1415, %v1416
  %vm1546 = vcmask 1041409
  %v1547 = vsel %vm1546, %v283, %v274
  %vm1548 = vcmask 1042434
  %v1549 = vsel %vm1548, %v292, %v1547
  %vm1550 = vcmask 1043459
  %v1551 = vsel %vm1550, %v301, %v1549
  %vm1552 = vcmask 1044484
  %v1553 = vsel %vm1552, %v310, %v1551
  %vm1554 = vcmask 1045509
  %v1555 = vsel %vm1554, %v319, %v1553
  %vm1556 = vcmask 1046534
  %v1557 = vsel %vm1556, %v328, %v1555
  %vm1558 = vcmask 1047559
  %v1559 = vsel %vm1558, %v337, %v1557
  %v1560 = vsel %vm1546, %v355, %v346
  %v1561 = vsel %vm1548, %v364, %v1560
  %v1562 = vsel %vm1550, %v373, %v1561
  %v1563 = vsel %vm1552, %v382, %v1562
  %v1564 = vsel %vm1554, %v391, %v1563
  %v1565 = vsel %vm1556, %v400, %v1564
  %v1566 = vsel %vm1558, %v409, %v1565
  %v1567 = vsel %vm1546, %v427, %v418
  %v1568 = vsel %vm1548, %v436, %v1567
  %v1569 = vsel %vm1550, %v445, %v1568
  %v1570 = vsel %vm1552, %v454, %v1569
  %v1571 = vsel %vm1554, %v463, %v1570
  %v1572 = vsel %vm1556, %v472, %v1571
  %v1573 = vsel %vm1558, %v481, %v1572
  %v1574 = vsel %vm1546, %v499, %v490
  %v1575 = vsel %vm1548, %v508, %v1574
  %v1576 = vsel %vm1550, %v517, %v1575
  %v1577 = vsel %vm1552, %v526, %v1576
  %v1578 = vsel %vm1554, %v535, %v1577
  %v1579 = vsel %vm1556, %v544, %v1578
  %v1580 = vsel %vm1558, %v553, %v1579
  %v1581 = vsel %vm1546, %v571, %v562
  %v1582 = vsel %vm1548, %v580, %v1581
  %v1583 = vsel %vm1550, %v589, %v1582
  %v1584 = vsel %vm1552, %v598, %v1583
  %v1585 = vsel %vm1554, %v607, %v1584
  %v1586 = vsel %vm1556, %v616, %v1585
  %v1587 = vsel %vm1558, %v625, %v1586
  %v1588 = vsel %vm1546, %v643, %v634
  %v1589 = vsel %vm1548, %v652, %v1588
  %v1590 = vsel %vm1550, %v661, %v1589
  %v1591 = vsel %vm1552, %v670, %v1590
  %v1592 = vsel %vm1554, %v679, %v1591
  %v1593 = vsel %vm1556, %v688, %v1592
  %v1594 = vsel %vm1558, %v697, %v1593
  %v1595 = vsel %vm1546, %v715, %v706
  %v1596 = vsel %vm1548, %v724, %v1595
  %v1597 = vsel %vm1550, %v733, %v1596
  %v1598 = vsel %vm1552, %v742, %v1597
  %v1599 = vsel %vm1554, %v751, %v1598
  %v1600 = vsel %vm1556, %v760, %v1599
  %v1601 = vsel %vm1558, %v769, %v1600
  %v1602 = vsel %vm1546, %v787, %v778
  %v1603 = vsel %vm1548, %v796, %v1602
  %v1604 = vsel %vm1550, %v805, %v1603
  %v1605 = vsel %vm1552, %v814, %v1604
  %v1606 = vsel %vm1554, %v823, %v1605
  %v1607 = vsel %vm1556, %v832, %v1606
  %v1608 = vsel %vm1558, %v841, %v1607
  %v1609 = vsel %vm1546, %v859, %v850
  %v1610 = vsel %vm1548, %v868, %v1609
  %v1611 = vsel %vm1550, %v877, %v1610
  %v1612 = vsel %vm1552, %v886, %v1611
  %v1613 = vsel %vm1554, %v895, %v1612
  %v1614 = vsel %vm1556, %v904, %v1613
  %v1615 = vsel %vm1558, %v913, %v1614
  %v1616 = vsel %vm1546, %v931, %v922
  %v1617 = vsel %vm1548, %v940, %v1616
  %v1618 = vsel %vm1550, %v949, %v1617
  %v1619 = vsel %vm1552, %v958, %v1618
  %v1620 = vsel %vm1554, %v967, %v1619
  %v1621 = vsel %vm1556, %v976, %v1620
  %v1622 = vsel %vm1558, %v985, %v1621
  %v1623 = vsel %vm1546, %v1003, %v994
  %v1624 = vsel %vm1548, %v1012, %v1623
  %v1625 = vsel %vm1550, %v1021, %v1624
  %v1626 = vsel %vm1552, %v1030, %v1625
  %v1627 = vsel %vm1554, %v1039, %v1626
  %v1628 = vsel %vm1556, %v1048, %v1627
  %v1629 = vsel %vm1558, %v1057, %v1628
  %v1630 = vsel %vm1546, %v1075, %v1066
  %v1631 = vsel %vm1548, %v1084, %v1630
  %v1632 = vsel %vm1550, %v1093, %v1631
  %v1633 = vsel %vm1552, %v1102, %v1632
  %v1634 = vsel %vm1554, %v1111, %v1633
  %v1635 = vsel %vm1556, %v1120, %v1634
  %v1636 = vsel %vm1558, %v1129, %v1635
  %v1637 = vsel %vm1546, %v1147, %v1138
  %v1638 = vsel %vm1548, %v1156, %v1637
  %v1639 = vsel %vm1550, %v1165, %v1638
  %v1640 = vsel %vm1552, %v1174, %v1639
  %v1641 = vsel %vm1554, %v1183, %v1640
  %v1642 = vsel %vm1556, %v1192, %v1641
  %v1643 = vsel %vm1558, %v1201, %v1642
  %v1644 = vsel %vm1546, %v1219, %v1210
  %v1645 = vsel %vm1548, %v1228, %v1644
  %v1646 = vsel %vm1550, %v1237, %v1645
  %v1647 = vsel %vm1552, %v1246, %v1646
  %v1648 = vsel %vm1554, %v1255, %v1647
  %v1649 = vsel %vm1556, %v1264, %v1648
  %v1650 = vsel %vm1558, %v1273, %v1649
  %v1651 = vsel %vm1546, %v1291, %v1282
  %v1652 = vsel %vm1548, %v1300, %v1651
  %v1653 = vsel %vm1550, %v1309, %v1652
  %v1654 = vsel %vm1552, %v1318, %v1653
  %v1655 = vsel %vm1554, %v1327, %v1654
  %v1656 = vsel %vm1556, %v1336, %v1655
  %v1657 = vsel %vm1558, %v1345, %v1656
  %v1658 = vsel %vm1546, %v1363, %v1354
  %v1659 = vsel %vm1548, %v1372, %v1658
  %v1660 = vsel %vm1550, %v1381, %v1659
  %v1661 = vsel %vm1552, %v1390, %v1660
  %v1662 = vsel %vm1554, %v1399, %v1661
  %v1663 = vsel %vm1556, %v1408, %v1662
  %v1664 = vsel %vm1558, %v1417, %v1663
  %1681 = vst.msk [vmem:[%s1] sm:$0xff] %vm264, %v1559
  %1682 = vst.msk [vmem:[%s1 + $0x8] sm:$0xff] %vm264, %v1566
  %1683 = vst.msk [vmem:[%s1 + $0x10] sm:$0xff] %vm264, %v1573
  %1684 = vst.msk [vmem:[%s1 + $0x18] sm:$0xff] %vm264, %v1580
  %1685 = vst.msk [vmem:[%s1 + $0x20] sm:$0xff] %vm264, %v1587
  %1686 = vst.msk [vmem:[%s1 + $0x28] sm:$0xff] %vm264, %v1594
  %1687 = vst.msk [vmem:[%s1 + $0x30] sm:$0xff] %vm264, %v1601
  %1688 = vst.msk [vmem:[%s1 + $0x38] sm:$0xff] %vm264, %v1608
  %1689 = vst.msk [vmem:[%s1 + $0x40] sm:$0xff] %vm264, %v1615
  %1690 = vst.msk [vmem:[%s1 + $0x48] sm:$0xff] %vm264, %v1622
  %1691 = vst.msk [vmem:[%s1 + $0x50] sm:$0xff] %vm264, %v1629
  %1692 = vst.msk [vmem:[%s1 + $0x58] sm:$0xff] %vm264, %v1636
  %1693 = vst.msk [vmem:[%s1 + $0x60] sm:$0xff] %vm264, %v1643
  %1694 = vst.msk [vmem:[%s1 + $0x68] sm:$0xff] %vm264, %v1650
  %1695 = vst.msk [vmem:[%s1 + $0x70] sm:$0xff] %vm264, %v1657
  %1696 = vst.msk [vmem:[%s1 + $0x78] sm:$0xff] %vm264, %v1664
  // Predicated region
  $region6: #{densenet_forward.15} parent=0 // pred_check
    _
  $region7: #{densenet_forward.15} parent=0 // pred_check_branch
    %1698 = sbr.rel (0) target = $region9
  $region8: #{densenet_forward.15} parent=0 // pred_region
    _
  $region9: #{densenet_forward.15} parent=0 // pred_fallthru
    _
  // Predicated region
  $region10: #{densenet_forward.15} parent=0 // pred_check
    _
  $region11: #{densenet_forward.15} parent=0 // pred_check_branch
    %1700 = sbr.rel (0) target = $region13
  $region12: #{densenet_forward.15} parent=0 // pred_region
    _
  $region13: #{densenet_forward.15} parent=0 // pred_fallthru
    _

// kernel: densenet_forward.16
$region0: #{densenet_forward.16}
  #allocation0 [shape = 'u32[]', space=smem, size = 0x4, offset = 0x4, fixed_abs, tag = 'smem constant byte address 0x4 - core index']
  #allocation1 [shape = 'u32[144,128]{1,0:T(1,128)}', space=vmem, size = 0x12000, scoped, tag = 'internal scratch']
  %s0 = inlined_call_operand.vmem [shape: f32[128,16], index: 0, kind: input, shape index: {}]
  %s1 = inlined_call_operand.vmem [shape: f32[1,16], index: 1, kind: input, shape index: {}]
  %s2 = inlined_call_operand.vmem [shape: f32[1,16], index: 2, kind: input, shape index: {}]
  %s3 = inlined_call_operand.vmem [shape: bf16[16,16], index: 3, kind: input, shape index: {}]
  %s4 = inlined_call_operand.vmem [shape: f32[1,16], index: 4, kind: input, shape index: {}]
  %s5 = inlined_call_operand.vmem [shape: f32[1,16], index: 5, kind: input, shape index: {}]
  %s6 = inlined_call_operand.vmem [shape: f32[128,16], index: 6, kind: output, shape index: {}]
  %s7 = sld [smem:[#allocation0]]
  $region34: #{densenet_forward.16} parent=0
    _
  %s9 = ssub.s32 1, %s7
  %s10 = scalar_select 0, %s9, %s7
  // Predicated region
  $region2: #{densenet_forward.16} parent=0 // pred_check
    _
  $region3: #{densenet_forward.16} parent=0 // pred_check_branch
    %12 = sbr.rel (0) target = $region5
  $region4: #{densenet_forward.16} parent=0 // pred_region
    _
  $region5: #{densenet_forward.16} parent=0 // pred_fallthru
    _
  // Predicated region
  $region6: #{densenet_forward.16} parent=0 // pred_check
    _
  $region7: #{densenet_forward.16} parent=0 // pred_check_branch
    %14 = sbr.rel (0) target = $region9
  $region8: #{densenet_forward.16} parent=0 // pred_region
    _
  $region9: #{densenet_forward.16} parent=0 // pred_fallthru
    _
  // Predicated region
  $region10: #{densenet_forward.16} parent=0 // pred_check
    _
  $region11: #{densenet_forward.16} parent=0 // pred_check_branch
    %16 = sbr.rel (0) target = $region13
  $region12: #{densenet_forward.16} parent=0 // pred_region
    _
  $region13: #{densenet_forward.16} parent=0 // pred_fallthru
    _
  // Predicated region
  $region14: #{densenet_forward.16} parent=0 // pred_check
    _
  $region15: #{densenet_forward.16} parent=0 // pred_check_branch
    %18 = sbr.rel (0) target = $region17
  $region16: #{densenet_forward.16} parent=0 // pred_region
    _
  $region17: #{densenet_forward.16} parent=0 // pred_fallthru
    _
  // Predicated region
  $region18: #{densenet_forward.16} parent=0 // pred_check
    _
  $region19: #{densenet_forward.16} parent=0 // pred_check_branch
    %20 = sbr.rel (0) target = $region21
  $region20: #{densenet_forward.16} parent=0 // pred_region
    _
  $region21: #{densenet_forward.16} parent=0 // pred_fallthru
    _
  // Predicated region
  $region22: #{densenet_forward.16} parent=0 // pred_check
    _
  $region23: #{densenet_forward.16} parent=0 // pred_check_branch
    %22 = sbr.rel (0) target = $region25
  $region24: #{densenet_forward.16} parent=0 // pred_region
    _
  $region25: #{densenet_forward.16} parent=0 // pred_fallthru
    _
  %v24 = vld [vmem:[%s0] sm:$0xff]
  %v25 = vld [vmem:[%s0 + $0x8] sm:$0xff]
  %v26 = vld [vmem:[%s0 + $0x10] sm:$0xff]
  %v27 = vld [vmem:[%s0 + $0x18] sm:$0xff]
  %v28 = vld [vmem:[%s0 + $0x20] sm:$0xff]
  %v29 = vld [vmem:[%s0 + $0x28] sm:$0xff]
  %v30 = vld [vmem:[%s0 + $0x30] sm:$0xff]
  %v31 = vld [vmem:[%s0 + $0x38] sm:$0xff]
  %v32 = vld [vmem:[%s0 + $0x40] sm:$0xff]
  %v33 = vld [vmem:[%s0 + $0x48] sm:$0xff]
  %v34 = vld [vmem:[%s0 + $0x50] sm:$0xff]
  %v35 = vld [vmem:[%s0 + $0x58] sm:$0xff]
  %v36 = vld [vmem:[%s0 + $0x60] sm:$0xff]
  %v37 = vld [vmem:[%s0 + $0x68] sm:$0xff]
  %v38 = vld [vmem:[%s0 + $0x70] sm:$0xff]
  %v39 = vld [vmem:[%s0 + $0x78] sm:$0xff]
  %v40 = vld [vmem:[%s1] sm:$0x1]
  %v42 = vlaneseq
  %v43 = vshrl.u32 %v42, 7
  %v44 = vsub.s32 0, %v43
  %v45 = vrot.slane %v40, %v44
  %v47 = vmul.f32 %v24, %v45
  %v48 = vmul.f32 %v25, %v45
  %v49 = vmul.f32 %v26, %v45
  %v50 = vmul.f32 %v27, %v45
  %v51 = vmul.f32 %v28, %v45
  %v52 = vmul.f32 %v29, %v45
  %v53 = vmul.f32 %v30, %v45
  %v54 = vmul.f32 %v31, %v45
  %v55 = vmul.f32 %v32, %v45
  %v56 = vmul.f32 %v33, %v45
  %v57 = vmul.f32 %v34, %v45
  %v58 = vmul.f32 %v35, %v45
  %v59 = vmul.f32 %v36, %v45
  %v60 = vmul.f32 %v37, %v45
  %v61 = vmul.f32 %v38, %v45
  %v62 = vmul.f32 %v39, %v45
  %v63 = vld [vmem:[%s2] sm:$0x1]
  %v65 = vlaneseq
  %v66 = vshrl.u32 %v65, 7
  %v67 = vsub.s32 0, %v66
  %v68 = vrot.slane %v63, %v67
  %v70 = vadd.f32 %v47, %v68
  %v71 = vadd.f32 %v48, %v68
  %v72 = vadd.f32 %v49, %v68
  %v73 = vadd.f32 %v50, %v68
  %v74 = vadd.f32 %v51, %v68
  %v75 = vadd.f32 %v52, %v68
  %v76 = vadd.f32 %v53, %v68
  %v77 = vadd.f32 %v54, %v68
  %v78 = vadd.f32 %v55, %v68
  %v79 = vadd.f32 %v56, %v68
  %v80 = vadd.f32 %v57, %v68
  %v81 = vadd.f32 %v58, %v68
  %v82 = vadd.f32 %v59, %v68
  %v83 = vadd.f32 %v60, %v68
  %v84 = vadd.f32 %v61, %v68
  %v85 = vadd.f32 %v62, %v68
  %v86 = vmax.f32 %v70, 0.0
  %v87 = vmax.f32 %v71, 0.0
  %v88 = vmax.f32 %v72, 0.0
  %v89 = vmax.f32 %v73, 0.0
  %v90 = vmax.f32 %v74, 0.0
  %v91 = vmax.f32 %v75, 0.0
  %v92 = vmax.f32 %v76, 0.0
  %v93 = vmax.f32 %v77, 0.0
  %v94 = vmax.f32 %v78, 0.0
  %v95 = vmax.f32 %v79, 0.0
  %v96 = vmax.f32 %v80, 0.0
  %v97 = vmax.f32 %v81, 0.0
  %v98 = vmax.f32 %v82, 0.0
  %v99 = vmax.f32 %v83, 0.0
  %v100 = vmax.f32 %v84, 0.0
  %v101 = vmax.f32 %v85, 0.0
  %v102 = vpack.c.bf16 %v87, %v86
  %v103 = vpack.c.bf16 %v89, %v88
  %v104 = vpack.c.bf16 %v91, %v90
  %v105 = vpack.c.bf16 %v93, %v92
  %v106 = vpack.c.bf16 %v95, %v94
  %v107 = vpack.c.bf16 %v97, %v96
  %v108 = vpack.c.bf16 %v99, %v98
  %v109 = vpack.c.bf16 %v101, %v100
  %v110 = vld [vmem:[%s3] sm:$0xf]
  %v111 = vld [vmem:[%s3 + $0x4] sm:$0xf]
  %v114 = vunpack.c.l.b16 %v110
  %v115 = vunpack.c.l.b16 %v111
  %v116 = vpack.c.b16 %v115, %v114
  %vm118 = vcmask 130048
  %v120 = vsel %vm118, %v102, 0
  %v123 = vsel %vm118, %v103, 0
  %v126 = vsel %vm118, %v104, 0
  %v129 = vsel %vm118, %v105, 0
  %v132 = vsel %vm118, %v106, 0
  %v135 = vsel %vm118, %v107, 0
  %v138 = vsel %vm118, %v108, 0
  %v141 = vsel %vm118, %v109, 0
  %143 = vmatprep.subr.bf16.mxu0 0
  %144 = vmatpush1.bf16.msra.mxu0 0
  %145 = vmatprep.subr.bf16.mxu0 0
  %146 = vmatpush1.bf16.msra.mxu0 0
  %147 = vmatprep.subr.bf16.mxu0 0
  %148 = vmatpush1.bf16.msra.mxu0 0
  %149 = vmatprep.subr.bf16.mxu0 0
  %150 = vmatpush1.bf16.msra.mxu0 0
  %151 = vmatprep.subr.bf16.mxu0 0
  %152 = vmatpush1.bf16.msra.mxu0 0
  %153 = vmatprep.subr.bf16.mxu0 0
  %154 = vmatpush1.bf16.msra.mxu0 0
  %155 = vmatprep.subr.bf16.mxu0 0
  %156 = vmatpush1.bf16.msra.mxu0 0
  %157 = vmatprep.subr.bf16.mxu0 0
  %158 = vmatpush1.bf16.msra.mxu0 %v116
  %159 = vmatprep.subr.bf16.mxu0 0
  %160 = vmatpush2.bf16.msra.mxu0 0
  %161 = vmatprep.subr.bf16.mxu0 0
  %162 = vmatpush2.bf16.msra.mxu0 0
  %163 = vmatprep.subr.bf16.mxu0 0
  %164 = vmatpush2.bf16.msra.mxu0 0
  %165 = vmatprep.subr.bf16.mxu0 0
  %166 = vmatpush2.bf16.msra.mxu0 0
  %167 = vmatprep.subr.bf16.mxu0 0
  %168 = vmatpush2.bf16.msra.mxu0 0
  %169 = vmatprep.subr.bf16.mxu0 0
  %170 = vmatpush2.bf16.msra.mxu0 0
  %171 = vmatprep.subr.bf16.mxu0 0
  %172 = vmatpush2.bf16.msra.mxu0 0
  %173 = vmatprep.subr.bf16.mxu0 0
  %174 = vmatpush2.bf16.msra.mxu0 0
  %175 = vmatprep.mubr.bf16.mxu0 0
  %176 = vmatmul.mubr.bf16.gmra.mxu0 %v120
  %v177 = vpop.f32.mrf.mxu0
  %v178 = vadd.f32 0.0, %v177
  %v179 = vpop.f32.mrf.mxu0
  %v180 = vpop.f32.mrf.mxu0
  %v181 = vadd.f32 0.0, %v180
  %v182 = vpop.f32.mrf.mxu0
  %183 = vmatprep.mubr.bf16.mxu0 0
  %184 = vmatmul.mubr.bf16.gmra.mxu0 %v123
  %v185 = vpop.f32.mrf.mxu0
  %v186 = vadd.f32 0.0, %v185
  %v187 = vpop.f32.mrf.mxu0
  %v188 = vpop.f32.mrf.mxu0
  %v189 = vadd.f32 0.0, %v188
  %v190 = vpop.f32.mrf.mxu0
  %191 = vmatprep.mubr.bf16.mxu0 0
  %192 = vmatmul.mubr.bf16.gmra.mxu0 %v126
  %v193 = vpop.f32.mrf.mxu0
  %v194 = vadd.f32 0.0, %v193
  %v195 = vpop.f32.mrf.mxu0
  %v196 = vpop.f32.mrf.mxu0
  %v197 = vadd.f32 0.0, %v196
  %v198 = vpop.f32.mrf.mxu0
  %199 = vmatprep.mubr.bf16.mxu0 0
  %200 = vmatmul.mubr.bf16.gmra.mxu0 %v129
  %v201 = vpop.f32.mrf.mxu0
  %v202 = vadd.f32 0.0, %v201
  %v203 = vpop.f32.mrf.mxu0
  %v204 = vpop.f32.mrf.mxu0
  %v205 = vadd.f32 0.0, %v204
  %v206 = vpop.f32.mrf.mxu0
  %207 = vmatprep.mubr.bf16.mxu0 0
  %208 = vmatmul.mubr.bf16.gmra.mxu0 %v132
  %v209 = vpop.f32.mrf.mxu0
  %v210 = vadd.f32 0.0, %v209
  %v211 = vpop.f32.mrf.mxu0
  %v212 = vpop.f32.mrf.mxu0
  %v213 = vadd.f32 0.0, %v212
  %v214 = vpop.f32.mrf.mxu0
  %215 = vmatprep.mubr.bf16.mxu0 0
  %216 = vmatmul.mubr.bf16.gmra.mxu0 %v135
  %v217 = vpop.f32.mrf.mxu0
  %v218 = vadd.f32 0.0, %v217
  %v219 = vpop.f32.mrf.mxu0
  %v220 = vpop.f32.mrf.mxu0
  %v221 = vadd.f32 0.0, %v220
  %v222 = vpop.f32.mrf.mxu0
  %223 = vmatprep.mubr.bf16.mxu0 0
  %224 = vmatmul.mubr.bf16.gmra.mxu0 %v138
  %v225 = vpop.f32.mrf.mxu0
  %v226 = vadd.f32 0.0, %v225
  %v227 = vpop.f32.mrf.mxu0
  %v228 = vpop.f32.mrf.mxu0
  %v229 = vadd.f32 0.0, %v228
  %v230 = vpop.f32.mrf.mxu0
  %231 = vmatprep.mubr.bf16.mxu0 0
  %232 = vmatmul.mubr.bf16.gmra.mxu0 %v141
  %v233 = vpop.f32.mrf.mxu0
  %v234 = vadd.f32 0.0, %v233
  %v235 = vpop.f32.mrf.mxu0
  %v236 = vpop.f32.mrf.mxu0
  %v237 = vadd.f32 0.0, %v236
  %v238 = vpop.f32.mrf.mxu0
  %239 = vdwg.mxu0
  %v240 = vld [vmem:[%s4] sm:$0x1]
  %v242 = vlaneseq
  %v243 = vshrl.u32 %v242, 7
  %v244 = vsub.s32 0, %v243
  %v245 = vrot.slane %v240, %v244
  %v247 = vmul.f32 %v178, %v245
  %v248 = vmul.f32 %v181, %v245
  %v249 = vmul.f32 %v186, %v245
  %v250 = vmul.f32 %v189, %v245
  %v251 = vmul.f32 %v194, %v245
  %v252 = vmul.f32 %v197, %v245
  %v253 = vmul.f32 %v202, %v245
  %v254 = vmul.f32 %v205, %v245
  %v255 = vmul.f32 %v210, %v245
  %v256 = vmul.f32 %v213, %v245
  %v257 = vmul.f32 %v218, %v245
  %v258 = vmul.f32 %v221, %v245
  %v259 = vmul.f32 %v226, %v245
  %v260 = vmul.f32 %v229, %v245
  %v261 = vmul.f32 %v234, %v245
  %v262 = vmul.f32 %v237, %v245
  %v263 = vld [vmem:[%s5] sm:$0x1]
  %v265 = vlaneseq
  %v266 = vshrl.u32 %v265, 7
  %v267 = vsub.s32 0, %v266
  %v268 = vrot.slane %v263, %v267
  %v270 = vadd.f32 %v247, %v268
  %v271 = vadd.f32 %v248, %v268
  %v272 = vadd.f32 %v249, %v268
  %v273 = vadd.f32 %v250, %v268
  %v274 = vadd.f32 %v251, %v268
  %v275 = vadd.f32 %v252, %v268
  %v276 = vadd.f32 %v253, %v268
  %v277 = vadd.f32 %v254, %v268
  %v278 = vadd.f32 %v255, %v268
  %v279 = vadd.f32 %v256, %v268
  %v280 = vadd.f32 %v257, %v268
  %v281 = vadd.f32 %v258, %v268
  %v282 = vadd.f32 %v259, %v268
  %v283 = vadd.f32 %v260, %v268
  %v284 = vadd.f32 %v261, %v268
  %v285 = vadd.f32 %v262, %v268
  %v286 = vmax.f32 %v270, 0.0
  %v287 = vmax.f32 %v271, 0.0
  %v288 = vmax.f32 %v272, 0.0
  %v289 = vmax.f32 %v273, 0.0
  %v290 = vmax.f32 %v274, 0.0
  %v291 = vmax.f32 %v275, 0.0
  %v292 = vmax.f32 %v276, 0.0
  %v293 = vmax.f32 %v277, 0.0
  %v294 = vmax.f32 %v278, 0.0
  %v295 = vmax.f32 %v279, 0.0
  %v296 = vmax.f32 %v280, 0.0
  %v297 = vmax.f32 %v281, 0.0
  %v298 = vmax.f32 %v282, 0.0
  %v299 = vmax.f32 %v283, 0.0
  %v300 = vmax.f32 %v284, 0.0
  %v301 = vmax.f32 %v285, 0.0
  %302 = vst.msk [vmem:[%s6] sm:$0xff] %vm118, %v286
  %303 = vst.msk [vmem:[%s6 + $0x8] sm:$0xff] %vm118, %v287
  %304 = vst.msk [vmem:[%s6 + $0x10] sm:$0xff] %vm118, %v288
  %305 = vst.msk [vmem:[%s6 + $0x18] sm:$0xff] %vm118, %v289
  %306 = vst.msk [vmem:[%s6 + $0x20] sm:$0xff] %vm118, %v290
  %307 = vst.msk [vmem:[%s6 + $0x28] sm:$0xff] %vm118, %v291
  %308 = vst.msk [vmem:[%s6 + $0x30] sm:$0xff] %vm118, %v292
  %309 = vst.msk [vmem:[%s6 + $0x38] sm:$0xff] %vm118, %v293
  %310 = vst.msk [vmem:[%s6 + $0x40] sm:$0xff] %vm118, %v294
  %311 = vst.msk [vmem:[%s6 + $0x48] sm:$0xff] %vm118, %v295
  %312 = vst.msk [vmem:[%s6 + $0x50] sm:$0xff] %vm118, %v296
  %313 = vst.msk [vmem:[%s6 + $0x58] sm:$0xff] %vm118, %v297
  %314 = vst.msk [vmem:[%s6 + $0x60] sm:$0xff] %vm118, %v298
  %315 = vst.msk [vmem:[%s6 + $0x68] sm:$0xff] %vm118, %v299
  %316 = vst.msk [vmem:[%s6 + $0x70] sm:$0xff] %vm118, %v300
  %317 = vst.msk [vmem:[%s6 + $0x78] sm:$0xff] %vm118, %v301
  // Predicated region
  $region26: #{densenet_forward.16} parent=0 // pred_check
    _
  $region27: #{densenet_forward.16} parent=0 // pred_check_branch
    %319 = sbr.rel (0) target = $region29
  $region28: #{densenet_forward.16} parent=0 // pred_region
    _
  $region29: #{densenet_forward.16} parent=0 // pred_fallthru
    _
  // Predicated region
  $region30: #{densenet_forward.16} parent=0 // pred_check
    _
  $region31: #{densenet_forward.16} parent=0 // pred_check_branch
    %321 = sbr.rel (0) target = $region33
  $region32: #{densenet_forward.16} parent=0 // pred_region
    _
  $region33: #{densenet_forward.16} parent=0 // pred_fallthru
    _

// kernel: densenet_forward.18
$region0: #{densenet_forward.18}
  #allocation0 [shape = 'u32[]', space=smem, size = 0x4, offset = 0x4, fixed_abs, tag = 'smem constant byte address 0x4 - core index']
  #allocation1 [shape = 'u32[144,128]{1,0:T(1,128)}', space=vmem, size = 0x12000, scoped, tag = 'internal scratch']
  %s0 = inlined_call_operand.vmem [shape: f32[128,24], index: 0, kind: input, shape index: {}]
  %s1 = inlined_call_operand.vmem [shape: f32[1,24], index: 1, kind: input, shape index: {}]
  %s2 = inlined_call_operand.vmem [shape: f32[1,24], index: 2, kind: input, shape index: {}]
  %s3 = inlined_call_operand.vmem [shape: bf16[24,16], index: 3, kind: input, shape index: {}]
  %s4 = inlined_call_operand.vmem [shape: f32[1,16], index: 4, kind: input, shape index: {}]
  %s5 = inlined_call_operand.vmem [shape: f32[1,16], index: 5, kind: input, shape index: {}]
  %s6 = inlined_call_operand.vmem [shape: f32[128,16], index: 6, kind: output, shape index: {}]
  %s7 = sld [smem:[#allocation0]]
  $region34: #{densenet_forward.18} parent=0
    _
  %s9 = ssub.s32 1, %s7
  %s10 = scalar_select 0, %s9, %s7
  // Predicated region
  $region2: #{densenet_forward.18} parent=0 // pred_check
    _
  $region3: #{densenet_forward.18} parent=0 // pred_check_branch
    %12 = sbr.rel (0) target = $region5
  $region4: #{densenet_forward.18} parent=0 // pred_region
    _
  $region5: #{densenet_forward.18} parent=0 // pred_fallthru
    _
  // Predicated region
  $region6: #{densenet_forward.18} parent=0 // pred_check
    _
  $region7: #{densenet_forward.18} parent=0 // pred_check_branch
    %14 = sbr.rel (0) target = $region9
  $region8: #{densenet_forward.18} parent=0 // pred_region
    _
  $region9: #{densenet_forward.18} parent=0 // pred_fallthru
    _
  // Predicated region
  $region10: #{densenet_forward.18} parent=0 // pred_check
    _
  $region11: #{densenet_forward.18} parent=0 // pred_check_branch
    %16 = sbr.rel (0) target = $region13
  $region12: #{densenet_forward.18} parent=0 // pred_region
    _
  $region13: #{densenet_forward.18} parent=0 // pred_fallthru
    _
  // Predicated region
  $region14: #{densenet_forward.18} parent=0 // pred_check
    _
  $region15: #{densenet_forward.18} parent=0 // pred_check_branch
    %18 = sbr.rel (0) target = $region17
  $region16: #{densenet_forward.18} parent=0 // pred_region
    _
  $region17: #{densenet_forward.18} parent=0 // pred_fallthru
    _
  // Predicated region
  $region18: #{densenet_forward.18} parent=0 // pred_check
    _
  $region19: #{densenet_forward.18} parent=0 // pred_check_branch
    %20 = sbr.rel (0) target = $region21
  $region20: #{densenet_forward.18} parent=0 // pred_region
    _
  $region21: #{densenet_forward.18} parent=0 // pred_fallthru
    _
  // Predicated region
  $region22: #{densenet_forward.18} parent=0 // pred_check
    _
  $region23: #{densenet_forward.18} parent=0 // pred_check_branch
    %22 = sbr.rel (0) target = $region25
  $region24: #{densenet_forward.18} parent=0 // pred_region
    _
  $region25: #{densenet_forward.18} parent=0 // pred_fallthru
    _
  %v24 = vld [vmem:[%s0] sm:$0xff]
  %v25 = vld [vmem:[%s0 + $0x8] sm:$0xff]
  %v26 = vld [vmem:[%s0 + $0x10] sm:$0xff]
  %v27 = vld [vmem:[%s0 + $0x18] sm:$0xff]
  %v28 = vld [vmem:[%s0 + $0x20] sm:$0xff]
  %v29 = vld [vmem:[%s0 + $0x28] sm:$0xff]
  %v30 = vld [vmem:[%s0 + $0x30] sm:$0xff]
  %v31 = vld [vmem:[%s0 + $0x38] sm:$0xff]
  %v32 = vld [vmem:[%s0 + $0x40] sm:$0xff]
  %v33 = vld [vmem:[%s0 + $0x48] sm:$0xff]
  %v34 = vld [vmem:[%s0 + $0x50] sm:$0xff]
  %v35 = vld [vmem:[%s0 + $0x58] sm:$0xff]
  %v36 = vld [vmem:[%s0 + $0x60] sm:$0xff]
  %v37 = vld [vmem:[%s0 + $0x68] sm:$0xff]
  %v38 = vld [vmem:[%s0 + $0x70] sm:$0xff]
  %v39 = vld [vmem:[%s0 + $0x78] sm:$0xff]
  %v40 = vld [vmem:[%s1] sm:$0x1]
  %v42 = vlaneseq
  %v43 = vshrl.u32 %v42, 7
  %v44 = vsub.s32 0, %v43
  %v45 = vrot.slane %v40, %v44
  %v47 = vmul.f32 %v24, %v45
  %v48 = vmul.f32 %v25, %v45
  %v49 = vmul.f32 %v26, %v45
  %v50 = vmul.f32 %v27, %v45
  %v51 = vmul.f32 %v28, %v45
  %v52 = vmul.f32 %v29, %v45
  %v53 = vmul.f32 %v30, %v45
  %v54 = vmul.f32 %v31, %v45
  %v55 = vmul.f32 %v32, %v45
  %v56 = vmul.f32 %v33, %v45
  %v57 = vmul.f32 %v34, %v45
  %v58 = vmul.f32 %v35, %v45
  %v59 = vmul.f32 %v36, %v45
  %v60 = vmul.f32 %v37, %v45
  %v61 = vmul.f32 %v38, %v45
  %v62 = vmul.f32 %v39, %v45
  %v63 = vld [vmem:[%s2] sm:$0x1]
  %v65 = vlaneseq
  %v66 = vshrl.u32 %v65, 7
  %v67 = vsub.s32 0, %v66
  %v68 = vrot.slane %v63, %v67
  %v70 = vadd.f32 %v47, %v68
  %v71 = vadd.f32 %v48, %v68
  %v72 = vadd.f32 %v49, %v68
  %v73 = vadd.f32 %v50, %v68
  %v74 = vadd.f32 %v51, %v68
  %v75 = vadd.f32 %v52, %v68
  %v76 = vadd.f32 %v53, %v68
  %v77 = vadd.f32 %v54, %v68
  %v78 = vadd.f32 %v55, %v68
  %v79 = vadd.f32 %v56, %v68
  %v80 = vadd.f32 %v57, %v68
  %v81 = vadd.f32 %v58, %v68
  %v82 = vadd.f32 %v59, %v68
  %v83 = vadd.f32 %v60, %v68
  %v84 = vadd.f32 %v61, %v68
  %v85 = vadd.f32 %v62, %v68
  %v86 = vmax.f32 %v70, 0.0
  %v87 = vmax.f32 %v71, 0.0
  %v88 = vmax.f32 %v72, 0.0
  %v89 = vmax.f32 %v73, 0.0
  %v90 = vmax.f32 %v74, 0.0
  %v91 = vmax.f32 %v75, 0.0
  %v92 = vmax.f32 %v76, 0.0
  %v93 = vmax.f32 %v77, 0.0
  %v94 = vmax.f32 %v78, 0.0
  %v95 = vmax.f32 %v79, 0.0
  %v96 = vmax.f32 %v80, 0.0
  %v97 = vmax.f32 %v81, 0.0
  %v98 = vmax.f32 %v82, 0.0
  %v99 = vmax.f32 %v83, 0.0
  %v100 = vmax.f32 %v84, 0.0
  %v101 = vmax.f32 %v85, 0.0
  %v102 = vpack.c.bf16 %v87, %v86
  %v103 = vpack.c.bf16 %v89, %v88
  %v104 = vpack.c.bf16 %v91, %v90
  %v105 = vpack.c.bf16 %v93, %v92
  %v106 = vpack.c.bf16 %v95, %v94
  %v107 = vpack.c.bf16 %v97, %v96
  %v108 = vpack.c.bf16 %v99, %v98
  %v109 = vpack.c.bf16 %v101, %v100
  %v110 = vld [vmem:[%s3] sm:$0xf]
  %v111 = vld [vmem:[%s3 + $0x4] sm:$0xf]
  %v112 = vld [vmem:[%s3 + $0x8] sm:$0xf]
  %v116 = vunpack.c.l.b16 %v110
  %v117 = vunpack.c.l.b16 %v111
  %v118 = vunpack.c.l.b16 %v112
  %v119 = vpack.c.b16 %v117, %v116
  %v120 = vpack.c.b16 %v118, %v118
  %vm122 = vcmask 195584
  %v124 = vsel %vm122, %v102, 0
  %v127 = vsel %vm122, %v103, 0
  %v130 = vsel %vm122, %v104, 0
  %v133 = vsel %vm122, %v105, 0
  %v136 = vsel %vm122, %v106, 0
  %v139 = vsel %vm122, %v107, 0
  %v142 = vsel %vm122, %v108, 0
  %v145 = vsel %vm122, %v109, 0
  %vm147 = vcmask 1043456
  %v149 = vsel %vm147, %v120, 0
  %151 = vmatprep.subr.bf16.mxu0 0
  %152 = vmatpush1.bf16.msra.mxu0 0
  %153 = vmatprep.subr.bf16.mxu0 0
  %154 = vmatpush1.bf16.msra.mxu0 0
  %155 = vmatprep.subr.bf16.mxu0 0
  %156 = vmatpush1.bf16.msra.mxu0 0
  %157 = vmatprep.subr.bf16.mxu0 0
  %158 = vmatpush1.bf16.msra.mxu0 0
  %159 = vmatprep.subr.bf16.mxu0 0
  %160 = vmatpush1.bf16.msra.mxu0 0
  %161 = vmatprep.subr.bf16.mxu0 0
  %162 = vmatpush1.bf16.msra.mxu0 0
  %163 = vmatprep.subr.bf16.mxu0 0
  %164 = vmatpush1.bf16.msra.mxu0 %v149
  %165 = vmatprep.subr.bf16.mxu0 0
  %166 = vmatpush1.bf16.msra.mxu0 %v119
  %167 = vmatprep.subr.bf16.mxu0 0
  %168 = vmatpush2.bf16.msra.mxu0 0
  %169 = vmatprep.subr.bf16.mxu0 0
  %170 = vmatpush2.bf16.msra.mxu0 0
  %171 = vmatprep.subr.bf16.mxu0 0
  %172 = vmatpush2.bf16.msra.mxu0 0
  %173 = vmatprep.subr.bf16.mxu0 0
  %174 = vmatpush2.bf16.msra.mxu0 0
  %175 = vmatprep.subr.bf16.mxu0 0
  %176 = vmatpush2.bf16.msra.mxu0 0
  %177 = vmatprep.subr.bf16.mxu0 0
  %178 = vmatpush2.bf16.msra.mxu0 0
  %179 = vmatprep.subr.bf16.mxu0 0
  %180 = vmatpush2.bf16.msra.mxu0 0
  %181 = vmatprep.subr.bf16.mxu0 0
  %182 = vmatpush2.bf16.msra.mxu0 0
  %183 = vmatprep.mubr.bf16.mxu0 0
  %184 = vmatmul.mubr.bf16.gmra.mxu0 %v124
  %v185 = vpop.f32.mrf.mxu0
  %v186 = vadd.f32 0.0, %v185
  %v187 = vpop.f32.mrf.mxu0
  %v188 = vpop.f32.mrf.mxu0
  %v189 = vadd.f32 0.0, %v188
  %v190 = vpop.f32.mrf.mxu0
  %191 = vmatprep.mubr.bf16.mxu0 0
  %192 = vmatmul.mubr.bf16.gmra.mxu0 %v127
  %v193 = vpop.f32.mrf.mxu0
  %v194 = vadd.f32 0.0, %v193
  %v195 = vpop.f32.mrf.mxu0
  %v196 = vpop.f32.mrf.mxu0
  %v197 = vadd.f32 0.0, %v196
  %v198 = vpop.f32.mrf.mxu0
  %199 = vmatprep.mubr.bf16.mxu0 0
  %200 = vmatmul.mubr.bf16.gmra.mxu0 %v130
  %v201 = vpop.f32.mrf.mxu0
  %v202 = vadd.f32 0.0, %v201
  %v203 = vpop.f32.mrf.mxu0
  %v204 = vpop.f32.mrf.mxu0
  %v205 = vadd.f32 0.0, %v204
  %v206 = vpop.f32.mrf.mxu0
  %207 = vmatprep.mubr.bf16.mxu0 0
  %208 = vmatmul.mubr.bf16.gmra.mxu0 %v133
  %v209 = vpop.f32.mrf.mxu0
  %v210 = vadd.f32 0.0, %v209
  %v211 = vpop.f32.mrf.mxu0
  %v212 = vpop.f32.mrf.mxu0
  %v213 = vadd.f32 0.0, %v212
  %v214 = vpop.f32.mrf.mxu0
  %215 = vmatprep.mubr.bf16.mxu0 0
  %216 = vmatmul.mubr.bf16.gmra.mxu0 %v136
  %v217 = vpop.f32.mrf.mxu0
  %v218 = vadd.f32 0.0, %v217
  %v219 = vpop.f32.mrf.mxu0
  %v220 = vpop.f32.mrf.mxu0
  %v221 = vadd.f32 0.0, %v220
  %v222 = vpop.f32.mrf.mxu0
  %223 = vmatprep.mubr.bf16.mxu0 0
  %224 = vmatmul.mubr.bf16.gmra.mxu0 %v139
  %v225 = vpop.f32.mrf.mxu0
  %v226 = vadd.f32 0.0, %v225
  %v227 = vpop.f32.mrf.mxu0
  %v228 = vpop.f32.mrf.mxu0
  %v229 = vadd.f32 0.0, %v228
  %v230 = vpop.f32.mrf.mxu0
  %231 = vmatprep.mubr.bf16.mxu0 0
  %232 = vmatmul.mubr.bf16.gmra.mxu0 %v142
  %v233 = vpop.f32.mrf.mxu0
  %v234 = vadd.f32 0.0, %v233
  %v235 = vpop.f32.mrf.mxu0
  %v236 = vpop.f32.mrf.mxu0
  %v237 = vadd.f32 0.0, %v236
  %v238 = vpop.f32.mrf.mxu0
  %239 = vmatprep.mubr.bf16.mxu0 0
  %240 = vmatmul.mubr.bf16.gmra.mxu0 %v145
  %v241 = vpop.f32.mrf.mxu0
  %v242 = vadd.f32 0.0, %v241
  %v243 = vpop.f32.mrf.mxu0
  %v244 = vpop.f32.mrf.mxu0
  %v245 = vadd.f32 0.0, %v244
  %v246 = vpop.f32.mrf.mxu0
  %247 = vdwg.mxu0
  %v248 = vld [vmem:[%s4] sm:$0x1]
  %v250 = vlaneseq
  %v251 = vshrl.u32 %v250, 7
  %v252 = vsub.s32 0, %v251
  %v253 = vrot.slane %v248, %v252
  %v255 = vmul.f32 %v186, %v253
  %v256 = vmul.f32 %v189, %v253
  %v257 = vmul.f32 %v194, %v253
  %v258 = vmul.f32 %v197, %v253
  %v259 = vmul.f32 %v202, %v253
  %v260 = vmul.f32 %v205, %v253
  %v261 = vmul.f32 %v210, %v253
  %v262 = vmul.f32 %v213, %v253
  %v263 = vmul.f32 %v218, %v253
  %v264 = vmul.f32 %v221, %v253
  %v265 = vmul.f32 %v226, %v253
  %v266 = vmul.f32 %v229, %v253
  %v267 = vmul.f32 %v234, %v253
  %v268 = vmul.f32 %v237, %v253
  %v269 = vmul.f32 %v242, %v253
  %v270 = vmul.f32 %v245, %v253
  %v271 = vld [vmem:[%s5] sm:$0x1]
  %v273 = vlaneseq
  %v274 = vshrl.u32 %v273, 7
  %v275 = vsub.s32 0, %v274
  %v276 = vrot.slane %v271, %v275
  %v278 = vadd.f32 %v255, %v276
  %v279 = vadd.f32 %v256, %v276
  %v280 = vadd.f32 %v257, %v276
  %v281 = vadd.f32 %v258, %v276
  %v282 = vadd.f32 %v259, %v276
  %v283 = vadd.f32 %v260, %v276
  %v284 = vadd.f32 %v261, %v276
  %v285 = vadd.f32 %v262, %v276
  %v286 = vadd.f32 %v263, %v276
  %v287 = vadd.f32 %v264, %v276
  %v288 = vadd.f32 %v265, %v276
  %v289 = vadd.f32 %v266, %v276
  %v290 = vadd.f32 %v267, %v276
  %v291 = vadd.f32 %v268, %v276
  %v292 = vadd.f32 %v269, %v276
  %v293 = vadd.f32 %v270, %v276
  %v294 = vmax.f32 %v278, 0.0
  %v295 = vmax.f32 %v279, 0.0
  %v296 = vmax.f32 %v280, 0.0
  %v297 = vmax.f32 %v281, 0.0
  %v298 = vmax.f32 %v282, 0.0
  %v299 = vmax.f32 %v283, 0.0
  %v300 = vmax.f32 %v284, 0.0
  %v301 = vmax.f32 %v285, 0.0
  %v302 = vmax.f32 %v286, 0.0
  %v303 = vmax.f32 %v287, 0.0
  %v304 = vmax.f32 %v288, 0.0
  %v305 = vmax.f32 %v289, 0.0
  %v306 = vmax.f32 %v290, 0.0
  %v307 = vmax.f32 %v291, 0.0
  %v308 = vmax.f32 %v292, 0.0
  %v309 = vmax.f32 %v293, 0.0
  %vm310 = vcmask 130048
  %311 = vst.msk [vmem:[%s6] sm:$0xff] %vm310, %v294
  %312 = vst.msk [vmem:[%s6 + $0x8] sm:$0xff] %vm310, %v295
  %313 = vst.msk [vmem:[%s6 + $0x10] sm:$0xff] %vm310, %v296
  %314 = vst.msk [vmem:[%s6 + $0x18] sm:$0xff] %vm310, %v297
  %315 = vst.msk [vmem:[%s6 + $0x20] sm:$0xff] %vm310, %v298
  %316 = vst.msk [vmem:[%s6 + $0x28] sm:$0xff] %vm310, %v299
  %317 = vst.msk [vmem:[%s6 + $0x30] sm:$0xff] %vm310, %v300
  %318 = vst.msk [vmem:[%s6 + $0x38] sm:$0xff] %vm310, %v301
  %319 = vst.msk [vmem:[%s6 + $0x40] sm:$0xff] %vm310, %v302
  %320 = vst.msk [vmem:[%s6 + $0x48] sm:$0xff] %vm310, %v303
  %321 = vst.msk [vmem:[%s6 + $0x50] sm:$0xff] %vm310, %v304
  %322 = vst.msk [vmem:[%s6 + $0x58] sm:$0xff] %vm310, %v305
  %323 = vst.msk [vmem:[%s6 + $0x60] sm:$0xff] %vm310, %v306
  %324 = vst.msk [vmem:[%s6 + $0x68] sm:$0xff] %vm310, %v307
  %325 = vst.msk [vmem:[%s6 + $0x70] sm:$0xff] %vm310, %v308
  %326 = vst.msk [vmem:[%s6 + $0x78] sm:$0xff] %vm310, %v309
  // Predicated region
  $region26: #{densenet_forward.18} parent=0 // pred_check
    _
  $region27: #{densenet_forward.18} parent=0 // pred_check_branch
    %328 = sbr.rel (0) target = $region29
  $region28: #{densenet_forward.18} parent=0 // pred_region
    _
  $region29: #{densenet_forward.18} parent=0 // pred_fallthru
    _
  // Predicated region
  $region30: #{densenet_forward.18} parent=0 // pred_check
    _
  $region31: #{densenet_forward.18} parent=0 // pred_check_branch
    %330 = sbr.rel (0) target = $region33
  $region32: #{densenet_forward.18} parent=0 // pred_region
    _
  $region33: #{densenet_forward.18} parent=0 // pred_fallthru
    _

// kernel: densenet_forward.17
$region0: #{densenet_forward.17}
  #allocation0 [shape = 'u32[]', space=smem, size = 0x4, offset = 0x4, fixed_abs, tag = 'smem constant byte address 0x4 - core index']
  #allocation1 [shape = 'u32[144,128]{1,0:T(1,128)}', space=vmem, size = 0x12000, scoped, tag = 'internal scratch']
  %s0 = inlined_call_operand.vmem [shape: f32[2,176,16], index: 0, kind: input, shape index: {}]
  %s1 = inlined_call_operand.vmem [shape: bf16[9,16,8], index: 1, kind: input, shape index: {}]
  %s2 = inlined_call_operand.vmem [shape: f32[2,8,8,8], index: 2, kind: output, shape index: {}]
  %s3 = sld [smem:[#allocation0]]
  $region41: #{densenet_forward.17} parent=0
    _
  %s5 = ssub.s32 1, %s3
  %s6 = scalar_select 0, %s5, %s3
  loop: start=0, step=1, limit=4
  $region2: #{densenet_forward.17} parent=0 // loop_pre_header
    _
  $region3: #{densenet_forward.17} parent=0 // loop_header
    %s8 = sphi 0, %s12
    %p9 = scmp.ge.s32.totalorder %s8, 4
    %s18 = sphi 0, %s20
    %s21 = sphi 0, %s18
    %s22 = sphi 0, %s21
    %s38 = sphi 0, %s22
    %s42 = sphi 0, %s42
    %s44 = sphi 0, %s42
    %s45 = sphi 0, %s44
    %s59 = sphi 0, %s45
    %s65 = sphi 0, %s67
    %s68 = sphi 0, %s65
    %s69 = sphi 0, %s68
    %s85 = sphi 0, %s69
  $region4: #{densenet_forward.17} parent=0 // loop_header_branch
    %11 = sbr.rel (%p9) target = $region8
  $region5: #{densenet_forward.17} parent=0 // loop_body
    %s13 = ssub.s32 %s8, 1
    %s14 = ssub.s32 %s8, 2
    %s15 = sadd.s32 %s8, 1
    %s16 = ssub.s32 %s8, %s15
    %p17 = scmp.eq.s32.totalorder %s16, 0
    %s19 = sadd.s32 %s18, 1
    %s20 = scalar_select %p17, %s18, %s19
    %p23 = pneg %p17
    %p24 = scmp.eq.s32.totalorder %s8, 1
    %p25 = por %p23, %p24
    %p26 = scmp.ne.s32.totalorder %s18, %s21
    %p27 = scmp.eq.s32.totalorder %s8, 0
    %p28 = por %p26, %p27
    %p29 = scmp.ne.s32.totalorder %s18, %s21
    %p30 = scmp.eq.s32.totalorder %s13, 1
    %p31 = por %p29, %p30
    %p32 = scmp.ne.s32.totalorder %s21, %s22
    %p33 = scmp.eq.s32.totalorder %s13, 0
    %p34 = por %p32, %p33
    %p35 = scmp.ne.s32.totalorder %s21, %s22
    %p36 = scmp.eq.s32.totalorder %s14, 1
    %p37 = por %p35, %p36
    %p39 = scmp.ne.s32.totalorder %s22, %s38
    %p40 = scmp.eq.s32.totalorder %s14, 0
    %p41 = por %p39, %p40
    %s43 = sadd.s32 %s42, 1
    %p46 = scmp.eq.s32.totalorder %s8, 1
    %p47 = scmp.ne.s32.totalorder %s42, %s44
    %p48 = scmp.eq.s32.totalorder %s8, 0
    %p49 = por %p47, %p48
    %p50 = scmp.ne.s32.totalorder %s42, %s44
    %p51 = scmp.eq.s32.totalorder %s13, 1
    %p52 = por %p50, %p51
    %p53 = scmp.ne.s32.totalorder %s44, %s45
    %p54 = scmp.eq.s32.totalorder %s13, 0
    %p55 = por %p53, %p54
    %p56 = scmp.ne.s32.totalorder %s44, %s45
    %p57 = scmp.eq.s32.totalorder %s14, 1
    %p58 = por %p56, %p57
    %p60 = scmp.ne.s32.totalorder %s45, %s59
    %p61 = scmp.eq.s32.totalorder %s14, 0
    %p62 = por %p60, %p61
    %s63 = ssub.s32 %s8, %s15
    %p64 = scmp.eq.s32.totalorder %s63, 0
    %s66 = sadd.s32 %s65, 1
    %s67 = scalar_select %p64, %s65, %s66
    %p70 = pneg %p64
    %p71 = scmp.eq.s32.totalorder %s8, 1
    %p72 = por %p70, %p71
    %p73 = scmp.ne.s32.totalorder %s65, %s68
    %p74 = scmp.eq.s32.totalorder %s8, 0
    %p75 = por %p73, %p74
    %p76 = scmp.ne.s32.totalorder %s65, %s68
    %p77 = scmp.eq.s32.totalorder %s13, 1
    %p78 = por %p76, %p77
    %p79 = scmp.ne.s32.totalorder %s68, %s69
    %p80 = scmp.eq.s32.totalorder %s13, 0
    %p81 = por %p79, %p80
    %p82 = scmp.ne.s32.totalorder %s68, %s69
    %p83 = scmp.eq.s32.totalorder %s14, 1
    %p84 = por %p82, %p83
    %p86 = scmp.ne.s32.totalorder %s69, %s85
    %p87 = scmp.eq.s32.totalorder %s14, 0
    %p88 = por %p86, %p87
    %p89 = scmp.le.s32.totalorder 1, %s8
    %p90 = scmp.lt.s32.totalorder %s8, 3
    %p91 = pnand %p89, %p90
    %p92 = pneg %p91
    // Predicated region
    $region9: #{densenet_forward.17} parent=5 // pred_check
      _
    $region10: #{densenet_forward.17} parent=5 // pred_check_branch
      %94 = sbr.rel (%p91) target = $region12
    $region11: #{densenet_forward.17} parent=5 // pred_region
      %s95 = ssub.s32 %s8, 1
      // Predicated region
      $region13: #{densenet_forward.17} parent=11 // pred_check
        %p96 = pneg %p55
      $region14: #{densenet_forward.17} parent=11 // pred_check_branch
        %98 = sbr.rel (%p96) target = $region16
      $region15: #{densenet_forward.17} parent=11 // pred_region
        _
      $region16: #{densenet_forward.17} parent=11 // pred_fallthru
        _
    $region12: #{densenet_forward.17} parent=5 // pred_fallthru
      _
    %p99 = scmp.lt.s32.totalorder %s8, 2
    // Predicated region
    $region17: #{densenet_forward.17} parent=5 // pred_check
      %p100 = pneg %p99
    $region18: #{densenet_forward.17} parent=5 // pred_check_branch
      %102 = sbr.rel (%p100) target = $region20
    $region19: #{densenet_forward.17} parent=5 // pred_region
      // Predicated region
      $region21: #{densenet_forward.17} parent=19 // pred_check
        %p103 = pneg %p28
      $region22: #{densenet_forward.17} parent=19 // pred_check_branch
        %105 = sbr.rel (%p103) target = $region24
      $region23: #{densenet_forward.17} parent=19 // pred_region
        %p106 = scmp.lt.s32.totalorder %s8, 1
        %s107 = scalar_select %p106, %s8, 1
        %s108 = smul.addr %s107, 22
        %s109 = smul.addr %s108, 8
        %s110 = scalar_lea.vmem %s0, %s109
      $region24: #{densenet_forward.17} parent=19 // pred_fallthru
        _
    $region20: #{densenet_forward.17} parent=5 // pred_fallthru
      _
    %p111 = scmp.le.s32.totalorder 1, %s8
    %p112 = scmp.lt.s32.totalorder %s8, 3
    %p113 = pnand %p111, %p112
    %p114 = pneg %p113
    // Predicated region
    $region25: #{densenet_forward.17} parent=5 // pred_check
      _
    $region26: #{densenet_forward.17} parent=5 // pred_check_branch
      %116 = sbr.rel (%p113) target = $region28
    $region27: #{densenet_forward.17} parent=5 // pred_region
      %s117 = ssub.s32 %s8, 1
      %p118 = scmp.lt.s32.totalorder %s13, 1
      %s119 = scalar_select %p118, %s13, 1
      %s120 = smul.addr %s119, 22
      %s121 = smul.addr %s120, 8
      %s122 = scalar_lea.vmem %s0, %s121
      %p123 = pneg %p34
      %p124 = pneg %p31
      %p125 = pneg %p55
      %p126 = pneg %p52
      %p127 = pneg %p81
      %p128 = pneg %p78
      %p129 = scmp.lt.s32.totalorder %s13, 1
      %s130 = scalar_select %p129, %s13, 1
      %s131 = smul.addr %s130, 8
      %s132 = smul.addr %s131, 8
      %s133 = scalar_lea.vmem %s2, %s132
      %p134 = scmp.lt.s32.totalorder %s13, 1
      %s135 = scalar_select %p134, %s13, 1
      %s136 = smul.addr %s135, 22
      %s137 = smul.addr %s136, 8
      %s138 = scalar_lea.vmem %s0, %s137
      %p139 = scmp.lt.s32.totalorder %s13, 1
      %s140 = scalar_select %p139, %s13, 1
      %s141 = smul.addr %s140, 8
      %s142 = smul.addr %s141, 8
      %s143 = scalar_lea.vmem %s2, %s142
      %v145 = vld [vmem:[%s138] sm:$0xff]
      %v146 = vld [vmem:[%s138 + $0x8] sm:$0xff]
      %v147 = vld [vmem:[%s138 + $0x10] sm:$0xff]
      %v148 = vld [vmem:[%s138 + $0x18] sm:$0xff]
      %v149 = vld [vmem:[%s138 + $0x20] sm:$0xff]
      %v150 = vld [vmem:[%s138 + $0x28] sm:$0xff]
      %v151 = vld [vmem:[%s138 + $0x30] sm:$0xff]
      %v152 = vld [vmem:[%s138 + $0x38] sm:$0xff]
      %v153 = vld [vmem:[%s138 + $0x40] sm:$0xff]
      %v154 = vld [vmem:[%s138 + $0x48] sm:$0xff]
      %v155 = vld [vmem:[%s138 + $0x50] sm:$0xff]
      %v156 = vld [vmem:[%s138 + $0x58] sm:$0xff]
      %v157 = vld [vmem:[%s138 + $0x60] sm:$0xff]
      %v158 = vld [vmem:[%s138 + $0x68] sm:$0xff]
      %v159 = vld [vmem:[%s138 + $0x70] sm:$0xff]
      %v160 = vld [vmem:[%s138 + $0x78] sm:$0xff]
      %v161 = vpack.c.bf16 %v146, %v145
      %v162 = vpack.c.bf16 %v148, %v147
      %v163 = vpack.c.bf16 %v150, %v149
      %v164 = vpack.c.bf16 %v152, %v151
      %v165 = vpack.c.bf16 %v154, %v153
      %v166 = vpack.c.bf16 %v156, %v155
      %v167 = vpack.c.bf16 %v158, %v157
      %v168 = vpack.c.bf16 %v160, %v159
      %v169 = vld [vmem:[%s1] sm:$0xf]
      %v170 = vld [vmem:[%s1 + $0x4] sm:$0xf]
      %v171 = vld [vmem:[%s138 + $0x1] sm:$0xff]
      %v172 = vld [vmem:[%s138 + $0x9] sm:$0xff]
      %v173 = vld [vmem:[%s138 + $0x11] sm:$0xff]
      %v174 = vld [vmem:[%s138 + $0x19] sm:$0xff]
      %v175 = vld [vmem:[%s138 + $0x21] sm:$0xff]
      %v176 = vld [vmem:[%s138 + $0x29] sm:$0xff]
      %v177 = vld [vmem:[%s138 + $0x31] sm:$0xff]
      %v178 = vld [vmem:[%s138 + $0x39] sm:$0xff]
      %v179 = vld [vmem:[%s138 + $0x41] sm:$0xff]
      %v180 = vld [vmem:[%s138 + $0x49] sm:$0xff]
      %v181 = vld [vmem:[%s138 + $0x51] sm:$0xff]
      %v182 = vld [vmem:[%s138 + $0x59] sm:$0xff]
      %v183 = vld [vmem:[%s138 + $0x61] sm:$0xff]
      %v184 = vld [vmem:[%s138 + $0x69] sm:$0xff]
      %v185 = vld [vmem:[%s138 + $0x71] sm:$0xff]
      %v186 = vld [vmem:[%s138 + $0x79] sm:$0xff]
      %v187 = vpack.c.bf16 %v172, %v171
      %v188 = vpack.c.bf16 %v174, %v173
      %v189 = vpack.c.bf16 %v176, %v175
      %v190 = vpack.c.bf16 %v178, %v177
      %v191 = vpack.c.bf16 %v180, %v179
      %v192 = vpack.c.bf16 %v182, %v181
      %v193 = vpack.c.bf16 %v184, %v183
      %v194 = vpack.c.bf16 %v186, %v185
      %s195 = scalar_lea.vmem %s1, 8
      %v196 = vld [vmem:[%s195] sm:$0xf]
      %v197 = vld [vmem:[%s195 + $0x4] sm:$0xf]
      %v200 = vunpack.c.l.b16 %v196
      %v201 = vunpack.c.l.b16 %v197
      %v202 = vpack.c.b16 %v201, %v200
      %vm204 = vcmask 130048
      %v206 = vsel %vm204, %v187, 0
      %v209 = vsel %vm204, %v188, 0
      %v212 = vsel %vm204, %v189, 0
      %v215 = vsel %vm204, %v190, 0
      %v218 = vsel %vm204, %v191, 0
      %v221 = vsel %vm204, %v192, 0
      %v224 = vsel %vm204, %v193, 0
      %v227 = vsel %vm204, %v194, 0
      %229 = vmatprep.subr.bf16.mxu0 0
      %230 = vmatpush1.bf16.msra.mxu0 0
      %231 = vmatprep.subr.bf16.mxu0 0
      %232 = vmatpush1.bf16.msra.mxu0 0
      %233 = vmatprep.subr.bf16.mxu0 0
      %234 = vmatpush1.bf16.msra.mxu0 0
      %235 = vmatprep.subr.bf16.mxu0 0
      %236 = vmatpush1.bf16.msra.mxu0 0
      %237 = vmatprep.subr.bf16.mxu0 0
      %238 = vmatpush1.bf16.msra.mxu0 0
      %239 = vmatprep.subr.bf16.mxu0 0
      %240 = vmatpush1.bf16.msra.mxu0 0
      %241 = vmatprep.subr.bf16.mxu0 0
      %242 = vmatpush1.bf16.msra.mxu0 0
      %243 = vmatprep.subr.bf16.mxu0 0
      %244 = vmatpush1.bf16.msra.mxu0 %v202
      %245 = vmatprep.subr.bf16.mxu0 0
      %246 = vmatpush2.bf16.msra.mxu0 0
      %247 = vmatprep.subr.bf16.mxu0 0
      %248 = vmatpush2.bf16.msra.mxu0 0
      %249 = vmatprep.subr.bf16.mxu0 0
      %250 = vmatpush2.bf16.msra.mxu0 0
      %251 = vmatprep.subr.bf16.mxu0 0
      %252 = vmatpush2.bf16.msra.mxu0 0
      %253 = vmatprep.subr.bf16.mxu0 0
      %254 = vmatpush2.bf16.msra.mxu0 0
      %255 = vmatprep.subr.bf16.mxu0 0
      %256 = vmatpush2.bf16.msra.mxu0 0
      %257 = vmatprep.subr.bf16.mxu0 0
      %258 = vmatpush2.bf16.msra.mxu0 0
      %259 = vmatprep.subr.bf16.mxu0 0
      %260 = vmatpush2.bf16.msra.mxu0 0
      %261 = vmatprep.mubr.bf16.mxu0 0
      %262 = vmatmul.mubr.bf16.gmra.mxu0 %v206
      %v263 = vpop.f32.mrf.mxu0
      %v264 = vadd.f32 0.0, %v263
      %v265 = vpop.f32.mrf.mxu0
      %v266 = vpop.f32.mrf.mxu0
      %v267 = vpop.f32.mrf.mxu0
      %268 = vmatprep.mubr.bf16.mxu0 0
      %269 = vmatmul.mubr.bf16.gmra.mxu0 %v209
      %v270 = vpop.f32.mrf.mxu0
      %v271 = vadd.f32 0.0, %v270
      %v272 = vpop.f32.mrf.mxu0
      %v273 = vpop.f32.mrf.mxu0
      %v274 = vpop.f32.mrf.mxu0
      %275 = vmatprep.mubr.bf16.mxu0 0
      %276 = vmatmul.mubr.bf16.gmra.mxu0 %v212
      %v277 = vpop.f32.mrf.mxu0
      %v278 = vadd.f32 0.0, %v277
      %v279 = vpop.f32.mrf.mxu0
      %v280 = vpop.f32.mrf.mxu0
      %v281 = vpop.f32.mrf.mxu0
      %282 = vmatprep.mubr.bf16.mxu0 0
      %283 = vmatmul.mubr.bf16.gmra.mxu0 %v215
      %v284 = vpop.f32.mrf.mxu0
      %v285 = vadd.f32 0.0, %v284
      %v286 = vpop.f32.mrf.mxu0
      %v287 = vpop.f32.mrf.mxu0
      %v288 = vpop.f32.mrf.mxu0
      %289 = vmatprep.mubr.bf16.mxu0 0
      %290 = vmatmul.mubr.bf16.gmra.mxu0 %v218
      %v291 = vpop.f32.mrf.mxu0
      %v292 = vadd.f32 0.0, %v291
      %v293 = vpop.f32.mrf.mxu0
      %v294 = vpop.f32.mrf.mxu0
      %v295 = vpop.f32.mrf.mxu0
      %296 = vmatprep.mubr.bf16.mxu0 0
      %297 = vmatmul.mubr.bf16.gmra.mxu0 %v221
      %v298 = vpop.f32.mrf.mxu0
      %v299 = vadd.f32 0.0, %v298
      %v300 = vpop.f32.mrf.mxu0
      %v301 = vpop.f32.mrf.mxu0
      %v302 = vpop.f32.mrf.mxu0
      %303 = vmatprep.mubr.bf16.mxu0 0
      %304 = vmatmul.mubr.bf16.gmra.mxu0 %v224
      %v305 = vpop.f32.mrf.mxu0
      %v306 = vadd.f32 0.0, %v305
      %v307 = vpop.f32.mrf.mxu0
      %v308 = vpop.f32.mrf.mxu0
      %v309 = vpop.f32.mrf.mxu0
      %310 = vmatprep.mubr.bf16.mxu0 0
      %311 = vmatmul.mubr.bf16.gmra.mxu0 %v227
      %v312 = vpop.f32.mrf.mxu0
      %v313 = vadd.f32 0.0, %v312
      %v314 = vpop.f32.mrf.mxu0
      %v315 = vpop.f32.mrf.mxu0
      %v316 = vpop.f32.mrf.mxu0
      %317 = vdwg.mxu0
      %v320 = vunpack.c.l.b16 %v169
      %v321 = vunpack.c.l.b16 %v170
      %v322 = vpack.c.b16 %v321, %v320
      %v325 = vsel %vm204, %v161, 0
      %v328 = vsel %vm204, %v162, 0
      %v331 = vsel %vm204, %v163, 0
      %v334 = vsel %vm204, %v164, 0
      %v337 = vsel %vm204, %v165, 0
      %v340 = vsel %vm204, %v166, 0
      %v343 = vsel %vm204, %v167, 0
      %v346 = vsel %vm204, %v168, 0
      %348 = vmatprep.subr.bf16.mxu0 0
      %349 = vmatpush1.bf16.msra.mxu0 0
      %350 = vmatprep.subr.bf16.mxu0 0
      %351 = vmatpush1.bf16.msra.mxu0 0
      %352 = vmatprep.subr.bf16.mxu0 0
      %353 = vmatpush1.bf16.msra.mxu0 0
      %354 = vmatprep.subr.bf16.mxu0 0
      %355 = vmatpush1.bf16.msra.mxu0 0
      %356 = vmatprep.subr.bf16.mxu0 0
      %357 = vmatpush1.bf16.msra.mxu0 0
      %358 = vmatprep.subr.bf16.mxu0 0
      %359 = vmatpush1.bf16.msra.mxu0 0
      %360 = vmatprep.subr.bf16.mxu0 0
      %361 = vmatpush1.bf16.msra.mxu0 0
      %362 = vmatprep.subr.bf16.mxu0 0
      %363 = vmatpush1.bf16.msra.mxu0 %v322
      %364 = vmatprep.subr.bf16.mxu0 0
      %365 = vmatpush2.bf16.msra.mxu0 0
      %366 = vmatprep.subr.bf16.mxu0 0
      %367 = vmatpush2.bf16.msra.mxu0 0
      %368 = vmatprep.subr.bf16.mxu0 0
      %369 = vmatpush2.bf16.msra.mxu0 0
      %370 = vmatprep.subr.bf16.mxu0 0
      %371 = vmatpush2.bf16.msra.mxu0 0
      %372 = vmatprep.subr.bf16.mxu0 0
      %373 = vmatpush2.bf16.msra.mxu0 0
      %374 = vmatprep.subr.bf16.mxu0 0
      %375 = vmatpush2.bf16.msra.mxu0 0
      %376 = vmatprep.subr.bf16.mxu0 0
      %377 = vmatpush2.bf16.msra.mxu0 0
      %378 = vmatprep.subr.bf16.mxu0 0
      %379 = vmatpush2.bf16.msra.mxu0 0
      %380 = vmatprep.mubr.bf16.mxu0 0
      %381 = vmatmul.mubr.bf16.gmra.mxu0 %v325
      %v382 = vpop.f32.mrf.mxu0
      %v383 = vadd.f32 %v264, %v382
      %v384 = vpop.f32.mrf.mxu0
      %v385 = vpop.f32.mrf.mxu0
      %v386 = vpop.f32.mrf.mxu0
      %387 = vmatprep.mubr.bf16.mxu0 0
      %388 = vmatmul.mubr.bf16.gmra.mxu0 %v328
      %v389 = vpop.f32.mrf.mxu0
      %v390 = vadd.f32 %v271, %v389
      %v391 = vpop.f32.mrf.mxu0
      %v392 = vpop.f32.mrf.mxu0
      %v393 = vpop.f32.mrf.mxu0
      %394 = vmatprep.mubr.bf16.mxu0 0
      %395 = vmatmul.mubr.bf16.gmra.mxu0 %v331
      %v396 = vpop.f32.mrf.mxu0
      %v397 = vadd.f32 %v278, %v396
      %v398 = vpop.f32.mrf.mxu0
      %v399 = vpop.f32.mrf.mxu0
      %v400 = vpop.f32.mrf.mxu0
      %401 = vmatprep.mubr.bf16.mxu0 0
      %402 = vmatmul.mubr.bf16.gmra.mxu0 %v334
      %v403 = vpop.f32.mrf.mxu0
      %v404 = vadd.f32 %v285, %v403
      %v405 = vpop.f32.mrf.mxu0
      %v406 = vpop.f32.mrf.mxu0
      %v407 = vpop.f32.mrf.mxu0
      %408 = vmatprep.mubr.bf16.mxu0 0
      %409 = vmatmul.mubr.bf16.gmra.mxu0 %v337
      %v410 = vpop.f32.mrf.mxu0
      %v411 = vadd.f32 %v292, %v410
      %v412 = vpop.f32.mrf.mxu0
      %v413 = vpop.f32.mrf.mxu0
      %v414 = vpop.f32.mrf.mxu0
      %415 = vmatprep.mubr.bf16.mxu0 0
      %416 = vmatmul.mubr.bf16.gmra.mxu0 %v340
      %v417 = vpop.f32.mrf.mxu0
      %v418 = vadd.f32 %v299, %v417
      %v419 = vpop.f32.mrf.mxu0
      %v420 = vpop.f32.mrf.mxu0
      %v421 = vpop.f32.mrf.mxu0
      %422 = vmatprep.mubr.bf16.mxu0 0
      %423 = vmatmul.mubr.bf16.gmra.mxu0 %v343
      %v424 = vpop.f32.mrf.mxu0
      %v425 = vadd.f32 %v306, %v424
      %v426 = vpop.f32.mrf.mxu0
      %v427 = vpop.f32.mrf.mxu0
      %v428 = vpop.f32.mrf.mxu0
      %429 = vmatprep.mubr.bf16.mxu0 0
      %430 = vmatmul.mubr.bf16.gmra.mxu0 %v346
      %v431 = vpop.f32.mrf.mxu0
      %v432 = vadd.f32 %v313, %v431
      %v433 = vpop.f32.mrf.mxu0
      %v434 = vpop.f32.mrf.mxu0
      %v435 = vpop.f32.mrf.mxu0
      %436 = vdwg.mxu0
      %v437 = vld [vmem:[%s138 + $0x2] sm:$0xff]
      %v438 = vld [vmem:[%s138 + $0xa] sm:$0xff]
      %v439 = vld [vmem:[%s138 + $0x12] sm:$0xff]
      %v440 = vld [vmem:[%s138 + $0x1a] sm:$0xff]
      %v441 = vld [vmem:[%s138 + $0x22] sm:$0xff]
      %v442 = vld [vmem:[%s138 + $0x2a] sm:$0xff]
      %v443 = vld [vmem:[%s138 + $0x32] sm:$0xff]
      %v444 = vld [vmem:[%s138 + $0x3a] sm:$0xff]
      %v445 = vld [vmem:[%s138 + $0x42] sm:$0xff]
      %v446 = vld [vmem:[%s138 + $0x4a] sm:$0xff]
      %v447 = vld [vmem:[%s138 + $0x52] sm:$0xff]
      %v448 = vld [vmem:[%s138 + $0x5a] sm:$0xff]
      %v449 = vld [vmem:[%s138 + $0x62] sm:$0xff]
      %v450 = vld [vmem:[%s138 + $0x6a] sm:$0xff]
      %v451 = vld [vmem:[%s138 + $0x72] sm:$0xff]
      %v452 = vld [vmem:[%s138 + $0x7a] sm:$0xff]
      %v453 = vpack.c.bf16 %v438, %v437
      %v454 = vpack.c.bf16 %v440, %v439
      %v455 = vpack.c.bf16 %v442, %v441
      %v456 = vpack.c.bf16 %v444, %v443
      %v457 = vpack.c.bf16 %v446, %v445
      %v458 = vpack.c.bf16 %v448, %v447
      %v459 = vpack.c.bf16 %v450, %v449
      %v460 = vpack.c.bf16 %v452, %v451
      %s461 = scalar_lea.vmem %s1, 16
      %v462 = vld [vmem:[%s461] sm:$0xf]
      %v463 = vld [vmem:[%s461 + $0x4] sm:$0xf]
      %v466 = vunpack.c.l.b16 %v462
      %v467 = vunpack.c.l.b16 %v463
      %v468 = vpack.c.b16 %v467, %v466
      %v471 = vsel %vm204, %v453, 0
      %v474 = vsel %vm204, %v454, 0
      %v477 = vsel %vm204, %v455, 0
      %v480 = vsel %vm204, %v456, 0
      %v483 = vsel %vm204, %v457, 0
      %v486 = vsel %vm204, %v458, 0
      %v489 = vsel %vm204, %v459, 0
      %v492 = vsel %vm204, %v460, 0
      %494 = vmatprep.subr.bf16.mxu0 0
      %495 = vmatpush1.bf16.msra.mxu0 0
      %496 = vmatprep.subr.bf16.mxu0 0
      %497 = vmatpush1.bf16.msra.mxu0 0
      %498 = vmatprep.subr.bf16.mxu0 0
      %499 = vmatpush1.bf16.msra.mxu0 0
      %500 = vmatprep.subr.bf16.mxu0 0
      %501 = vmatpush1.bf16.msra.mxu0 0
      %502 = vmatprep.subr.bf16.mxu0 0
      %503 = vmatpush1.bf16.msra.mxu0 0
      %504 = vmatprep.subr.bf16.mxu0 0
      %505 = vmatpush1.bf16.msra.mxu0 0
      %506 = vmatprep.subr.bf16.mxu0 0
      %507 = vmatpush1.bf16.msra.mxu0 0
      %508 = vmatprep.subr.bf16.mxu0 0
      %509 = vmatpush1.bf16.msra.mxu0 %v468
      %510 = vmatprep.subr.bf16.mxu0 0
      %511 = vmatpush2.bf16.msra.mxu0 0
      %512 = vmatprep.subr.bf16.mxu0 0
      %513 = vmatpush2.bf16.msra.mxu0 0
      %514 = vmatprep.subr.bf16.mxu0 0
      %515 = vmatpush2.bf16.msra.mxu0 0
      %516 = vmatprep.subr.bf16.mxu0 0
      %517 = vmatpush2.bf16.msra.mxu0 0
      %518 = vmatprep.subr.bf16.mxu0 0
      %519 = vmatpush2.bf16.msra.mxu0 0
      %520 = vmatprep.subr.bf16.mxu0 0
      %521 = vmatpush2.bf16.msra.mxu0 0
      %522 = vmatprep.subr.bf16.mxu0 0
      %523 = vmatpush2.bf16.msra.mxu0 0
      %524 = vmatprep.subr.bf16.mxu0 0
      %525 = vmatpush2.bf16.msra.mxu0 0
      %526 = vmatprep.mubr.bf16.mxu0 0
      %527 = vmatmul.mubr.bf16.gmra.mxu0 %v471
      %v528 = vpop.f32.mrf.mxu0
      %v529 = vadd.f32 0.0, %v528
      %v530 = vpop.f32.mrf.mxu0
      %v531 = vpop.f32.mrf.mxu0
      %v532 = vpop.f32.mrf.mxu0
      %533 = vmatprep.mubr.bf16.mxu0 0
      %534 = vmatmul.mubr.bf16.gmra.mxu0 %v474
      %v535 = vpop.f32.mrf.mxu0
      %v536 = vadd.f32 0.0, %v535
      %v537 = vpop.f32.mrf.mxu0
      %v538 = vpop.f32.mrf.mxu0
      %v539 = vpop.f32.mrf.mxu0
      %540 = vmatprep.mubr.bf16.mxu0 0
      %541 = vmatmul.mubr.bf16.gmra.mxu0 %v477
      %v542 = vpop.f32.mrf.mxu0
      %v543 = vadd.f32 0.0, %v542
      %v544 = vpop.f32.mrf.mxu0
      %v545 = vpop.f32.mrf.mxu0
      %v546 = vpop.f32.mrf.mxu0
      %547 = vmatprep.mubr.bf16.mxu0 0
      %548 = vmatmul.mubr.bf16.gmra.mxu0 %v480
      %v549 = vpop.f32.mrf.mxu0
      %v550 = vadd.f32 0.0, %v549
      %v551 = vpop.f32.mrf.mxu0
      %v552 = vpop.f32.mrf.mxu0
      %v553 = vpop.f32.mrf.mxu0
      %554 = vmatprep.mubr.bf16.mxu0 0
      %555 = vmatmul.mubr.bf16.gmra.mxu0 %v483
      %v556 = vpop.f32.mrf.mxu0
      %v557 = vadd.f32 0.0, %v556
      %v558 = vpop.f32.mrf.mxu0
      %v559 = vpop.f32.mrf.mxu0
      %v560 = vpop.f32.mrf.mxu0
      %561 = vmatprep.mubr.bf16.mxu0 0
      %562 = vmatmul.mubr.bf16.gmra.mxu0 %v486
      %v563 = vpop.f32.mrf.mxu0
      %v564 = vadd.f32 0.0, %v563
      %v565 = vpop.f32.mrf.mxu0
      %v566 = vpop.f32.mrf.mxu0
      %v567 = vpop.f32.mrf.mxu0
      %568 = vmatprep.mubr.bf16.mxu0 0
      %569 = vmatmul.mubr.bf16.gmra.mxu0 %v489
      %v570 = vpop.f32.mrf.mxu0
      %v571 = vadd.f32 0.0, %v570
      %v572 = vpop.f32.mrf.mxu0
      %v573 = vpop.f32.mrf.mxu0
      %v574 = vpop.f32.mrf.mxu0
      %575 = vmatprep.mubr.bf16.mxu0 0
      %576 = vmatmul.mubr.bf16.gmra.mxu0 %v492
      %v577 = vpop.f32.mrf.mxu0
      %v578 = vadd.f32 0.0, %v577
      %v579 = vpop.f32.mrf.mxu0
      %v580 = vpop.f32.mrf.mxu0
      %v581 = vpop.f32.mrf.mxu0
      %582 = vdwg.mxu0
      %v583 = vadd.f32 %v383, %v529
      %v584 = vadd.f32 %v390, %v536
      %v585 = vadd.f32 %v397, %v543
      %v586 = vadd.f32 %v404, %v550
      %v587 = vadd.f32 %v411, %v557
      %v588 = vadd.f32 %v418, %v564
      %v589 = vadd.f32 %v425, %v571
      %v590 = vadd.f32 %v432, %v578
      %v591 = vld [vmem:[%s138 + $0x10] sm:$0xff]
      %v592 = vld [vmem:[%s138 + $0x18] sm:$0xff]
      %v593 = vld [vmem:[%s138 + $0x20] sm:$0xff]
      %v594 = vld [vmem:[%s138 + $0x28] sm:$0xff]
      %v595 = vld [vmem:[%s138 + $0x30] sm:$0xff]
      %v596 = vld [vmem:[%s138 + $0x38] sm:$0xff]
      %v597 = vld [vmem:[%s138 + $0x40] sm:$0xff]
      %v598 = vld [vmem:[%s138 + $0x48] sm:$0xff]
      %v599 = vld [vmem:[%s138 + $0x50] sm:$0xff]
      %v600 = vld [vmem:[%s138 + $0x58] sm:$0xff]
      %v601 = vld [vmem:[%s138 + $0x60] sm:$0xff]
      %v602 = vld [vmem:[%s138 + $0x68] sm:$0xff]
      %v603 = vld [vmem:[%s138 + $0x70] sm:$0xff]
      %v604 = vld [vmem:[%s138 + $0x78] sm:$0xff]
      %v605 = vld [vmem:[%s138 + $0x80] sm:$0xff]
      %v606 = vld [vmem:[%s138 + $0x88] sm:$0xff]
      %v607 = vpack.c.bf16 %v592, %v591
      %v608 = vpack.c.bf16 %v594, %v593
      %v609 = vpack.c.bf16 %v596, %v595
      %v610 = vpack.c.bf16 %v598, %v597
      %v611 = vpack.c.bf16 %v600, %v599
      %v612 = vpack.c.bf16 %v602, %v601
      %v613 = vpack.c.bf16 %v604, %v603
      %v614 = vpack.c.bf16 %v606, %v605
      %s615 = scalar_lea.vmem %s1, 24
      %v616 = vld [vmem:[%s615] sm:$0xf]
      %v617 = vld [vmem:[%s615 + $0x4] sm:$0xf]
      %v620 = vunpack.c.l.b16 %v616
      %v621 = vunpack.c.l.b16 %v617
      %v622 = vpack.c.b16 %v621, %v620
      %v625 = vsel %vm204, %v607, 0
      %v628 = vsel %vm204, %v608, 0
      %v631 = vsel %vm204, %v609, 0
      %v634 = vsel %vm204, %v610, 0
      %v637 = vsel %vm204, %v611, 0
      %v640 = vsel %vm204, %v612, 0
      %v643 = vsel %vm204, %v613, 0
      %v646 = vsel %vm204, %v614, 0
      %648 = vmatprep.subr.bf16.mxu0 0
      %649 = vmatpush1.bf16.msra.mxu0 0
      %650 = vmatprep.subr.bf16.mxu0 0
      %651 = vmatpush1.bf16.msra.mxu0 0
      %652 = vmatprep.subr.bf16.mxu0 0
      %653 = vmatpush1.bf16.msra.mxu0 0
      %654 = vmatprep.subr.bf16.mxu0 0
      %655 = vmatpush1.bf16.msra.mxu0 0
      %656 = vmatprep.subr.bf16.mxu0 0
      %657 = vmatpush1.bf16.msra.mxu0 0
      %658 = vmatprep.subr.bf16.mxu0 0
      %659 = vmatpush1.bf16.msra.mxu0 0
      %660 = vmatprep.subr.bf16.mxu0 0
      %661 = vmatpush1.bf16.msra.mxu0 0
      %662 = vmatprep.subr.bf16.mxu0 0
      %663 = vmatpush1.bf16.msra.mxu0 %v622
      %664 = vmatprep.subr.bf16.mxu0 0
      %665 = vmatpush2.bf16.msra.mxu0 0
      %666 = vmatprep.subr.bf16.mxu0 0
      %667 = vmatpush2.bf16.msra.mxu0 0
      %668 = vmatprep.subr.bf16.mxu0 0
      %669 = vmatpush2.bf16.msra.mxu0 0
      %670 = vmatprep.subr.bf16.mxu0 0
      %671 = vmatpush2.bf16.msra.mxu0 0
      %672 = vmatprep.subr.bf16.mxu0 0
      %673 = vmatpush2.bf16.msra.mxu0 0
      %674 = vmatprep.subr.bf16.mxu0 0
      %675 = vmatpush2.bf16.msra.mxu0 0
      %676 = vmatprep.subr.bf16.mxu0 0
      %677 = vmatpush2.bf16.msra.mxu0 0
      %678 = vmatprep.subr.bf16.mxu0 0
      %679 = vmatpush2.bf16.msra.mxu0 0
      %680 = vmatprep.mubr.bf16.mxu0 0
      %681 = vmatmul.mubr.bf16.gmra.mxu0 %v625
      %v682 = vpop.f32.mrf.mxu0
      %v683 = vadd.f32 0.0, %v682
      %v684 = vpop.f32.mrf.mxu0
      %v685 = vpop.f32.mrf.mxu0
      %v686 = vpop.f32.mrf.mxu0
      %687 = vmatprep.mubr.bf16.mxu0 0
      %688 = vmatmul.mubr.bf16.gmra.mxu0 %v628
      %v689 = vpop.f32.mrf.mxu0
      %v690 = vadd.f32 0.0, %v689
      %v691 = vpop.f32.mrf.mxu0
      %v692 = vpop.f32.mrf.mxu0
      %v693 = vpop.f32.mrf.mxu0
      %694 = vmatprep.mubr.bf16.mxu0 0
      %695 = vmatmul.mubr.bf16.gmra.mxu0 %v631
      %v696 = vpop.f32.mrf.mxu0
      %v697 = vadd.f32 0.0, %v696
      %v698 = vpop.f32.mrf.mxu0
      %v699 = vpop.f32.mrf.mxu0
      %v700 = vpop.f32.mrf.mxu0
      %701 = vmatprep.mubr.bf16.mxu0 0
      %702 = vmatmul.mubr.bf16.gmra.mxu0 %v634
      %v703 = vpop.f32.mrf.mxu0
      %v704 = vadd.f32 0.0, %v703
      %v705 = vpop.f32.mrf.mxu0
      %v706 = vpop.f32.mrf.mxu0
      %v707 = vpop.f32.mrf.mxu0
      %708 = vmatprep.mubr.bf16.mxu0 0
      %709 = vmatmul.mubr.bf16.gmra.mxu0 %v637
      %v710 = vpop.f32.mrf.mxu0
      %v711 = vadd.f32 0.0, %v710
      %v712 = vpop.f32.mrf.mxu0
      %v713 = vpop.f32.mrf.mxu0
      %v714 = vpop.f32.mrf.mxu0
      %715 = vmatprep.mubr.bf16.mxu0 0
      %716 = vmatmul.mubr.bf16.gmra.mxu0 %v640
      %v717 = vpop.f32.mrf.mxu0
      %v718 = vadd.f32 0.0, %v717
      %v719 = vpop.f32.mrf.mxu0
      %v720 = vpop.f32.mrf.mxu0
      %v721 = vpop.f32.mrf.mxu0
      %722 = vmatprep.mubr.bf16.mxu0 0
      %723 = vmatmul.mubr.bf16.gmra.mxu0 %v643
      %v724 = vpop.f32.mrf.mxu0
      %v725 = vadd.f32 0.0, %v724
      %v726 = vpop.f32.mrf.mxu0
      %v727 = vpop.f32.mrf.mxu0
      %v728 = vpop.f32.mrf.mxu0
      %729 = vmatprep.mubr.bf16.mxu0 0
      %730 = vmatmul.mubr.bf16.gmra.mxu0 %v646
      %v731 = vpop.f32.mrf.mxu0
      %v732 = vadd.f32 0.0, %v731
      %v733 = vpop.f32.mrf.mxu0
      %v734 = vpop.f32.mrf.mxu0
      %v735 = vpop.f32.mrf.mxu0
      %736 = vdwg.mxu0
      %v737 = vadd.f32 %v583, %v683
      %v738 = vadd.f32 %v584, %v690
      %v739 = vadd.f32 %v585, %v697
      %v740 = vadd.f32 %v586, %v704
      %v741 = vadd.f32 %v587, %v711
      %v742 = vadd.f32 %v588, %v718
      %v743 = vadd.f32 %v589, %v725
      %v744 = vadd.f32 %v590, %v732
      %v745 = vld [vmem:[%s138 + $0x11] sm:$0xff]
      %v746 = vld [vmem:[%s138 + $0x19] sm:$0xff]
      %v747 = vld [vmem:[%s138 + $0x21] sm:$0xff]
      %v748 = vld [vmem:[%s138 + $0x29] sm:$0xff]
      %v749 = vld [vmem:[%s138 + $0x31] sm:$0xff]
      %v750 = vld [vmem:[%s138 + $0x39] sm:$0xff]
      %v751 = vld [vmem:[%s138 + $0x41] sm:$0xff]
      %v752 = vld [vmem:[%s138 + $0x49] sm:$0xff]
      %v753 = vld [vmem:[%s138 + $0x51] sm:$0xff]
      %v754 = vld [vmem:[%s138 + $0x59] sm:$0xff]
      %v755 = vld [vmem:[%s138 + $0x61] sm:$0xff]
      %v756 = vld [vmem:[%s138 + $0x69] sm:$0xff]
      %v757 = vld [vmem:[%s138 + $0x71] sm:$0xff]
      %v758 = vld [vmem:[%s138 + $0x79] sm:$0xff]
      %v759 = vld [vmem:[%s138 + $0x81] sm:$0xff]
      %v760 = vld [vmem:[%s138 + $0x89] sm:$0xff]
      %v761 = vpack.c.bf16 %v746, %v745
      %v762 = vpack.c.bf16 %v748, %v747
      %v763 = vpack.c.bf16 %v750, %v749
      %v764 = vpack.c.bf16 %v752, %v751
      %v765 = vpack.c.bf16 %v754, %v753
      %v766 = vpack.c.bf16 %v756, %v755
      %v767 = vpack.c.bf16 %v758, %v757
      %v768 = vpack.c.bf16 %v760, %v759
      %s769 = scalar_lea.vmem %s1, 32
      %v770 = vld [vmem:[%s769] sm:$0xf]
      %v771 = vld [vmem:[%s769 + $0x4] sm:$0xf]
      %v774 = vunpack.c.l.b16 %v770
      %v775 = vunpack.c.l.b16 %v771
      %v776 = vpack.c.b16 %v775, %v774
      %v779 = vsel %vm204, %v761, 0
      %v782 = vsel %vm204, %v762, 0
      %v785 = vsel %vm204, %v763, 0
      %v788 = vsel %vm204, %v764, 0
      %v791 = vsel %vm204, %v765, 0
      %v794 = vsel %vm204, %v766, 0
      %v797 = vsel %vm204, %v767, 0
      %v800 = vsel %vm204, %v768, 0
      %802 = vmatprep.subr.bf16.mxu0 0
      %803 = vmatpush1.bf16.msra.mxu0 0
      %804 = vmatprep.subr.bf16.mxu0 0
      %805 = vmatpush1.bf16.msra.mxu0 0
      %806 = vmatprep.subr.bf16.mxu0 0
      %807 = vmatpush1.bf16.msra.mxu0 0
      %808 = vmatprep.subr.bf16.mxu0 0
      %809 = vmatpush1.bf16.msra.mxu0 0
      %810 = vmatprep.subr.bf16.mxu0 0
      %811 = vmatpush1.bf16.msra.mxu0 0
      %812 = vmatprep.subr.bf16.mxu0 0
      %813 = vmatpush1.bf16.msra.mxu0 0
      %814 = vmatprep.subr.bf16.mxu0 0
      %815 = vmatpush1.bf16.msra.mxu0 0
      %816 = vmatprep.subr.bf16.mxu0 0
      %817 = vmatpush1.bf16.msra.mxu0 %v776
      %818 = vmatprep.subr.bf16.mxu0 0
      %819 = vmatpush2.bf16.msra.mxu0 0
      %820 = vmatprep.subr.bf16.mxu0 0
      %821 = vmatpush2.bf16.msra.mxu0 0
      %822 = vmatprep.subr.bf16.mxu0 0
      %823 = vmatpush2.bf16.msra.mxu0 0
      %824 = vmatprep.subr.bf16.mxu0 0
      %825 = vmatpush2.bf16.msra.mxu0 0
      %826 = vmatprep.subr.bf16.mxu0 0
      %827 = vmatpush2.bf16.msra.mxu0 0
      %828 = vmatprep.subr.bf16.mxu0 0
      %829 = vmatpush2.bf16.msra.mxu0 0
      %830 = vmatprep.subr.bf16.mxu0 0
      %831 = vmatpush2.bf16.msra.mxu0 0
      %832 = vmatprep.subr.bf16.mxu0 0
      %833 = vmatpush2.bf16.msra.mxu0 0
      %834 = vmatprep.mubr.bf16.mxu0 0
      %835 = vmatmul.mubr.bf16.gmra.mxu0 %v779
      %v836 = vpop.f32.mrf.mxu0
      %v837 = vadd.f32 0.0, %v836
      %v838 = vpop.f32.mrf.mxu0
      %v839 = vpop.f32.mrf.mxu0
      %v840 = vpop.f32.mrf.mxu0
      %841 = vmatprep.mubr.bf16.mxu0 0
      %842 = vmatmul.mubr.bf16.gmra.mxu0 %v782
      %v843 = vpop.f32.mrf.mxu0
      %v844 = vadd.f32 0.0, %v843
      %v845 = vpop.f32.mrf.mxu0
      %v846 = vpop.f32.mrf.mxu0
      %v847 = vpop.f32.mrf.mxu0
      %848 = vmatprep.mubr.bf16.mxu0 0
      %849 = vmatmul.mubr.bf16.gmra.mxu0 %v785
      %v850 = vpop.f32.mrf.mxu0
      %v851 = vadd.f32 0.0, %v850
      %v852 = vpop.f32.mrf.mxu0
      %v853 = vpop.f32.mrf.mxu0
      %v854 = vpop.f32.mrf.mxu0
      %855 = vmatprep.mubr.bf16.mxu0 0
      %856 = vmatmul.mubr.bf16.gmra.mxu0 %v788
      %v857 = vpop.f32.mrf.mxu0
      %v858 = vadd.f32 0.0, %v857
      %v859 = vpop.f32.mrf.mxu0
      %v860 = vpop.f32.mrf.mxu0
      %v861 = vpop.f32.mrf.mxu0
      %862 = vmatprep.mubr.bf16.mxu0 0
      %863 = vmatmul.mubr.bf16.gmra.mxu0 %v791
      %v864 = vpop.f32.mrf.mxu0
      %v865 = vadd.f32 0.0, %v864
      %v866 = vpop.f32.mrf.mxu0
      %v867 = vpop.f32.mrf.mxu0
      %v868 = vpop.f32.mrf.mxu0
      %869 = vmatprep.mubr.bf16.mxu0 0
      %870 = vmatmul.mubr.bf16.gmra.mxu0 %v794
      %v871 = vpop.f32.mrf.mxu0
      %v872 = vadd.f32 0.0, %v871
      %v873 = vpop.f32.mrf.mxu0
      %v874 = vpop.f32.mrf.mxu0
      %v875 = vpop.f32.mrf.mxu0
      %876 = vmatprep.mubr.bf16.mxu0 0
      %877 = vmatmul.mubr.bf16.gmra.mxu0 %v797
      %v878 = vpop.f32.mrf.mxu0
      %v879 = vadd.f32 0.0, %v878
      %v880 = vpop.f32.mrf.mxu0
      %v881 = vpop.f32.mrf.mxu0
      %v882 = vpop.f32.mrf.mxu0
      %883 = vmatprep.mubr.bf16.mxu0 0
      %884 = vmatmul.mubr.bf16.gmra.mxu0 %v800
      %v885 = vpop.f32.mrf.mxu0
      %v886 = vadd.f32 0.0, %v885
      %v887 = vpop.f32.mrf.mxu0
      %v888 = vpop.f32.mrf.mxu0
      %v889 = vpop.f32.mrf.mxu0
      %890 = vdwg.mxu0
      %v891 = vadd.f32 %v737, %v837
      %v892 = vadd.f32 %v738, %v844
      %v893 = vadd.f32 %v739, %v851
      %v894 = vadd.f32 %v740, %v858
      %v895 = vadd.f32 %v741, %v865
      %v896 = vadd.f32 %v742, %v872
      %v897 = vadd.f32 %v743, %v879
      %v898 = vadd.f32 %v744, %v886
      %v899 = vld [vmem:[%s138 + $0x12] sm:$0xff]
      %v900 = vld [vmem:[%s138 + $0x1a] sm:$0xff]
      %v901 = vld [vmem:[%s138 + $0x22] sm:$0xff]
      %v902 = vld [vmem:[%s138 + $0x2a] sm:$0xff]
      %v903 = vld [vmem:[%s138 + $0x32] sm:$0xff]
      %v904 = vld [vmem:[%s138 + $0x3a] sm:$0xff]
      %v905 = vld [vmem:[%s138 + $0x42] sm:$0xff]
      %v906 = vld [vmem:[%s138 + $0x4a] sm:$0xff]
      %v907 = vld [vmem:[%s138 + $0x52] sm:$0xff]
      %v908 = vld [vmem:[%s138 + $0x5a] sm:$0xff]
      %v909 = vld [vmem:[%s138 + $0x62] sm:$0xff]
      %v910 = vld [vmem:[%s138 + $0x6a] sm:$0xff]
      %v911 = vld [vmem:[%s138 + $0x72] sm:$0xff]
      %v912 = vld [vmem:[%s138 + $0x7a] sm:$0xff]
      %v913 = vld [vmem:[%s138 + $0x82] sm:$0xff]
      %v914 = vld [vmem:[%s138 + $0x8a] sm:$0xff]
      %v915 = vpack.c.bf16 %v900, %v899
      %v916 = vpack.c.bf16 %v902, %v901
      %v917 = vpack.c.bf16 %v904, %v903
      %v918 = vpack.c.bf16 %v906, %v905
      %v919 = vpack.c.bf16 %v908, %v907
      %v920 = vpack.c.bf16 %v910, %v909
      %v921 = vpack.c.bf16 %v912, %v911
      %v922 = vpack.c.bf16 %v914, %v913
      %s923 = scalar_lea.vmem %s1, 40
      %v924 = vld [vmem:[%s923] sm:$0xf]
      %v925 = vld [vmem:[%s923 + $0x4] sm:$0xf]
      %v928 = vunpack.c.l.b16 %v924
      %v929 = vunpack.c.l.b16 %v925
      %v930 = vpack.c.b16 %v929, %v928
      %v933 = vsel %vm204, %v915, 0
      %v936 = vsel %vm204, %v916, 0
      %v939 = vsel %vm204, %v917, 0
      %v942 = vsel %vm204, %v918, 0
      %v945 = vsel %vm204, %v919, 0
      %v948 = vsel %vm204, %v920, 0
      %v951 = vsel %vm204, %v921, 0
      %v954 = vsel %vm204, %v922, 0
      %956 = vmatprep.subr.bf16.mxu0 0
      %957 = vmatpush1.bf16.msra.mxu0 0
      %958 = vmatprep.subr.bf16.mxu0 0
      %959 = vmatpush1.bf16.msra.mxu0 0
      %960 = vmatprep.subr.bf16.mxu0 0
      %961 = vmatpush1.bf16.msra.mxu0 0
      %962 = vmatprep.subr.bf16.mxu0 0
      %963 = vmatpush1.bf16.msra.mxu0 0
      %964 = vmatprep.subr.bf16.mxu0 0
      %965 = vmatpush1.bf16.msra.mxu0 0
      %966 = vmatprep.subr.bf16.mxu0 0
      %967 = vmatpush1.bf16.msra.mxu0 0
      %968 = vmatprep.subr.bf16.mxu0 0
      %969 = vmatpush1.bf16.msra.mxu0 0
      %970 = vmatprep.subr.bf16.mxu0 0
      %971 = vmatpush1.bf16.msra.mxu0 %v930
      %972 = vmatprep.subr.bf16.mxu0 0
      %973 = vmatpush2.bf16.msra.mxu0 0
      %974 = vmatprep.subr.bf16.mxu0 0
      %975 = vmatpush2.bf16.msra.mxu0 0
      %976 = vmatprep.subr.bf16.mxu0 0
      %977 = vmatpush2.bf16.msra.mxu0 0
      %978 = vmatprep.subr.bf16.mxu0 0
      %979 = vmatpush2.bf16.msra.mxu0 0
      %980 = vmatprep.subr.bf16.mxu0 0
      %981 = vmatpush2.bf16.msra.mxu0 0
      %982 = vmatprep.subr.bf16.mxu0 0
      %983 = vmatpush2.bf16.msra.mxu0 0
      %984 = vmatprep.subr.bf16.mxu0 0
      %985 = vmatpush2.bf16.msra.mxu0 0
      %986 = vmatprep.subr.bf16.mxu0 0
      %987 = vmatpush2.bf16.msra.mxu0 0
      %988 = vmatprep.mubr.bf16.mxu0 0
      %989 = vmatmul.mubr.bf16.gmra.mxu0 %v933
      %v990 = vpop.f32.mrf.mxu0
      %v991 = vadd.f32 0.0, %v990
      %v992 = vpop.f32.mrf.mxu0
      %v993 = vpop.f32.mrf.mxu0
      %v994 = vpop.f32.mrf.mxu0
      %995 = vmatprep.mubr.bf16.mxu0 0
      %996 = vmatmul.mubr.bf16.gmra.mxu0 %v936
      %v997 = vpop.f32.mrf.mxu0
      %v998 = vadd.f32 0.0, %v997
      %v999 = vpop.f32.mrf.mxu0
      %v1000 = vpop.f32.mrf.mxu0
      %v1001 = vpop.f32.mrf.mxu0
      %1002 = vmatprep.mubr.bf16.mxu0 0
      %1003 = vmatmul.mubr.bf16.gmra.mxu0 %v939
      %v1004 = vpop.f32.mrf.mxu0
      %v1005 = vadd.f32 0.0, %v1004
      %v1006 = vpop.f32.mrf.mxu0
      %v1007 = vpop.f32.mrf.mxu0
      %v1008 = vpop.f32.mrf.mxu0
      %1009 = vmatprep.mubr.bf16.mxu0 0
      %1010 = vmatmul.mubr.bf16.gmra.mxu0 %v942
      %v1011 = vpop.f32.mrf.mxu0
      %v1012 = vadd.f32 0.0, %v1011
      %v1013 = vpop.f32.mrf.mxu0
      %v1014 = vpop.f32.mrf.mxu0
      %v1015 = vpop.f32.mrf.mxu0
      %1016 = vmatprep.mubr.bf16.mxu0 0
      %1017 = vmatmul.mubr.bf16.gmra.mxu0 %v945
      %v1018 = vpop.f32.mrf.mxu0
      %v1019 = vadd.f32 0.0, %v1018
      %v1020 = vpop.f32.mrf.mxu0
      %v1021 = vpop.f32.mrf.mxu0
      %v1022 = vpop.f32.mrf.mxu0
      %1023 = vmatprep.mubr.bf16.mxu0 0
      %1024 = vmatmul.mubr.bf16.gmra.mxu0 %v948
      %v1025 = vpop.f32.mrf.mxu0
      %v1026 = vadd.f32 0.0, %v1025
      %v1027 = vpop.f32.mrf.mxu0
      %v1028 = vpop.f32.mrf.mxu0
      %v1029 = vpop.f32.mrf.mxu0
      %1030 = vmatprep.mubr.bf16.mxu0 0
      %1031 = vmatmul.mubr.bf16.gmra.mxu0 %v951
      %v1032 = vpop.f32.mrf.mxu0
      %v1033 = vadd.f32 0.0, %v1032
      %v1034 = vpop.f32.mrf.mxu0
      %v1035 = vpop.f32.mrf.mxu0
      %v1036 = vpop.f32.mrf.mxu0
      %1037 = vmatprep.mubr.bf16.mxu0 0
      %1038 = vmatmul.mubr.bf16.gmra.mxu0 %v954
      %v1039 = vpop.f32.mrf.mxu0
      %v1040 = vadd.f32 0.0, %v1039
      %v1041 = vpop.f32.mrf.mxu0
      %v1042 = vpop.f32.mrf.mxu0
      %v1043 = vpop.f32.mrf.mxu0
      %1044 = vdwg.mxu0
      %v1045 = vadd.f32 %v891, %v991
      %v1046 = vadd.f32 %v892, %v998
      %v1047 = vadd.f32 %v893, %v1005
      %v1048 = vadd.f32 %v894, %v1012
      %v1049 = vadd.f32 %v895, %v1019
      %v1050 = vadd.f32 %v896, %v1026
      %v1051 = vadd.f32 %v897, %v1033
      %v1052 = vadd.f32 %v898, %v1040
      %v1053 = vld [vmem:[%s138 + $0x20] sm:$0xff]
      %v1054 = vld [vmem:[%s138 + $0x28] sm:$0xff]
      %v1055 = vld [vmem:[%s138 + $0x30] sm:$0xff]
      %v1056 = vld [vmem:[%s138 + $0x38] sm:$0xff]
      %v1057 = vld [vmem:[%s138 + $0x40] sm:$0xff]
      %v1058 = vld [vmem:[%s138 + $0x48] sm:$0xff]
      %v1059 = vld [vmem:[%s138 + $0x50] sm:$0xff]
      %v1060 = vld [vmem:[%s138 + $0x58] sm:$0xff]
      %v1061 = vld [vmem:[%s138 + $0x60] sm:$0xff]
      %v1062 = vld [vmem:[%s138 + $0x68] sm:$0xff]
      %v1063 = vld [vmem:[%s138 + $0x70] sm:$0xff]
      %v1064 = vld [vmem:[%s138 + $0x78] sm:$0xff]
      %v1065 = vld [vmem:[%s138 + $0x80] sm:$0xff]
      %v1066 = vld [vmem:[%s138 + $0x88] sm:$0xff]
      %v1067 = vld [vmem:[%s138 + $0x90] sm:$0xff]
      %v1068 = vld [vmem:[%s138 + $0x98] sm:$0xff]
      %v1069 = vpack.c.bf16 %v1054, %v1053
      %v1070 = vpack.c.bf16 %v1056, %v1055
      %v1071 = vpack.c.bf16 %v1058, %v1057
      %v1072 = vpack.c.bf16 %v1060, %v1059
      %v1073 = vpack.c.bf16 %v1062, %v1061
      %v1074 = vpack.c.bf16 %v1064, %v1063
      %v1075 = vpack.c.bf16 %v1066, %v1065
      %v1076 = vpack.c.bf16 %v1068, %v1067
      %s1077 = scalar_lea.vmem %s1, 48
      %v1078 = vld [vmem:[%s1077] sm:$0xf]
      %v1079 = vld [vmem:[%s1077 + $0x4] sm:$0xf]
      %v1082 = vunpack.c.l.b16 %v1078
      %v1083 = vunpack.c.l.b16 %v1079
      %v1084 = vpack.c.b16 %v1083, %v1082
      %v1087 = vsel %vm204, %v1069, 0
      %v1090 = vsel %vm204, %v1070, 0
      %v1093 = vsel %vm204, %v1071, 0
      %v1096 = vsel %vm204, %v1072, 0
      %v1099 = vsel %vm204, %v1073, 0
      %v1102 = vsel %vm204, %v1074, 0
      %v1105 = vsel %vm204, %v1075, 0
      %v1108 = vsel %vm204, %v1076, 0
      %1110 = vmatprep.subr.bf16.mxu0 0
      %1111 = vmatpush1.bf16.msra.mxu0 0
      %1112 = vmatprep.subr.bf16.mxu0 0
      %1113 = vmatpush1.bf16.msra.mxu0 0
      %1114 = vmatprep.subr.bf16.mxu0 0
      %1115 = vmatpush1.bf16.msra.mxu0 0
      %1116 = vmatprep.subr.bf16.mxu0 0
      %1117 = vmatpush1.bf16.msra.mxu0 0
      %1118 = vmatprep.subr.bf16.mxu0 0
      %1119 = vmatpush1.bf16.msra.mxu0 0
      %1120 = vmatprep.subr.bf16.mxu0 0
      %1121 = vmatpush1.bf16.msra.mxu0 0
      %1122 = vmatprep.subr.bf16.mxu0 0
      %1123 = vmatpush1.bf16.msra.mxu0 0
      %1124 = vmatprep.subr.bf16.mxu0 0
      %1125 = vmatpush1.bf16.msra.mxu0 %v1084
      %1126 = vmatprep.subr.bf16.mxu0 0
      %1127 = vmatpush2.bf16.msra.mxu0 0
      %1128 = vmatprep.subr.bf16.mxu0 0
      %1129 = vmatpush2.bf16.msra.mxu0 0
      %1130 = vmatprep.subr.bf16.mxu0 0
      %1131 = vmatpush2.bf16.msra.mxu0 0
      %1132 = vmatprep.subr.bf16.mxu0 0
      %1133 = vmatpush2.bf16.msra.mxu0 0
      %1134 = vmatprep.subr.bf16.mxu0 0
      %1135 = vmatpush2.bf16.msra.mxu0 0
      %1136 = vmatprep.subr.bf16.mxu0 0
      %1137 = vmatpush2.bf16.msra.mxu0 0
      %1138 = vmatprep.subr.bf16.mxu0 0
      %1139 = vmatpush2.bf16.msra.mxu0 0
      %1140 = vmatprep.subr.bf16.mxu0 0
      %1141 = vmatpush2.bf16.msra.mxu0 0
      %1142 = vmatprep.mubr.bf16.mxu0 0
      %1143 = vmatmul.mubr.bf16.gmra.mxu0 %v1087
      %v1144 = vpop.f32.mrf.mxu0
      %v1145 = vadd.f32 0.0, %v1144
      %v1146 = vpop.f32.mrf.mxu0
      %v1147 = vpop.f32.mrf.mxu0
      %v1148 = vpop.f32.mrf.mxu0
      %1149 = vmatprep.mubr.bf16.mxu0 0
      %1150 = vmatmul.mubr.bf16.gmra.mxu0 %v1090
      %v1151 = vpop.f32.mrf.mxu0
      %v1152 = vadd.f32 0.0, %v1151
      %v1153 = vpop.f32.mrf.mxu0
      %v1154 = vpop.f32.mrf.mxu0
      %v1155 = vpop.f32.mrf.mxu0
      %1156 = vmatprep.mubr.bf16.mxu0 0
      %1157 = vmatmul.mubr.bf16.gmra.mxu0 %v1093
      %v1158 = vpop.f32.mrf.mxu0
      %v1159 = vadd.f32 0.0, %v1158
      %v1160 = vpop.f32.mrf.mxu0
      %v1161 = vpop.f32.mrf.mxu0
      %v1162 = vpop.f32.mrf.mxu0
      %1163 = vmatprep.mubr.bf16.mxu0 0
      %1164 = vmatmul.mubr.bf16.gmra.mxu0 %v1096
      %v1165 = vpop.f32.mrf.mxu0
      %v1166 = vadd.f32 0.0, %v1165
      %v1167 = vpop.f32.mrf.mxu0
      %v1168 = vpop.f32.mrf.mxu0
      %v1169 = vpop.f32.mrf.mxu0
      %1170 = vmatprep.mubr.bf16.mxu0 0
      %1171 = vmatmul.mubr.bf16.gmra.mxu0 %v1099
      %v1172 = vpop.f32.mrf.mxu0
      %v1173 = vadd.f32 0.0, %v1172
      %v1174 = vpop.f32.mrf.mxu0
      %v1175 = vpop.f32.mrf.mxu0
      %v1176 = vpop.f32.mrf.mxu0
      %1177 = vmatprep.mubr.bf16.mxu0 0
      %1178 = vmatmul.mubr.bf16.gmra.mxu0 %v1102
      %v1179 = vpop.f32.mrf.mxu0
      %v1180 = vadd.f32 0.0, %v1179
      %v1181 = vpop.f32.mrf.mxu0
      %v1182 = vpop.f32.mrf.mxu0
      %v1183 = vpop.f32.mrf.mxu0
      %1184 = vmatprep.mubr.bf16.mxu0 0
      %1185 = vmatmul.mubr.bf16.gmra.mxu0 %v1105
      %v1186 = vpop.f32.mrf.mxu0
      %v1187 = vadd.f32 0.0, %v1186
      %v1188 = vpop.f32.mrf.mxu0
      %v1189 = vpop.f32.mrf.mxu0
      %v1190 = vpop.f32.mrf.mxu0
      %1191 = vmatprep.mubr.bf16.mxu0 0
      %1192 = vmatmul.mubr.bf16.gmra.mxu0 %v1108
      %v1193 = vpop.f32.mrf.mxu0
      %v1194 = vadd.f32 0.0, %v1193
      %v1195 = vpop.f32.mrf.mxu0
      %v1196 = vpop.f32.mrf.mxu0
      %v1197 = vpop.f32.mrf.mxu0
      %1198 = vdwg.mxu0
      %v1199 = vadd.f32 %v1045, %v1145
      %v1200 = vadd.f32 %v1046, %v1152
      %v1201 = vadd.f32 %v1047, %v1159
      %v1202 = vadd.f32 %v1048, %v1166
      %v1203 = vadd.f32 %v1049, %v1173
      %v1204 = vadd.f32 %v1050, %v1180
      %v1205 = vadd.f32 %v1051, %v1187
      %v1206 = vadd.f32 %v1052, %v1194
      %v1207 = vld [vmem:[%s138 + $0x21] sm:$0xff]
      %v1208 = vld [vmem:[%s138 + $0x29] sm:$0xff]
      %v1209 = vld [vmem:[%s138 + $0x31] sm:$0xff]
      %v1210 = vld [vmem:[%s138 + $0x39] sm:$0xff]
      %v1211 = vld [vmem:[%s138 + $0x41] sm:$0xff]
      %v1212 = vld [vmem:[%s138 + $0x49] sm:$0xff]
      %v1213 = vld [vmem:[%s138 + $0x51] sm:$0xff]
      %v1214 = vld [vmem:[%s138 + $0x59] sm:$0xff]
      %v1215 = vld [vmem:[%s138 + $0x61] sm:$0xff]
      %v1216 = vld [vmem:[%s138 + $0x69] sm:$0xff]
      %v1217 = vld [vmem:[%s138 + $0x71] sm:$0xff]
      %v1218 = vld [vmem:[%s138 + $0x79] sm:$0xff]
      %v1219 = vld [vmem:[%s138 + $0x81] sm:$0xff]
      %v1220 = vld [vmem:[%s138 + $0x89] sm:$0xff]
      %v1221 = vld [vmem:[%s138 + $0x91] sm:$0xff]
      %v1222 = vld [vmem:[%s138 + $0x99] sm:$0xff]
      %v1223 = vpack.c.bf16 %v1208, %v1207
      %v1224 = vpack.c.bf16 %v1210, %v1209
      %v1225 = vpack.c.bf16 %v1212, %v1211
      %v1226 = vpack.c.bf16 %v1214, %v1213
      %v1227 = vpack.c.bf16 %v1216, %v1215
      %v1228 = vpack.c.bf16 %v1218, %v1217
      %v1229 = vpack.c.bf16 %v1220, %v1219
      %v1230 = vpack.c.bf16 %v1222, %v1221
      %s1231 = scalar_lea.vmem %s1, 56
      %v1232 = vld [vmem:[%s1231] sm:$0xf]
      %v1233 = vld [vmem:[%s1231 + $0x4] sm:$0xf]
      %v1236 = vunpack.c.l.b16 %v1232
      %v1237 = vunpack.c.l.b16 %v1233
      %v1238 = vpack.c.b16 %v1237, %v1236
      %v1241 = vsel %vm204, %v1223, 0
      %v1244 = vsel %vm204, %v1224, 0
      %v1247 = vsel %vm204, %v1225, 0
      %v1250 = vsel %vm204, %v1226, 0
      %v1253 = vsel %vm204, %v1227, 0
      %v1256 = vsel %vm204, %v1228, 0
      %v1259 = vsel %vm204, %v1229, 0
      %v1262 = vsel %vm204, %v1230, 0
      %1264 = vmatprep.subr.bf16.mxu0 0
      %1265 = vmatpush1.bf16.msra.mxu0 0
      %1266 = vmatprep.subr.bf16.mxu0 0
      %1267 = vmatpush1.bf16.msra.mxu0 0
      %1268 = vmatprep.subr.bf16.mxu0 0
      %1269 = vmatpush1.bf16.msra.mxu0 0
      %1270 = vmatprep.subr.bf16.mxu0 0
      %1271 = vmatpush1.bf16.msra.mxu0 0
      %1272 = vmatprep.subr.bf16.mxu0 0
      %1273 = vmatpush1.bf16.msra.mxu0 0
      %1274 = vmatprep.subr.bf16.mxu0 0
      %1275 = vmatpush1.bf16.msra.mxu0 0
      %1276 = vmatprep.subr.bf16.mxu0 0
      %1277 = vmatpush1.bf16.msra.mxu0 0
      %1278 = vmatprep.subr.bf16.mxu0 0
      %1279 = vmatpush1.bf16.msra.mxu0 %v1238
      %1280 = vmatprep.subr.bf16.mxu0 0
      %1281 = vmatpush2.bf16.msra.mxu0 0
      %1282 = vmatprep.subr.bf16.mxu0 0
      %1283 = vmatpush2.bf16.msra.mxu0 0
      %1284 = vmatprep.subr.bf16.mxu0 0
      %1285 = vmatpush2.bf16.msra.mxu0 0
      %1286 = vmatprep.subr.bf16.mxu0 0
      %1287 = vmatpush2.bf16.msra.mxu0 0
      %1288 = vmatprep.subr.bf16.mxu0 0
      %1289 = vmatpush2.bf16.msra.mxu0 0
      %1290 = vmatprep.subr.bf16.mxu0 0
      %1291 = vmatpush2.bf16.msra.mxu0 0
      %1292 = vmatprep.subr.bf16.mxu0 0
      %1293 = vmatpush2.bf16.msra.mxu0 0
      %1294 = vmatprep.subr.bf16.mxu0 0
      %1295 = vmatpush2.bf16.msra.mxu0 0
      %1296 = vmatprep.mubr.bf16.mxu0 0
      %1297 = vmatmul.mubr.bf16.gmra.mxu0 %v1241
      %v1298 = vpop.f32.mrf.mxu0
      %v1299 = vadd.f32 0.0, %v1298
      %v1300 = vpop.f32.mrf.mxu0
      %v1301 = vpop.f32.mrf.mxu0
      %v1302 = vpop.f32.mrf.mxu0
      %1303 = vmatprep.mubr.bf16.mxu0 0
      %1304 = vmatmul.mubr.bf16.gmra.mxu0 %v1244
      %v1305 = vpop.f32.mrf.mxu0
      %v1306 = vadd.f32 0.0, %v1305
      %v1307 = vpop.f32.mrf.mxu0
      %v1308 = vpop.f32.mrf.mxu0
      %v1309 = vpop.f32.mrf.mxu0
      %1310 = vmatprep.mubr.bf16.mxu0 0
      %1311 = vmatmul.mubr.bf16.gmra.mxu0 %v1247
      %v1312 = vpop.f32.mrf.mxu0
      %v1313 = vadd.f32 0.0, %v1312
      %v1314 = vpop.f32.mrf.mxu0
      %v1315 = vpop.f32.mrf.mxu0
      %v1316 = vpop.f32.mrf.mxu0
      %1317 = vmatprep.mubr.bf16.mxu0 0
      %1318 = vmatmul.mubr.bf16.gmra.mxu0 %v1250
      %v1319 = vpop.f32.mrf.mxu0
      %v1320 = vadd.f32 0.0, %v1319
      %v1321 = vpop.f32.mrf.mxu0
      %v1322 = vpop.f32.mrf.mxu0
      %v1323 = vpop.f32.mrf.mxu0
      %1324 = vmatprep.mubr.bf16.mxu0 0
      %1325 = vmatmul.mubr.bf16.gmra.mxu0 %v1253
      %v1326 = vpop.f32.mrf.mxu0
      %v1327 = vadd.f32 0.0, %v1326
      %v1328 = vpop.f32.mrf.mxu0
      %v1329 = vpop.f32.mrf.mxu0
      %v1330 = vpop.f32.mrf.mxu0
      %1331 = vmatprep.mubr.bf16.mxu0 0
      %1332 = vmatmul.mubr.bf16.gmra.mxu0 %v1256
      %v1333 = vpop.f32.mrf.mxu0
      %v1334 = vadd.f32 0.0, %v1333
      %v1335 = vpop.f32.mrf.mxu0
      %v1336 = vpop.f32.mrf.mxu0
      %v1337 = vpop.f32.mrf.mxu0
      %1338 = vmatprep.mubr.bf16.mxu0 0
      %1339 = vmatmul.mubr.bf16.gmra.mxu0 %v1259
      %v1340 = vpop.f32.mrf.mxu0
      %v1341 = vadd.f32 0.0, %v1340
      %v1342 = vpop.f32.mrf.mxu0
      %v1343 = vpop.f32.mrf.mxu0
      %v1344 = vpop.f32.mrf.mxu0
      %1345 = vmatprep.mubr.bf16.mxu0 0
      %1346 = vmatmul.mubr.bf16.gmra.mxu0 %v1262
      %v1347 = vpop.f32.mrf.mxu0
      %v1348 = vadd.f32 0.0, %v1347
      %v1349 = vpop.f32.mrf.mxu0
      %v1350 = vpop.f32.mrf.mxu0
      %v1351 = vpop.f32.mrf.mxu0
      %1352 = vdwg.mxu0
      %v1353 = vadd.f32 %v1199, %v1299
      %v1354 = vadd.f32 %v1200, %v1306
      %v1355 = vadd.f32 %v1201, %v1313
      %v1356 = vadd.f32 %v1202, %v1320
      %v1357 = vadd.f32 %v1203, %v1327
      %v1358 = vadd.f32 %v1204, %v1334
      %v1359 = vadd.f32 %v1205, %v1341
      %v1360 = vadd.f32 %v1206, %v1348
      %v1361 = vld [vmem:[%s138 + $0x22] sm:$0xff]
      %v1362 = vld [vmem:[%s138 + $0x2a] sm:$0xff]
      %v1363 = vld [vmem:[%s138 + $0x32] sm:$0xff]
      %v1364 = vld [vmem:[%s138 + $0x3a] sm:$0xff]
      %v1365 = vld [vmem:[%s138 + $0x42] sm:$0xff]
      %v1366 = vld [vmem:[%s138 + $0x4a] sm:$0xff]
      %v1367 = vld [vmem:[%s138 + $0x52] sm:$0xff]
      %v1368 = vld [vmem:[%s138 + $0x5a] sm:$0xff]
      %v1369 = vld [vmem:[%s138 + $0x62] sm:$0xff]
      %v1370 = vld [vmem:[%s138 + $0x6a] sm:$0xff]
      %v1371 = vld [vmem:[%s138 + $0x72] sm:$0xff]
      %v1372 = vld [vmem:[%s138 + $0x7a] sm:$0xff]
      %v1373 = vld [vmem:[%s138 + $0x82] sm:$0xff]
      %v1374 = vld [vmem:[%s138 + $0x8a] sm:$0xff]
      %v1375 = vld [vmem:[%s138 + $0x92] sm:$0xff]
      %v1376 = vld [vmem:[%s138 + $0x9a] sm:$0xff]
      %v1377 = vpack.c.bf16 %v1362, %v1361
      %v1378 = vpack.c.bf16 %v1364, %v1363
      %v1379 = vpack.c.bf16 %v1366, %v1365
      %v1380 = vpack.c.bf16 %v1368, %v1367
      %v1381 = vpack.c.bf16 %v1370, %v1369
      %v1382 = vpack.c.bf16 %v1372, %v1371
      %v1383 = vpack.c.bf16 %v1374, %v1373
      %v1384 = vpack.c.bf16 %v1376, %v1375
      %s1385 = scalar_lea.vmem %s1, 64
      %v1386 = vld [vmem:[%s1385] sm:$0xf]
      %v1387 = vld [vmem:[%s1385 + $0x4] sm:$0xf]
      %v1390 = vunpack.c.l.b16 %v1386
      %v1391 = vunpack.c.l.b16 %v1387
      %v1392 = vpack.c.b16 %v1391, %v1390
      %v1395 = vsel %vm204, %v1377, 0
      %v1398 = vsel %vm204, %v1378, 0
      %v1401 = vsel %vm204, %v1379, 0
      %v1404 = vsel %vm204, %v1380, 0
      %v1407 = vsel %vm204, %v1381, 0
      %v1410 = vsel %vm204, %v1382, 0
      %v1413 = vsel %vm204, %v1383, 0
      %v1416 = vsel %vm204, %v1384, 0
      %1418 = vmatprep.subr.bf16.mxu0 0
      %1419 = vmatpush1.bf16.msra.mxu0 0
      %1420 = vmatprep.subr.bf16.mxu0 0
      %1421 = vmatpush1.bf16.msra.mxu0 0
      %1422 = vmatprep.subr.bf16.mxu0 0
      %1423 = vmatpush1.bf16.msra.mxu0 0
      %1424 = vmatprep.subr.bf16.mxu0 0
      %1425 = vmatpush1.bf16.msra.mxu0 0
      %1426 = vmatprep.subr.bf16.mxu0 0
      %1427 = vmatpush1.bf16.msra.mxu0 0
      %1428 = vmatprep.subr.bf16.mxu0 0
      %1429 = vmatpush1.bf16.msra.mxu0 0
      %1430 = vmatprep.subr.bf16.mxu0 0
      %1431 = vmatpush1.bf16.msra.mxu0 0
      %1432 = vmatprep.subr.bf16.mxu0 0
      %1433 = vmatpush1.bf16.msra.mxu0 %v1392
      %1434 = vmatprep.subr.bf16.mxu0 0
      %1435 = vmatpush2.bf16.msra.mxu0 0
      %1436 = vmatprep.subr.bf16.mxu0 0
      %1437 = vmatpush2.bf16.msra.mxu0 0
      %1438 = vmatprep.subr.bf16.mxu0 0
      %1439 = vmatpush2.bf16.msra.mxu0 0
      %1440 = vmatprep.subr.bf16.mxu0 0
      %1441 = vmatpush2.bf16.msra.mxu0 0
      %1442 = vmatprep.subr.bf16.mxu0 0
      %1443 = vmatpush2.bf16.msra.mxu0 0
      %1444 = vmatprep.subr.bf16.mxu0 0
      %1445 = vmatpush2.bf16.msra.mxu0 0
      %1446 = vmatprep.subr.bf16.mxu0 0
      %1447 = vmatpush2.bf16.msra.mxu0 0
      %1448 = vmatprep.subr.bf16.mxu0 0
      %1449 = vmatpush2.bf16.msra.mxu0 0
      %1450 = vmatprep.mubr.bf16.mxu0 0
      %1451 = vmatmul.mubr.bf16.gmra.mxu0 %v1395
      %v1452 = vpop.f32.mrf.mxu0
      %v1453 = vadd.f32 0.0, %v1452
      %v1454 = vpop.f32.mrf.mxu0
      %v1455 = vpop.f32.mrf.mxu0
      %v1456 = vpop.f32.mrf.mxu0
      %1457 = vmatprep.mubr.bf16.mxu0 0
      %1458 = vmatmul.mubr.bf16.gmra.mxu0 %v1398
      %v1459 = vpop.f32.mrf.mxu0
      %v1460 = vadd.f32 0.0, %v1459
      %v1461 = vpop.f32.mrf.mxu0
      %v1462 = vpop.f32.mrf.mxu0
      %v1463 = vpop.f32.mrf.mxu0
      %1464 = vmatprep.mubr.bf16.mxu0 0
      %1465 = vmatmul.mubr.bf16.gmra.mxu0 %v1401
      %v1466 = vpop.f32.mrf.mxu0
      %v1467 = vadd.f32 0.0, %v1466
      %v1468 = vpop.f32.mrf.mxu0
      %v1469 = vpop.f32.mrf.mxu0
      %v1470 = vpop.f32.mrf.mxu0
      %1471 = vmatprep.mubr.bf16.mxu0 0
      %1472 = vmatmul.mubr.bf16.gmra.mxu0 %v1404
      %v1473 = vpop.f32.mrf.mxu0
      %v1474 = vadd.f32 0.0, %v1473
      %v1475 = vpop.f32.mrf.mxu0
      %v1476 = vpop.f32.mrf.mxu0
      %v1477 = vpop.f32.mrf.mxu0
      %1478 = vmatprep.mubr.bf16.mxu0 0
      %1479 = vmatmul.mubr.bf16.gmra.mxu0 %v1407
      %v1480 = vpop.f32.mrf.mxu0
      %v1481 = vadd.f32 0.0, %v1480
      %v1482 = vpop.f32.mrf.mxu0
      %v1483 = vpop.f32.mrf.mxu0
      %v1484 = vpop.f32.mrf.mxu0
      %1485 = vmatprep.mubr.bf16.mxu0 0
      %1486 = vmatmul.mubr.bf16.gmra.mxu0 %v1410
      %v1487 = vpop.f32.mrf.mxu0
      %v1488 = vadd.f32 0.0, %v1487
      %v1489 = vpop.f32.mrf.mxu0
      %v1490 = vpop.f32.mrf.mxu0
      %v1491 = vpop.f32.mrf.mxu0
      %1492 = vmatprep.mubr.bf16.mxu0 0
      %1493 = vmatmul.mubr.bf16.gmra.mxu0 %v1413
      %v1494 = vpop.f32.mrf.mxu0
      %v1495 = vadd.f32 0.0, %v1494
      %v1496 = vpop.f32.mrf.mxu0
      %v1497 = vpop.f32.mrf.mxu0
      %v1498 = vpop.f32.mrf.mxu0
      %1499 = vmatprep.mubr.bf16.mxu0 0
      %1500 = vmatmul.mubr.bf16.gmra.mxu0 %v1416
      %v1501 = vpop.f32.mrf.mxu0
      %v1502 = vadd.f32 0.0, %v1501
      %v1503 = vpop.f32.mrf.mxu0
      %v1504 = vpop.f32.mrf.mxu0
      %v1505 = vpop.f32.mrf.mxu0
      %1506 = vdwg.mxu0
      %v1507 = vadd.f32 %v1353, %v1453
      %v1508 = vadd.f32 %v1354, %v1460
      %v1509 = vadd.f32 %v1355, %v1467
      %v1510 = vadd.f32 %v1356, %v1474
      %v1511 = vadd.f32 %v1357, %v1481
      %v1512 = vadd.f32 %v1358, %v1488
      %v1513 = vadd.f32 %v1359, %v1495
      %v1514 = vadd.f32 %v1360, %v1502
      %vm1515 = vcmask 64512
      %1516 = vst.msk [vmem:[%s143] sm:$0xff] %vm1515, %v1507
      %1517 = vst.msk [vmem:[%s143 + $0x8] sm:$0xff] %vm1515, %v1508
      %1518 = vst.msk [vmem:[%s143 + $0x10] sm:$0xff] %vm1515, %v1509
      %1519 = vst.msk [vmem:[%s143 + $0x18] sm:$0xff] %vm1515, %v1510
      %1520 = vst.msk [vmem:[%s143 + $0x20] sm:$0xff] %vm1515, %v1511
      %1521 = vst.msk [vmem:[%s143 + $0x28] sm:$0xff] %vm1515, %v1512
      %1522 = vst.msk [vmem:[%s143 + $0x30] sm:$0xff] %vm1515, %v1513
      %1523 = vst.msk [vmem:[%s143 + $0x38] sm:$0xff] %vm1515, %v1514
      %p1524 = scmp.lt.s32.totalorder %s13, 1
      %s1525 = scalar_select %p1524, %s13, 1
      %s1526 = smul.addr %s1525, 8
      %s1527 = smul.addr %s1526, 8
      %s1528 = scalar_lea.vmem %s2, %s1527
      // Predicated region
      $region29: #{densenet_forward.17} parent=27 // pred_check
        %p1529 = pneg %p78
      $region30: #{densenet_forward.17} parent=27 // pred_check_branch
        %1531 = sbr.rel (%p1529) target = $region32
      $region31: #{densenet_forward.17} parent=27 // pred_region
        _
      $region32: #{densenet_forward.17} parent=27 // pred_fallthru
        _
    $region28: #{densenet_forward.17} parent=5 // pred_fallthru
      _
    %p1532 = scmp.le.s32.totalorder 2, %s8
    // Predicated region
    $region33: #{densenet_forward.17} parent=5 // pred_check
      %p1533 = pneg %p1532
    $region34: #{densenet_forward.17} parent=5 // pred_check_branch
      %1535 = sbr.rel (%p1533) target = $region36
    $region35: #{densenet_forward.17} parent=5 // pred_region
      %s1536 = ssub.s32 %s8, 2
      // Predicated region
      $region37: #{densenet_forward.17} parent=35 // pred_check
        %p1537 = pneg %p84
      $region38: #{densenet_forward.17} parent=35 // pred_check_branch
        %1539 = sbr.rel (%p1537) target = $region40
      $region39: #{densenet_forward.17} parent=35 // pred_region
        %p1540 = scmp.lt.s32.totalorder %s14, 1
        %s1541 = scalar_select %p1540, %s14, 1
        %s1542 = smul.addr %s1541, 8
        %s1543 = smul.addr %s1542, 8
        %s1544 = scalar_lea.vmem %s2, %s1543
      $region40: #{densenet_forward.17} parent=35 // pred_fallthru
        _
    $region36: #{densenet_forward.17} parent=5 // pred_fallthru
      _
  $region6: #{densenet_forward.17} parent=0 // loop_footer
    %s12 = sadd.s32 1, %s8
  $region7: #{densenet_forward.17} parent=0 // loop_footer_branch
    %7 = sbr.rel target = $region3
  $region8: #{densenet_forward.17} parent=0 // loop_exit
    _

// kernel: densenet_forward.20
$region0: #{densenet_forward.20}
  #allocation0 [shape = 'u32[]', space=smem, size = 0x4, offset = 0x4, fixed_abs, tag = 'smem constant byte address 0x4 - core index']
  #allocation1 [shape = 'u32[144,128]{1,0:T(1,128)}', space=vmem, size = 0x12000, scoped, tag = 'internal scratch']
  %s0 = inlined_call_operand.vmem [shape: f32[128,32], index: 0, kind: input, shape index: {}]
  %s1 = inlined_call_operand.vmem [shape: f32[1,32], index: 1, kind: input, shape index: {}]
  %s2 = inlined_call_operand.vmem [shape: f32[1,32], index: 2, kind: input, shape index: {}]
  %s3 = inlined_call_operand.vmem [shape: bf16[32,16], index: 3, kind: input, shape index: {}]
  %s4 = inlined_call_operand.vmem [shape: f32[128,16], index: 4, kind: output, shape index: {}]
  %s5 = sld [smem:[#allocation0]]
  $region26: #{densenet_forward.20} parent=0
    _
  %s7 = ssub.s32 1, %s5
  %s8 = scalar_select 0, %s7, %s5
  // Predicated region
  $region2: #{densenet_forward.20} parent=0 // pred_check
    _
  $region3: #{densenet_forward.20} parent=0 // pred_check_branch
    %10 = sbr.rel (0) target = $region5
  $region4: #{densenet_forward.20} parent=0 // pred_region
    _
  $region5: #{densenet_forward.20} parent=0 // pred_fallthru
    _
  // Predicated region
  $region6: #{densenet_forward.20} parent=0 // pred_check
    _
  $region7: #{densenet_forward.20} parent=0 // pred_check_branch
    %12 = sbr.rel (0) target = $region9
  $region8: #{densenet_forward.20} parent=0 // pred_region
    _
  $region9: #{densenet_forward.20} parent=0 // pred_fallthru
    _
  // Predicated region
  $region10: #{densenet_forward.20} parent=0 // pred_check
    _
  $region11: #{densenet_forward.20} parent=0 // pred_check_branch
    %14 = sbr.rel (0) target = $region13
  $region12: #{densenet_forward.20} parent=0 // pred_region
    _
  $region13: #{densenet_forward.20} parent=0 // pred_fallthru
    _
  // Predicated region
  $region14: #{densenet_forward.20} parent=0 // pred_check
    _
  $region15: #{densenet_forward.20} parent=0 // pred_check_branch
    %16 = sbr.rel (0) target = $region17
  $region16: #{densenet_forward.20} parent=0 // pred_region
    _
  $region17: #{densenet_forward.20} parent=0 // pred_fallthru
    _
  %v18 = vld [vmem:[%s0] sm:$0xff]
  %v19 = vld [vmem:[%s0 + $0x8] sm:$0xff]
  %v20 = vld [vmem:[%s0 + $0x10] sm:$0xff]
  %v21 = vld [vmem:[%s0 + $0x18] sm:$0xff]
  %v22 = vld [vmem:[%s0 + $0x20] sm:$0xff]
  %v23 = vld [vmem:[%s0 + $0x28] sm:$0xff]
  %v24 = vld [vmem:[%s0 + $0x30] sm:$0xff]
  %v25 = vld [vmem:[%s0 + $0x38] sm:$0xff]
  %v26 = vld [vmem:[%s0 + $0x40] sm:$0xff]
  %v27 = vld [vmem:[%s0 + $0x48] sm:$0xff]
  %v28 = vld [vmem:[%s0 + $0x50] sm:$0xff]
  %v29 = vld [vmem:[%s0 + $0x58] sm:$0xff]
  %v30 = vld [vmem:[%s0 + $0x60] sm:$0xff]
  %v31 = vld [vmem:[%s0 + $0x68] sm:$0xff]
  %v32 = vld [vmem:[%s0 + $0x70] sm:$0xff]
  %v33 = vld [vmem:[%s0 + $0x78] sm:$0xff]
  %v34 = vld [vmem:[%s1] sm:$0x1]
  %v36 = vlaneseq
  %v37 = vshrl.u32 %v36, 7
  %v38 = vsub.s32 0, %v37
  %v39 = vrot.slane %v34, %v38
  %v41 = vmul.f32 %v18, %v39
  %v42 = vmul.f32 %v19, %v39
  %v43 = vmul.f32 %v20, %v39
  %v44 = vmul.f32 %v21, %v39
  %v45 = vmul.f32 %v22, %v39
  %v46 = vmul.f32 %v23, %v39
  %v47 = vmul.f32 %v24, %v39
  %v48 = vmul.f32 %v25, %v39
  %v49 = vmul.f32 %v26, %v39
  %v50 = vmul.f32 %v27, %v39
  %v51 = vmul.f32 %v28, %v39
  %v52 = vmul.f32 %v29, %v39
  %v53 = vmul.f32 %v30, %v39
  %v54 = vmul.f32 %v31, %v39
  %v55 = vmul.f32 %v32, %v39
  %v56 = vmul.f32 %v33, %v39
  %v57 = vld [vmem:[%s2] sm:$0x1]
  %v59 = vlaneseq
  %v60 = vshrl.u32 %v59, 7
  %v61 = vsub.s32 0, %v60
  %v62 = vrot.slane %v57, %v61
  %v64 = vadd.f32 %v41, %v62
  %v65 = vadd.f32 %v42, %v62
  %v66 = vadd.f32 %v43, %v62
  %v67 = vadd.f32 %v44, %v62
  %v68 = vadd.f32 %v45, %v62
  %v69 = vadd.f32 %v46, %v62
  %v70 = vadd.f32 %v47, %v62
  %v71 = vadd.f32 %v48, %v62
  %v72 = vadd.f32 %v49, %v62
  %v73 = vadd.f32 %v50, %v62
  %v74 = vadd.f32 %v51, %v62
  %v75 = vadd.f32 %v52, %v62
  %v76 = vadd.f32 %v53, %v62
  %v77 = vadd.f32 %v54, %v62
  %v78 = vadd.f32 %v55, %v62
  %v79 = vadd.f32 %v56, %v62
  %v80 = vmax.f32 %v64, 0.0
  %v81 = vmax.f32 %v65, 0.0
  %v82 = vmax.f32 %v66, 0.0
  %v83 = vmax.f32 %v67, 0.0
  %v84 = vmax.f32 %v68, 0.0
  %v85 = vmax.f32 %v69, 0.0
  %v86 = vmax.f32 %v70, 0.0
  %v87 = vmax.f32 %v71, 0.0
  %v88 = vmax.f32 %v72, 0.0
  %v89 = vmax.f32 %v73, 0.0
  %v90 = vmax.f32 %v74, 0.0
  %v91 = vmax.f32 %v75, 0.0
  %v92 = vmax.f32 %v76, 0.0
  %v93 = vmax.f32 %v77, 0.0
  %v94 = vmax.f32 %v78, 0.0
  %v95 = vmax.f32 %v79, 0.0
  %v96 = vpack.c.bf16 %v81, %v80
  %v97 = vpack.c.bf16 %v83, %v82
  %v98 = vpack.c.bf16 %v85, %v84
  %v99 = vpack.c.bf16 %v87, %v86
  %v100 = vpack.c.bf16 %v89, %v88
  %v101 = vpack.c.bf16 %v91, %v90
  %v102 = vpack.c.bf16 %v93, %v92
  %v103 = vpack.c.bf16 %v95, %v94
  %v104 = vld [vmem:[%s3] sm:$0xf]
  %v105 = vld [vmem:[%s3 + $0x4] sm:$0xf]
  %v106 = vld [vmem:[%s3 + $0x8] sm:$0xf]
  %v107 = vld [vmem:[%s3 + $0xc] sm:$0xf]
  %v112 = vunpack.c.l.b16 %v104
  %v113 = vunpack.c.l.b16 %v105
  %v114 = vunpack.c.l.b16 %v106
  %v115 = vunpack.c.l.b16 %v107
  %v116 = vpack.c.b16 %v113, %v112
  %v117 = vpack.c.b16 %v115, %v114
  %vm120 = vcmask 261120
  %v122 = vsel %vm120, %v96, 0
  %v125 = vsel %vm120, %v97, 0
  %v128 = vsel %vm120, %v98, 0
  %v131 = vsel %vm120, %v99, 0
  %v134 = vsel %vm120, %v100, 0
  %v137 = vsel %vm120, %v101, 0
  %v140 = vsel %vm120, %v102, 0
  %v143 = vsel %vm120, %v103, 0
  %145 = vmatprep.subr.bf16.mxu0 0
  %146 = vmatpush1.bf16.msra.mxu0 0
  %147 = vmatprep.subr.bf16.mxu0 0
  %148 = vmatpush1.bf16.msra.mxu0 0
  %149 = vmatprep.subr.bf16.mxu0 0
  %150 = vmatpush1.bf16.msra.mxu0 0
  %151 = vmatprep.subr.bf16.mxu0 0
  %152 = vmatpush1.bf16.msra.mxu0 0
  %153 = vmatprep.subr.bf16.mxu0 0
  %154 = vmatpush1.bf16.msra.mxu0 0
  %155 = vmatprep.subr.bf16.mxu0 0
  %156 = vmatpush1.bf16.msra.mxu0 0
  %157 = vmatprep.subr.bf16.mxu0 0
  %158 = vmatpush1.bf16.msra.mxu0 %v117
  %159 = vmatprep.subr.bf16.mxu0 0
  %160 = vmatpush1.bf16.msra.mxu0 %v116
  %161 = vmatprep.subr.bf16.mxu0 0
  %162 = vmatpush2.bf16.msra.mxu0 0
  %163 = vmatprep.subr.bf16.mxu0 0
  %164 = vmatpush2.bf16.msra.mxu0 0
  %165 = vmatprep.subr.bf16.mxu0 0
  %166 = vmatpush2.bf16.msra.mxu0 0
  %167 = vmatprep.subr.bf16.mxu0 0
  %168 = vmatpush2.bf16.msra.mxu0 0
  %169 = vmatprep.subr.bf16.mxu0 0
  %170 = vmatpush2.bf16.msra.mxu0 0
  %171 = vmatprep.subr.bf16.mxu0 0
  %172 = vmatpush2.bf16.msra.mxu0 0
  %173 = vmatprep.subr.bf16.mxu0 0
  %174 = vmatpush2.bf16.msra.mxu0 0
  %175 = vmatprep.subr.bf16.mxu0 0
  %176 = vmatpush2.bf16.msra.mxu0 0
  %177 = vmatprep.mubr.bf16.mxu0 0
  %178 = vmatmul.mubr.bf16.gmra.mxu0 %v122
  %v179 = vpop.f32.mrf.mxu0
  %v180 = vadd.f32 0.0, %v179
  %v181 = vpop.f32.mrf.mxu0
  %v182 = vpop.f32.mrf.mxu0
  %v183 = vadd.f32 0.0, %v182
  %v184 = vpop.f32.mrf.mxu0
  %185 = vmatprep.mubr.bf16.mxu0 0
  %186 = vmatmul.mubr.bf16.gmra.mxu0 %v125
  %v187 = vpop.f32.mrf.mxu0
  %v188 = vadd.f32 0.0, %v187
  %v189 = vpop.f32.mrf.mxu0
  %v190 = vpop.f32.mrf.mxu0
  %v191 = vadd.f32 0.0, %v190
  %v192 = vpop.f32.mrf.mxu0
  %193 = vmatprep.mubr.bf16.mxu0 0
  %194 = vmatmul.mubr.bf16.gmra.mxu0 %v128
  %v195 = vpop.f32.mrf.mxu0
  %v196 = vadd.f32 0.0, %v195
  %v197 = vpop.f32.mrf.mxu0
  %v198 = vpop.f32.mrf.mxu0
  %v199 = vadd.f32 0.0, %v198
  %v200 = vpop.f32.mrf.mxu0
  %201 = vmatprep.mubr.bf16.mxu0 0
  %202 = vmatmul.mubr.bf16.gmra.mxu0 %v131
  %v203 = vpop.f32.mrf.mxu0
  %v204 = vadd.f32 0.0, %v203
  %v205 = vpop.f32.mrf.mxu0
  %v206 = vpop.f32.mrf.mxu0
  %v207 = vadd.f32 0.0, %v206
  %v208 = vpop.f32.mrf.mxu0
  %209 = vmatprep.mubr.bf16.mxu0 0
  %210 = vmatmul.mubr.bf16.gmra.mxu0 %v134
  %v211 = vpop.f32.mrf.mxu0
  %v212 = vadd.f32 0.0, %v211
  %v213 = vpop.f32.mrf.mxu0
  %v214 = vpop.f32.mrf.mxu0
  %v215 = vadd.f32 0.0, %v214
  %v216 = vpop.f32.mrf.mxu0
  %217 = vmatprep.mubr.bf16.mxu0 0
  %218 = vmatmul.mubr.bf16.gmra.mxu0 %v137
  %v219 = vpop.f32.mrf.mxu0
  %v220 = vadd.f32 0.0, %v219
  %v221 = vpop.f32.mrf.mxu0
  %v222 = vpop.f32.mrf.mxu0
  %v223 = vadd.f32 0.0, %v222
  %v224 = vpop.f32.mrf.mxu0
  %225 = vmatprep.mubr.bf16.mxu0 0
  %226 = vmatmul.mubr.bf16.gmra.mxu0 %v140
  %v227 = vpop.f32.mrf.mxu0
  %v228 = vadd.f32 0.0, %v227
  %v229 = vpop.f32.mrf.mxu0
  %v230 = vpop.f32.mrf.mxu0
  %v231 = vadd.f32 0.0, %v230
  %v232 = vpop.f32.mrf.mxu0
  %233 = vmatprep.mubr.bf16.mxu0 0
  %234 = vmatmul.mubr.bf16.gmra.mxu0 %v143
  %v235 = vpop.f32.mrf.mxu0
  %v236 = vadd.f32 0.0, %v235
  %v237 = vpop.f32.mrf.mxu0
  %v238 = vpop.f32.mrf.mxu0
  %v239 = vadd.f32 0.0, %v238
  %v240 = vpop.f32.mrf.mxu0
  %241 = vdwg.mxu0
  %vm242 = vcmask 130048
  %243 = vst.msk [vmem:[%s4] sm:$0xff] %vm242, %v180
  %244 = vst.msk [vmem:[%s4 + $0x8] sm:$0xff] %vm242, %v183
  %245 = vst.msk [vmem:[%s4 + $0x10] sm:$0xff] %vm242, %v188
  %246 = vst.msk [vmem:[%s4 + $0x18] sm:$0xff] %vm242, %v191
  %247 = vst.msk [vmem:[%s4 + $0x20] sm:$0xff] %vm242, %v196
  %248 = vst.msk [vmem:[%s4 + $0x28] sm:$0xff] %vm242, %v199
  %249 = vst.msk [vmem:[%s4 + $0x30] sm:$0xff] %vm242, %v204
  %250 = vst.msk [vmem:[%s4 + $0x38] sm:$0xff] %vm242, %v207
  %251 = vst.msk [vmem:[%s4 + $0x40] sm:$0xff] %vm242, %v212
  %252 = vst.msk [vmem:[%s4 + $0x48] sm:$0xff] %vm242, %v215
  %253 = vst.msk [vmem:[%s4 + $0x50] sm:$0xff] %vm242, %v220
  %254 = vst.msk [vmem:[%s4 + $0x58] sm:$0xff] %vm242, %v223
  %255 = vst.msk [vmem:[%s4 + $0x60] sm:$0xff] %vm242, %v228
  %256 = vst.msk [vmem:[%s4 + $0x68] sm:$0xff] %vm242, %v231
  %257 = vst.msk [vmem:[%s4 + $0x70] sm:$0xff] %vm242, %v236
  %258 = vst.msk [vmem:[%s4 + $0x78] sm:$0xff] %vm242, %v239
  // Predicated region
  $region18: #{densenet_forward.20} parent=0 // pred_check
    _
  $region19: #{densenet_forward.20} parent=0 // pred_check_branch
    %260 = sbr.rel (0) target = $region21
  $region20: #{densenet_forward.20} parent=0 // pred_region
    _
  $region21: #{densenet_forward.20} parent=0 // pred_fallthru
    _
  // Predicated region
  $region22: #{densenet_forward.20} parent=0 // pred_check
    _
  $region23: #{densenet_forward.20} parent=0 // pred_check_branch
    %262 = sbr.rel (0) target = $region25
  $region24: #{densenet_forward.20} parent=0 // pred_region
    _
  $region25: #{densenet_forward.20} parent=0 // pred_fallthru
    _

// kernel: densenet_forward.21
$region0: #{densenet_forward.21}
  #allocation0 [shape = 'u32[]', space=smem, size = 0x4, offset = 0x4, fixed_abs, tag = 'smem constant byte address 0x4 - core index']
  #allocation1 [shape = 'u32[144,128]{1,0:T(1,128)}', space=vmem, size = 0x12000, scoped, tag = 'internal scratch']
  %s0 = inlined_call_operand.vmem [shape: f32[32,4,16], index: 0, kind: input, shape index: {}]
  %s1 = inlined_call_operand.vmem [shape: f32[32,16], index: 1, kind: output, shape index: {}]
  %s2 = sld [smem:[#allocation0]]
  $region14: #{densenet_forward.21} parent=0
    _
  %s4 = ssub.s32 1, %s2
  %s5 = scalar_select 0, %s4, %s2
  // Predicated region
  $region2: #{densenet_forward.21} parent=0 // pred_check
    _
  $region3: #{densenet_forward.21} parent=0 // pred_check_branch
    %7 = sbr.rel (0) target = $region5
  $region4: #{densenet_forward.21} parent=0 // pred_region
    _
  $region5: #{densenet_forward.21} parent=0 // pred_fallthru
    _
  %v8 = vld [vmem:[%s0] sm:$0xf]
  %v9 = vld [vmem:[%s0 + $0x4] sm:$0xf]
  %v10 = vld [vmem:[%s0 + $0x8] sm:$0xf]
  %v11 = vld [vmem:[%s0 + $0xc] sm:$0xf]
  %v12 = vld [vmem:[%s0 + $0x10] sm:$0xf]
  %v13 = vld [vmem:[%s0 + $0x14] sm:$0xf]
  %v14 = vld [vmem:[%s0 + $0x18] sm:$0xf]
  %v15 = vld [vmem:[%s0 + $0x1c] sm:$0xf]
  %v16 = vld [vmem:[%s0 + $0x20] sm:$0xf]
  %v17 = vld [vmem:[%s0 + $0x24] sm:$0xf]
  %v18 = vld [vmem:[%s0 + $0x28] sm:$0xf]
  %v19 = vld [vmem:[%s0 + $0x2c] sm:$0xf]
  %v20 = vld [vmem:[%s0 + $0x30] sm:$0xf]
  %v21 = vld [vmem:[%s0 + $0x34] sm:$0xf]
  %v22 = vld [vmem:[%s0 + $0x38] sm:$0xf]
  %v23 = vld [vmem:[%s0 + $0x3c] sm:$0xf]
  %v24 = vld [vmem:[%s0 + $0x40] sm:$0xf]
  %v25 = vld [vmem:[%s0 + $0x44] sm:$0xf]
  %v26 = vld [vmem:[%s0 + $0x48] sm:$0xf]
  %v27 = vld [vmem:[%s0 + $0x4c] sm:$0xf]
  %v28 = vld [vmem:[%s0 + $0x50] sm:$0xf]
  %v29 = vld [vmem:[%s0 + $0x54] sm:$0xf]
  %v30 = vld [vmem:[%s0 + $0x58] sm:$0xf]
  %v31 = vld [vmem:[%s0 + $0x5c] sm:$0xf]
  %v32 = vld [vmem:[%s0 + $0x60] sm:$0xf]
  %v33 = vld [vmem:[%s0 + $0x64] sm:$0xf]
  %v34 = vld [vmem:[%s0 + $0x68] sm:$0xf]
  %v35 = vld [vmem:[%s0 + $0x6c] sm:$0xf]
  %v36 = vld [vmem:[%s0 + $0x70] sm:$0xf]
  %v37 = vld [vmem:[%s0 + $0x74] sm:$0xf]
  %v38 = vld [vmem:[%s0 + $0x78] sm:$0xf]
  %v39 = vld [vmem:[%s0 + $0x7c] sm:$0xf]
  %vm40 = vcmask 125952
  %v41 = vsel %vm40, %v8, 0.0
  %v42 = vrot.slane %v41, 4
  %v43 = vadd.f32 %v41, %v42
  %v44 = vrot.slane %v43, 2
  %v45 = vadd.f32 %v43, %v44
  %v46 = vrot.slane %v45, 1
  %v47 = vadd.f32 %v45, %v46
  %v48 = vsel %vm40, %v9, 0.0
  %v49 = vrot.slane %v48, 4
  %v50 = vadd.f32 %v48, %v49
  %v51 = vrot.slane %v50, 2
  %v52 = vadd.f32 %v50, %v51
  %v53 = vrot.slane %v52, 1
  %v54 = vadd.f32 %v52, %v53
  %v55 = vsel %vm40, %v10, 0.0
  %v56 = vrot.slane %v55, 4
  %v57 = vadd.f32 %v55, %v56
  %v58 = vrot.slane %v57, 2
  %v59 = vadd.f32 %v57, %v58
  %v60 = vrot.slane %v59, 1
  %v61 = vadd.f32 %v59, %v60
  %v62 = vsel %vm40, %v11, 0.0
  %v63 = vrot.slane %v62, 4
  %v64 = vadd.f32 %v62, %v63
  %v65 = vrot.slane %v64, 2
  %v66 = vadd.f32 %v64, %v65
  %v67 = vrot.slane %v66, 1
  %v68 = vadd.f32 %v66, %v67
  %v69 = vsel %vm40, %v12, 0.0
  %v70 = vrot.slane %v69, 4
  %v71 = vadd.f32 %v69, %v70
  %v72 = vrot.slane %v71, 2
  %v73 = vadd.f32 %v71, %v72
  %v74 = vrot.slane %v73, 1
  %v75 = vadd.f32 %v73, %v74
  %v76 = vsel %vm40, %v13, 0.0
  %v77 = vrot.slane %v76, 4
  %v78 = vadd.f32 %v76, %v77
  %v79 = vrot.slane %v78, 2
  %v80 = vadd.f32 %v78, %v79
  %v81 = vrot.slane %v80, 1
  %v82 = vadd.f32 %v80, %v81
  %v83 = vsel %vm40, %v14, 0.0
  %v84 = vrot.slane %v83, 4
  %v85 = vadd.f32 %v83, %v84
  %v86 = vrot.slane %v85, 2
  %v87 = vadd.f32 %v85, %v86
  %v88 = vrot.slane %v87, 1
  %v89 = vadd.f32 %v87, %v88
  %v90 = vsel %vm40, %v15, 0.0
  %v91 = vrot.slane %v90, 4
  %v92 = vadd.f32 %v90, %v91
  %v93 = vrot.slane %v92, 2
  %v94 = vadd.f32 %v92, %v93
  %v95 = vrot.slane %v94, 1
  %v96 = vadd.f32 %v94, %v95
  %v97 = vsel %vm40, %v16, 0.0
  %v98 = vrot.slane %v97, 4
  %v99 = vadd.f32 %v97, %v98
  %v100 = vrot.slane %v99, 2
  %v101 = vadd.f32 %v99, %v100
  %v102 = vrot.slane %v101, 1
  %v103 = vadd.f32 %v101, %v102
  %v104 = vsel %vm40, %v17, 0.0
  %v105 = vrot.slane %v104, 4
  %v106 = vadd.f32 %v104, %v105
  %v107 = vrot.slane %v106, 2
  %v108 = vadd.f32 %v106, %v107
  %v109 = vrot.slane %v108, 1
  %v110 = vadd.f32 %v108, %v109
  %v111 = vsel %vm40, %v18, 0.0
  %v112 = vrot.slane %v111, 4
  %v113 = vadd.f32 %v111, %v112
  %v114 = vrot.slane %v113, 2
  %v115 = vadd.f32 %v113, %v114
  %v116 = vrot.slane %v115, 1
  %v117 = vadd.f32 %v115, %v116
  %v118 = vsel %vm40, %v19, 0.0
  %v119 = vrot.slane %v118, 4
  %v120 = vadd.f32 %v118, %v119
  %v121 = vrot.slane %v120, 2
  %v122 = vadd.f32 %v120, %v121
  %v123 = vrot.slane %v122, 1
  %v124 = vadd.f32 %v122, %v123
  %v125 = vsel %vm40, %v20, 0.0
  %v126 = vrot.slane %v125, 4
  %v127 = vadd.f32 %v125, %v126
  %v128 = vrot.slane %v127, 2
  %v129 = vadd.f32 %v127, %v128
  %v130 = vrot.slane %v129, 1
  %v131 = vadd.f32 %v129, %v130
  %v132 = vsel %vm40, %v21, 0.0
  %v133 = vrot.slane %v132, 4
  %v134 = vadd.f32 %v132, %v133
  %v135 = vrot.slane %v134, 2
  %v136 = vadd.f32 %v134, %v135
  %v137 = vrot.slane %v136, 1
  %v138 = vadd.f32 %v136, %v137
  %v139 = vsel %vm40, %v22, 0.0
  %v140 = vrot.slane %v139, 4
  %v141 = vadd.f32 %v139, %v140
  %v142 = vrot.slane %v141, 2
  %v143 = vadd.f32 %v141, %v142
  %v144 = vrot.slane %v143, 1
  %v145 = vadd.f32 %v143, %v144
  %v146 = vsel %vm40, %v23, 0.0
  %v147 = vrot.slane %v146, 4
  %v148 = vadd.f32 %v146, %v147
  %v149 = vrot.slane %v148, 2
  %v150 = vadd.f32 %v148, %v149
  %v151 = vrot.slane %v150, 1
  %v152 = vadd.f32 %v150, %v151
  %v153 = vsel %vm40, %v24, 0.0
  %v154 = vrot.slane %v153, 4
  %v155 = vadd.f32 %v153, %v154
  %v156 = vrot.slane %v155, 2
  %v157 = vadd.f32 %v155, %v156
  %v158 = vrot.slane %v157, 1
  %v159 = vadd.f32 %v157, %v158
  %v160 = vsel %vm40, %v25, 0.0
  %v161 = vrot.slane %v160, 4
  %v162 = vadd.f32 %v160, %v161
  %v163 = vrot.slane %v162, 2
  %v164 = vadd.f32 %v162, %v163
  %v165 = vrot.slane %v164, 1
  %v166 = vadd.f32 %v164, %v165
  %v167 = vsel %vm40, %v26, 0.0
  %v168 = vrot.slane %v167, 4
  %v169 = vadd.f32 %v167, %v168
  %v170 = vrot.slane %v169, 2
  %v171 = vadd.f32 %v169, %v170
  %v172 = vrot.slane %v171, 1
  %v173 = vadd.f32 %v171, %v172
  %v174 = vsel %vm40, %v27, 0.0
  %v175 = vrot.slane %v174, 4
  %v176 = vadd.f32 %v174, %v175
  %v177 = vrot.slane %v176, 2
  %v178 = vadd.f32 %v176, %v177
  %v179 = vrot.slane %v178, 1
  %v180 = vadd.f32 %v178, %v179
  %v181 = vsel %vm40, %v28, 0.0
  %v182 = vrot.slane %v181, 4
  %v183 = vadd.f32 %v181, %v182
  %v184 = vrot.slane %v183, 2
  %v185 = vadd.f32 %v183, %v184
  %v186 = vrot.slane %v185, 1
  %v187 = vadd.f32 %v185, %v186
  %v188 = vsel %vm40, %v29, 0.0
  %v189 = vrot.slane %v188, 4
  %v190 = vadd.f32 %v188, %v189
  %v191 = vrot.slane %v190, 2
  %v192 = vadd.f32 %v190, %v191
  %v193 = vrot.slane %v192, 1
  %v194 = vadd.f32 %v192, %v193
  %v195 = vsel %vm40, %v30, 0.0
  %v196 = vrot.slane %v195, 4
  %v197 = vadd.f32 %v195, %v196
  %v198 = vrot.slane %v197, 2
  %v199 = vadd.f32 %v197, %v198
  %v200 = vrot.slane %v199, 1
  %v201 = vadd.f32 %v199, %v200
  %v202 = vsel %vm40, %v31, 0.0
  %v203 = vrot.slane %v202, 4
  %v204 = vadd.f32 %v202, %v203
  %v205 = vrot.slane %v204, 2
  %v206 = vadd.f32 %v204, %v205
  %v207 = vrot.slane %v206, 1
  %v208 = vadd.f32 %v206, %v207
  %v209 = vsel %vm40, %v32, 0.0
  %v210 = vrot.slane %v209, 4
  %v211 = vadd.f32 %v209, %v210
  %v212 = vrot.slane %v211, 2
  %v213 = vadd.f32 %v211, %v212
  %v214 = vrot.slane %v213, 1
  %v215 = vadd.f32 %v213, %v214
  %v216 = vsel %vm40, %v33, 0.0
  %v217 = vrot.slane %v216, 4
  %v218 = vadd.f32 %v216, %v217
  %v219 = vrot.slane %v218, 2
  %v220 = vadd.f32 %v218, %v219
  %v221 = vrot.slane %v220, 1
  %v222 = vadd.f32 %v220, %v221
  %v223 = vsel %vm40, %v34, 0.0
  %v224 = vrot.slane %v223, 4
  %v225 = vadd.f32 %v223, %v224
  %v226 = vrot.slane %v225, 2
  %v227 = vadd.f32 %v225, %v226
  %v228 = vrot.slane %v227, 1
  %v229 = vadd.f32 %v227, %v228
  %v230 = vsel %vm40, %v35, 0.0
  %v231 = vrot.slane %v230, 4
  %v232 = vadd.f32 %v230, %v231
  %v233 = vrot.slane %v232, 2
  %v234 = vadd.f32 %v232, %v233
  %v235 = vrot.slane %v234, 1
  %v236 = vadd.f32 %v234, %v235
  %v237 = vsel %vm40, %v36, 0.0
  %v238 = vrot.slane %v237, 4
  %v239 = vadd.f32 %v237, %v238
  %v240 = vrot.slane %v239, 2
  %v241 = vadd.f32 %v239, %v240
  %v242 = vrot.slane %v241, 1
  %v243 = vadd.f32 %v241, %v242
  %v244 = vsel %vm40, %v37, 0.0
  %v245 = vrot.slane %v244, 4
  %v246 = vadd.f32 %v244, %v245
  %v247 = vrot.slane %v246, 2
  %v248 = vadd.f32 %v246, %v247
  %v249 = vrot.slane %v248, 1
  %v250 = vadd.f32 %v248, %v249
  %v251 = vsel %vm40, %v38, 0.0
  %v252 = vrot.slane %v251, 4
  %v253 = vadd.f32 %v251, %v252
  %v254 = vrot.slane %v253, 2
  %v255 = vadd.f32 %v253, %v254
  %v256 = vrot.slane %v255, 1
  %v257 = vadd.f32 %v255, %v256
  %v258 = vsel %vm40, %v39, 0.0
  %v259 = vrot.slane %v258, 4
  %v260 = vadd.f32 %v258, %v259
  %v261 = vrot.slane %v260, 2
  %v262 = vadd.f32 %v260, %v261
  %v263 = vrot.slane %v262, 1
  %v264 = vadd.f32 %v262, %v263
  %v265 = vrcp.pop 4.0
  %v266 = vmul.f32 %v47, %v265
  %v267 = vmul.f32 %v54, %v265
  %v268 = vmul.f32 %v61, %v265
  %v269 = vmul.f32 %v68, %v265
  %v270 = vmul.f32 %v75, %v265
  %v271 = vmul.f32 %v82, %v265
  %v272 = vmul.f32 %v89, %v265
  %v273 = vmul.f32 %v96, %v265
  %v274 = vmul.f32 %v103, %v265
  %v275 = vmul.f32 %v110, %v265
  %v276 = vmul.f32 %v117, %v265
  %v277 = vmul.f32 %v124, %v265
  %v278 = vmul.f32 %v131, %v265
  %v279 = vmul.f32 %v138, %v265
  %v280 = vmul.f32 %v145, %v265
  %v281 = vmul.f32 %v152, %v265
  %v282 = vmul.f32 %v159, %v265
  %v283 = vmul.f32 %v166, %v265
  %v284 = vmul.f32 %v173, %v265
  %v285 = vmul.f32 %v180, %v265
  %v286 = vmul.f32 %v187, %v265
  %v287 = vmul.f32 %v194, %v265
  %v288 = vmul.f32 %v201, %v265
  %v289 = vmul.f32 %v208, %v265
  %v290 = vmul.f32 %v215, %v265
  %v291 = vmul.f32 %v222, %v265
  %v292 = vmul.f32 %v229, %v265
  %v293 = vmul.f32 %v236, %v265
  %v294 = vmul.f32 %v243, %v265
  %v295 = vmul.f32 %v250, %v265
  %v296 = vmul.f32 %v257, %v265
  %v297 = vmul.f32 %v264, %v265
  %vm330 = vcmask 1041409
  %v331 = vsel %vm330, %v267, %v266
  %vm332 = vcmask 1042434
  %v333 = vsel %vm332, %v268, %v331
  %vm334 = vcmask 1043459
  %v335 = vsel %vm334, %v269, %v333
  %vm336 = vcmask 1044484
  %v337 = vsel %vm336, %v270, %v335
  %vm338 = vcmask 1045509
  %v339 = vsel %vm338, %v271, %v337
  %vm340 = vcmask 1046534
  %v341 = vsel %vm340, %v272, %v339
  %vm342 = vcmask 1047559
  %v343 = vsel %vm342, %v273, %v341
  %v344 = vsel %vm330, %v275, %v274
  %v345 = vsel %vm332, %v276, %v344
  %v346 = vsel %vm334, %v277, %v345
  %v347 = vsel %vm336, %v278, %v346
  %v348 = vsel %vm338, %v279, %v347
  %v349 = vsel %vm340, %v280, %v348
  %v350 = vsel %vm342, %v281, %v349
  %v351 = vsel %vm330, %v283, %v282
  %v352 = vsel %vm332, %v284, %v351
  %v353 = vsel %vm334, %v285, %v352
  %v354 = vsel %vm336, %v286, %v353
  %v355 = vsel %vm338, %v287, %v354
  %v356 = vsel %vm340, %v288, %v355
  %v357 = vsel %vm342, %v289, %v356
  %v358 = vsel %vm330, %v291, %v290
  %v359 = vsel %vm332, %v292, %v358
  %v360 = vsel %vm334, %v293, %v359
  %v361 = vsel %vm336, %v294, %v360
  %v362 = vsel %vm338, %v295, %v361
  %v363 = vsel %vm340, %v296, %v362
  %v364 = vsel %vm342, %v297, %v363
  %vm369 = vcmask 130048
  %370 = vst.msk [vmem:[%s1] sm:$0xff] %vm369, %v343
  %371 = vst.msk [vmem:[%s1 + $0x8] sm:$0xff] %vm369, %v350
  %372 = vst.msk [vmem:[%s1 + $0x10] sm:$0xff] %vm369, %v357
  %373 = vst.msk [vmem:[%s1 + $0x18] sm:$0xff] %vm369, %v364
  // Predicated region
  $region6: #{densenet_forward.21} parent=0 // pred_check
    _
  $region7: #{densenet_forward.21} parent=0 // pred_check_branch
    %375 = sbr.rel (0) target = $region9
  $region8: #{densenet_forward.21} parent=0 // pred_region
    _
  $region9: #{densenet_forward.21} parent=0 // pred_fallthru
    _
  // Predicated region
  $region10: #{densenet_forward.21} parent=0 // pred_check
    _
  $region11: #{densenet_forward.21} parent=0 // pred_check_branch
    %377 = sbr.rel (0) target = $region13
  $region12: #{densenet_forward.21} parent=0 // pred_region
    _
  $region13: #{densenet_forward.21} parent=0 // pred_fallthru
    _

// kernel: densenet_forward.22
$region0: #{densenet_forward.22}
  #allocation0 [shape = 'u32[]', space=smem, size = 0x4, offset = 0x4, fixed_abs, tag = 'smem constant byte address 0x4 - core index']
  #allocation1 [shape = 'u32[144,128]{1,0:T(1,128)}', space=vmem, size = 0x12000, scoped, tag = 'internal scratch']
  %s0 = inlined_call_operand.vmem [shape: f32[32,16], index: 0, kind: input, shape index: {}]
  %s1 = inlined_call_operand.vmem [shape: f32[1,16], index: 1, kind: input, shape index: {}]
  %s2 = inlined_call_operand.vmem [shape: f32[1,16], index: 2, kind: input, shape index: {}]
  %s3 = inlined_call_operand.vmem [shape: bf16[16,16], index: 3, kind: input, shape index: {}]
  %s4 = inlined_call_operand.vmem [shape: f32[1,16], index: 4, kind: input, shape index: {}]
  %s5 = inlined_call_operand.vmem [shape: f32[1,16], index: 5, kind: input, shape index: {}]
  %s6 = inlined_call_operand.vmem [shape: f32[32,16], index: 6, kind: output, shape index: {}]
  %s7 = sld [smem:[#allocation0]]
  $region34: #{densenet_forward.22} parent=0
    _
  %s9 = ssub.s32 1, %s7
  %s10 = scalar_select 0, %s9, %s7
  // Predicated region
  $region2: #{densenet_forward.22} parent=0 // pred_check
    _
  $region3: #{densenet_forward.22} parent=0 // pred_check_branch
    %12 = sbr.rel (0) target = $region5
  $region4: #{densenet_forward.22} parent=0 // pred_region
    _
  $region5: #{densenet_forward.22} parent=0 // pred_fallthru
    _
  // Predicated region
  $region6: #{densenet_forward.22} parent=0 // pred_check
    _
  $region7: #{densenet_forward.22} parent=0 // pred_check_branch
    %14 = sbr.rel (0) target = $region9
  $region8: #{densenet_forward.22} parent=0 // pred_region
    _
  $region9: #{densenet_forward.22} parent=0 // pred_fallthru
    _
  // Predicated region
  $region10: #{densenet_forward.22} parent=0 // pred_check
    _
  $region11: #{densenet_forward.22} parent=0 // pred_check_branch
    %16 = sbr.rel (0) target = $region13
  $region12: #{densenet_forward.22} parent=0 // pred_region
    _
  $region13: #{densenet_forward.22} parent=0 // pred_fallthru
    _
  // Predicated region
  $region14: #{densenet_forward.22} parent=0 // pred_check
    _
  $region15: #{densenet_forward.22} parent=0 // pred_check_branch
    %18 = sbr.rel (0) target = $region17
  $region16: #{densenet_forward.22} parent=0 // pred_region
    _
  $region17: #{densenet_forward.22} parent=0 // pred_fallthru
    _
  // Predicated region
  $region18: #{densenet_forward.22} parent=0 // pred_check
    _
  $region19: #{densenet_forward.22} parent=0 // pred_check_branch
    %20 = sbr.rel (0) target = $region21
  $region20: #{densenet_forward.22} parent=0 // pred_region
    _
  $region21: #{densenet_forward.22} parent=0 // pred_fallthru
    _
  // Predicated region
  $region22: #{densenet_forward.22} parent=0 // pred_check
    _
  $region23: #{densenet_forward.22} parent=0 // pred_check_branch
    %22 = sbr.rel (0) target = $region25
  $region24: #{densenet_forward.22} parent=0 // pred_region
    _
  $region25: #{densenet_forward.22} parent=0 // pred_fallthru
    _
  %v24 = vld [vmem:[%s0] sm:$0xff]
  %v25 = vld [vmem:[%s0 + $0x8] sm:$0xff]
  %v26 = vld [vmem:[%s0 + $0x10] sm:$0xff]
  %v27 = vld [vmem:[%s0 + $0x18] sm:$0xff]
  %v28 = vld [vmem:[%s1] sm:$0x1]
  %v30 = vlaneseq
  %v31 = vshrl.u32 %v30, 7
  %v32 = vsub.s32 0, %v31
  %v33 = vrot.slane %v28, %v32
  %v35 = vmul.f32 %v24, %v33
  %v36 = vmul.f32 %v25, %v33
  %v37 = vmul.f32 %v26, %v33
  %v38 = vmul.f32 %v27, %v33
  %v39 = vld [vmem:[%s2] sm:$0x1]
  %v41 = vlaneseq
  %v42 = vshrl.u32 %v41, 7
  %v43 = vsub.s32 0, %v42
  %v44 = vrot.slane %v39, %v43
  %v46 = vadd.f32 %v35, %v44
  %v47 = vadd.f32 %v36, %v44
  %v48 = vadd.f32 %v37, %v44
  %v49 = vadd.f32 %v38, %v44
  %v50 = vmax.f32 %v46, 0.0
  %v51 = vmax.f32 %v47, 0.0
  %v52 = vmax.f32 %v48, 0.0
  %v53 = vmax.f32 %v49, 0.0
  %v54 = vpack.c.bf16 %v51, %v50
  %v55 = vpack.c.bf16 %v53, %v52
  %v56 = vld [vmem:[%s3] sm:$0xf]
  %v57 = vld [vmem:[%s3 + $0x4] sm:$0xf]
  %v60 = vunpack.c.l.b16 %v56
  %v61 = vunpack.c.l.b16 %v57
  %v62 = vpack.c.b16 %v61, %v60
  %vm64 = vcmask 130048
  %v66 = vsel %vm64, %v54, 0
  %v69 = vsel %vm64, %v55, 0
  %71 = vmatprep.subr.bf16.mxu0 0
  %72 = vmatpush1.bf16.msra.mxu0 0
  %73 = vmatprep.subr.bf16.mxu0 0
  %74 = vmatpush1.bf16.msra.mxu0 0
  %75 = vmatprep.subr.bf16.mxu0 0
  %76 = vmatpush1.bf16.msra.mxu0 0
  %77 = vmatprep.subr.bf16.mxu0 0
  %78 = vmatpush1.bf16.msra.mxu0 0
  %79 = vmatprep.subr.bf16.mxu0 0
  %80 = vmatpush1.bf16.msra.mxu0 0
  %81 = vmatprep.subr.bf16.mxu0 0
  %82 = vmatpush1.bf16.msra.mxu0 0
  %83 = vmatprep.subr.bf16.mxu0 0
  %84 = vmatpush1.bf16.msra.mxu0 0
  %85 = vmatprep.subr.bf16.mxu0 0
  %86 = vmatpush1.bf16.msra.mxu0 %v62
  %87 = vmatprep.subr.bf16.mxu0 0
  %88 = vmatpush2.bf16.msra.mxu0 0
  %89 = vmatprep.subr.bf16.mxu0 0
  %90 = vmatpush2.bf16.msra.mxu0 0
  %91 = vmatprep.subr.bf16.mxu0 0
  %92 = vmatpush2.bf16.msra.mxu0 0
  %93 = vmatprep.subr.bf16.mxu0 0
  %94 = vmatpush2.bf16.msra.mxu0 0
  %95 = vmatprep.subr.bf16.mxu0 0
  %96 = vmatpush2.bf16.msra.mxu0 0
  %97 = vmatprep.subr.bf16.mxu0 0
  %98 = vmatpush2.bf16.msra.mxu0 0
  %99 = vmatprep.subr.bf16.mxu0 0
  %100 = vmatpush2.bf16.msra.mxu0 0
  %101 = vmatprep.subr.bf16.mxu0 0
  %102 = vmatpush2.bf16.msra.mxu0 0
  %103 = vmatprep.mubr.bf16.mxu0 0
  %104 = vmatmul.mubr.bf16.gmra.mxu0 %v66
  %v105 = vpop.f32.mrf.mxu0
  %v106 = vadd.f32 0.0, %v105
  %v107 = vpop.f32.mrf.mxu0
  %v108 = vpop.f32.mrf.mxu0
  %v109 = vadd.f32 0.0, %v108
  %v110 = vpop.f32.mrf.mxu0
  %111 = vmatprep.mubr.bf16.mxu0 0
  %112 = vmatmul.mubr.bf16.gmra.mxu0 %v69
  %v113 = vpop.f32.mrf.mxu0
  %v114 = vadd.f32 0.0, %v113
  %v115 = vpop.f32.mrf.mxu0
  %v116 = vpop.f32.mrf.mxu0
  %v117 = vadd.f32 0.0, %v116
  %v118 = vpop.f32.mrf.mxu0
  %119 = vdwg.mxu0
  %v120 = vld [vmem:[%s4] sm:$0x1]
  %v122 = vlaneseq
  %v123 = vshrl.u32 %v122, 7
  %v124 = vsub.s32 0, %v123
  %v125 = vrot.slane %v120, %v124
  %v127 = vmul.f32 %v106, %v125
  %v128 = vmul.f32 %v109, %v125
  %v129 = vmul.f32 %v114, %v125
  %v130 = vmul.f32 %v117, %v125
  %v131 = vld [vmem:[%s5] sm:$0x1]
  %v133 = vlaneseq
  %v134 = vshrl.u32 %v133, 7
  %v135 = vsub.s32 0, %v134
  %v136 = vrot.slane %v131, %v135
  %v138 = vadd.f32 %v127, %v136
  %v139 = vadd.f32 %v128, %v136
  %v140 = vadd.f32 %v129, %v136
  %v141 = vadd.f32 %v130, %v136
  %v142 = vmax.f32 %v138, 0.0
  %v143 = vmax.f32 %v139, 0.0
  %v144 = vmax.f32 %v140, 0.0
  %v145 = vmax.f32 %v141, 0.0
  %146 = vst.msk [vmem:[%s6] sm:$0xff] %vm64, %v142
  %147 = vst.msk [vmem:[%s6 + $0x8] sm:$0xff] %vm64, %v143
  %148 = vst.msk [vmem:[%s6 + $0x10] sm:$0xff] %vm64, %v144
  %149 = vst.msk [vmem:[%s6 + $0x18] sm:$0xff] %vm64, %v145
  // Predicated region
  $region26: #{densenet_forward.22} parent=0 // pred_check
    _
  $region27: #{densenet_forward.22} parent=0 // pred_check_branch
    %151 = sbr.rel (0) target = $region29
  $region28: #{densenet_forward.22} parent=0 // pred_region
    _
  $region29: #{densenet_forward.22} parent=0 // pred_fallthru
    _
  // Predicated region
  $region30: #{densenet_forward.22} parent=0 // pred_check
    _
  $region31: #{densenet_forward.22} parent=0 // pred_check_branch
    %153 = sbr.rel (0) target = $region33
  $region32: #{densenet_forward.22} parent=0 // pred_region
    _
  $region33: #{densenet_forward.22} parent=0 // pred_fallthru
    _

// kernel: densenet_forward.24
$region0: #{densenet_forward.24}
  #allocation0 [shape = 'u32[]', space=smem, size = 0x4, offset = 0x4, fixed_abs, tag = 'smem constant byte address 0x4 - core index']
  #allocation1 [shape = 'u32[144,128]{1,0:T(1,128)}', space=vmem, size = 0x12000, scoped, tag = 'internal scratch']
  %s0 = inlined_call_operand.vmem [shape: f32[32,24], index: 0, kind: input, shape index: {}]
  %s1 = inlined_call_operand.vmem [shape: f32[1,24], index: 1, kind: input, shape index: {}]
  %s2 = inlined_call_operand.vmem [shape: f32[1,24], index: 2, kind: input, shape index: {}]
  %s3 = inlined_call_operand.vmem [shape: bf16[24,16], index: 3, kind: input, shape index: {}]
  %s4 = inlined_call_operand.vmem [shape: f32[1,16], index: 4, kind: input, shape index: {}]
  %s5 = inlined_call_operand.vmem [shape: f32[1,16], index: 5, kind: input, shape index: {}]
  %s6 = inlined_call_operand.vmem [shape: f32[32,16], index: 6, kind: output, shape index: {}]
  %s7 = sld [smem:[#allocation0]]
  $region34: #{densenet_forward.24} parent=0
    _
  %s9 = ssub.s32 1, %s7
  %s10 = scalar_select 0, %s9, %s7
  // Predicated region
  $region2: #{densenet_forward.24} parent=0 // pred_check
    _
  $region3: #{densenet_forward.24} parent=0 // pred_check_branch
    %12 = sbr.rel (0) target = $region5
  $region4: #{densenet_forward.24} parent=0 // pred_region
    _
  $region5: #{densenet_forward.24} parent=0 // pred_fallthru
    _
  // Predicated region
  $region6: #{densenet_forward.24} parent=0 // pred_check
    _
  $region7: #{densenet_forward.24} parent=0 // pred_check_branch
    %14 = sbr.rel (0) target = $region9
  $region8: #{densenet_forward.24} parent=0 // pred_region
    _
  $region9: #{densenet_forward.24} parent=0 // pred_fallthru
    _
  // Predicated region
  $region10: #{densenet_forward.24} parent=0 // pred_check
    _
  $region11: #{densenet_forward.24} parent=0 // pred_check_branch
    %16 = sbr.rel (0) target = $region13
  $region12: #{densenet_forward.24} parent=0 // pred_region
    _
  $region13: #{densenet_forward.24} parent=0 // pred_fallthru
    _
  // Predicated region
  $region14: #{densenet_forward.24} parent=0 // pred_check
    _
  $region15: #{densenet_forward.24} parent=0 // pred_check_branch
    %18 = sbr.rel (0) target = $region17
  $region16: #{densenet_forward.24} parent=0 // pred_region
    _
  $region17: #{densenet_forward.24} parent=0 // pred_fallthru
    _
  // Predicated region
  $region18: #{densenet_forward.24} parent=0 // pred_check
    _
  $region19: #{densenet_forward.24} parent=0 // pred_check_branch
    %20 = sbr.rel (0) target = $region21
  $region20: #{densenet_forward.24} parent=0 // pred_region
    _
  $region21: #{densenet_forward.24} parent=0 // pred_fallthru
    _
  // Predicated region
  $region22: #{densenet_forward.24} parent=0 // pred_check
    _
  $region23: #{densenet_forward.24} parent=0 // pred_check_branch
    %22 = sbr.rel (0) target = $region25
  $region24: #{densenet_forward.24} parent=0 // pred_region
    _
  $region25: #{densenet_forward.24} parent=0 // pred_fallthru
    _
  %v24 = vld [vmem:[%s0] sm:$0xff]
  %v25 = vld [vmem:[%s0 + $0x8] sm:$0xff]
  %v26 = vld [vmem:[%s0 + $0x10] sm:$0xff]
  %v27 = vld [vmem:[%s0 + $0x18] sm:$0xff]
  %v28 = vld [vmem:[%s1] sm:$0x1]
  %v30 = vlaneseq
  %v31 = vshrl.u32 %v30, 7
  %v32 = vsub.s32 0, %v31
  %v33 = vrot.slane %v28, %v32
  %v35 = vmul.f32 %v24, %v33
  %v36 = vmul.f32 %v25, %v33
  %v37 = vmul.f32 %v26, %v33
  %v38 = vmul.f32 %v27, %v33
  %v39 = vld [vmem:[%s2] sm:$0x1]
  %v41 = vlaneseq
  %v42 = vshrl.u32 %v41, 7
  %v43 = vsub.s32 0, %v42
  %v44 = vrot.slane %v39, %v43
  %v46 = vadd.f32 %v35, %v44
  %v47 = vadd.f32 %v36, %v44
  %v48 = vadd.f32 %v37, %v44
  %v49 = vadd.f32 %v38, %v44
  %v50 = vmax.f32 %v46, 0.0
  %v51 = vmax.f32 %v47, 0.0
  %v52 = vmax.f32 %v48, 0.0
  %v53 = vmax.f32 %v49, 0.0
  %v54 = vpack.c.bf16 %v51, %v50
  %v55 = vpack.c.bf16 %v53, %v52
  %v56 = vld [vmem:[%s3] sm:$0xf]
  %v57 = vld [vmem:[%s3 + $0x4] sm:$0xf]
  %v58 = vld [vmem:[%s3 + $0x8] sm:$0xf]
  %v62 = vunpack.c.l.b16 %v56
  %v63 = vunpack.c.l.b16 %v57
  %v64 = vunpack.c.l.b16 %v58
  %v65 = vpack.c.b16 %v63, %v62
  %v66 = vpack.c.b16 %v64, %v64
  %vm68 = vcmask 195584
  %v70 = vsel %vm68, %v54, 0
  %v73 = vsel %vm68, %v55, 0
  %vm75 = vcmask 1043456
  %v77 = vsel %vm75, %v66, 0
  %79 = vmatprep.subr.bf16.mxu0 0
  %80 = vmatpush1.bf16.msra.mxu0 0
  %81 = vmatprep.subr.bf16.mxu0 0
  %82 = vmatpush1.bf16.msra.mxu0 0
  %83 = vmatprep.subr.bf16.mxu0 0
  %84 = vmatpush1.bf16.msra.mxu0 0
  %85 = vmatprep.subr.bf16.mxu0 0
  %86 = vmatpush1.bf16.msra.mxu0 0
  %87 = vmatprep.subr.bf16.mxu0 0
  %88 = vmatpush1.bf16.msra.mxu0 0
  %89 = vmatprep.subr.bf16.mxu0 0
  %90 = vmatpush1.bf16.msra.mxu0 0
  %91 = vmatprep.subr.bf16.mxu0 0
  %92 = vmatpush1.bf16.msra.mxu0 %v77
  %93 = vmatprep.subr.bf16.mxu0 0
  %94 = vmatpush1.bf16.msra.mxu0 %v65
  %95 = vmatprep.subr.bf16.mxu0 0
  %96 = vmatpush2.bf16.msra.mxu0 0
  %97 = vmatprep.subr.bf16.mxu0 0
  %98 = vmatpush2.bf16.msra.mxu0 0
  %99 = vmatprep.subr.bf16.mxu0 0
  %100 = vmatpush2.bf16.msra.mxu0 0
  %101 = vmatprep.subr.bf16.mxu0 0
  %102 = vmatpush2.bf16.msra.mxu0 0
  %103 = vmatprep.subr.bf16.mxu0 0
  %104 = vmatpush2.bf16.msra.mxu0 0
  %105 = vmatprep.subr.bf16.mxu0 0
  %106 = vmatpush2.bf16.msra.mxu0 0
  %107 = vmatprep.subr.bf16.mxu0 0
  %108 = vmatpush2.bf16.msra.mxu0 0
  %109 = vmatprep.subr.bf16.mxu0 0
  %110 = vmatpush2.bf16.msra.mxu0 0
  %111 = vmatprep.mubr.bf16.mxu0 0
  %112 = vmatmul.mubr.bf16.gmra.mxu0 %v70
  %v113 = vpop.f32.mrf.mxu0
  %v114 = vadd.f32 0.0, %v113
  %v115 = vpop.f32.mrf.mxu0
  %v116 = vpop.f32.mrf.mxu0
  %v117 = vadd.f32 0.0, %v116
  %v118 = vpop.f32.mrf.mxu0
  %119 = vmatprep.mubr.bf16.mxu0 0
  %120 = vmatmul.mubr.bf16.gmra.mxu0 %v73
  %v121 = vpop.f32.mrf.mxu0
  %v122 = vadd.f32 0.0, %v121
  %v123 = vpop.f32.mrf.mxu0
  %v124 = vpop.f32.mrf.mxu0
  %v125 = vadd.f32 0.0, %v124
  %v126 = vpop.f32.mrf.mxu0
  %127 = vdwg.mxu0
  %v128 = vld [vmem:[%s4] sm:$0x1]
  %v130 = vlaneseq
  %v131 = vshrl.u32 %v130, 7
  %v132 = vsub.s32 0, %v131
  %v133 = vrot.slane %v128, %v132
  %v135 = vmul.f32 %v114, %v133
  %v136 = vmul.f32 %v117, %v133
  %v137 = vmul.f32 %v122, %v133
  %v138 = vmul.f32 %v125, %v133
  %v139 = vld [vmem:[%s5] sm:$0x1]
  %v141 = vlaneseq
  %v142 = vshrl.u32 %v141, 7
  %v143 = vsub.s32 0, %v142
  %v144 = vrot.slane %v139, %v143
  %v146 = vadd.f32 %v135, %v144
  %v147 = vadd.f32 %v136, %v144
  %v148 = vadd.f32 %v137, %v144
  %v149 = vadd.f32 %v138, %v144
  %v150 = vmax.f32 %v146, 0.0
  %v151 = vmax.f32 %v147, 0.0
  %v152 = vmax.f32 %v148, 0.0
  %v153 = vmax.f32 %v149, 0.0
  %vm154 = vcmask 130048
  %155 = vst.msk [vmem:[%s6] sm:$0xff] %vm154, %v150
  %156 = vst.msk [vmem:[%s6 + $0x8] sm:$0xff] %vm154, %v151
  %157 = vst.msk [vmem:[%s6 + $0x10] sm:$0xff] %vm154, %v152
  %158 = vst.msk [vmem:[%s6 + $0x18] sm:$0xff] %vm154, %v153
  // Predicated region
  $region26: #{densenet_forward.24} parent=0 // pred_check
    _
  $region27: #{densenet_forward.24} parent=0 // pred_check_branch
    %160 = sbr.rel (0) target = $region29
  $region28: #{densenet_forward.24} parent=0 // pred_region
    _
  $region29: #{densenet_forward.24} parent=0 // pred_fallthru
    _
  // Predicated region
  $region30: #{densenet_forward.24} parent=0 // pred_check
    _
  $region31: #{densenet_forward.24} parent=0 // pred_check_branch
    %162 = sbr.rel (0) target = $region33
  $region32: #{densenet_forward.24} parent=0 // pred_region
    _
  $region33: #{densenet_forward.24} parent=0 // pred_fallthru
    _

// kernel: densenet_forward.26
$region0: #{densenet_forward.26}
  #allocation0 [shape = 'u32[]', space=smem, size = 0x4, offset = 0x4, fixed_abs, tag = 'smem constant byte address 0x4 - core index']
  #allocation1 [shape = 'u32[144,128]{1,0:T(1,128)}', space=vmem, size = 0x12000, scoped, tag = 'internal scratch']
  %s0 = inlined_call_operand.vmem [shape: f32[2,16,32], index: 0, kind: input, shape index: {}]
  %s1 = inlined_call_operand.vmem [shape: f32[1,32], index: 1, kind: input, shape index: {}]
  %s2 = inlined_call_operand.vmem [shape: f32[1,32], index: 2, kind: input, shape index: {}]
  %s3 = inlined_call_operand.vmem [shape: f32[2,32], index: 3, kind: output, shape index: {}]
  %s4 = sld [smem:[#allocation0]]
  $region22: #{densenet_forward.26} parent=0
    _
  %s6 = ssub.s32 1, %s4
  %s7 = scalar_select 0, %s6, %s4
  // Predicated region
  $region2: #{densenet_forward.26} parent=0 // pred_check
    _
  $region3: #{densenet_forward.26} parent=0 // pred_check_branch
    %9 = sbr.rel (0) target = $region5
  $region4: #{densenet_forward.26} parent=0 // pred_region
    _
  $region5: #{densenet_forward.26} parent=0 // pred_fallthru
    _
  // Predicated region
  $region6: #{densenet_forward.26} parent=0 // pred_check
    _
  $region7: #{densenet_forward.26} parent=0 // pred_check_branch
    %11 = sbr.rel (0) target = $region9
  $region8: #{densenet_forward.26} parent=0 // pred_region
    _
  $region9: #{densenet_forward.26} parent=0 // pred_fallthru
    _
  // Predicated region
  $region10: #{densenet_forward.26} parent=0 // pred_check
    _
  $region11: #{densenet_forward.26} parent=0 // pred_check_branch
    %13 = sbr.rel (0) target = $region13
  $region12: #{densenet_forward.26} parent=0 // pred_region
    _
  $region13: #{densenet_forward.26} parent=0 // pred_fallthru
    _
  %v14 = vld [vmem:[%s0] sm:$0xff]
  %v15 = vld [vmem:[%s0 + $0x8] sm:$0xff]
  %v16 = vld [vmem:[%s0 + $0x10] sm:$0xff]
  %v17 = vld [vmem:[%s0 + $0x18] sm:$0xff]
  %v18 = vld [vmem:[%s1] sm:$0x1]
  %v20 = vlaneseq
  %v21 = vshrl.u32 %v20, 7
  %v22 = vsub.s32 0, %v21
  %v23 = vrot.slane %v18, %v22
  %v25 = vmul.f32 %v14, %v23
  %v26 = vmul.f32 %v15, %v23
  %v27 = vmul.f32 %v16, %v23
  %v28 = vmul.f32 %v17, %v23
  %v29 = vld [vmem:[%s2] sm:$0x1]
  %v31 = vlaneseq
  %v32 = vshrl.u32 %v31, 7
  %v33 = vsub.s32 0, %v32
  %v34 = vrot.slane %v29, %v33
  %v36 = vadd.f32 %v25, %v34
  %v37 = vadd.f32 %v26, %v34
  %v38 = vadd.f32 %v27, %v34
  %v39 = vadd.f32 %v28, %v34
  %v40 = vmax.f32 %v36, 0.0
  %v41 = vmax.f32 %v37, 0.0
  %v42 = vmax.f32 %v38, 0.0
  %v43 = vmax.f32 %v39, 0.0
  %vm44 = vcmask 261120
  %v45 = vsel %vm44, %v40, 0.0
  %v46 = vsel %vm44, %v41, 0.0
  %v47 = vadd.f32 %v45, %v46
  %v48 = vrot.slane %v47, 4
  %v49 = vadd.f32 %v47, %v48
  %v50 = vrot.slane %v49, 2
  %v51 = vadd.f32 %v49, %v50
  %v52 = vrot.slane %v51, 1
  %v53 = vadd.f32 %v51, %v52
  %v54 = vsel %vm44, %v42, 0.0
  %v55 = vsel %vm44, %v43, 0.0
  %v56 = vadd.f32 %v54, %v55
  %v57 = vrot.slane %v56, 4
  %v58 = vadd.f32 %v56, %v57
  %v59 = vrot.slane %v58, 2
  %v60 = vadd.f32 %v58, %v59
  %v61 = vrot.slane %v60, 1
  %v62 = vadd.f32 %v60, %v61
  %v63 = vrcp.pop 16.0
  %v64 = vmul.f32 %v53, %v63
  %v65 = vmul.f32 %v62, %v63
  %vm68 = vcmask 1041409
  %v69 = vsel %vm68, %v65, %v64
  %vm71 = vcmask 254976
  %72 = vst.msk [vmem:[%s3] sm:$0x3] %vm71, %v69
  // Predicated region
  $region14: #{densenet_forward.26} parent=0 // pred_check
    _
  $region15: #{densenet_forward.26} parent=0 // pred_check_branch
    %74 = sbr.rel (0) target = $region17
  $region16: #{densenet_forward.26} parent=0 // pred_region
    _
  $region17: #{densenet_forward.26} parent=0 // pred_fallthru
    _
  // Predicated region
  $region18: #{densenet_forward.26} parent=0 // pred_check
    _
  $region19: #{densenet_forward.26} parent=0 // pred_check_branch
    %76 = sbr.rel (0) target = $region21
  $region20: #{densenet_forward.26} parent=0 // pred_region
    _
  $region21: #{densenet_forward.26} parent=0 // pred_fallthru
    _

// kernel: densenet_forward.23
$region0: #{densenet_forward.23}
  #allocation0 [shape = 'u32[]', space=smem, size = 0x4, offset = 0x4, fixed_abs, tag = 'smem constant byte address 0x4 - core index']
  #allocation1 [shape = 'u32[144,128]{1,0:T(1,128)}', space=vmem, size = 0x12000, scoped, tag = 'internal scratch']
  %s0 = inlined_call_operand.vmem [shape: f32[2,56,16], index: 0, kind: input, shape index: {}]
  %s1 = inlined_call_operand.vmem [shape: bf16[9,16,8], index: 1, kind: input, shape index: {}]
  %s2 = inlined_call_operand.vmem [shape: f32[2,4,4,8], index: 2, kind: output, shape index: {}]
  %s3 = sld [smem:[#allocation0]]
  $region41: #{densenet_forward.23} parent=0
    _
  %s5 = ssub.s32 1, %s3
  %s6 = scalar_select 0, %s5, %s3
  loop: start=0, step=1, limit=4
  $region2: #{densenet_forward.23} parent=0 // loop_pre_header
    _
  $region3: #{densenet_forward.23} parent=0 // loop_header
    %s8 = sphi 0, %s12
    %p9 = scmp.ge.s32.totalorder %s8, 4
    %s18 = sphi 0, %s20
    %s21 = sphi 0, %s18
    %s22 = sphi 0, %s21
    %s38 = sphi 0, %s22
    %s42 = sphi 0, %s42
    %s44 = sphi 0, %s42
    %s45 = sphi 0, %s44
    %s59 = sphi 0, %s45
    %s65 = sphi 0, %s67
    %s68 = sphi 0, %s65
    %s69 = sphi 0, %s68
    %s85 = sphi 0, %s69
  $region4: #{densenet_forward.23} parent=0 // loop_header_branch
    %11 = sbr.rel (%p9) target = $region8
  $region5: #{densenet_forward.23} parent=0 // loop_body
    %s13 = ssub.s32 %s8, 1
    %s14 = ssub.s32 %s8, 2
    %s15 = sadd.s32 %s8, 1
    %s16 = ssub.s32 %s8, %s15
    %p17 = scmp.eq.s32.totalorder %s16, 0
    %s19 = sadd.s32 %s18, 1
    %s20 = scalar_select %p17, %s18, %s19
    %p23 = pneg %p17
    %p24 = scmp.eq.s32.totalorder %s8, 1
    %p25 = por %p23, %p24
    %p26 = scmp.ne.s32.totalorder %s18, %s21
    %p27 = scmp.eq.s32.totalorder %s8, 0
    %p28 = por %p26, %p27
    %p29 = scmp.ne.s32.totalorder %s18, %s21
    %p30 = scmp.eq.s32.totalorder %s13, 1
    %p31 = por %p29, %p30
    %p32 = scmp.ne.s32.totalorder %s21, %s22
    %p33 = scmp.eq.s32.totalorder %s13, 0
    %p34 = por %p32, %p33
    %p35 = scmp.ne.s32.totalorder %s21, %s22
    %p36 = scmp.eq.s32.totalorder %s14, 1
    %p37 = por %p35, %p36
    %p39 = scmp.ne.s32.totalorder %s22, %s38
    %p40 = scmp.eq.s32.totalorder %s14, 0
    %p41 = por %p39, %p40
    %s43 = sadd.s32 %s42, 1
    %p46 = scmp.eq.s32.totalorder %s8, 1
    %p47 = scmp.ne.s32.totalorder %s42, %s44
    %p48 = scmp.eq.s32.totalorder %s8, 0
    %p49 = por %p47, %p48
    %p50 = scmp.ne.s32.totalorder %s42, %s44
    %p51 = scmp.eq.s32.totalorder %s13, 1
    %p52 = por %p50, %p51
    %p53 = scmp.ne.s32.totalorder %s44, %s45
    %p54 = scmp.eq.s32.totalorder %s13, 0
    %p55 = por %p53, %p54
    %p56 = scmp.ne.s32.totalorder %s44, %s45
    %p57 = scmp.eq.s32.totalorder %s14, 1
    %p58 = por %p56, %p57
    %p60 = scmp.ne.s32.totalorder %s45, %s59
    %p61 = scmp.eq.s32.totalorder %s14, 0
    %p62 = por %p60, %p61
    %s63 = ssub.s32 %s8, %s15
    %p64 = scmp.eq.s32.totalorder %s63, 0
    %s66 = sadd.s32 %s65, 1
    %s67 = scalar_select %p64, %s65, %s66
    %p70 = pneg %p64
    %p71 = scmp.eq.s32.totalorder %s8, 1
    %p72 = por %p70, %p71
    %p73 = scmp.ne.s32.totalorder %s65, %s68
    %p74 = scmp.eq.s32.totalorder %s8, 0
    %p75 = por %p73, %p74
    %p76 = scmp.ne.s32.totalorder %s65, %s68
    %p77 = scmp.eq.s32.totalorder %s13, 1
    %p78 = por %p76, %p77
    %p79 = scmp.ne.s32.totalorder %s68, %s69
    %p80 = scmp.eq.s32.totalorder %s13, 0
    %p81 = por %p79, %p80
    %p82 = scmp.ne.s32.totalorder %s68, %s69
    %p83 = scmp.eq.s32.totalorder %s14, 1
    %p84 = por %p82, %p83
    %p86 = scmp.ne.s32.totalorder %s69, %s85
    %p87 = scmp.eq.s32.totalorder %s14, 0
    %p88 = por %p86, %p87
    %p89 = scmp.le.s32.totalorder 1, %s8
    %p90 = scmp.lt.s32.totalorder %s8, 3
    %p91 = pnand %p89, %p90
    %p92 = pneg %p91
    // Predicated region
    $region9: #{densenet_forward.23} parent=5 // pred_check
      _
    $region10: #{densenet_forward.23} parent=5 // pred_check_branch
      %94 = sbr.rel (%p91) target = $region12
    $region11: #{densenet_forward.23} parent=5 // pred_region
      %s95 = ssub.s32 %s8, 1
      // Predicated region
      $region13: #{densenet_forward.23} parent=11 // pred_check
        %p96 = pneg %p55
      $region14: #{densenet_forward.23} parent=11 // pred_check_branch
        %98 = sbr.rel (%p96) target = $region16
      $region15: #{densenet_forward.23} parent=11 // pred_region
        _
      $region16: #{densenet_forward.23} parent=11 // pred_fallthru
        _
    $region12: #{densenet_forward.23} parent=5 // pred_fallthru
      _
    %p99 = scmp.lt.s32.totalorder %s8, 2
    // Predicated region
    $region17: #{densenet_forward.23} parent=5 // pred_check
      %p100 = pneg %p99
    $region18: #{densenet_forward.23} parent=5 // pred_check_branch
      %102 = sbr.rel (%p100) target = $region20
    $region19: #{densenet_forward.23} parent=5 // pred_region
      // Predicated region
      $region21: #{densenet_forward.23} parent=19 // pred_check
        %p103 = pneg %p28
      $region22: #{densenet_forward.23} parent=19 // pred_check_branch
        %105 = sbr.rel (%p103) target = $region24
      $region23: #{densenet_forward.23} parent=19 // pred_region
        %p106 = scmp.lt.s32.totalorder %s8, 1
        %s107 = scalar_select %p106, %s8, 1
        %s108 = smul.addr %s107, 7
        %s109 = smul.addr %s108, 8
        %s110 = scalar_lea.vmem %s0, %s109
      $region24: #{densenet_forward.23} parent=19 // pred_fallthru
        _
    $region20: #{densenet_forward.23} parent=5 // pred_fallthru
      _
    %p111 = scmp.le.s32.totalorder 1, %s8
    %p112 = scmp.lt.s32.totalorder %s8, 3
    %p113 = pnand %p111, %p112
    %p114 = pneg %p113
    // Predicated region
    $region25: #{densenet_forward.23} parent=5 // pred_check
      _
    $region26: #{densenet_forward.23} parent=5 // pred_check_branch
      %116 = sbr.rel (%p113) target = $region28
    $region27: #{densenet_forward.23} parent=5 // pred_region
      %s117 = ssub.s32 %s8, 1
      %p118 = scmp.lt.s32.totalorder %s13, 1
      %s119 = scalar_select %p118, %s13, 1
      %s120 = smul.addr %s119, 7
      %s121 = smul.addr %s120, 8
      %s122 = scalar_lea.vmem %s0, %s121
      %p123 = pneg %p34
      %p124 = pneg %p31
      %p125 = pneg %p55
      %p126 = pneg %p52
      %p127 = pneg %p81
      %p128 = pneg %p78
      %p129 = scmp.lt.s32.totalorder %s13, 1
      %s130 = scalar_select %p129, %s13, 1
      %s131 = smul.addr %s130, 4
      %s132 = smul.addr %s131, 4
      %s133 = scalar_lea.vmem %s2, %s132
      %p134 = scmp.lt.s32.totalorder %s13, 1
      %s135 = scalar_select %p134, %s13, 1
      %s136 = smul.addr %s135, 7
      %s137 = smul.addr %s136, 8
      %s138 = scalar_lea.vmem %s0, %s137
      %p139 = scmp.lt.s32.totalorder %s13, 1
      %s140 = scalar_select %p139, %s13, 1
      %s141 = smul.addr %s140, 4
      %s142 = smul.addr %s141, 4
      %s143 = scalar_lea.vmem %s2, %s142
      %v145 = vld [vmem:[%s138] sm:$0xff]
      %v146 = vld [vmem:[%s138 + $0x8] sm:$0xff]
      %v147 = vld [vmem:[%s138 + $0x10] sm:$0xff]
      %v148 = vld [vmem:[%s138 + $0x18] sm:$0xff]
      %v149 = vpack.c.bf16 %v146, %v145
      %v150 = vpack.c.bf16 %v148, %v147
      %v151 = vld [vmem:[%s1] sm:$0xf]
      %v152 = vld [vmem:[%s1 + $0x4] sm:$0xf]
      %v153 = vld [vmem:[%s138 + $0x1] sm:$0xff]
      %v154 = vld [vmem:[%s138 + $0x9] sm:$0xff]
      %v155 = vld [vmem:[%s138 + $0x11] sm:$0xff]
      %v156 = vld [vmem:[%s138 + $0x19] sm:$0xff]
      %v157 = vpack.c.bf16 %v154, %v153
      %v158 = vpack.c.bf16 %v156, %v155
      %s159 = scalar_lea.vmem %s1, 8
      %v160 = vld [vmem:[%s159] sm:$0xf]
      %v161 = vld [vmem:[%s159 + $0x4] sm:$0xf]
      %v164 = vunpack.c.l.b16 %v160
      %v165 = vunpack.c.l.b16 %v161
      %v166 = vpack.c.b16 %v165, %v164
      %vm168 = vcmask 130048
      %v170 = vsel %vm168, %v157, 0
      %v173 = vsel %vm168, %v158, 0
      %175 = vmatprep.subr.bf16.mxu0 0
      %176 = vmatpush1.bf16.msra.mxu0 0
      %177 = vmatprep.subr.bf16.mxu0 0
      %178 = vmatpush1.bf16.msra.mxu0 0
      %179 = vmatprep.subr.bf16.mxu0 0
      %180 = vmatpush1.bf16.msra.mxu0 0
      %181 = vmatprep.subr.bf16.mxu0 0
      %182 = vmatpush1.bf16.msra.mxu0 0
      %183 = vmatprep.subr.bf16.mxu0 0
      %184 = vmatpush1.bf16.msra.mxu0 0
      %185 = vmatprep.subr.bf16.mxu0 0
      %186 = vmatpush1.bf16.msra.mxu0 0
      %187 = vmatprep.subr.bf16.mxu0 0
      %188 = vmatpush1.bf16.msra.mxu0 0
      %189 = vmatprep.subr.bf16.mxu0 0
      %190 = vmatpush1.bf16.msra.mxu0 %v166
      %191 = vmatprep.subr.bf16.mxu0 0
      %192 = vmatpush2.bf16.msra.mxu0 0
      %193 = vmatprep.subr.bf16.mxu0 0
      %194 = vmatpush2.bf16.msra.mxu0 0
      %195 = vmatprep.subr.bf16.mxu0 0
      %196 = vmatpush2.bf16.msra.mxu0 0
      %197 = vmatprep.subr.bf16.mxu0 0
      %198 = vmatpush2.bf16.msra.mxu0 0
      %199 = vmatprep.subr.bf16.mxu0 0
      %200 = vmatpush2.bf16.msra.mxu0 0
      %201 = vmatprep.subr.bf16.mxu0 0
      %202 = vmatpush2.bf16.msra.mxu0 0
      %203 = vmatprep.subr.bf16.mxu0 0
      %204 = vmatpush2.bf16.msra.mxu0 0
      %205 = vmatprep.subr.bf16.mxu0 0
      %206 = vmatpush2.bf16.msra.mxu0 0
      %207 = vmatprep.mubr.bf16.mxu0 0
      %208 = vmatmul.mubr.bf16.gmra.mxu0 %v170
      %v209 = vpop.f32.mrf.mxu0
      %v210 = vadd.f32 0.0, %v209
      %v211 = vpop.f32.mrf.mxu0
      %v212 = vpop.f32.mrf.mxu0
      %v213 = vadd.f32 0.0, %v212
      %v214 = vpop.f32.mrf.mxu0
      %215 = vmatprep.mubr.bf16.mxu0 0
      %216 = vmatmul.mubr.bf16.gmra.mxu0 %v173
      %v217 = vpop.f32.mrf.mxu0
      %v218 = vadd.f32 0.0, %v217
      %v219 = vpop.f32.mrf.mxu0
      %v220 = vpop.f32.mrf.mxu0
      %v221 = vadd.f32 0.0, %v220
      %v222 = vpop.f32.mrf.mxu0
      %223 = vdwg.mxu0
      %v226 = vunpack.c.l.b16 %v151
      %v227 = vunpack.c.l.b16 %v152
      %v228 = vpack.c.b16 %v227, %v226
      %v231 = vsel %vm168, %v149, 0
      %v234 = vsel %vm168, %v150, 0
      %236 = vmatprep.subr.bf16.mxu0 0
      %237 = vmatpush1.bf16.msra.mxu0 0
      %238 = vmatprep.subr.bf16.mxu0 0
      %239 = vmatpush1.bf16.msra.mxu0 0
      %240 = vmatprep.subr.bf16.mxu0 0
      %241 = vmatpush1.bf16.msra.mxu0 0
      %242 = vmatprep.subr.bf16.mxu0 0
      %243 = vmatpush1.bf16.msra.mxu0 0
      %244 = vmatprep.subr.bf16.mxu0 0
      %245 = vmatpush1.bf16.msra.mxu0 0
      %246 = vmatprep.subr.bf16.mxu0 0
      %247 = vmatpush1.bf16.msra.mxu0 0
      %248 = vmatprep.subr.bf16.mxu0 0
      %249 = vmatpush1.bf16.msra.mxu0 0
      %250 = vmatprep.subr.bf16.mxu0 0
      %251 = vmatpush1.bf16.msra.mxu0 %v228
      %252 = vmatprep.subr.bf16.mxu0 0
      %253 = vmatpush2.bf16.msra.mxu0 0
      %254 = vmatprep.subr.bf16.mxu0 0
      %255 = vmatpush2.bf16.msra.mxu0 0
      %256 = vmatprep.subr.bf16.mxu0 0
      %257 = vmatpush2.bf16.msra.mxu0 0
      %258 = vmatprep.subr.bf16.mxu0 0
      %259 = vmatpush2.bf16.msra.mxu0 0
      %260 = vmatprep.subr.bf16.mxu0 0
      %261 = vmatpush2.bf16.msra.mxu0 0
      %262 = vmatprep.subr.bf16.mxu0 0
      %263 = vmatpush2.bf16.msra.mxu0 0
      %264 = vmatprep.subr.bf16.mxu0 0
      %265 = vmatpush2.bf16.msra.mxu0 0
      %266 = vmatprep.subr.bf16.mxu0 0
      %267 = vmatpush2.bf16.msra.mxu0 0
      %268 = vmatprep.mubr.bf16.mxu0 0
      %269 = vmatmul.mubr.bf16.gmra.mxu0 %v231
      %v270 = vpop.f32.mrf.mxu0
      %v271 = vadd.f32 %v210, %v270
      %v272 = vpop.f32.mrf.mxu0
      %v273 = vpop.f32.mrf.mxu0
      %v274 = vadd.f32 %v213, %v273
      %v275 = vpop.f32.mrf.mxu0
      %276 = vmatprep.mubr.bf16.mxu0 0
      %277 = vmatmul.mubr.bf16.gmra.mxu0 %v234
      %v278 = vpop.f32.mrf.mxu0
      %v279 = vadd.f32 %v218, %v278
      %v280 = vpop.f32.mrf.mxu0
      %v281 = vpop.f32.mrf.mxu0
      %v282 = vadd.f32 %v221, %v281
      %v283 = vpop.f32.mrf.mxu0
      %284 = vdwg.mxu0
      %v285 = vld [vmem:[%s138 + $0x2] sm:$0xff]
      %v286 = vld [vmem:[%s138 + $0xa] sm:$0xff]
      %v287 = vld [vmem:[%s138 + $0x12] sm:$0xff]
      %v288 = vld [vmem:[%s138 + $0x1a] sm:$0xff]
      %v289 = vpack.c.bf16 %v286, %v285
      %v290 = vpack.c.bf16 %v288, %v287
      %s291 = scalar_lea.vmem %s1, 16
      %v292 = vld [vmem:[%s291] sm:$0xf]
      %v293 = vld [vmem:[%s291 + $0x4] sm:$0xf]
      %v296 = vunpack.c.l.b16 %v292
      %v297 = vunpack.c.l.b16 %v293
      %v298 = vpack.c.b16 %v297, %v296
      %v301 = vsel %vm168, %v289, 0
      %v304 = vsel %vm168, %v290, 0
      %306 = vmatprep.subr.bf16.mxu0 0
      %307 = vmatpush1.bf16.msra.mxu0 0
      %308 = vmatprep.subr.bf16.mxu0 0
      %309 = vmatpush1.bf16.msra.mxu0 0
      %310 = vmatprep.subr.bf16.mxu0 0
      %311 = vmatpush1.bf16.msra.mxu0 0
      %312 = vmatprep.subr.bf16.mxu0 0
      %313 = vmatpush1.bf16.msra.mxu0 0
      %314 = vmatprep.subr.bf16.mxu0 0
      %315 = vmatpush1.bf16.msra.mxu0 0
      %316 = vmatprep.subr.bf16.mxu0 0
      %317 = vmatpush1.bf16.msra.mxu0 0
      %318 = vmatprep.subr.bf16.mxu0 0
      %319 = vmatpush1.bf16.msra.mxu0 0
      %320 = vmatprep.subr.bf16.mxu0 0
      %321 = vmatpush1.bf16.msra.mxu0 %v298
      %322 = vmatprep.subr.bf16.mxu0 0
      %323 = vmatpush2.bf16.msra.mxu0 0
      %324 = vmatprep.subr.bf16.mxu0 0
      %325 = vmatpush2.bf16.msra.mxu0 0
      %326 = vmatprep.subr.bf16.mxu0 0
      %327 = vmatpush2.bf16.msra.mxu0 0
      %328 = vmatprep.subr.bf16.mxu0 0
      %329 = vmatpush2.bf16.msra.mxu0 0
      %330 = vmatprep.subr.bf16.mxu0 0
      %331 = vmatpush2.bf16.msra.mxu0 0
      %332 = vmatprep.subr.bf16.mxu0 0
      %333 = vmatpush2.bf16.msra.mxu0 0
      %334 = vmatprep.subr.bf16.mxu0 0
      %335 = vmatpush2.bf16.msra.mxu0 0
      %336 = vmatprep.subr.bf16.mxu0 0
      %337 = vmatpush2.bf16.msra.mxu0 0
      %338 = vmatprep.mubr.bf16.mxu0 0
      %339 = vmatmul.mubr.bf16.gmra.mxu0 %v301
      %v340 = vpop.f32.mrf.mxu0
      %v341 = vadd.f32 0.0, %v340
      %v342 = vpop.f32.mrf.mxu0
      %v343 = vpop.f32.mrf.mxu0
      %v344 = vadd.f32 0.0, %v343
      %v345 = vpop.f32.mrf.mxu0
      %346 = vmatprep.mubr.bf16.mxu0 0
      %347 = vmatmul.mubr.bf16.gmra.mxu0 %v304
      %v348 = vpop.f32.mrf.mxu0
      %v349 = vadd.f32 0.0, %v348
      %v350 = vpop.f32.mrf.mxu0
      %v351 = vpop.f32.mrf.mxu0
      %v352 = vadd.f32 0.0, %v351
      %v353 = vpop.f32.mrf.mxu0
      %354 = vdwg.mxu0
      %v355 = vadd.f32 %v271, %v341
      %v356 = vadd.f32 %v274, %v344
      %v357 = vadd.f32 %v279, %v349
      %v358 = vadd.f32 %v282, %v352
      %v359 = vld [vmem:[%s138 + $0x8] sm:$0xff]
      %v360 = vld [vmem:[%s138 + $0x10] sm:$0xff]
      %v361 = vld [vmem:[%s138 + $0x18] sm:$0xff]
      %v362 = vld [vmem:[%s138 + $0x20] sm:$0xff]
      %v363 = vpack.c.bf16 %v360, %v359
      %v364 = vpack.c.bf16 %v362, %v361
      %s365 = scalar_lea.vmem %s1, 24
      %v366 = vld [vmem:[%s365] sm:$0xf]
      %v367 = vld [vmem:[%s365 + $0x4] sm:$0xf]
      %v370 = vunpack.c.l.b16 %v366
      %v371 = vunpack.c.l.b16 %v367
      %v372 = vpack.c.b16 %v371, %v370
      %v375 = vsel %vm168, %v363, 0
      %v378 = vsel %vm168, %v364, 0
      %380 = vmatprep.subr.bf16.mxu0 0
      %381 = vmatpush1.bf16.msra.mxu0 0
      %382 = vmatprep.subr.bf16.mxu0 0
      %383 = vmatpush1.bf16.msra.mxu0 0
      %384 = vmatprep.subr.bf16.mxu0 0
      %385 = vmatpush1.bf16.msra.mxu0 0
      %386 = vmatprep.subr.bf16.mxu0 0
      %387 = vmatpush1.bf16.msra.mxu0 0
      %388 = vmatprep.subr.bf16.mxu0 0
      %389 = vmatpush1.bf16.msra.mxu0 0
      %390 = vmatprep.subr.bf16.mxu0 0
      %391 = vmatpush1.bf16.msra.mxu0 0
      %392 = vmatprep.subr.bf16.mxu0 0
      %393 = vmatpush1.bf16.msra.mxu0 0
      %394 = vmatprep.subr.bf16.mxu0 0
      %395 = vmatpush1.bf16.msra.mxu0 %v372
      %396 = vmatprep.subr.bf16.mxu0 0
      %397 = vmatpush2.bf16.msra.mxu0 0
      %398 = vmatprep.subr.bf16.mxu0 0
      %399 = vmatpush2.bf16.msra.mxu0 0
      %400 = vmatprep.subr.bf16.mxu0 0
      %401 = vmatpush2.bf16.msra.mxu0 0
      %402 = vmatprep.subr.bf16.mxu0 0
      %403 = vmatpush2.bf16.msra.mxu0 0
      %404 = vmatprep.subr.bf16.mxu0 0
      %405 = vmatpush2.bf16.msra.mxu0 0
      %406 = vmatprep.subr.bf16.mxu0 0
      %407 = vmatpush2.bf16.msra.mxu0 0
      %408 = vmatprep.subr.bf16.mxu0 0
      %409 = vmatpush2.bf16.msra.mxu0 0
      %410 = vmatprep.subr.bf16.mxu0 0
      %411 = vmatpush2.bf16.msra.mxu0 0
      %412 = vmatprep.mubr.bf16.mxu0 0
      %413 = vmatmul.mubr.bf16.gmra.mxu0 %v375
      %v414 = vpop.f32.mrf.mxu0
      %v415 = vadd.f32 0.0, %v414
      %v416 = vpop.f32.mrf.mxu0
      %v417 = vpop.f32.mrf.mxu0
      %v418 = vadd.f32 0.0, %v417
      %v419 = vpop.f32.mrf.mxu0
      %420 = vmatprep.mubr.bf16.mxu0 0
      %421 = vmatmul.mubr.bf16.gmra.mxu0 %v378
      %v422 = vpop.f32.mrf.mxu0
      %v423 = vadd.f32 0.0, %v422
      %v424 = vpop.f32.mrf.mxu0
      %v425 = vpop.f32.mrf.mxu0
      %v426 = vadd.f32 0.0, %v425
      %v427 = vpop.f32.mrf.mxu0
      %428 = vdwg.mxu0
      %v429 = vadd.f32 %v355, %v415
      %v430 = vadd.f32 %v356, %v418
      %v431 = vadd.f32 %v357, %v423
      %v432 = vadd.f32 %v358, %v426
      %v433 = vld [vmem:[%s138 + $0x9] sm:$0xff]
      %v434 = vld [vmem:[%s138 + $0x11] sm:$0xff]
      %v435 = vld [vmem:[%s138 + $0x19] sm:$0xff]
      %v436 = vld [vmem:[%s138 + $0x21] sm:$0xff]
      %v437 = vpack.c.bf16 %v434, %v433
      %v438 = vpack.c.bf16 %v436, %v435
      %s439 = scalar_lea.vmem %s1, 32
      %v440 = vld [vmem:[%s439] sm:$0xf]
      %v441 = vld [vmem:[%s439 + $0x4] sm:$0xf]
      %v444 = vunpack.c.l.b16 %v440
      %v445 = vunpack.c.l.b16 %v441
      %v446 = vpack.c.b16 %v445, %v444
      %v449 = vsel %vm168, %v437, 0
      %v452 = vsel %vm168, %v438, 0
      %454 = vmatprep.subr.bf16.mxu0 0
      %455 = vmatpush1.bf16.msra.mxu0 0
      %456 = vmatprep.subr.bf16.mxu0 0
      %457 = vmatpush1.bf16.msra.mxu0 0
      %458 = vmatprep.subr.bf16.mxu0 0
      %459 = vmatpush1.bf16.msra.mxu0 0
      %460 = vmatprep.subr.bf16.mxu0 0
      %461 = vmatpush1.bf16.msra.mxu0 0
      %462 = vmatprep.subr.bf16.mxu0 0
      %463 = vmatpush1.bf16.msra.mxu0 0
      %464 = vmatprep.subr.bf16.mxu0 0
      %465 = vmatpush1.bf16.msra.mxu0 0
      %466 = vmatprep.subr.bf16.mxu0 0
      %467 = vmatpush1.bf16.msra.mxu0 0
      %468 = vmatprep.subr.bf16.mxu0 0
      %469 = vmatpush1.bf16.msra.mxu0 %v446
      %470 = vmatprep.subr.bf16.mxu0 0
      %471 = vmatpush2.bf16.msra.mxu0 0
      %472 = vmatprep.subr.bf16.mxu0 0
      %473 = vmatpush2.bf16.msra.mxu0 0
      %474 = vmatprep.subr.bf16.mxu0 0
      %475 = vmatpush2.bf16.msra.mxu0 0
      %476 = vmatprep.subr.bf16.mxu0 0
      %477 = vmatpush2.bf16.msra.mxu0 0
      %478 = vmatprep.subr.bf16.mxu0 0
      %479 = vmatpush2.bf16.msra.mxu0 0
      %480 = vmatprep.subr.bf16.mxu0 0
      %481 = vmatpush2.bf16.msra.mxu0 0
      %482 = vmatprep.subr.bf16.mxu0 0
      %483 = vmatpush2.bf16.msra.mxu0 0
      %484 = vmatprep.subr.bf16.mxu0 0
      %485 = vmatpush2.bf16.msra.mxu0 0
      %486 = vmatprep.mubr.bf16.mxu0 0
      %487 = vmatmul.mubr.bf16.gmra.mxu0 %v449
      %v488 = vpop.f32.mrf.mxu0
      %v489 = vadd.f32 0.0, %v488
      %v490 = vpop.f32.mrf.mxu0
      %v491 = vpop.f32.mrf.mxu0
      %v492 = vadd.f32 0.0, %v491
      %v493 = vpop.f32.mrf.mxu0
      %494 = vmatprep.mubr.bf16.mxu0 0
      %495 = vmatmul.mubr.bf16.gmra.mxu0 %v452
      %v496 = vpop.f32.mrf.mxu0
      %v497 = vadd.f32 0.0, %v496
      %v498 = vpop.f32.mrf.mxu0
      %v499 = vpop.f32.mrf.mxu0
      %v500 = vadd.f32 0.0, %v499
      %v501 = vpop.f32.mrf.mxu0
      %502 = vdwg.mxu0
      %v503 = vadd.f32 %v429, %v489
      %v504 = vadd.f32 %v430, %v492
      %v505 = vadd.f32 %v431, %v497
      %v506 = vadd.f32 %v432, %v500
      %v507 = vld [vmem:[%s138 + $0xa] sm:$0xff]
      %v508 = vld [vmem:[%s138 + $0x12] sm:$0xff]
      %v509 = vld [vmem:[%s138 + $0x1a] sm:$0xff]
      %v510 = vld [vmem:[%s138 + $0x22] sm:$0xff]
      %v511 = vpack.c.bf16 %v508, %v507
      %v512 = vpack.c.bf16 %v510, %v509
      %s513 = scalar_lea.vmem %s1, 40
      %v514 = vld [vmem:[%s513] sm:$0xf]
      %v515 = vld [vmem:[%s513 + $0x4] sm:$0xf]
      %v518 = vunpack.c.l.b16 %v514
      %v519 = vunpack.c.l.b16 %v515
      %v520 = vpack.c.b16 %v519, %v518
      %v523 = vsel %vm168, %v511, 0
      %v526 = vsel %vm168, %v512, 0
      %528 = vmatprep.subr.bf16.mxu0 0
      %529 = vmatpush1.bf16.msra.mxu0 0
      %530 = vmatprep.subr.bf16.mxu0 0
      %531 = vmatpush1.bf16.msra.mxu0 0
      %532 = vmatprep.subr.bf16.mxu0 0
      %533 = vmatpush1.bf16.msra.mxu0 0
      %534 = vmatprep.subr.bf16.mxu0 0
      %535 = vmatpush1.bf16.msra.mxu0 0
      %536 = vmatprep.subr.bf16.mxu0 0
      %537 = vmatpush1.bf16.msra.mxu0 0
      %538 = vmatprep.subr.bf16.mxu0 0
      %539 = vmatpush1.bf16.msra.mxu0 0
      %540 = vmatprep.subr.bf16.mxu0 0
      %541 = vmatpush1.bf16.msra.mxu0 0
      %542 = vmatprep.subr.bf16.mxu0 0
      %543 = vmatpush1.bf16.msra.mxu0 %v520
      %544 = vmatprep.subr.bf16.mxu0 0
      %545 = vmatpush2.bf16.msra.mxu0 0
      %546 = vmatprep.subr.bf16.mxu0 0
      %547 = vmatpush2.bf16.msra.mxu0 0
      %548 = vmatprep.subr.bf16.mxu0 0
      %549 = vmatpush2.bf16.msra.mxu0 0
      %550 = vmatprep.subr.bf16.mxu0 0
      %551 = vmatpush2.bf16.msra.mxu0 0
      %552 = vmatprep.subr.bf16.mxu0 0
      %553 = vmatpush2.bf16.msra.mxu0 0
      %554 = vmatprep.subr.bf16.mxu0 0
      %555 = vmatpush2.bf16.msra.mxu0 0
      %556 = vmatprep.subr.bf16.mxu0 0
      %557 = vmatpush2.bf16.msra.mxu0 0
      %558 = vmatprep.subr.bf16.mxu0 0
      %559 = vmatpush2.bf16.msra.mxu0 0
      %560 = vmatprep.mubr.bf16.mxu0 0
      %561 = vmatmul.mubr.bf16.gmra.mxu0 %v523
      %v562 = vpop.f32.mrf.mxu0
      %v563 = vadd.f32 0.0, %v562
      %v564 = vpop.f32.mrf.mxu0
      %v565 = vpop.f32.mrf.mxu0
      %v566 = vadd.f32 0.0, %v565
      %v567 = vpop.f32.mrf.mxu0
      %568 = vmatprep.mubr.bf16.mxu0 0
      %569 = vmatmul.mubr.bf16.gmra.mxu0 %v526
      %v570 = vpop.f32.mrf.mxu0
      %v571 = vadd.f32 0.0, %v570
      %v572 = vpop.f32.mrf.mxu0
      %v573 = vpop.f32.mrf.mxu0
      %v574 = vadd.f32 0.0, %v573
      %v575 = vpop.f32.mrf.mxu0
      %576 = vdwg.mxu0
      %v577 = vadd.f32 %v503, %v563
      %v578 = vadd.f32 %v504, %v566
      %v579 = vadd.f32 %v505, %v571
      %v580 = vadd.f32 %v506, %v574
      %v581 = vld [vmem:[%s138 + $0x10] sm:$0xff]
      %v582 = vld [vmem:[%s138 + $0x18] sm:$0xff]
      %v583 = vld [vmem:[%s138 + $0x20] sm:$0xff]
      %v584 = vld [vmem:[%s138 + $0x28] sm:$0xff]
      %v585 = vpack.c.bf16 %v582, %v581
      %v586 = vpack.c.bf16 %v584, %v583
      %s587 = scalar_lea.vmem %s1, 48
      %v588 = vld [vmem:[%s587] sm:$0xf]
      %v589 = vld [vmem:[%s587 + $0x4] sm:$0xf]
      %v592 = vunpack.c.l.b16 %v588
      %v593 = vunpack.c.l.b16 %v589
      %v594 = vpack.c.b16 %v593, %v592
      %v597 = vsel %vm168, %v585, 0
      %v600 = vsel %vm168, %v586, 0
      %602 = vmatprep.subr.bf16.mxu0 0
      %603 = vmatpush1.bf16.msra.mxu0 0
      %604 = vmatprep.subr.bf16.mxu0 0
      %605 = vmatpush1.bf16.msra.mxu0 0
      %606 = vmatprep.subr.bf16.mxu0 0
      %607 = vmatpush1.bf16.msra.mxu0 0
      %608 = vmatprep.subr.bf16.mxu0 0
      %609 = vmatpush1.bf16.msra.mxu0 0
      %610 = vmatprep.subr.bf16.mxu0 0
      %611 = vmatpush1.bf16.msra.mxu0 0
      %612 = vmatprep.subr.bf16.mxu0 0
      %613 = vmatpush1.bf16.msra.mxu0 0
      %614 = vmatprep.subr.bf16.mxu0 0
      %615 = vmatpush1.bf16.msra.mxu0 0
      %616 = vmatprep.subr.bf16.mxu0 0
      %617 = vmatpush1.bf16.msra.mxu0 %v594
      %618 = vmatprep.subr.bf16.mxu0 0
      %619 = vmatpush2.bf16.msra.mxu0 0
      %620 = vmatprep.subr.bf16.mxu0 0
      %621 = vmatpush2.bf16.msra.mxu0 0
      %622 = vmatprep.subr.bf16.mxu0 0
      %623 = vmatpush2.bf16.msra.mxu0 0
      %624 = vmatprep.subr.bf16.mxu0 0
      %625 = vmatpush2.bf16.msra.mxu0 0
      %626 = vmatprep.subr.bf16.mxu0 0
      %627 = vmatpush2.bf16.msra.mxu0 0
      %628 = vmatprep.subr.bf16.mxu0 0
      %629 = vmatpush2.bf16.msra.mxu0 0
      %630 = vmatprep.subr.bf16.mxu0 0
      %631 = vmatpush2.bf16.msra.mxu0 0
      %632 = vmatprep.subr.bf16.mxu0 0
      %633 = vmatpush2.bf16.msra.mxu0 0
      %634 = vmatprep.mubr.bf16.mxu0 0
      %635 = vmatmul.mubr.bf16.gmra.mxu0 %v597
      %v636 = vpop.f32.mrf.mxu0
      %v637 = vadd.f32 0.0, %v636
      %v638 = vpop.f32.mrf.mxu0
      %v639 = vpop.f32.mrf.mxu0
      %v640 = vadd.f32 0.0, %v639
      %v641 = vpop.f32.mrf.mxu0
      %642 = vmatprep.mubr.bf16.mxu0 0
      %643 = vmatmul.mubr.bf16.gmra.mxu0 %v600
      %v644 = vpop.f32.mrf.mxu0
      %v645 = vadd.f32 0.0, %v644
      %v646 = vpop.f32.mrf.mxu0
      %v647 = vpop.f32.mrf.mxu0
      %v648 = vadd.f32 0.0, %v647
      %v649 = vpop.f32.mrf.mxu0
      %650 = vdwg.mxu0
      %v651 = vadd.f32 %v577, %v637
      %v652 = vadd.f32 %v578, %v640
      %v653 = vadd.f32 %v579, %v645
      %v654 = vadd.f32 %v580, %v648
      %v655 = vld [vmem:[%s138 + $0x11] sm:$0xff]
      %v656 = vld [vmem:[%s138 + $0x19] sm:$0xff]
      %v657 = vld [vmem:[%s138 + $0x21] sm:$0xff]
      %v658 = vld [vmem:[%s138 + $0x29] sm:$0xff]
      %v659 = vpack.c.bf16 %v656, %v655
      %v660 = vpack.c.bf16 %v658, %v657
      %s661 = scalar_lea.vmem %s1, 56
      %v662 = vld [vmem:[%s661] sm:$0xf]
      %v663 = vld [vmem:[%s661 + $0x4] sm:$0xf]
      %v666 = vunpack.c.l.b16 %v662
      %v667 = vunpack.c.l.b16 %v663
      %v668 = vpack.c.b16 %v667, %v666
      %v671 = vsel %vm168, %v659, 0
      %v674 = vsel %vm168, %v660, 0
      %676 = vmatprep.subr.bf16.mxu0 0
      %677 = vmatpush1.bf16.msra.mxu0 0
      %678 = vmatprep.subr.bf16.mxu0 0
      %679 = vmatpush1.bf16.msra.mxu0 0
      %680 = vmatprep.subr.bf16.mxu0 0
      %681 = vmatpush1.bf16.msra.mxu0 0
      %682 = vmatprep.subr.bf16.mxu0 0
      %683 = vmatpush1.bf16.msra.mxu0 0
      %684 = vmatprep.subr.bf16.mxu0 0
      %685 = vmatpush1.bf16.msra.mxu0 0
      %686 = vmatprep.subr.bf16.mxu0 0
      %687 = vmatpush1.bf16.msra.mxu0 0
      %688 = vmatprep.subr.bf16.mxu0 0
      %689 = vmatpush1.bf16.msra.mxu0 0
      %690 = vmatprep.subr.bf16.mxu0 0
      %691 = vmatpush1.bf16.msra.mxu0 %v668
      %692 = vmatprep.subr.bf16.mxu0 0
      %693 = vmatpush2.bf16.msra.mxu0 0
      %694 = vmatprep.subr.bf16.mxu0 0
      %695 = vmatpush2.bf16.msra.mxu0 0
      %696 = vmatprep.subr.bf16.mxu0 0
      %697 = vmatpush2.bf16.msra.mxu0 0
      %698 = vmatprep.subr.bf16.mxu0 0
      %699 = vmatpush2.bf16.msra.mxu0 0
      %700 = vmatprep.subr.bf16.mxu0 0
      %701 = vmatpush2.bf16.msra.mxu0 0
      %702 = vmatprep.subr.bf16.mxu0 0
      %703 = vmatpush2.bf16.msra.mxu0 0
      %704 = vmatprep.subr.bf16.mxu0 0
      %705 = vmatpush2.bf16.msra.mxu0 0
      %706 = vmatprep.subr.bf16.mxu0 0
      %707 = vmatpush2.bf16.msra.mxu0 0
      %708 = vmatprep.mubr.bf16.mxu0 0
      %709 = vmatmul.mubr.bf16.gmra.mxu0 %v671
      %v710 = vpop.f32.mrf.mxu0
      %v711 = vadd.f32 0.0, %v710
      %v712 = vpop.f32.mrf.mxu0
      %v713 = vpop.f32.mrf.mxu0
      %v714 = vadd.f32 0.0, %v713
      %v715 = vpop.f32.mrf.mxu0
      %716 = vmatprep.mubr.bf16.mxu0 0
      %717 = vmatmul.mubr.bf16.gmra.mxu0 %v674
      %v718 = vpop.f32.mrf.mxu0
      %v719 = vadd.f32 0.0, %v718
      %v720 = vpop.f32.mrf.mxu0
      %v721 = vpop.f32.mrf.mxu0
      %v722 = vadd.f32 0.0, %v721
      %v723 = vpop.f32.mrf.mxu0
      %724 = vdwg.mxu0
      %v725 = vadd.f32 %v651, %v711
      %v726 = vadd.f32 %v652, %v714
      %v727 = vadd.f32 %v653, %v719
      %v728 = vadd.f32 %v654, %v722
      %v729 = vld [vmem:[%s138 + $0x12] sm:$0xff]
      %v730 = vld [vmem:[%s138 + $0x1a] sm:$0xff]
      %v731 = vld [vmem:[%s138 + $0x22] sm:$0xff]
      %v732 = vld [vmem:[%s138 + $0x2a] sm:$0xff]
      %v733 = vpack.c.bf16 %v730, %v729
      %v734 = vpack.c.bf16 %v732, %v731
      %s735 = scalar_lea.vmem %s1, 64
      %v736 = vld [vmem:[%s735] sm:$0xf]
      %v737 = vld [vmem:[%s735 + $0x4] sm:$0xf]
      %v740 = vunpack.c.l.b16 %v736
      %v741 = vunpack.c.l.b16 %v737
      %v742 = vpack.c.b16 %v741, %v740
      %v745 = vsel %vm168, %v733, 0
      %v748 = vsel %vm168, %v734, 0
      %750 = vmatprep.subr.bf16.mxu0 0
      %751 = vmatpush1.bf16.msra.mxu0 0
      %752 = vmatprep.subr.bf16.mxu0 0
      %753 = vmatpush1.bf16.msra.mxu0 0
      %754 = vmatprep.subr.bf16.mxu0 0
      %755 = vmatpush1.bf16.msra.mxu0 0
      %756 = vmatprep.subr.bf16.mxu0 0
      %757 = vmatpush1.bf16.msra.mxu0 0
      %758 = vmatprep.subr.bf16.mxu0 0
      %759 = vmatpush1.bf16.msra.mxu0 0
      %760 = vmatprep.subr.bf16.mxu0 0
      %761 = vmatpush1.bf16.msra.mxu0 0
      %762 = vmatprep.subr.bf16.mxu0 0
      %763 = vmatpush1.bf16.msra.mxu0 0
      %764 = vmatprep.subr.bf16.mxu0 0
      %765 = vmatpush1.bf16.msra.mxu0 %v742
      %766 = vmatprep.subr.bf16.mxu0 0
      %767 = vmatpush2.bf16.msra.mxu0 0
      %768 = vmatprep.subr.bf16.mxu0 0
      %769 = vmatpush2.bf16.msra.mxu0 0
      %770 = vmatprep.subr.bf16.mxu0 0
      %771 = vmatpush2.bf16.msra.mxu0 0
      %772 = vmatprep.subr.bf16.mxu0 0
      %773 = vmatpush2.bf16.msra.mxu0 0
      %774 = vmatprep.subr.bf16.mxu0 0
      %775 = vmatpush2.bf16.msra.mxu0 0
      %776 = vmatprep.subr.bf16.mxu0 0
      %777 = vmatpush2.bf16.msra.mxu0 0
      %778 = vmatprep.subr.bf16.mxu0 0
      %779 = vmatpush2.bf16.msra.mxu0 0
      %780 = vmatprep.subr.bf16.mxu0 0
      %781 = vmatpush2.bf16.msra.mxu0 0
      %782 = vmatprep.mubr.bf16.mxu0 0
      %783 = vmatmul.mubr.bf16.gmra.mxu0 %v745
      %v784 = vpop.f32.mrf.mxu0
      %v785 = vadd.f32 0.0, %v784
      %v786 = vpop.f32.mrf.mxu0
      %v787 = vpop.f32.mrf.mxu0
      %v788 = vadd.f32 0.0, %v787
      %v789 = vpop.f32.mrf.mxu0
      %790 = vmatprep.mubr.bf16.mxu0 0
      %791 = vmatmul.mubr.bf16.gmra.mxu0 %v748
      %v792 = vpop.f32.mrf.mxu0
      %v793 = vadd.f32 0.0, %v792
      %v794 = vpop.f32.mrf.mxu0
      %v795 = vpop.f32.mrf.mxu0
      %v796 = vadd.f32 0.0, %v795
      %v797 = vpop.f32.mrf.mxu0
      %798 = vdwg.mxu0
      %v799 = vadd.f32 %v725, %v785
      %v800 = vadd.f32 %v726, %v788
      %v801 = vadd.f32 %v727, %v793
      %v802 = vadd.f32 %v728, %v796
      %vm803 = vcmask 60416
      %804 = vst.msk [vmem:[%s143] sm:$0xf] %vm803, %v799
      %805 = vst.msk [vmem:[%s143 + $0x4] sm:$0xf] %vm803, %v800
      %806 = vst.msk [vmem:[%s143 + $0x8] sm:$0xf] %vm803, %v801
      %807 = vst.msk [vmem:[%s143 + $0xc] sm:$0xf] %vm803, %v802
      %p808 = scmp.lt.s32.totalorder %s13, 1
      %s809 = scalar_select %p808, %s13, 1
      %s810 = smul.addr %s809, 4
      %s811 = smul.addr %s810, 4
      %s812 = scalar_lea.vmem %s2, %s811
      // Predicated region
      $region29: #{densenet_forward.23} parent=27 // pred_check
        %p813 = pneg %p78
      $region30: #{densenet_forward.23} parent=27 // pred_check_branch
        %815 = sbr.rel (%p813) target = $region32
      $region31: #{densenet_forward.23} parent=27 // pred_region
        _
      $region32: #{densenet_forward.23} parent=27 // pred_fallthru
        _
    $region28: #{densenet_forward.23} parent=5 // pred_fallthru
      _
    %p816 = scmp.le.s32.totalorder 2, %s8
    // Predicated region
    $region33: #{densenet_forward.23} parent=5 // pred_check
      %p817 = pneg %p816
    $region34: #{densenet_forward.23} parent=5 // pred_check_branch
      %819 = sbr.rel (%p817) target = $region36
    $region35: #{densenet_forward.23} parent=5 // pred_region
      %s820 = ssub.s32 %s8, 2
      // Predicated region
      $region37: #{densenet_forward.23} parent=35 // pred_check
        %p821 = pneg %p84
      $region38: #{densenet_forward.23} parent=35 // pred_check_branch
        %823 = sbr.rel (%p821) target = $region40
      $region39: #{densenet_forward.23} parent=35 // pred_region
        %p824 = scmp.lt.s32.totalorder %s14, 1
        %s825 = scalar_select %p824, %s14, 1
        %s826 = smul.addr %s825, 4
        %s827 = smul.addr %s826, 4
        %s828 = scalar_lea.vmem %s2, %s827
      $region40: #{densenet_forward.23} parent=35 // pred_fallthru
        _
    $region36: #{densenet_forward.23} parent=5 // pred_fallthru
      _
  $region6: #{densenet_forward.23} parent=0 // loop_footer
    %s12 = sadd.s32 1, %s8
  $region7: #{densenet_forward.23} parent=0 // loop_footer_branch
    %7 = sbr.rel target = $region3
  $region8: #{densenet_forward.23} parent=0 // loop_exit
    _

// kernel: densenet_forward.27
$region0: #{densenet_forward.27}
  #allocation0 [shape = 'u32[]', space=smem, size = 0x4, offset = 0x4, fixed_abs, tag = 'smem constant byte address 0x4 - core index']
  #allocation1 [shape = 'u32[144,128]{1,0:T(1,128)}', space=vmem, size = 0x12000, scoped, tag = 'internal scratch']
  %s0 = inlined_call_operand.vmem [shape: f32[2,32], index: 0, kind: input, shape index: {}]
  %s1 = inlined_call_operand.vmem [shape: bf16[32,10], index: 1, kind: input, shape index: {}]
  %s2 = inlined_call_operand.hbm [shape: f32[1,10], index: 2, kind: input, shape index: {}]
  %s3 = inlined_call_operand.hbm [shape: f32[2,10], index: 3, kind: output, shape index: {}]
  %s4 = sld [smem:[#allocation0]]
  $region26: #{densenet_forward.27} parent=0
    _
  %s6 = ssub.s32 1, %s4
  %s7 = scalar_select 0, %s6, %s4
  $region1: #{densenet_forward.27} parent=0
    #allocation2 [shape = 'u8[512]{0}', space=vmem, size = 0x400, scoped, tag = 'input window, operand 2, single buffered']
    #allocation3 [shape = 's32[1]{0}', space=sflag, size = 0x4, scoped, tag = 'scoped memory for densenet_forward.27']
    #allocation4 [shape = 's32[1]{0}', space=sflag, size = 0x4, scoped, tag = 'scoped memory for densenet_forward.27']
    #allocation5 [shape = 'u8[1024]{0}', space=vmem, size = 0x400, scoped, tag = 'output window, operand 0, single buffered']
    %8 = vsyncpa [#allocation3], 0
    %9 = vsyncpa [#allocation4], 0
    // Predicated region
    $region2: #{densenet_forward.27} parent=1 // pred_check
      _
    $region3: #{densenet_forward.27} parent=1 // pred_check_branch
      %11 = sbr.rel (0) target = $region5
    $region4: #{densenet_forward.27} parent=1 // pred_region
      _
    $region5: #{densenet_forward.27} parent=1 // pred_fallthru
      _
    // Predicated region
    $region6: #{densenet_forward.27} parent=1 // pred_check
      _
    $region7: #{densenet_forward.27} parent=1 // pred_check_branch
      %13 = sbr.rel (0) target = $region9
    $region8: #{densenet_forward.27} parent=1 // pred_region
      _
    $region9: #{densenet_forward.27} parent=1 // pred_fallthru
      _
    // Predicated region
    $region10: #{densenet_forward.27} parent=1 // pred_check
      _
    $region11: #{densenet_forward.27} parent=1 // pred_check_branch
      %15 = sbr.rel (0) target = $region13
    $region12: #{densenet_forward.27} parent=1 // pred_region
      %s17 = ssub.s32 16, 16
      %18 = vsyncadd [#allocation3], %s17
      %s20 = sshll.u32 [#allocation2], 4
      %s21 = int_to_ptr.vmem [resolvable:$true] %s20
      %23 = dma.hbm_to_vmem [thread:$0]  %s2, 16, %s21, [#allocation3]
    $region13: #{densenet_forward.27} parent=1 // pred_fallthru
      _
    // Predicated region
    $region14: #{densenet_forward.27} parent=1 // pred_check
      _
    $region15: #{densenet_forward.27} parent=1 // pred_check_branch
      %25 = sbr.rel (0) target = $region17
    $region16: #{densenet_forward.27} parent=1 // pred_region
      %26 = dma.done [#allocation3], 16
    $region17: #{densenet_forward.27} parent=1 // pred_fallthru
      _
    %v28 = vld [vmem:[%s0] sm:$0x3]
    %v29 = vpack.c.bf16 %v28, %v28
    %v30 = vld [vmem:[%s1] sm:$0xf]
    %v31 = vld [vmem:[%s1 + $0x4] sm:$0xf]
    %v32 = vld [vmem:[%s1 + $0x8] sm:$0xf]
    %v33 = vld [vmem:[%s1 + $0xc] sm:$0xf]
    %v34 = vld [vmem:[#allocation2] sm:$0x1]
    %v36 = vlaneseq
    %v37 = vshrl.u32 %v36, 7
    %v38 = vsub.s32 0, %v37
    %v39 = vrot.slane %v34, %v38
    %v45 = vunpack.c.l.b16 %v30
    %v46 = vunpack.c.l.b16 %v31
    %v47 = vunpack.c.l.b16 %v32
    %v48 = vunpack.c.l.b16 %v33
    %v49 = vpack.c.b16 %v46, %v45
    %v50 = vpack.c.b16 %v48, %v47
    %vm53 = vcmask 261120
    %v55 = vsel %vm53, %v29, 0
    %57 = vmatprep.subr.bf16.mxu0 0
    %58 = vmatpush1.bf16.msra.mxu0 0
    %59 = vmatprep.subr.bf16.mxu0 0
    %60 = vmatpush1.bf16.msra.mxu0 0
    %61 = vmatprep.subr.bf16.mxu0 0
    %62 = vmatpush1.bf16.msra.mxu0 0
    %63 = vmatprep.subr.bf16.mxu0 0
    %64 = vmatpush1.bf16.msra.mxu0 0
    %65 = vmatprep.subr.bf16.mxu0 0
    %66 = vmatpush1.bf16.msra.mxu0 0
    %67 = vmatprep.subr.bf16.mxu0 0
    %68 = vmatpush1.bf16.msra.mxu0 0
    %69 = vmatprep.subr.bf16.mxu0 0
    %70 = vmatpush1.bf16.msra.mxu0 %v50
    %71 = vmatprep.subr.bf16.mxu0 0
    %72 = vmatpush1.bf16.msra.mxu0 %v49
    %73 = vmatprep.subr.bf16.mxu0 0
    %74 = vmatpush2.bf16.msra.mxu0 0
    %75 = vmatprep.subr.bf16.mxu0 0
    %76 = vmatpush2.bf16.msra.mxu0 0
    %77 = vmatprep.subr.bf16.mxu0 0
    %78 = vmatpush2.bf16.msra.mxu0 0
    %79 = vmatprep.subr.bf16.mxu0 0
    %80 = vmatpush2.bf16.msra.mxu0 0
    %81 = vmatprep.subr.bf16.mxu0 0
    %82 = vmatpush2.bf16.msra.mxu0 0
    %83 = vmatprep.subr.bf16.mxu0 0
    %84 = vmatpush2.bf16.msra.mxu0 0
    %85 = vmatprep.subr.bf16.mxu0 0
    %86 = vmatpush2.bf16.msra.mxu0 0
    %87 = vmatprep.subr.bf16.mxu0 0
    %88 = vmatpush2.bf16.msra.mxu0 0
    %89 = vmatprep.mubr.bf16.mxu0 0
    %90 = vmatmul.mubr.bf16.gmra.mxu0 %v55
    %v91 = vpop.f32.mrf.mxu0
    %v92 = vadd.f32 %v39, %v91
    %v93 = vpop.f32.mrf.mxu0
    %v94 = vpop.f32.mrf.mxu0
    %v95 = vpop.f32.mrf.mxu0
    %96 = vdwg.mxu0
    %vm97 = vcmask 74752
    %98 = vst.msk [vmem:[#allocation5] sm:$0x3] %vm97, %v92
    // Predicated region
    $region18: #{densenet_forward.27} parent=1 // pred_check
      _
    $region19: #{densenet_forward.27} parent=1 // pred_check_branch
      %100 = sbr.rel (0) target = $region21
    $region20: #{densenet_forward.27} parent=1 // pred_region
      %s102 = ssub.s32 32, 32
      %103 = vsyncadd [#allocation4], %s102
      %s105 = sshll.u32 [#allocation5], 4
      %s106 = int_to_ptr.vmem [resolvable:$true] %s105
      %108 = dma.vmem_to_hbm [thread:$0]  %s106, 32, %s3, [#allocation4]
    $region21: #{densenet_forward.27} parent=1 // pred_fallthru
      _
    // Predicated region
    $region22: #{densenet_forward.27} parent=1 // pred_check
      _
    $region23: #{densenet_forward.27} parent=1 // pred_check_branch
      %110 = sbr.rel (0) target = $region25
    $region24: #{densenet_forward.27} parent=1 // pred_region
      %111 = dma.done [#allocation4], 32
    $region25: #{densenet_forward.27} parent=1 // pred_fallthru
      _
    %112 = vsyncpa [#allocation3], 1
    %113 = vsyncpa [#allocation4], 1

</llo_original>
